<compile_context>
chip_gen: v7x
topology: tpu7x:2x2x1
jax: 0.10.0
libtpu: 0.0.40
codegen_flags: <defaults>
</compile_context>

<pallas_src>
import jax
import jax.numpy as jnp
from jax.experimental import pallas as pl
from jax.experimental.pallas import tpu as pltpu


# ----------------------------- kernel-side helpers -----------------------------

def _mm(a, b):
    """MXU matmul: bf16 operands, f32 accumulation."""
    return jnp.dot(a.astype(jnp.bfloat16), b.astype(jnp.bfloat16),
                   preferred_element_type=jnp.float32)


def _sigmoid(x):
    # exp on the EUP, divide replaced by the (otherwise idle) approx reciprocal.
    return pl.reciprocal(1.0 + jnp.exp(-x), approx=True)


# ----------------------------- fused encoder kernel -----------------------------

def _build_fused_encoder(blocks, Adj, Kt, T0, V, C0):
    """Builds the fused EfficientGCN_Blocks kernel.

    Returns (kernel_fn, flat_param_list, T_out, C_out).  The kernel processes
    one batch element end-to-end (all blocks), keeping the activation in
    VMEM between layers.
    """
    pad = (Kt - 1) // 2
    flat = []      # parameter arrays, in exactly the order the kernel consumes them
    cfg = []       # static per-block structure
    T = T0
    for blk in blocks:
        g, tcn, att = blk['gcn'], blk['tcn'], blk['attn']
        K = g['edge'].shape[0]
        Cout = g['sc'].shape[-1]
        # Graph-aggregation operator: concat_k kron(I_T, (A_k*edge_k)^T), so
        #   agg = Akron @ stack_k(conv_out_k)
        # is ONE (T*V, K*T*V) x (K*T*V, Cout) MXU matmul.
        A_eff = Adj[:K] * g['edge']                                   # (K, V, V)
        I_T = jnp.eye(T, dtype=jnp.float32)
        akron = jnp.concatenate(
            [jnp.kron(I_T, A_eff[k].T) for k in range(K)], axis=1)    # (T*V, K*T*V)
        gcn_res = 'Wr' in g
        flat += [akron.astype(jnp.bfloat16), g['Wg'], g['bg'], g['sc'], g['sh']]
        if gcn_res:
            flat += [g['Wr'], g['br']]
        tcfg = []
        for tp in tcn:
            s = tp['stride']
            T_next = (T + 2 * pad - Kt) // s + 1
            conv_res = 'Wr' in tp
            flat += [tp['Wt'], tp['bt'], tp['sc'], tp['sh']]
            if conv_res:
                flat += [tp['Wr'], tp['br']]
            tcfg.append((s, conv_res, T_next))
            T = T_next
        flat += [att['Wf'], att['bf'], att['Wt'], att['bt'],
                 att['Wv'], att['bv'], att['sc'], att['sh']]
        cfg.append(dict(K=K, Cout=Cout, gcn_res=gcn_res, tcn=tcfg))
    T_out = T
    C_out = cfg[-1]['Cout']
    n_par = len(flat)

    def kernel(*refs):
        x_ref = refs[0]
        par = iter(refs[1:1 + n_par])
        o_ref = refs[1 + n_par]
        nxt = lambda: next(par)[...]

        x = x_ref[...].astype(jnp.float32)                    # (T, V, Cin)
        for bc in cfg:
            K, Co = bc['K'], bc['Cout']
            Tb = x.shape[0]
            M = Tb * V

            # ---- Spatial_Graph_Layer: relu(BN(graph_conv(x)) + residual(x)) ----
            akr = nxt()                                       # (M, K*M) bf16
            Wg, bg, gsc, gsh = nxt(), nxt(), nxt(), nxt()
            xf = x.reshape(M, x.shape[-1])
            y = _mm(xf, Wg) + bg                              # (M, K*Co) 1x1 conv
            ystack = jnp.concatenate(
                [y[:, k * Co:(k + 1) * Co] for k in range(K)], axis=0)   # (K*M, Co)
            agg = _mm(akr, ystack)                            # one MXU contraction
            if bc['gcn_res']:
                Wr, br = nxt(), nxt()
                res = _mm(xf, Wr) + br                        # folded conv1x1 + BN
            else:
                res = xf                                      # identity (Cin == Cout)
            x = jnp.maximum(agg * gsc + gsh + res, 0.0).reshape(Tb, V, Co)

            # ---- depth x Temporal_Basic_Layer ----
            for (s, conv_res, To) in bc['tcn']:
                Wt, bt, tsc, tsh = nxt(), nxt(), nxt(), nxt()
                # SAME padding in VMEM (+ a little right slack for striding)
                xp = jnp.concatenate(
                    [jnp.zeros((pad, V, Co), jnp.float32), x,
                     jnp.zeros((pad + s - 1, V, Co), jnp.float32)], axis=0)
                Mo = To * V
                acc = jnp.zeros((Mo, Co), jnp.float32)
                for k in range(Kt):                           # Kt static & small
                    blk = xp[k:k + s * To]
                    if s > 1:
                        blk = blk.reshape(To, s, V, Co)[:, 0]
                    acc = acc + _mm(blk.reshape(Mo, Co), Wt[k])
                acc = (acc + bt) * tsc + tsh                  # conv bias + BN
                if conv_res:                                  # strided conv1x1 + BN
                    Wr, br = nxt(), nxt()
                    rblk = xp[pad:pad + s * To]
                    if s > 1:
                        rblk = rblk.reshape(To, s, V, Co)[:, 0]
                    res = _mm(rblk.reshape(Mo, Co), Wr) + br
                else:
                    res = x.reshape(Mo, Co)                   # identity (stride == 1)
                x = jnp.maximum(acc + res, 0.0).reshape(To, V, Co)

            # ---- Attention_Layer (ST-Joint) ----
            Wf, bf = nxt(), nxt()
            Wta, bta = nxt(), nxt()
            Wv, bv = nxt(), nxt()
            asc, ash = nxt(), nxt()
            Tb = x.shape[0]
            xt = jnp.mean(x, axis=1)                          # (Tb, Co) pool joints
            xv = jnp.mean(x, axis=0)                          # (V, Co)  pool frames
            z = jnp.concatenate([xt, xv], axis=0)             # (Tb+V, Co)
            z = _mm(z, Wf) + bf                               # fcn conv + BN folded
            z = z * jnp.clip(z + 3.0, 0.0, 6.0) * (1.0 / 6.0)     # hardswish
            at = _sigmoid(_mm(z[:Tb], Wta) + bta)             # (Tb, Co)
            av = _sigmoid(_mm(z[Tb:], Wv) + bv)               # (V, Co)
            att = at[:, None, :] * av[None, :, :]             # (Tb, V, Co)
            Mo = Tb * V
            xm = x.reshape(Mo, Co)
            ym = (x * att).reshape(Mo, Co)
            x = jnp.maximum(ym * asc + ash + xm, 0.0).reshape(Tb, V, Co)

        o_ref[...] = x.astype(o_ref.dtype)

    return kernel, flat, T_out, C_out


# ----------------------------- edge-predictor head kernel -----------------------------

def _head_kernel(x_ref, b_ref, o_ref):
    """out[v,g] = sum_{n,t,c} x[n,t,v,c] * x[n,t,g,c]  (== einsum('nctv,gtcn->vg')), then @ B."""
    N, T, V, C = x_ref.shape
    gram = jnp.zeros((V, V), jnp.float32)
    for n in range(N):                                        # N static & small
        xn = x_ref[n]                                         # (T, V, C)
        g = jnp.einsum('tvc,tgc->tvg', xn, xn,
                       preferred_element_type=jnp.float32)    # batched over frames
        gram = gram + jnp.sum(g, axis=0)
    o_ref[...] = jnp.dot(gram, b_ref[...], preferred_element_type=jnp.float32)


# ----------------------------- pallas_call wrappers -----------------------------

def _full_spec(arr):
    nd = arr.ndim
    return pl.BlockSpec(arr.shape, lambda i, _nd=nd: (0,) * _nd)


def edge_predictor_forward(x_nctv, Adj, blocks, B, args):
    """== EdgePredictor.forward (fused EfficientGCN encoder + x.x^T @ B head)."""
    Kt, _ = args['kernel_size']
    # PyTorch (N, C, T, V) -> kernel layout (N, T, V, C)
    x = jnp.transpose(x_nctv, (0, 2, 3, 1)).astype(jnp.float32)
    N, T0, V, C0 = x.shape

    kernel, flat, T_out, C_out = _build_fused_encoder(blocks, Adj, Kt, T0, V, C0)
    # NOTE: weight/scale inputs have a constant index_map; at these sizes the
    # default double buffering is negligible, so pipeline_mode tweaks are skipped.
    enc = pl.pallas_call(
        kernel,
        out_shape=jax.ShapeDtypeStruct((N, T_out, V, C_out), jnp.float32),
        grid=(N,),
        in_specs=[pl.BlockSpec((None, T0, V, C0), lambda n: (n, 0, 0, 0))]
                 + [_full_spec(a) for a in flat],
        out_specs=pl.BlockSpec((None, T_out, V, C_out), lambda n: (n, 0, 0, 0)),
        compiler_params=pltpu.CompilerParams(
            dimension_semantics=("parallel",)),   # 2-way batch split on v7x
    )(x, *flat)

    out = pl.pallas_call(
        _head_kernel,
        out_shape=jax.ShapeDtypeStruct((V, V), jnp.float32),
        grid=(1,),
        in_specs=[_full_spec(enc), _full_spec(B)],
        out_specs=pl.BlockSpec((V, V), lambda i: (0, 0)),
    )(enc, B)
    return out


# ----------------------------- parameters (deterministic, synthetic) -----------------------------

def _normal(key, shape, scale):
    return scale * jax.random.normal(key, shape, jnp.float32)


def _fold_bn(key, C, eps=1e-5):
    k1, k2, k3, k4 = jax.random.split(key, 4)
    gamma = 1.0 + 0.1 * jax.random.normal(k1, (C,), jnp.float32)
    beta = 0.1 * jax.random.normal(k2, (C,), jnp.float32)
    mean = 0.05 * jax.random.normal(k3, (C,), jnp.float32)
    var = 1.0 + 0.1 * jax.random.uniform(k4, (C,), jnp.float32)
    sc = gamma * jax.lax.rsqrt(var + eps)
    sh = beta - mean * sc
    return sc.reshape(1, C), sh.reshape(1, C)


def build_params(key, args, block_args, V):
    Kt, max_dist = args['kernel_size']
    Ks = max_dist + 1
    Cin = args['stream_input_channel']
    rr = args['reduct_ratio']
    blocks = []
    for (Cout, stride, depth) in block_args:
        key, *ks = jax.random.split(key, 8)
        # ---- Spatial_Graph_Layer ----
        gcn = dict(
            Wg=_normal(ks[0], (Cin, Ks * Cout), (1.0 / Cin) ** 0.5),
            bg=_normal(ks[1], (1, Ks * Cout), 0.05),
            edge=jnp.ones((Ks, V, V), jnp.float32),
        )
        gcn['sc'], gcn['sh'] = _fold_bn(ks[2], Cout)
        if Cin != Cout:                               # residual conv1x1 + BN, folded
            Wr_c = _normal(ks[3], (Cin, Cout), (1.0 / Cin) ** 0.5)
            br_c = _normal(ks[4], (1, Cout), 0.05)
            rsc, rsh = _fold_bn(ks[5], Cout)
            gcn['Wr'] = Wr_c * rsc
            gcn['br'] = br_c * rsc + rsh
        # ---- depth x Temporal_Basic_Layer ----
        tcn = []
        for j in range(depth):
            s = stride if j == 0 else 1
            key, *kt = jax.random.split(key, 7)
            layer = dict(
                Wt=_normal(kt[0], (Kt, Cout, Cout), (1.0 / (Cout * Kt)) ** 0.5),
                bt=_normal(kt[1], (1, Cout), 0.05),
                stride=s,
            )
            layer['sc'], layer['sh'] = _fold_bn(kt[2], Cout)
            if s != 1:                                # residual conv1x1 + BN, folded
                Wr_t = _normal(kt[3], (Cout, Cout), (1.0 / Cout) ** 0.5)
                br_t = _normal(kt[4], (1, Cout), 0.05)
                rsc, rsh = _fold_bn(kt[5], Cout)
                layer['Wr'] = Wr_t * rsc
                layer['br'] = br_t * rsc + rsh
            tcn.append(layer)
        # ---- Attention_Layer (ST-Joint) ----
        Ci = max(Cout // rr, 1)
        key, *ka = jax.random.split(key, 9)
        Wf_c = _normal(ka[0], (Cout, Ci), (1.0 / Cout) ** 0.5)
        bf_c = _normal(ka[1], (1, Ci), 0.05)
        fsc, fsh = _fold_bn(ka[2], Ci)
        attn = dict(
            Wf=Wf_c * fsc, bf=bf_c * fsc + fsh,       # fcn conv + BN folded
            Wt=_normal(ka[3], (Ci, Cout), (1.0 / Ci) ** 0.5),
            bt=_normal(ka[4], (1, Cout), 0.05),
            Wv=_normal(ka[5], (Ci, Cout), (1.0 / Ci) ** 0.5),
            bv=_normal(ka[6], (1, Cout), 0.05),
        )
        attn['sc'], attn['sh'] = _fold_bn(ka[7], Cout)
        blocks.append(dict(gcn=gcn, tcn=tcn, attn=attn))
        Cin = Cout
    return blocks


# ----------------------------- demo -----------------------------

if __name__ == "__main__":
    key = jax.random.PRNGKey(0)
    args = dict(kernel_size=(3, 1),          # temporal_window_size, max_graph_distance
                stream_input_channel=4,
                reduct_ratio=4,
                bias=True)
    block_args = [[16, 1, 2], [32, 2, 2]]    # [output_channel, stride, depth]

    N, C, T, V = 2, 4, 16, 16
    kx, kp, kb = jax.random.split(key, 3)
    x = jax.random.normal(kx, (N, C, T, V), jnp.float32)

    # adjacency kernels: identity + symmetrically-normalized ring graph
    Ks = args['kernel_size'][1] + 1
    ring = jnp.roll(jnp.eye(V), 1, axis=1) + jnp.roll(jnp.eye(V), -1, axis=1)
    ring = ring / jnp.sum(ring, axis=0, keepdims=True)
    Adj = jnp.stack([jnp.eye(V), ring]).astype(jnp.float32)[:Ks]

    blocks = build_params(kp, args, block_args, V)
    # TODO(synk): original EdgePredictor hardcodes B = zeros((51, 51)) (V=51 skeleton);
    #             demo uses a small random (V, V) so the output is non-trivial.
    B = 0.1 * jax.random.normal(kb, (V, V), jnp.float32)

    out = edge_predictor_forward(x, Adj, blocks, B, args)
    out = jax.block_until_ready(out)

    assert out.shape == (V, V), out.shape
    assert bool(jnp.all(jnp.isfinite(out)))
    print("KERNEL_OK")
</pallas_src>

<mosaic_0001>
module attributes {stable_mosaic.version = 11 : i64} {
  func.func @kernel(%arg0: i32, %arg1: memref<1x16x16x4xf32, #tpu.memory_space<vmem>>, %arg2: memref<256x512xbf16, #tpu.memory_space<vmem>>, %arg3: memref<4x32xf32, #tpu.memory_space<vmem>>, %arg4: memref<1x32xf32, #tpu.memory_space<vmem>>, %arg5: memref<1x16xf32, #tpu.memory_space<vmem>>, %arg6: memref<1x16xf32, #tpu.memory_space<vmem>>, %arg7: memref<4x16xf32, #tpu.memory_space<vmem>>, %arg8: memref<1x16xf32, #tpu.memory_space<vmem>>, %arg9: memref<3x16x16xf32, #tpu.memory_space<vmem>>, %arg10: memref<1x16xf32, #tpu.memory_space<vmem>>, %arg11: memref<1x16xf32, #tpu.memory_space<vmem>>, %arg12: memref<1x16xf32, #tpu.memory_space<vmem>>, %arg13: memref<3x16x16xf32, #tpu.memory_space<vmem>>, %arg14: memref<1x16xf32, #tpu.memory_space<vmem>>, %arg15: memref<1x16xf32, #tpu.memory_space<vmem>>, %arg16: memref<1x16xf32, #tpu.memory_space<vmem>>, %arg17: memref<16x4xf32, #tpu.memory_space<vmem>>, %arg18: memref<1x4xf32, #tpu.memory_space<vmem>>, %arg19: memref<4x16xf32, #tpu.memory_space<vmem>>, %arg20: memref<1x16xf32, #tpu.memory_space<vmem>>, %arg21: memref<4x16xf32, #tpu.memory_space<vmem>>, %arg22: memref<1x16xf32, #tpu.memory_space<vmem>>, %arg23: memref<1x16xf32, #tpu.memory_space<vmem>>, %arg24: memref<1x16xf32, #tpu.memory_space<vmem>>, %arg25: memref<256x512xbf16, #tpu.memory_space<vmem>>, %arg26: memref<16x64xf32, #tpu.memory_space<vmem>>, %arg27: memref<1x64xf32, #tpu.memory_space<vmem>>, %arg28: memref<1x32xf32, #tpu.memory_space<vmem>>, %arg29: memref<1x32xf32, #tpu.memory_space<vmem>>, %arg30: memref<16x32xf32, #tpu.memory_space<vmem>>, %arg31: memref<1x32xf32, #tpu.memory_space<vmem>>, %arg32: memref<3x32x32xf32, #tpu.memory_space<vmem>>, %arg33: memref<1x32xf32, #tpu.memory_space<vmem>>, %arg34: memref<1x32xf32, #tpu.memory_space<vmem>>, %arg35: memref<1x32xf32, #tpu.memory_space<vmem>>, %arg36: memref<32x32xf32, #tpu.memory_space<vmem>>, %arg37: memref<1x32xf32, #tpu.memory_space<vmem>>, %arg38: memref<3x32x32xf32, #tpu.memory_space<vmem>>, %arg39: memref<1x32xf32, #tpu.memory_space<vmem>>, %arg40: memref<1x32xf32, #tpu.memory_space<vmem>>, %arg41: memref<1x32xf32, #tpu.memory_space<vmem>>, %arg42: memref<32x8xf32, #tpu.memory_space<vmem>>, %arg43: memref<1x8xf32, #tpu.memory_space<vmem>>, %arg44: memref<8x32xf32, #tpu.memory_space<vmem>>, %arg45: memref<1x32xf32, #tpu.memory_space<vmem>>, %arg46: memref<8x32xf32, #tpu.memory_space<vmem>>, %arg47: memref<1x32xf32, #tpu.memory_space<vmem>>, %arg48: memref<1x32xf32, #tpu.memory_space<vmem>>, %arg49: memref<1x32xf32, #tpu.memory_space<vmem>>, %arg50: memref<1x8x16x32xf32, #tpu.memory_space<vmem>>) attributes {dimension_semantics = [#tpu.dimension_semantics<parallel>], iteration_bounds = array<i64: 2>, scalar_prefetch = 0 : i64, scratch_operands = 0 : i64, tpu.core_type = #tpu.core_type<tc>, window_params = [{transform_indices = @transform_0, window_bounds = array<i64: 1, 16, 16, 4>}, {pipeline_mode = #tpu.pipeline_mode<synchronous>, transform_indices = @transform_1, window_bounds = array<i64: 256, 512>}, {pipeline_mode = #tpu.pipeline_mode<synchronous>, transform_indices = @transform_2, window_bounds = array<i64: 4, 32>}, {pipeline_mode = #tpu.pipeline_mode<synchronous>, transform_indices = @transform_3, window_bounds = array<i64: 1, 32>}, {pipeline_mode = #tpu.pipeline_mode<synchronous>, transform_indices = @transform_4, window_bounds = array<i64: 1, 16>}, {pipeline_mode = #tpu.pipeline_mode<synchronous>, transform_indices = @transform_5, window_bounds = array<i64: 1, 16>}, {pipeline_mode = #tpu.pipeline_mode<synchronous>, transform_indices = @transform_6, window_bounds = array<i64: 4, 16>}, {pipeline_mode = #tpu.pipeline_mode<synchronous>, transform_indices = @transform_7, window_bounds = array<i64: 1, 16>}, {pipeline_mode = #tpu.pipeline_mode<synchronous>, transform_indices = @transform_8, window_bounds = array<i64: 3, 16, 16>}, {pipeline_mode = #tpu.pipeline_mode<synchronous>, transform_indices = @transform_9, window_bounds = array<i64: 1, 16>}, {pipeline_mode = #tpu.pipeline_mode<synchronous>, transform_indices = @transform_10, window_bounds = array<i64: 1, 16>}, {pipeline_mode = #tpu.pipeline_mode<synchronous>, transform_indices = @transform_11, window_bounds = array<i64: 1, 16>}, {pipeline_mode = #tpu.pipeline_mode<synchronous>, transform_indices = @transform_12, window_bounds = array<i64: 3, 16, 16>}, {pipeline_mode = #tpu.pipeline_mode<synchronous>, transform_indices = @transform_13, window_bounds = array<i64: 1, 16>}, {pipeline_mode = #tpu.pipeline_mode<synchronous>, transform_indices = @transform_14, window_bounds = array<i64: 1, 16>}, {pipeline_mode = #tpu.pipeline_mode<synchronous>, transform_indices = @transform_15, window_bounds = array<i64: 1, 16>}, {pipeline_mode = #tpu.pipeline_mode<synchronous>, transform_indices = @transform_16, window_bounds = array<i64: 16, 4>}, {pipeline_mode = #tpu.pipeline_mode<synchronous>, transform_indices = @transform_17, window_bounds = array<i64: 1, 4>}, {pipeline_mode = #tpu.pipeline_mode<synchronous>, transform_indices = @transform_18, window_bounds = array<i64: 4, 16>}, {pipeline_mode = #tpu.pipeline_mode<synchronous>, transform_indices = @transform_19, window_bounds = array<i64: 1, 16>}, {pipeline_mode = #tpu.pipeline_mode<synchronous>, transform_indices = @transform_20, window_bounds = array<i64: 4, 16>}, {pipeline_mode = #tpu.pipeline_mode<synchronous>, transform_indices = @transform_21, window_bounds = array<i64: 1, 16>}, {pipeline_mode = #tpu.pipeline_mode<synchronous>, transform_indices = @transform_22, window_bounds = array<i64: 1, 16>}, {pipeline_mode = #tpu.pipeline_mode<synchronous>, transform_indices = @transform_23, window_bounds = array<i64: 1, 16>}, {pipeline_mode = #tpu.pipeline_mode<synchronous>, transform_indices = @transform_24, window_bounds = array<i64: 256, 512>}, {pipeline_mode = #tpu.pipeline_mode<synchronous>, transform_indices = @transform_25, window_bounds = array<i64: 16, 64>}, {pipeline_mode = #tpu.pipeline_mode<synchronous>, transform_indices = @transform_26, window_bounds = array<i64: 1, 64>}, {pipeline_mode = #tpu.pipeline_mode<synchronous>, transform_indices = @transform_27, window_bounds = array<i64: 1, 32>}, {pipeline_mode = #tpu.pipeline_mode<synchronous>, transform_indices = @transform_28, window_bounds = array<i64: 1, 32>}, {pipeline_mode = #tpu.pipeline_mode<synchronous>, transform_indices = @transform_29, window_bounds = array<i64: 16, 32>}, {pipeline_mode = #tpu.pipeline_mode<synchronous>, transform_indices = @transform_30, window_bounds = array<i64: 1, 32>}, {pipeline_mode = #tpu.pipeline_mode<synchronous>, transform_indices = @transform_31, window_bounds = array<i64: 3, 32, 32>}, {pipeline_mode = #tpu.pipeline_mode<synchronous>, transform_indices = @transform_32, window_bounds = array<i64: 1, 32>}, {pipeline_mode = #tpu.pipeline_mode<synchronous>, transform_indices = @transform_33, window_bounds = array<i64: 1, 32>}, {pipeline_mode = #tpu.pipeline_mode<synchronous>, transform_indices = @transform_34, window_bounds = array<i64: 1, 32>}, {pipeline_mode = #tpu.pipeline_mode<synchronous>, transform_indices = @transform_35, window_bounds = array<i64: 32, 32>}, {pipeline_mode = #tpu.pipeline_mode<synchronous>, transform_indices = @transform_36, window_bounds = array<i64: 1, 32>}, {pipeline_mode = #tpu.pipeline_mode<synchronous>, transform_indices = @transform_37, window_bounds = array<i64: 3, 32, 32>}, {pipeline_mode = #tpu.pipeline_mode<synchronous>, transform_indices = @transform_38, window_bounds = array<i64: 1, 32>}, {pipeline_mode = #tpu.pipeline_mode<synchronous>, transform_indices = @transform_39, window_bounds = array<i64: 1, 32>}, {pipeline_mode = #tpu.pipeline_mode<synchronous>, transform_indices = @transform_40, window_bounds = array<i64: 1, 32>}, {pipeline_mode = #tpu.pipeline_mode<synchronous>, transform_indices = @transform_41, window_bounds = array<i64: 32, 8>}, {pipeline_mode = #tpu.pipeline_mode<synchronous>, transform_indices = @transform_42, window_bounds = array<i64: 1, 8>}, {pipeline_mode = #tpu.pipeline_mode<synchronous>, transform_indices = @transform_43, window_bounds = array<i64: 8, 32>}, {pipeline_mode = #tpu.pipeline_mode<synchronous>, transform_indices = @transform_44, window_bounds = array<i64: 1, 32>}, {pipeline_mode = #tpu.pipeline_mode<synchronous>, transform_indices = @transform_45, window_bounds = array<i64: 8, 32>}, {pipeline_mode = #tpu.pipeline_mode<synchronous>, transform_indices = @transform_46, window_bounds = array<i64: 1, 32>}, {pipeline_mode = #tpu.pipeline_mode<synchronous>, transform_indices = @transform_47, window_bounds = array<i64: 1, 32>}, {pipeline_mode = #tpu.pipeline_mode<synchronous>, transform_indices = @transform_48, window_bounds = array<i64: 1, 32>}, {transform_indices = @transform_49, window_bounds = array<i64: 1, 8, 16, 32>}]} {
    %c0 = arith.constant 0 : index
    %c0_0 = arith.constant 0 : index
    %c0_1 = arith.constant 0 : index
    %c0_2 = arith.constant 0 : index
    %0 = vector.load %arg1[%c0, %c0_0, %c0_1, %c0_2] : memref<1x16x16x4xf32, #tpu.memory_space<vmem>>, vector<1x16x16x4xf32>
    %1 = vector.shape_cast %0 : vector<1x16x16x4xf32> to vector<16x16x4xf32>
    %c0_3 = arith.constant 0 : index
    %c0_4 = arith.constant 0 : index
    %2 = vector.load %arg2[%c0_3, %c0_4] : memref<256x512xbf16, #tpu.memory_space<vmem>>, vector<256x512xbf16>
    %c0_5 = arith.constant 0 : index
    %c0_6 = arith.constant 0 : index
    %3 = vector.load %arg3[%c0_5, %c0_6] : memref<4x32xf32, #tpu.memory_space<vmem>>, vector<4x32xf32>
    %c0_7 = arith.constant 0 : index
    %c0_8 = arith.constant 0 : index
    %4 = vector.load %arg4[%c0_7, %c0_8] : memref<1x32xf32, #tpu.memory_space<vmem>>, vector<1x32xf32>
    %c0_9 = arith.constant 0 : index
    %c0_10 = arith.constant 0 : index
    %5 = vector.load %arg5[%c0_9, %c0_10] : memref<1x16xf32, #tpu.memory_space<vmem>>, vector<1x16xf32>
    %c0_11 = arith.constant 0 : index
    %c0_12 = arith.constant 0 : index
    %6 = vector.load %arg6[%c0_11, %c0_12] : memref<1x16xf32, #tpu.memory_space<vmem>>, vector<1x16xf32>
    %7 = vector.shape_cast %1 : vector<16x16x4xf32> to vector<256x4xf32>
    %8 = arith.truncf %7 : vector<256x4xf32> to vector<256x4xbf16>
    %9 = arith.truncf %3 : vector<4x32xf32> to vector<4x32xbf16>
    %cst = arith.constant dense<0.000000e+00> : vector<256x32xf32>
    %10 = tpu.matmul %8, %9, %cst {dimension_numbers = #tpu.dot_dimension_numbers<[1], [0], [0], [1], [0, 0, 1, 1], [], []>} : vector<256x4xbf16>, vector<4x32xbf16>, vector<256x32xf32> -> vector<256x32xf32>
    %11 = vector.broadcast %4 : vector<1x32xf32> to vector<256x32xf32>
    %12 = arith.addf %10, %11 : vector<256x32xf32>
    %13 = vector.extract_strided_slice %12 {offsets = [0, 0], sizes = [256, 16], strides = [1, 1]} : vector<256x32xf32> to vector<256x16xf32>
    %14 = vector.extract_strided_slice %12 {offsets = [0, 16], sizes = [256, 16], strides = [1, 1]} : vector<256x32xf32> to vector<256x16xf32>
    %15 = tpu.concatenate %13, %14 in 0 : vector<256x16xf32>, vector<256x16xf32> -> vector<512x16xf32>
    %16 = arith.truncf %15 : vector<512x16xf32> to vector<512x16xbf16>
    %cst_13 = arith.constant dense<0.000000e+00> : vector<256x16xf32>
    %17 = tpu.matmul %2, %16, %cst_13 {dimension_numbers = #tpu.dot_dimension_numbers<[1], [0], [0], [1], [0, 0, 1, 1], [], []>} : vector<256x512xbf16>, vector<512x16xbf16>, vector<256x16xf32> -> vector<256x16xf32>
    %c0_14 = arith.constant 0 : index
    %c0_15 = arith.constant 0 : index
    %18 = vector.load %arg7[%c0_14, %c0_15] : memref<4x16xf32, #tpu.memory_space<vmem>>, vector<4x16xf32>
    %c0_16 = arith.constant 0 : index
    %c0_17 = arith.constant 0 : index
    %19 = vector.load %arg8[%c0_16, %c0_17] : memref<1x16xf32, #tpu.memory_space<vmem>>, vector<1x16xf32>
    %20 = arith.truncf %7 : vector<256x4xf32> to vector<256x4xbf16>
    %21 = arith.truncf %18 : vector<4x16xf32> to vector<4x16xbf16>
    %cst_18 = arith.constant dense<0.000000e+00> : vector<256x16xf32>
    %22 = tpu.matmul %20, %21, %cst_18 {dimension_numbers = #tpu.dot_dimension_numbers<[1], [0], [0], [1], [0, 0, 1, 1], [], []>} : vector<256x4xbf16>, vector<4x16xbf16>, vector<256x16xf32> -> vector<256x16xf32>
    %23 = vector.broadcast %19 : vector<1x16xf32> to vector<256x16xf32>
    %24 = arith.addf %22, %23 : vector<256x16xf32>
    %25 = vector.broadcast %5 : vector<1x16xf32> to vector<256x16xf32>
    %26 = arith.mulf %17, %25 : vector<256x16xf32>
    %27 = vector.broadcast %6 : vector<1x16xf32> to vector<256x16xf32>
    %28 = arith.addf %26, %27 : vector<256x16xf32>
    %29 = arith.addf %28, %24 : vector<256x16xf32>
    %cst_19 = arith.constant 0.000000e+00 : f32
    %30 = vector.broadcast %cst_19 : f32 to vector<256x16xf32>
    %31 = arith.maximumf %29, %30 : vector<256x16xf32>
    %32 = vector.shape_cast %31 : vector<256x16xf32> to vector<16x16x16xf32>
    %c0_20 = arith.constant 0 : index
    %c0_21 = arith.constant 0 : index
    %c0_22 = arith.constant 0 : index
    %33 = vector.load %arg9[%c0_20, %c0_21, %c0_22] : memref<3x16x16xf32, #tpu.memory_space<vmem>>, vector<3x16x16xf32>
    %c0_23 = arith.constant 0 : index
    %c0_24 = arith.constant 0 : index
    %34 = vector.load %arg10[%c0_23, %c0_24] : memref<1x16xf32, #tpu.memory_space<vmem>>, vector<1x16xf32>
    %c0_25 = arith.constant 0 : index
    %c0_26 = arith.constant 0 : index
    %35 = vector.load %arg11[%c0_25, %c0_26] : memref<1x16xf32, #tpu.memory_space<vmem>>, vector<1x16xf32>
    %c0_27 = arith.constant 0 : index
    %c0_28 = arith.constant 0 : index
    %36 = vector.load %arg12[%c0_27, %c0_28] : memref<1x16xf32, #tpu.memory_space<vmem>>, vector<1x16xf32>
    %cst_29 = arith.constant 0.000000e+00 : f32
    %37 = vector.broadcast %cst_29 : f32 to vector<1x16x16xf32>
    %cst_30 = arith.constant 0.000000e+00 : f32
    %38 = vector.broadcast %cst_30 : f32 to vector<1x16x16xf32>
    %39 = tpu.concatenate %37, %32, %38 in 0 : vector<1x16x16xf32>, vector<16x16x16xf32>, vector<1x16x16xf32> -> vector<18x16x16xf32>
    %cst_31 = arith.constant 0.000000e+00 : f32
    %40 = vector.broadcast %cst_31 : f32 to vector<256x16xf32>
    %41 = vector.extract_strided_slice %39 {offsets = [0, 0, 0], sizes = [16, 16, 16], strides = [1, 1, 1]} : vector<18x16x16xf32> to vector<16x16x16xf32>
    %42 = vector.shape_cast %41 : vector<16x16x16xf32> to vector<256x16xf32>
    %43 = vector.extract_strided_slice %33 {offsets = [0, 0, 0], sizes = [1, 16, 16], strides = [1, 1, 1]} : vector<3x16x16xf32> to vector<1x16x16xf32>
    %44 = vector.shape_cast %43 : vector<1x16x16xf32> to vector<16x16xf32>
    %45 = arith.truncf %42 : vector<256x16xf32> to vector<256x16xbf16>
    %46 = arith.truncf %44 : vector<16x16xf32> to vector<16x16xbf16>
    %cst_32 = arith.constant dense<0.000000e+00> : vector<256x16xf32>
    %47 = tpu.matmul %45, %46, %cst_32 {dimension_numbers = #tpu.dot_dimension_numbers<[1], [0], [0], [1], [0, 0, 1, 1], [], []>} : vector<256x16xbf16>, vector<16x16xbf16>, vector<256x16xf32> -> vector<256x16xf32>
    %48 = arith.addf %40, %47 : vector<256x16xf32>
    %49 = vector.extract_strided_slice %39 {offsets = [1, 0, 0], sizes = [16, 16, 16], strides = [1, 1, 1]} : vector<18x16x16xf32> to vector<16x16x16xf32>
    %50 = vector.shape_cast %49 : vector<16x16x16xf32> to vector<256x16xf32>
    %51 = vector.extract_strided_slice %33 {offsets = [1, 0, 0], sizes = [1, 16, 16], strides = [1, 1, 1]} : vector<3x16x16xf32> to vector<1x16x16xf32>
    %52 = vector.shape_cast %51 : vector<1x16x16xf32> to vector<16x16xf32>
    %53 = arith.truncf %50 : vector<256x16xf32> to vector<256x16xbf16>
    %54 = arith.truncf %52 : vector<16x16xf32> to vector<16x16xbf16>
    %cst_33 = arith.constant dense<0.000000e+00> : vector<256x16xf32>
    %55 = tpu.matmul %53, %54, %cst_33 {dimension_numbers = #tpu.dot_dimension_numbers<[1], [0], [0], [1], [0, 0, 1, 1], [], []>} : vector<256x16xbf16>, vector<16x16xbf16>, vector<256x16xf32> -> vector<256x16xf32>
    %56 = arith.addf %48, %55 : vector<256x16xf32>
    %57 = vector.extract_strided_slice %39 {offsets = [2, 0, 0], sizes = [16, 16, 16], strides = [1, 1, 1]} : vector<18x16x16xf32> to vector<16x16x16xf32>
    %58 = vector.shape_cast %57 : vector<16x16x16xf32> to vector<256x16xf32>
    %59 = vector.extract_strided_slice %33 {offsets = [2, 0, 0], sizes = [1, 16, 16], strides = [1, 1, 1]} : vector<3x16x16xf32> to vector<1x16x16xf32>
    %60 = vector.shape_cast %59 : vector<1x16x16xf32> to vector<16x16xf32>
    %61 = arith.truncf %58 : vector<256x16xf32> to vector<256x16xbf16>
    %62 = arith.truncf %60 : vector<16x16xf32> to vector<16x16xbf16>
    %cst_34 = arith.constant dense<0.000000e+00> : vector<256x16xf32>
    %63 = tpu.matmul %61, %62, %cst_34 {dimension_numbers = #tpu.dot_dimension_numbers<[1], [0], [0], [1], [0, 0, 1, 1], [], []>} : vector<256x16xbf16>, vector<16x16xbf16>, vector<256x16xf32> -> vector<256x16xf32>
    %64 = arith.addf %56, %63 : vector<256x16xf32>
    %65 = vector.broadcast %34 : vector<1x16xf32> to vector<256x16xf32>
    %66 = arith.addf %64, %65 : vector<256x16xf32>
    %67 = vector.broadcast %35 : vector<1x16xf32> to vector<256x16xf32>
    %68 = arith.mulf %66, %67 : vector<256x16xf32>
    %69 = vector.broadcast %36 : vector<1x16xf32> to vector<256x16xf32>
    %70 = arith.addf %68, %69 : vector<256x16xf32>
    %71 = vector.shape_cast %32 : vector<16x16x16xf32> to vector<256x16xf32>
    %72 = arith.addf %70, %71 : vector<256x16xf32>
    %cst_35 = arith.constant 0.000000e+00 : f32
    %73 = vector.broadcast %cst_35 : f32 to vector<256x16xf32>
    %74 = arith.maximumf %72, %73 : vector<256x16xf32>
    %75 = vector.shape_cast %74 : vector<256x16xf32> to vector<16x16x16xf32>
    %c0_36 = arith.constant 0 : index
    %c0_37 = arith.constant 0 : index
    %c0_38 = arith.constant 0 : index
    %76 = vector.load %arg13[%c0_36, %c0_37, %c0_38] : memref<3x16x16xf32, #tpu.memory_space<vmem>>, vector<3x16x16xf32>
    %c0_39 = arith.constant 0 : index
    %c0_40 = arith.constant 0 : index
    %77 = vector.load %arg14[%c0_39, %c0_40] : memref<1x16xf32, #tpu.memory_space<vmem>>, vector<1x16xf32>
    %c0_41 = arith.constant 0 : index
    %c0_42 = arith.constant 0 : index
    %78 = vector.load %arg15[%c0_41, %c0_42] : memref<1x16xf32, #tpu.memory_space<vmem>>, vector<1x16xf32>
    %c0_43 = arith.constant 0 : index
    %c0_44 = arith.constant 0 : index
    %79 = vector.load %arg16[%c0_43, %c0_44] : memref<1x16xf32, #tpu.memory_space<vmem>>, vector<1x16xf32>
    %cst_45 = arith.constant 0.000000e+00 : f32
    %80 = vector.broadcast %cst_45 : f32 to vector<1x16x16xf32>
    %cst_46 = arith.constant 0.000000e+00 : f32
    %81 = vector.broadcast %cst_46 : f32 to vector<1x16x16xf32>
    %82 = tpu.concatenate %80, %75, %81 in 0 : vector<1x16x16xf32>, vector<16x16x16xf32>, vector<1x16x16xf32> -> vector<18x16x16xf32>
    %cst_47 = arith.constant 0.000000e+00 : f32
    %83 = vector.broadcast %cst_47 : f32 to vector<256x16xf32>
    %84 = vector.extract_strided_slice %82 {offsets = [0, 0, 0], sizes = [16, 16, 16], strides = [1, 1, 1]} : vector<18x16x16xf32> to vector<16x16x16xf32>
    %85 = vector.shape_cast %84 : vector<16x16x16xf32> to vector<256x16xf32>
    %86 = vector.extract_strided_slice %76 {offsets = [0, 0, 0], sizes = [1, 16, 16], strides = [1, 1, 1]} : vector<3x16x16xf32> to vector<1x16x16xf32>
    %87 = vector.shape_cast %86 : vector<1x16x16xf32> to vector<16x16xf32>
    %88 = arith.truncf %85 : vector<256x16xf32> to vector<256x16xbf16>
    %89 = arith.truncf %87 : vector<16x16xf32> to vector<16x16xbf16>
    %cst_48 = arith.constant dense<0.000000e+00> : vector<256x16xf32>
    %90 = tpu.matmul %88, %89, %cst_48 {dimension_numbers = #tpu.dot_dimension_numbers<[1], [0], [0], [1], [0, 0, 1, 1], [], []>} : vector<256x16xbf16>, vector<16x16xbf16>, vector<256x16xf32> -> vector<256x16xf32>
    %91 = arith.addf %83, %90 : vector<256x16xf32>
    %92 = vector.extract_strided_slice %82 {offsets = [1, 0, 0], sizes = [16, 16, 16], strides = [1, 1, 1]} : vector<18x16x16xf32> to vector<16x16x16xf32>
    %93 = vector.shape_cast %92 : vector<16x16x16xf32> to vector<256x16xf32>
    %94 = vector.extract_strided_slice %76 {offsets = [1, 0, 0], sizes = [1, 16, 16], strides = [1, 1, 1]} : vector<3x16x16xf32> to vector<1x16x16xf32>
    %95 = vector.shape_cast %94 : vector<1x16x16xf32> to vector<16x16xf32>
    %96 = arith.truncf %93 : vector<256x16xf32> to vector<256x16xbf16>
    %97 = arith.truncf %95 : vector<16x16xf32> to vector<16x16xbf16>
    %cst_49 = arith.constant dense<0.000000e+00> : vector<256x16xf32>
    %98 = tpu.matmul %96, %97, %cst_49 {dimension_numbers = #tpu.dot_dimension_numbers<[1], [0], [0], [1], [0, 0, 1, 1], [], []>} : vector<256x16xbf16>, vector<16x16xbf16>, vector<256x16xf32> -> vector<256x16xf32>
    %99 = arith.addf %91, %98 : vector<256x16xf32>
    %100 = vector.extract_strided_slice %82 {offsets = [2, 0, 0], sizes = [16, 16, 16], strides = [1, 1, 1]} : vector<18x16x16xf32> to vector<16x16x16xf32>
    %101 = vector.shape_cast %100 : vector<16x16x16xf32> to vector<256x16xf32>
    %102 = vector.extract_strided_slice %76 {offsets = [2, 0, 0], sizes = [1, 16, 16], strides = [1, 1, 1]} : vector<3x16x16xf32> to vector<1x16x16xf32>
    %103 = vector.shape_cast %102 : vector<1x16x16xf32> to vector<16x16xf32>
    %104 = arith.truncf %101 : vector<256x16xf32> to vector<256x16xbf16>
    %105 = arith.truncf %103 : vector<16x16xf32> to vector<16x16xbf16>
    %cst_50 = arith.constant dense<0.000000e+00> : vector<256x16xf32>
    %106 = tpu.matmul %104, %105, %cst_50 {dimension_numbers = #tpu.dot_dimension_numbers<[1], [0], [0], [1], [0, 0, 1, 1], [], []>} : vector<256x16xbf16>, vector<16x16xbf16>, vector<256x16xf32> -> vector<256x16xf32>
    %107 = arith.addf %99, %106 : vector<256x16xf32>
    %108 = vector.broadcast %77 : vector<1x16xf32> to vector<256x16xf32>
    %109 = arith.addf %107, %108 : vector<256x16xf32>
    %110 = vector.broadcast %78 : vector<1x16xf32> to vector<256x16xf32>
    %111 = arith.mulf %109, %110 : vector<256x16xf32>
    %112 = vector.broadcast %79 : vector<1x16xf32> to vector<256x16xf32>
    %113 = arith.addf %111, %112 : vector<256x16xf32>
    %114 = vector.shape_cast %75 : vector<16x16x16xf32> to vector<256x16xf32>
    %115 = arith.addf %113, %114 : vector<256x16xf32>
    %cst_51 = arith.constant 0.000000e+00 : f32
    %116 = vector.broadcast %cst_51 : f32 to vector<256x16xf32>
    %117 = arith.maximumf %115, %116 : vector<256x16xf32>
    %118 = vector.shape_cast %117 : vector<256x16xf32> to vector<16x16x16xf32>
    %c0_52 = arith.constant 0 : index
    %c0_53 = arith.constant 0 : index
    %119 = vector.load %arg17[%c0_52, %c0_53] : memref<16x4xf32, #tpu.memory_space<vmem>>, vector<16x4xf32>
    %c0_54 = arith.constant 0 : index
    %c0_55 = arith.constant 0 : index
    %120 = vector.load %arg18[%c0_54, %c0_55] : memref<1x4xf32, #tpu.memory_space<vmem>>, vector<1x4xf32>
    %c0_56 = arith.constant 0 : index
    %c0_57 = arith.constant 0 : index
    %121 = vector.load %arg19[%c0_56, %c0_57] : memref<4x16xf32, #tpu.memory_space<vmem>>, vector<4x16xf32>
    %c0_58 = arith.constant 0 : index
    %c0_59 = arith.constant 0 : index
    %122 = vector.load %arg20[%c0_58, %c0_59] : memref<1x16xf32, #tpu.memory_space<vmem>>, vector<1x16xf32>
    %c0_60 = arith.constant 0 : index
    %c0_61 = arith.constant 0 : index
    %123 = vector.load %arg21[%c0_60, %c0_61] : memref<4x16xf32, #tpu.memory_space<vmem>>, vector<4x16xf32>
    %c0_62 = arith.constant 0 : index
    %c0_63 = arith.constant 0 : index
    %124 = vector.load %arg22[%c0_62, %c0_63] : memref<1x16xf32, #tpu.memory_space<vmem>>, vector<1x16xf32>
    %c0_64 = arith.constant 0 : index
    %c0_65 = arith.constant 0 : index
    %125 = vector.load %arg23[%c0_64, %c0_65] : memref<1x16xf32, #tpu.memory_space<vmem>>, vector<1x16xf32>
    %c0_66 = arith.constant 0 : index
    %c0_67 = arith.constant 0 : index
    %126 = vector.load %arg24[%c0_66, %c0_67] : memref<1x16xf32, #tpu.memory_space<vmem>>, vector<1x16xf32>
    %cst_68 = arith.constant dense<0.000000e+00> : vector<16x16xf32>
    %127 = vector.multi_reduction <add>, %118, %cst_68 [1] : vector<16x16x16xf32> to vector<16x16xf32>
    %cst_69 = arith.constant 1.600000e+01 : f32
    %128 = vector.broadcast %cst_69 : f32 to vector<16x16xf32>
    %129 = arith.divf %127, %128 : vector<16x16xf32>
    %cst_70 = arith.constant dense<0.000000e+00> : vector<16x16xf32>
    %130 = vector.multi_reduction <add>, %118, %cst_70 [0] : vector<16x16x16xf32> to vector<16x16xf32>
    %cst_71 = arith.constant 1.600000e+01 : f32
    %131 = vector.broadcast %cst_71 : f32 to vector<16x16xf32>
    %132 = arith.divf %130, %131 : vector<16x16xf32>
    %133 = tpu.concatenate %129, %132 in 0 : vector<16x16xf32>, vector<16x16xf32> -> vector<32x16xf32>
    %134 = arith.truncf %133 : vector<32x16xf32> to vector<32x16xbf16>
    %135 = arith.truncf %119 : vector<16x4xf32> to vector<16x4xbf16>
    %cst_72 = arith.constant dense<0.000000e+00> : vector<32x4xf32>
    %136 = tpu.matmul %134, %135, %cst_72 {dimension_numbers = #tpu.dot_dimension_numbers<[1], [0], [0], [1], [0, 0, 1, 1], [], []>} : vector<32x16xbf16>, vector<16x4xbf16>, vector<32x4xf32> -> vector<32x4xf32>
    %137 = vector.broadcast %120 : vector<1x4xf32> to vector<32x4xf32>
    %138 = arith.addf %136, %137 : vector<32x4xf32>
    %cst_73 = arith.constant 3.000000e+00 : f32
    %139 = vector.broadcast %cst_73 : f32 to vector<32x4xf32>
    %140 = arith.addf %138, %139 : vector<32x4xf32>
    %cst_74 = arith.constant 0.000000e+00 : f32
    %cst_75 = arith.constant 6.000000e+00 : f32
    %141 = vector.broadcast %cst_74 : f32 to vector<32x4xf32>
    %142 = arith.maximumf %141, %140 : vector<32x4xf32>
    %143 = vector.broadcast %cst_75 : f32 to vector<32x4xf32>
    %144 = arith.minimumf %143, %142 : vector<32x4xf32>
    %145 = arith.mulf %138, %144 : vector<32x4xf32>
    %cst_76 = arith.constant 0.166666672 : f32
    %146 = vector.broadcast %cst_76 : f32 to vector<32x4xf32>
    %147 = arith.mulf %145, %146 : vector<32x4xf32>
    %148 = vector.extract_strided_slice %147 {offsets = [0, 0], sizes = [16, 4], strides = [1, 1]} : vector<32x4xf32> to vector<16x4xf32>
    %149 = arith.truncf %148 : vector<16x4xf32> to vector<16x4xbf16>
    %150 = arith.truncf %121 : vector<4x16xf32> to vector<4x16xbf16>
    %cst_77 = arith.constant dense<0.000000e+00> : vector<16x16xf32>
    %151 = tpu.matmul %149, %150, %cst_77 {dimension_numbers = #tpu.dot_dimension_numbers<[1], [0], [0], [1], [0, 0, 1, 1], [], []>} : vector<16x4xbf16>, vector<4x16xbf16>, vector<16x16xf32> -> vector<16x16xf32>
    %152 = vector.broadcast %122 : vector<1x16xf32> to vector<16x16xf32>
    %153 = arith.addf %151, %152 : vector<16x16xf32>
    %cst_78 = arith.constant 0.000000e+00 : f32
    %154 = vector.broadcast %cst_78 : f32 to vector<16x16xf32>
    %155 = arith.subf %154, %153 : vector<16x16xf32>
    %156 = math.exp %155 : vector<16x16xf32>
    %cst_79 = arith.constant 1.000000e+00 : f32
    %157 = vector.broadcast %cst_79 : f32 to vector<16x16xf32>
    %158 = arith.addf %157, %156 : vector<16x16xf32>
    %159 = tpu.reciprocal %158 {approx = true} : vector<16x16xf32> -> vector<16x16xf32>
    %160 = vector.extract_strided_slice %147 {offsets = [16, 0], sizes = [16, 4], strides = [1, 1]} : vector<32x4xf32> to vector<16x4xf32>
    %161 = arith.truncf %160 : vector<16x4xf32> to vector<16x4xbf16>
    %162 = arith.truncf %123 : vector<4x16xf32> to vector<4x16xbf16>
    %cst_80 = arith.constant dense<0.000000e+00> : vector<16x16xf32>
    %163 = tpu.matmul %161, %162, %cst_80 {dimension_numbers = #tpu.dot_dimension_numbers<[1], [0], [0], [1], [0, 0, 1, 1], [], []>} : vector<16x4xbf16>, vector<4x16xbf16>, vector<16x16xf32> -> vector<16x16xf32>
    %164 = vector.broadcast %124 : vector<1x16xf32> to vector<16x16xf32>
    %165 = arith.addf %163, %164 : vector<16x16xf32>
    %cst_81 = arith.constant 0.000000e+00 : f32
    %166 = vector.broadcast %cst_81 : f32 to vector<16x16xf32>
    %167 = arith.subf %166, %165 : vector<16x16xf32>
    %168 = math.exp %167 : vector<16x16xf32>
    %cst_82 = arith.constant 1.000000e+00 : f32
    %169 = vector.broadcast %cst_82 : f32 to vector<16x16xf32>
    %170 = arith.addf %169, %168 : vector<16x16xf32>
    %171 = tpu.reciprocal %170 {approx = true} : vector<16x16xf32> -> vector<16x16xf32>
    %172 = vector.shape_cast %159 : vector<16x16xf32> to vector<16x1x16xf32>
    %173 = vector.shape_cast %171 : vector<16x16xf32> to vector<1x16x16xf32>
    %174 = vector.broadcast %172 : vector<16x1x16xf32> to vector<16x16x16xf32>
    %175 = vector.broadcast %173 : vector<1x16x16xf32> to vector<16x16x16xf32>
    %176 = arith.mulf %174, %175 : vector<16x16x16xf32>
    %177 = vector.shape_cast %118 : vector<16x16x16xf32> to vector<256x16xf32>
    %178 = arith.mulf %118, %176 : vector<16x16x16xf32>
    %179 = vector.shape_cast %178 : vector<16x16x16xf32> to vector<256x16xf32>
    %180 = vector.broadcast %125 : vector<1x16xf32> to vector<256x16xf32>
    %181 = arith.mulf %179, %180 : vector<256x16xf32>
    %182 = vector.broadcast %126 : vector<1x16xf32> to vector<256x16xf32>
    %183 = arith.addf %181, %182 : vector<256x16xf32>
    %184 = arith.addf %183, %177 : vector<256x16xf32>
    %cst_83 = arith.constant 0.000000e+00 : f32
    %185 = vector.broadcast %cst_83 : f32 to vector<256x16xf32>
    %186 = arith.maximumf %184, %185 : vector<256x16xf32>
    %187 = vector.shape_cast %186 : vector<256x16xf32> to vector<16x16x16xf32>
    %c0_84 = arith.constant 0 : index
    %c0_85 = arith.constant 0 : index
    %188 = vector.load %arg25[%c0_84, %c0_85] : memref<256x512xbf16, #tpu.memory_space<vmem>>, vector<256x512xbf16>
    %c0_86 = arith.constant 0 : index
    %c0_87 = arith.constant 0 : index
    %189 = vector.load %arg26[%c0_86, %c0_87] : memref<16x64xf32, #tpu.memory_space<vmem>>, vector<16x64xf32>
    %c0_88 = arith.constant 0 : index
    %c0_89 = arith.constant 0 : index
    %190 = vector.load %arg27[%c0_88, %c0_89] : memref<1x64xf32, #tpu.memory_space<vmem>>, vector<1x64xf32>
    %c0_90 = arith.constant 0 : index
    %c0_91 = arith.constant 0 : index
    %191 = vector.load %arg28[%c0_90, %c0_91] : memref<1x32xf32, #tpu.memory_space<vmem>>, vector<1x32xf32>
    %c0_92 = arith.constant 0 : index
    %c0_93 = arith.constant 0 : index
    %192 = vector.load %arg29[%c0_92, %c0_93] : memref<1x32xf32, #tpu.memory_space<vmem>>, vector<1x32xf32>
    %193 = vector.shape_cast %187 : vector<16x16x16xf32> to vector<256x16xf32>
    %194 = arith.truncf %193 : vector<256x16xf32> to vector<256x16xbf16>
    %195 = arith.truncf %189 : vector<16x64xf32> to vector<16x64xbf16>
    %cst_94 = arith.constant dense<0.000000e+00> : vector<256x64xf32>
    %196 = tpu.matmul %194, %195, %cst_94 {dimension_numbers = #tpu.dot_dimension_numbers<[1], [0], [0], [1], [0, 0, 1, 1], [], []>} : vector<256x16xbf16>, vector<16x64xbf16>, vector<256x64xf32> -> vector<256x64xf32>
    %197 = vector.broadcast %190 : vector<1x64xf32> to vector<256x64xf32>
    %198 = arith.addf %196, %197 : vector<256x64xf32>
    %199 = vector.extract_strided_slice %198 {offsets = [0, 0], sizes = [256, 32], strides = [1, 1]} : vector<256x64xf32> to vector<256x32xf32>
    %200 = vector.extract_strided_slice %198 {offsets = [0, 32], sizes = [256, 32], strides = [1, 1]} : vector<256x64xf32> to vector<256x32xf32>
    %201 = tpu.concatenate %199, %200 in 0 : vector<256x32xf32>, vector<256x32xf32> -> vector<512x32xf32>
    %202 = arith.truncf %201 : vector<512x32xf32> to vector<512x32xbf16>
    %cst_95 = arith.constant dense<0.000000e+00> : vector<256x32xf32>
    %203 = tpu.matmul %188, %202, %cst_95 {dimension_numbers = #tpu.dot_dimension_numbers<[1], [0], [0], [1], [0, 0, 1, 1], [], []>} : vector<256x512xbf16>, vector<512x32xbf16>, vector<256x32xf32> -> vector<256x32xf32>
    %c0_96 = arith.constant 0 : index
    %c0_97 = arith.constant 0 : index
    %204 = vector.load %arg30[%c0_96, %c0_97] : memref<16x32xf32, #tpu.memory_space<vmem>>, vector<16x32xf32>
    %c0_98 = arith.constant 0 : index
    %c0_99 = arith.constant 0 : index
    %205 = vector.load %arg31[%c0_98, %c0_99] : memref<1x32xf32, #tpu.memory_space<vmem>>, vector<1x32xf32>
    %206 = arith.truncf %193 : vector<256x16xf32> to vector<256x16xbf16>
    %207 = arith.truncf %204 : vector<16x32xf32> to vector<16x32xbf16>
    %cst_100 = arith.constant dense<0.000000e+00> : vector<256x32xf32>
    %208 = tpu.matmul %206, %207, %cst_100 {dimension_numbers = #tpu.dot_dimension_numbers<[1], [0], [0], [1], [0, 0, 1, 1], [], []>} : vector<256x16xbf16>, vector<16x32xbf16>, vector<256x32xf32> -> vector<256x32xf32>
    %209 = vector.broadcast %205 : vector<1x32xf32> to vector<256x32xf32>
    %210 = arith.addf %208, %209 : vector<256x32xf32>
    %211 = vector.broadcast %191 : vector<1x32xf32> to vector<256x32xf32>
    %212 = arith.mulf %203, %211 : vector<256x32xf32>
    %213 = vector.broadcast %192 : vector<1x32xf32> to vector<256x32xf32>
    %214 = arith.addf %212, %213 : vector<256x32xf32>
    %215 = arith.addf %214, %210 : vector<256x32xf32>
    %cst_101 = arith.constant 0.000000e+00 : f32
    %216 = vector.broadcast %cst_101 : f32 to vector<256x32xf32>
    %217 = arith.maximumf %215, %216 : vector<256x32xf32>
    %218 = vector.shape_cast %217 : vector<256x32xf32> to vector<16x16x32xf32>
    %c0_102 = arith.constant 0 : index
    %c0_103 = arith.constant 0 : index
    %c0_104 = arith.constant 0 : index
    %219 = vector.load %arg32[%c0_102, %c0_103, %c0_104] : memref<3x32x32xf32, #tpu.memory_space<vmem>>, vector<3x32x32xf32>
    %c0_105 = arith.constant 0 : index
    %c0_106 = arith.constant 0 : index
    %220 = vector.load %arg33[%c0_105, %c0_106] : memref<1x32xf32, #tpu.memory_space<vmem>>, vector<1x32xf32>
    %c0_107 = arith.constant 0 : index
    %c0_108 = arith.constant 0 : index
    %221 = vector.load %arg34[%c0_107, %c0_108] : memref<1x32xf32, #tpu.memory_space<vmem>>, vector<1x32xf32>
    %c0_109 = arith.constant 0 : index
    %c0_110 = arith.constant 0 : index
    %222 = vector.load %arg35[%c0_109, %c0_110] : memref<1x32xf32, #tpu.memory_space<vmem>>, vector<1x32xf32>
    %cst_111 = arith.constant 0.000000e+00 : f32
    %223 = vector.broadcast %cst_111 : f32 to vector<1x16x32xf32>
    %cst_112 = arith.constant 0.000000e+00 : f32
    %224 = vector.broadcast %cst_112 : f32 to vector<2x16x32xf32>
    %225 = tpu.concatenate %223, %218, %224 in 0 : vector<1x16x32xf32>, vector<16x16x32xf32>, vector<2x16x32xf32> -> vector<19x16x32xf32>
    %cst_113 = arith.constant 0.000000e+00 : f32
    %226 = vector.broadcast %cst_113 : f32 to vector<128x32xf32>
    %227 = vector.extract_strided_slice %225 {offsets = [0, 0, 0], sizes = [16, 16, 32], strides = [1, 1, 1]} : vector<19x16x32xf32> to vector<16x16x32xf32>
    %228 = vector.shape_cast %227 : vector<16x16x32xf32> to vector<8x2x16x32xf32>
    %229 = vector.extract_strided_slice %228 {offsets = [0, 0, 0, 0], sizes = [8, 1, 16, 32], strides = [1, 1, 1, 1]} : vector<8x2x16x32xf32> to vector<8x1x16x32xf32>
    %230 = vector.shape_cast %229 : vector<8x1x16x32xf32> to vector<8x16x32xf32>
    %231 = vector.shape_cast %230 : vector<8x16x32xf32> to vector<128x32xf32>
    %232 = vector.extract_strided_slice %219 {offsets = [0, 0, 0], sizes = [1, 32, 32], strides = [1, 1, 1]} : vector<3x32x32xf32> to vector<1x32x32xf32>
    %233 = vector.shape_cast %232 : vector<1x32x32xf32> to vector<32x32xf32>
    %234 = arith.truncf %231 : vector<128x32xf32> to vector<128x32xbf16>
    %235 = arith.truncf %233 : vector<32x32xf32> to vector<32x32xbf16>
    %cst_114 = arith.constant dense<0.000000e+00> : vector<128x32xf32>
    %236 = tpu.matmul %234, %235, %cst_114 {dimension_numbers = #tpu.dot_dimension_numbers<[1], [0], [0], [1], [0, 0, 1, 1], [], []>} : vector<128x32xbf16>, vector<32x32xbf16>, vector<128x32xf32> -> vector<128x32xf32>
    %237 = arith.addf %226, %236 : vector<128x32xf32>
    %238 = vector.extract_strided_slice %225 {offsets = [1, 0, 0], sizes = [16, 16, 32], strides = [1, 1, 1]} : vector<19x16x32xf32> to vector<16x16x32xf32>
    %239 = vector.shape_cast %238 : vector<16x16x32xf32> to vector<8x2x16x32xf32>
    %240 = vector.extract_strided_slice %239 {offsets = [0, 0, 0, 0], sizes = [8, 1, 16, 32], strides = [1, 1, 1, 1]} : vector<8x2x16x32xf32> to vector<8x1x16x32xf32>
    %241 = vector.shape_cast %240 : vector<8x1x16x32xf32> to vector<8x16x32xf32>
    %242 = vector.shape_cast %241 : vector<8x16x32xf32> to vector<128x32xf32>
    %243 = vector.extract_strided_slice %219 {offsets = [1, 0, 0], sizes = [1, 32, 32], strides = [1, 1, 1]} : vector<3x32x32xf32> to vector<1x32x32xf32>
    %244 = vector.shape_cast %243 : vector<1x32x32xf32> to vector<32x32xf32>
    %245 = arith.truncf %242 : vector<128x32xf32> to vector<128x32xbf16>
    %246 = arith.truncf %244 : vector<32x32xf32> to vector<32x32xbf16>
    %cst_115 = arith.constant dense<0.000000e+00> : vector<128x32xf32>
    %247 = tpu.matmul %245, %246, %cst_115 {dimension_numbers = #tpu.dot_dimension_numbers<[1], [0], [0], [1], [0, 0, 1, 1], [], []>} : vector<128x32xbf16>, vector<32x32xbf16>, vector<128x32xf32> -> vector<128x32xf32>
    %248 = arith.addf %237, %247 : vector<128x32xf32>
    %249 = vector.extract_strided_slice %225 {offsets = [2, 0, 0], sizes = [16, 16, 32], strides = [1, 1, 1]} : vector<19x16x32xf32> to vector<16x16x32xf32>
    %250 = vector.shape_cast %249 : vector<16x16x32xf32> to vector<8x2x16x32xf32>
    %251 = vector.extract_strided_slice %250 {offsets = [0, 0, 0, 0], sizes = [8, 1, 16, 32], strides = [1, 1, 1, 1]} : vector<8x2x16x32xf32> to vector<8x1x16x32xf32>
    %252 = vector.shape_cast %251 : vector<8x1x16x32xf32> to vector<8x16x32xf32>
    %253 = vector.shape_cast %252 : vector<8x16x32xf32> to vector<128x32xf32>
    %254 = vector.extract_strided_slice %219 {offsets = [2, 0, 0], sizes = [1, 32, 32], strides = [1, 1, 1]} : vector<3x32x32xf32> to vector<1x32x32xf32>
    %255 = vector.shape_cast %254 : vector<1x32x32xf32> to vector<32x32xf32>
    %256 = arith.truncf %253 : vector<128x32xf32> to vector<128x32xbf16>
    %257 = arith.truncf %255 : vector<32x32xf32> to vector<32x32xbf16>
    %cst_116 = arith.constant dense<0.000000e+00> : vector<128x32xf32>
    %258 = tpu.matmul %256, %257, %cst_116 {dimension_numbers = #tpu.dot_dimension_numbers<[1], [0], [0], [1], [0, 0, 1, 1], [], []>} : vector<128x32xbf16>, vector<32x32xbf16>, vector<128x32xf32> -> vector<128x32xf32>
    %259 = arith.addf %248, %258 : vector<128x32xf32>
    %260 = vector.broadcast %220 : vector<1x32xf32> to vector<128x32xf32>
    %261 = arith.addf %259, %260 : vector<128x32xf32>
    %262 = vector.broadcast %221 : vector<1x32xf32> to vector<128x32xf32>
    %263 = arith.mulf %261, %262 : vector<128x32xf32>
    %264 = vector.broadcast %222 : vector<1x32xf32> to vector<128x32xf32>
    %265 = arith.addf %263, %264 : vector<128x32xf32>
    %c0_117 = arith.constant 0 : index
    %c0_118 = arith.constant 0 : index
    %266 = vector.load %arg36[%c0_117, %c0_118] : memref<32x32xf32, #tpu.memory_space<vmem>>, vector<32x32xf32>
    %c0_119 = arith.constant 0 : index
    %c0_120 = arith.constant 0 : index
    %267 = vector.load %arg37[%c0_119, %c0_120] : memref<1x32xf32, #tpu.memory_space<vmem>>, vector<1x32xf32>
    %268 = vector.extract_strided_slice %225 {offsets = [1, 0, 0], sizes = [16, 16, 32], strides = [1, 1, 1]} : vector<19x16x32xf32> to vector<16x16x32xf32>
    %269 = vector.shape_cast %268 : vector<16x16x32xf32> to vector<8x2x16x32xf32>
    %270 = vector.extract_strided_slice %269 {offsets = [0, 0, 0, 0], sizes = [8, 1, 16, 32], strides = [1, 1, 1, 1]} : vector<8x2x16x32xf32> to vector<8x1x16x32xf32>
    %271 = vector.shape_cast %270 : vector<8x1x16x32xf32> to vector<8x16x32xf32>
    %272 = vector.shape_cast %271 : vector<8x16x32xf32> to vector<128x32xf32>
    %273 = arith.truncf %272 : vector<128x32xf32> to vector<128x32xbf16>
    %274 = arith.truncf %266 : vector<32x32xf32> to vector<32x32xbf16>
    %cst_121 = arith.constant dense<0.000000e+00> : vector<128x32xf32>
    %275 = tpu.matmul %273, %274, %cst_121 {dimension_numbers = #tpu.dot_dimension_numbers<[1], [0], [0], [1], [0, 0, 1, 1], [], []>} : vector<128x32xbf16>, vector<32x32xbf16>, vector<128x32xf32> -> vector<128x32xf32>
    %276 = vector.broadcast %267 : vector<1x32xf32> to vector<128x32xf32>
    %277 = arith.addf %275, %276 : vector<128x32xf32>
    %278 = arith.addf %265, %277 : vector<128x32xf32>
    %cst_122 = arith.constant 0.000000e+00 : f32
    %279 = vector.broadcast %cst_122 : f32 to vector<128x32xf32>
    %280 = arith.maximumf %278, %279 : vector<128x32xf32>
    %281 = vector.shape_cast %280 : vector<128x32xf32> to vector<8x16x32xf32>
    %c0_123 = arith.constant 0 : index
    %c0_124 = arith.constant 0 : index
    %c0_125 = arith.constant 0 : index
    %282 = vector.load %arg38[%c0_123, %c0_124, %c0_125] : memref<3x32x32xf32, #tpu.memory_space<vmem>>, vector<3x32x32xf32>
    %c0_126 = arith.constant 0 : index
    %c0_127 = arith.constant 0 : index
    %283 = vector.load %arg39[%c0_126, %c0_127] : memref<1x32xf32, #tpu.memory_space<vmem>>, vector<1x32xf32>
    %c0_128 = arith.constant 0 : index
    %c0_129 = arith.constant 0 : index
    %284 = vector.load %arg40[%c0_128, %c0_129] : memref<1x32xf32, #tpu.memory_space<vmem>>, vector<1x32xf32>
    %c0_130 = arith.constant 0 : index
    %c0_131 = arith.constant 0 : index
    %285 = vector.load %arg41[%c0_130, %c0_131] : memref<1x32xf32, #tpu.memory_space<vmem>>, vector<1x32xf32>
    %cst_132 = arith.constant 0.000000e+00 : f32
    %286 = vector.broadcast %cst_132 : f32 to vector<1x16x32xf32>
    %cst_133 = arith.constant 0.000000e+00 : f32
    %287 = vector.broadcast %cst_133 : f32 to vector<1x16x32xf32>
    %288 = tpu.concatenate %286, %281, %287 in 0 : vector<1x16x32xf32>, vector<8x16x32xf32>, vector<1x16x32xf32> -> vector<10x16x32xf32>
    %cst_134 = arith.constant 0.000000e+00 : f32
    %289 = vector.broadcast %cst_134 : f32 to vector<128x32xf32>
    %290 = vector.extract_strided_slice %288 {offsets = [0, 0, 0], sizes = [8, 16, 32], strides = [1, 1, 1]} : vector<10x16x32xf32> to vector<8x16x32xf32>
    %291 = vector.shape_cast %290 : vector<8x16x32xf32> to vector<128x32xf32>
    %292 = vector.extract_strided_slice %282 {offsets = [0, 0, 0], sizes = [1, 32, 32], strides = [1, 1, 1]} : vector<3x32x32xf32> to vector<1x32x32xf32>
    %293 = vector.shape_cast %292 : vector<1x32x32xf32> to vector<32x32xf32>
    %294 = arith.truncf %291 : vector<128x32xf32> to vector<128x32xbf16>
    %295 = arith.truncf %293 : vector<32x32xf32> to vector<32x32xbf16>
    %cst_135 = arith.constant dense<0.000000e+00> : vector<128x32xf32>
    %296 = tpu.matmul %294, %295, %cst_135 {dimension_numbers = #tpu.dot_dimension_numbers<[1], [0], [0], [1], [0, 0, 1, 1], [], []>} : vector<128x32xbf16>, vector<32x32xbf16>, vector<128x32xf32> -> vector<128x32xf32>
    %297 = arith.addf %289, %296 : vector<128x32xf32>
    %298 = vector.extract_strided_slice %288 {offsets = [1, 0, 0], sizes = [8, 16, 32], strides = [1, 1, 1]} : vector<10x16x32xf32> to vector<8x16x32xf32>
    %299 = vector.shape_cast %298 : vector<8x16x32xf32> to vector<128x32xf32>
    %300 = vector.extract_strided_slice %282 {offsets = [1, 0, 0], sizes = [1, 32, 32], strides = [1, 1, 1]} : vector<3x32x32xf32> to vector<1x32x32xf32>
    %301 = vector.shape_cast %300 : vector<1x32x32xf32> to vector<32x32xf32>
    %302 = arith.truncf %299 : vector<128x32xf32> to vector<128x32xbf16>
    %303 = arith.truncf %301 : vector<32x32xf32> to vector<32x32xbf16>
    %cst_136 = arith.constant dense<0.000000e+00> : vector<128x32xf32>
    %304 = tpu.matmul %302, %303, %cst_136 {dimension_numbers = #tpu.dot_dimension_numbers<[1], [0], [0], [1], [0, 0, 1, 1], [], []>} : vector<128x32xbf16>, vector<32x32xbf16>, vector<128x32xf32> -> vector<128x32xf32>
    %305 = arith.addf %297, %304 : vector<128x32xf32>
    %306 = vector.extract_strided_slice %288 {offsets = [2, 0, 0], sizes = [8, 16, 32], strides = [1, 1, 1]} : vector<10x16x32xf32> to vector<8x16x32xf32>
    %307 = vector.shape_cast %306 : vector<8x16x32xf32> to vector<128x32xf32>
    %308 = vector.extract_strided_slice %282 {offsets = [2, 0, 0], sizes = [1, 32, 32], strides = [1, 1, 1]} : vector<3x32x32xf32> to vector<1x32x32xf32>
    %309 = vector.shape_cast %308 : vector<1x32x32xf32> to vector<32x32xf32>
    %310 = arith.truncf %307 : vector<128x32xf32> to vector<128x32xbf16>
    %311 = arith.truncf %309 : vector<32x32xf32> to vector<32x32xbf16>
    %cst_137 = arith.constant dense<0.000000e+00> : vector<128x32xf32>
    %312 = tpu.matmul %310, %311, %cst_137 {dimension_numbers = #tpu.dot_dimension_numbers<[1], [0], [0], [1], [0, 0, 1, 1], [], []>} : vector<128x32xbf16>, vector<32x32xbf16>, vector<128x32xf32> -> vector<128x32xf32>
    %313 = arith.addf %305, %312 : vector<128x32xf32>
    %314 = vector.broadcast %283 : vector<1x32xf32> to vector<128x32xf32>
    %315 = arith.addf %313, %314 : vector<128x32xf32>
    %316 = vector.broadcast %284 : vector<1x32xf32> to vector<128x32xf32>
    %317 = arith.mulf %315, %316 : vector<128x32xf32>
    %318 = vector.broadcast %285 : vector<1x32xf32> to vector<128x32xf32>
    %319 = arith.addf %317, %318 : vector<128x32xf32>
    %320 = vector.shape_cast %281 : vector<8x16x32xf32> to vector<128x32xf32>
    %321 = arith.addf %319, %320 : vector<128x32xf32>
    %cst_138 = arith.constant 0.000000e+00 : f32
    %322 = vector.broadcast %cst_138 : f32 to vector<128x32xf32>
    %323 = arith.maximumf %321, %322 : vector<128x32xf32>
    %324 = vector.shape_cast %323 : vector<128x32xf32> to vector<8x16x32xf32>
    %c0_139 = arith.constant 0 : index
    %c0_140 = arith.constant 0 : index
    %325 = vector.load %arg42[%c0_139, %c0_140] : memref<32x8xf32, #tpu.memory_space<vmem>>, vector<32x8xf32>
    %c0_141 = arith.constant 0 : index
    %c0_142 = arith.constant 0 : index
    %326 = vector.load %arg43[%c0_141, %c0_142] : memref<1x8xf32, #tpu.memory_space<vmem>>, vector<1x8xf32>
    %c0_143 = arith.constant 0 : index
    %c0_144 = arith.constant 0 : index
    %327 = vector.load %arg44[%c0_143, %c0_144] : memref<8x32xf32, #tpu.memory_space<vmem>>, vector<8x32xf32>
    %c0_145 = arith.constant 0 : index
    %c0_146 = arith.constant 0 : index
    %328 = vector.load %arg45[%c0_145, %c0_146] : memref<1x32xf32, #tpu.memory_space<vmem>>, vector<1x32xf32>
    %c0_147 = arith.constant 0 : index
    %c0_148 = arith.constant 0 : index
    %329 = vector.load %arg46[%c0_147, %c0_148] : memref<8x32xf32, #tpu.memory_space<vmem>>, vector<8x32xf32>
    %c0_149 = arith.constant 0 : index
    %c0_150 = arith.constant 0 : index
    %330 = vector.load %arg47[%c0_149, %c0_150] : memref<1x32xf32, #tpu.memory_space<vmem>>, vector<1x32xf32>
    %c0_151 = arith.constant 0 : index
    %c0_152 = arith.constant 0 : index
    %331 = vector.load %arg48[%c0_151, %c0_152] : memref<1x32xf32, #tpu.memory_space<vmem>>, vector<1x32xf32>
    %c0_153 = arith.constant 0 : index
    %c0_154 = arith.constant 0 : index
    %332 = vector.load %arg49[%c0_153, %c0_154] : memref<1x32xf32, #tpu.memory_space<vmem>>, vector<1x32xf32>
    %cst_155 = arith.constant dense<0.000000e+00> : vector<8x32xf32>
    %333 = vector.multi_reduction <add>, %324, %cst_155 [1] : vector<8x16x32xf32> to vector<8x32xf32>
    %cst_156 = arith.constant 1.600000e+01 : f32
    %334 = vector.broadcast %cst_156 : f32 to vector<8x32xf32>
    %335 = arith.divf %333, %334 : vector<8x32xf32>
    %cst_157 = arith.constant dense<0.000000e+00> : vector<16x32xf32>
    %336 = vector.multi_reduction <add>, %324, %cst_157 [0] : vector<8x16x32xf32> to vector<16x32xf32>
    %cst_158 = arith.constant 8.000000e+00 : f32
    %337 = vector.broadcast %cst_158 : f32 to vector<16x32xf32>
    %338 = arith.divf %336, %337 : vector<16x32xf32>
    %339 = tpu.concatenate %335, %338 in 0 : vector<8x32xf32>, vector<16x32xf32> -> vector<24x32xf32>
    %340 = arith.truncf %339 : vector<24x32xf32> to vector<24x32xbf16>
    %341 = arith.truncf %325 : vector<32x8xf32> to vector<32x8xbf16>
    %cst_159 = arith.constant dense<0.000000e+00> : vector<24x8xf32>
    %342 = tpu.matmul %340, %341, %cst_159 {dimension_numbers = #tpu.dot_dimension_numbers<[1], [0], [0], [1], [0, 0, 1, 1], [], []>} : vector<24x32xbf16>, vector<32x8xbf16>, vector<24x8xf32> -> vector<24x8xf32>
    %343 = vector.broadcast %326 : vector<1x8xf32> to vector<24x8xf32>
    %344 = arith.addf %342, %343 : vector<24x8xf32>
    %cst_160 = arith.constant 3.000000e+00 : f32
    %345 = vector.broadcast %cst_160 : f32 to vector<24x8xf32>
    %346 = arith.addf %344, %345 : vector<24x8xf32>
    %cst_161 = arith.constant 0.000000e+00 : f32
    %cst_162 = arith.constant 6.000000e+00 : f32
    %347 = vector.broadcast %cst_161 : f32 to vector<24x8xf32>
    %348 = arith.maximumf %347, %346 : vector<24x8xf32>
    %349 = vector.broadcast %cst_162 : f32 to vector<24x8xf32>
    %350 = arith.minimumf %349, %348 : vector<24x8xf32>
    %351 = arith.mulf %344, %350 : vector<24x8xf32>
    %cst_163 = arith.constant 0.166666672 : f32
    %352 = vector.broadcast %cst_163 : f32 to vector<24x8xf32>
    %353 = arith.mulf %351, %352 : vector<24x8xf32>
    %354 = vector.extract_strided_slice %353 {offsets = [0, 0], sizes = [8, 8], strides = [1, 1]} : vector<24x8xf32> to vector<8x8xf32>
    %355 = arith.truncf %354 : vector<8x8xf32> to vector<8x8xbf16>
    %356 = arith.truncf %327 : vector<8x32xf32> to vector<8x32xbf16>
    %cst_164 = arith.constant dense<0.000000e+00> : vector<8x32xf32>
    %357 = tpu.matmul %355, %356, %cst_164 {dimension_numbers = #tpu.dot_dimension_numbers<[1], [0], [0], [1], [0, 0, 1, 1], [], []>} : vector<8x8xbf16>, vector<8x32xbf16>, vector<8x32xf32> -> vector<8x32xf32>
    %358 = vector.broadcast %328 : vector<1x32xf32> to vector<8x32xf32>
    %359 = arith.addf %357, %358 : vector<8x32xf32>
    %cst_165 = arith.constant 0.000000e+00 : f32
    %360 = vector.broadcast %cst_165 : f32 to vector<8x32xf32>
    %361 = arith.subf %360, %359 : vector<8x32xf32>
    %362 = math.exp %361 : vector<8x32xf32>
    %cst_166 = arith.constant 1.000000e+00 : f32
    %363 = vector.broadcast %cst_166 : f32 to vector<8x32xf32>
    %364 = arith.addf %363, %362 : vector<8x32xf32>
    %365 = tpu.reciprocal %364 {approx = true} : vector<8x32xf32> -> vector<8x32xf32>
    %366 = vector.extract_strided_slice %353 {offsets = [8, 0], sizes = [16, 8], strides = [1, 1]} : vector<24x8xf32> to vector<16x8xf32>
    %367 = arith.truncf %366 : vector<16x8xf32> to vector<16x8xbf16>
    %368 = arith.truncf %329 : vector<8x32xf32> to vector<8x32xbf16>
    %cst_167 = arith.constant dense<0.000000e+00> : vector<16x32xf32>
    %369 = tpu.matmul %367, %368, %cst_167 {dimension_numbers = #tpu.dot_dimension_numbers<[1], [0], [0], [1], [0, 0, 1, 1], [], []>} : vector<16x8xbf16>, vector<8x32xbf16>, vector<16x32xf32> -> vector<16x32xf32>
    %370 = vector.broadcast %330 : vector<1x32xf32> to vector<16x32xf32>
    %371 = arith.addf %369, %370 : vector<16x32xf32>
    %cst_168 = arith.constant 0.000000e+00 : f32
    %372 = vector.broadcast %cst_168 : f32 to vector<16x32xf32>
    %373 = arith.subf %372, %371 : vector<16x32xf32>
    %374 = math.exp %373 : vector<16x32xf32>
    %cst_169 = arith.constant 1.000000e+00 : f32
    %375 = vector.broadcast %cst_169 : f32 to vector<16x32xf32>
    %376 = arith.addf %375, %374 : vector<16x32xf32>
    %377 = tpu.reciprocal %376 {approx = true} : vector<16x32xf32> -> vector<16x32xf32>
    %378 = vector.shape_cast %365 : vector<8x32xf32> to vector<8x1x32xf32>
    %379 = vector.shape_cast %377 : vector<16x32xf32> to vector<1x16x32xf32>
    %380 = vector.broadcast %378 : vector<8x1x32xf32> to vector<8x16x32xf32>
    %381 = vector.broadcast %379 : vector<1x16x32xf32> to vector<8x16x32xf32>
    %382 = arith.mulf %380, %381 : vector<8x16x32xf32>
    %383 = vector.shape_cast %324 : vector<8x16x32xf32> to vector<128x32xf32>
    %384 = arith.mulf %324, %382 : vector<8x16x32xf32>
    %385 = vector.shape_cast %384 : vector<8x16x32xf32> to vector<128x32xf32>
    %386 = vector.broadcast %331 : vector<1x32xf32> to vector<128x32xf32>
    %387 = arith.mulf %385, %386 : vector<128x32xf32>
    %388 = vector.broadcast %332 : vector<1x32xf32> to vector<128x32xf32>
    %389 = arith.addf %387, %388 : vector<128x32xf32>
    %390 = arith.addf %389, %383 : vector<128x32xf32>
    %cst_170 = arith.constant 0.000000e+00 : f32
    %391 = vector.broadcast %cst_170 : f32 to vector<128x32xf32>
    %392 = arith.maximumf %390, %391 : vector<128x32xf32>
    %393 = vector.shape_cast %392 : vector<128x32xf32> to vector<8x16x32xf32>
    %c0_171 = arith.constant 0 : index
    %c0_172 = arith.constant 0 : index
    %c0_173 = arith.constant 0 : index
    %c0_174 = arith.constant 0 : index
    %394 = vector.load %arg50[%c0_171, %c0_172, %c0_173, %c0_174] : memref<1x8x16x32xf32, #tpu.memory_space<vmem>>, vector<1x8x16x32xf32>
    %395 = vector.shape_cast %394 : vector<1x8x16x32xf32> to vector<8x16x32xf32>
    %396 = vector.shape_cast %393 : vector<8x16x32xf32> to vector<1x8x16x32xf32>
    tpu.vector_store %arg50[%c0_171, %c0_172, %c0_173, %c0_174], %396 {strides = array<i32>} : memref<1x8x16x32xf32, #tpu.memory_space<vmem>>, vector<1x8x16x32xf32>,
    return
  }
  func.func @transform_0(%arg0: i32) -> (i32, i32, i32, i32) {
    %c0_i32 = arith.constant 0 : i32
    %c0_i32_0 = arith.constant 0 : i32
    %c0_i32_1 = arith.constant 0 : i32
    %c0_i32_2 = arith.constant 0 : i32
    return %arg0, %c0_i32, %c0_i32_0, %c0_i32_1 : i32, i32, i32, i32
  }
  func.func @transform_1(%arg0: i32) -> (i32, i32) {
    %c0_i32 = arith.constant 0 : i32
    %c0_i32_0 = arith.constant 0 : i32
    %c0_i32_1 = arith.constant 0 : i32
    return %c0_i32, %c0_i32_0 : i32, i32
  }
  func.func @transform_2(%arg0: i32) -> (i32, i32) {
    %c0_i32 = arith.constant 0 : i32
    %c0_i32_0 = arith.constant 0 : i32
    %c0_i32_1 = arith.constant 0 : i32
    return %c0_i32, %c0_i32_0 : i32, i32
  }
  func.func @transform_3(%arg0: i32) -> (i32, i32) {
    %c0_i32 = arith.constant 0 : i32
    %c0_i32_0 = arith.constant 0 : i32
    %c0_i32_1 = arith.constant 0 : i32
    return %c0_i32, %c0_i32_0 : i32, i32
  }
  func.func @transform_4(%arg0: i32) -> (i32, i32) {
    %c0_i32 = arith.constant 0 : i32
    %c0_i32_0 = arith.constant 0 : i32
    %c0_i32_1 = arith.constant 0 : i32
    return %c0_i32, %c0_i32_0 : i32, i32
  }
  func.func @transform_5(%arg0: i32) -> (i32, i32) {
    %c0_i32 = arith.constant 0 : i32
    %c0_i32_0 = arith.constant 0 : i32
    %c0_i32_1 = arith.constant 0 : i32
    return %c0_i32, %c0_i32_0 : i32, i32
  }
  func.func @transform_6(%arg0: i32) -> (i32, i32) {
    %c0_i32 = arith.constant 0 : i32
    %c0_i32_0 = arith.constant 0 : i32
    %c0_i32_1 = arith.constant 0 : i32
    return %c0_i32, %c0_i32_0 : i32, i32
  }
  func.func @transform_7(%arg0: i32) -> (i32, i32) {
    %c0_i32 = arith.constant 0 : i32
    %c0_i32_0 = arith.constant 0 : i32
    %c0_i32_1 = arith.constant 0 : i32
    return %c0_i32, %c0_i32_0 : i32, i32
  }
  func.func @transform_8(%arg0: i32) -> (i32, i32, i32) {
    %c0_i32 = arith.constant 0 : i32
    %c0_i32_0 = arith.constant 0 : i32
    %c0_i32_1 = arith.constant 0 : i32
    %c0_i32_2 = arith.constant 0 : i32
    return %c0_i32, %c0_i32_0, %c0_i32_1 : i32, i32, i32
  }
  func.func @transform_9(%arg0: i32) -> (i32, i32) {
    %c0_i32 = arith.constant 0 : i32
    %c0_i32_0 = arith.constant 0 : i32
    %c0_i32_1 = arith.constant 0 : i32
    return %c0_i32, %c0_i32_0 : i32, i32
  }
  func.func @transform_10(%arg0: i32) -> (i32, i32) {
    %c0_i32 = arith.constant 0 : i32
    %c0_i32_0 = arith.constant 0 : i32
    %c0_i32_1 = arith.constant 0 : i32
    return %c0_i32, %c0_i32_0 : i32, i32
  }
  func.func @transform_11(%arg0: i32) -> (i32, i32) {
    %c0_i32 = arith.constant 0 : i32
    %c0_i32_0 = arith.constant 0 : i32
    %c0_i32_1 = arith.constant 0 : i32
    return %c0_i32, %c0_i32_0 : i32, i32
  }
  func.func @transform_12(%arg0: i32) -> (i32, i32, i32) {
    %c0_i32 = arith.constant 0 : i32
    %c0_i32_0 = arith.constant 0 : i32
    %c0_i32_1 = arith.constant 0 : i32
    %c0_i32_2 = arith.constant 0 : i32
    return %c0_i32, %c0_i32_0, %c0_i32_1 : i32, i32, i32
  }
  func.func @transform_13(%arg0: i32) -> (i32, i32) {
    %c0_i32 = arith.constant 0 : i32
    %c0_i32_0 = arith.constant 0 : i32
    %c0_i32_1 = arith.constant 0 : i32
    return %c0_i32, %c0_i32_0 : i32, i32
  }
  func.func @transform_14(%arg0: i32) -> (i32, i32) {
    %c0_i32 = arith.constant 0 : i32
    %c0_i32_0 = arith.constant 0 : i32
    %c0_i32_1 = arith.constant 0 : i32
    return %c0_i32, %c0_i32_0 : i32, i32
  }
  func.func @transform_15(%arg0: i32) -> (i32, i32) {
    %c0_i32 = arith.constant 0 : i32
    %c0_i32_0 = arith.constant 0 : i32
    %c0_i32_1 = arith.constant 0 : i32
    return %c0_i32, %c0_i32_0 : i32, i32
  }
  func.func @transform_16(%arg0: i32) -> (i32, i32) {
    %c0_i32 = arith.constant 0 : i32
    %c0_i32_0 = arith.constant 0 : i32
    %c0_i32_1 = arith.constant 0 : i32
    return %c0_i32, %c0_i32_0 : i32, i32
  }
  func.func @transform_17(%arg0: i32) -> (i32, i32) {
    %c0_i32 = arith.constant 0 : i32
    %c0_i32_0 = arith.constant 0 : i32
    %c0_i32_1 = arith.constant 0 : i32
    return %c0_i32, %c0_i32_0 : i32, i32
  }
  func.func @transform_18(%arg0: i32) -> (i32, i32) {
    %c0_i32 = arith.constant 0 : i32
    %c0_i32_0 = arith.constant 0 : i32
    %c0_i32_1 = arith.constant 0 : i32
    return %c0_i32, %c0_i32_0 : i32, i32
  }
  func.func @transform_19(%arg0: i32) -> (i32, i32) {
    %c0_i32 = arith.constant 0 : i32
    %c0_i32_0 = arith.constant 0 : i32
    %c0_i32_1 = arith.constant 0 : i32
    return %c0_i32, %c0_i32_0 : i32, i32
  }
  func.func @transform_20(%arg0: i32) -> (i32, i32) {
    %c0_i32 = arith.constant 0 : i32
    %c0_i32_0 = arith.constant 0 : i32
    %c0_i32_1 = arith.constant 0 : i32
    return %c0_i32, %c0_i32_0 : i32, i32
  }
  func.func @transform_21(%arg0: i32) -> (i32, i32) {
    %c0_i32 = arith.constant 0 : i32
    %c0_i32_0 = arith.constant 0 : i32
    %c0_i32_1 = arith.constant 0 : i32
    return %c0_i32, %c0_i32_0 : i32, i32
  }
  func.func @transform_22(%arg0: i32) -> (i32, i32) {
    %c0_i32 = arith.constant 0 : i32
    %c0_i32_0 = arith.constant 0 : i32
    %c0_i32_1 = arith.constant 0 : i32
    return %c0_i32, %c0_i32_0 : i32, i32
  }
  func.func @transform_23(%arg0: i32) -> (i32, i32) {
    %c0_i32 = arith.constant 0 : i32
    %c0_i32_0 = arith.constant 0 : i32
    %c0_i32_1 = arith.constant 0 : i32
    return %c0_i32, %c0_i32_0 : i32, i32
  }
  func.func @transform_24(%arg0: i32) -> (i32, i32) {
    %c0_i32 = arith.constant 0 : i32
    %c0_i32_0 = arith.constant 0 : i32
    %c0_i32_1 = arith.constant 0 : i32
    return %c0_i32, %c0_i32_0 : i32, i32
  }
  func.func @transform_25(%arg0: i32) -> (i32, i32) {
    %c0_i32 = arith.constant 0 : i32
    %c0_i32_0 = arith.constant 0 : i32
    %c0_i32_1 = arith.constant 0 : i32
    return %c0_i32, %c0_i32_0 : i32, i32
  }
  func.func @transform_26(%arg0: i32) -> (i32, i32) {
    %c0_i32 = arith.constant 0 : i32
    %c0_i32_0 = arith.constant 0 : i32
    %c0_i32_1 = arith.constant 0 : i32
    return %c0_i32, %c0_i32_0 : i32, i32
  }
  func.func @transform_27(%arg0: i32) -> (i32, i32) {
    %c0_i32 = arith.constant 0 : i32
    %c0_i32_0 = arith.constant 0 : i32
    %c0_i32_1 = arith.constant 0 : i32
    return %c0_i32, %c0_i32_0 : i32, i32
  }
  func.func @transform_28(%arg0: i32) -> (i32, i32) {
    %c0_i32 = arith.constant 0 : i32
    %c0_i32_0 = arith.constant 0 : i32
    %c0_i32_1 = arith.constant 0 : i32
    return %c0_i32, %c0_i32_0 : i32, i32
  }
  func.func @transform_29(%arg0: i32) -> (i32, i32) {
    %c0_i32 = arith.constant 0 : i32
    %c0_i32_0 = arith.constant 0 : i32
    %c0_i32_1 = arith.constant 0 : i32
    return %c0_i32, %c0_i32_0 : i32, i32
  }
  func.func @transform_30(%arg0: i32) -> (i32, i32) {
    %c0_i32 = arith.constant 0 : i32
    %c0_i32_0 = arith.constant 0 : i32
    %c0_i32_1 = arith.constant 0 : i32
    return %c0_i32, %c0_i32_0 : i32, i32
  }
  func.func @transform_31(%arg0: i32) -> (i32, i32, i32) {
    %c0_i32 = arith.constant 0 : i32
    %c0_i32_0 = arith.constant 0 : i32
    %c0_i32_1 = arith.constant 0 : i32
    %c0_i32_2 = arith.constant 0 : i32
    return %c0_i32, %c0_i32_0, %c0_i32_1 : i32, i32, i32
  }
  func.func @transform_32(%arg0: i32) -> (i32, i32) {
    %c0_i32 = arith.constant 0 : i32
    %c0_i32_0 = arith.constant 0 : i32
    %c0_i32_1 = arith.constant 0 : i32
    return %c0_i32, %c0_i32_0 : i32, i32
  }
  func.func @transform_33(%arg0: i32) -> (i32, i32) {
    %c0_i32 = arith.constant 0 : i32
    %c0_i32_0 = arith.constant 0 : i32
    %c0_i32_1 = arith.constant 0 : i32
    return %c0_i32, %c0_i32_0 : i32, i32
  }
  func.func @transform_34(%arg0: i32) -> (i32, i32) {
    %c0_i32 = arith.constant 0 : i32
    %c0_i32_0 = arith.constant 0 : i32
    %c0_i32_1 = arith.constant 0 : i32
    return %c0_i32, %c0_i32_0 : i32, i32
  }
  func.func @transform_35(%arg0: i32) -> (i32, i32) {
    %c0_i32 = arith.constant 0 : i32
    %c0_i32_0 = arith.constant 0 : i32
    %c0_i32_1 = arith.constant 0 : i32
    return %c0_i32, %c0_i32_0 : i32, i32
  }
  func.func @transform_36(%arg0: i32) -> (i32, i32) {
    %c0_i32 = arith.constant 0 : i32
    %c0_i32_0 = arith.constant 0 : i32
    %c0_i32_1 = arith.constant 0 : i32
    return %c0_i32, %c0_i32_0 : i32, i32
  }
  func.func @transform_37(%arg0: i32) -> (i32, i32, i32) {
    %c0_i32 = arith.constant 0 : i32
    %c0_i32_0 = arith.constant 0 : i32
    %c0_i32_1 = arith.constant 0 : i32
    %c0_i32_2 = arith.constant 0 : i32
    return %c0_i32, %c0_i32_0, %c0_i32_1 : i32, i32, i32
  }
  func.func @transform_38(%arg0: i32) -> (i32, i32) {
    %c0_i32 = arith.constant 0 : i32
    %c0_i32_0 = arith.constant 0 : i32
    %c0_i32_1 = arith.constant 0 : i32
    return %c0_i32, %c0_i32_0 : i32, i32
  }
  func.func @transform_39(%arg0: i32) -> (i32, i32) {
    %c0_i32 = arith.constant 0 : i32
    %c0_i32_0 = arith.constant 0 : i32
    %c0_i32_1 = arith.constant 0 : i32
    return %c0_i32, %c0_i32_0 : i32, i32
  }
  func.func @transform_40(%arg0: i32) -> (i32, i32) {
    %c0_i32 = arith.constant 0 : i32
    %c0_i32_0 = arith.constant 0 : i32
    %c0_i32_1 = arith.constant 0 : i32
    return %c0_i32, %c0_i32_0 : i32, i32
  }
  func.func @transform_41(%arg0: i32) -> (i32, i32) {
    %c0_i32 = arith.constant 0 : i32
    %c0_i32_0 = arith.constant 0 : i32
    %c0_i32_1 = arith.constant 0 : i32
    return %c0_i32, %c0_i32_0 : i32, i32
  }
  func.func @transform_42(%arg0: i32) -> (i32, i32) {
    %c0_i32 = arith.constant 0 : i32
    %c0_i32_0 = arith.constant 0 : i32
    %c0_i32_1 = arith.constant 0 : i32
    return %c0_i32, %c0_i32_0 : i32, i32
  }
  func.func @transform_43(%arg0: i32) -> (i32, i32) {
    %c0_i32 = arith.constant 0 : i32
    %c0_i32_0 = arith.constant 0 : i32
    %c0_i32_1 = arith.constant 0 : i32
    return %c0_i32, %c0_i32_0 : i32, i32
  }
  func.func @transform_44(%arg0: i32) -> (i32, i32) {
    %c0_i32 = arith.constant 0 : i32
    %c0_i32_0 = arith.constant 0 : i32
    %c0_i32_1 = arith.constant 0 : i32
    return %c0_i32, %c0_i32_0 : i32, i32
  }
  func.func @transform_45(%arg0: i32) -> (i32, i32) {
    %c0_i32 = arith.constant 0 : i32
    %c0_i32_0 = arith.constant 0 : i32
    %c0_i32_1 = arith.constant 0 : i32
    return %c0_i32, %c0_i32_0 : i32, i32
  }
  func.func @transform_46(%arg0: i32) -> (i32, i32) {
    %c0_i32 = arith.constant 0 : i32
    %c0_i32_0 = arith.constant 0 : i32
    %c0_i32_1 = arith.constant 0 : i32
    return %c0_i32, %c0_i32_0 : i32, i32
  }
  func.func @transform_47(%arg0: i32) -> (i32, i32) {
    %c0_i32 = arith.constant 0 : i32
    %c0_i32_0 = arith.constant 0 : i32
    %c0_i32_1 = arith.constant 0 : i32
    return %c0_i32, %c0_i32_0 : i32, i32
  }
  func.func @transform_48(%arg0: i32) -> (i32, i32) {
    %c0_i32 = arith.constant 0 : i32
    %c0_i32_0 = arith.constant 0 : i32
    %c0_i32_1 = arith.constant 0 : i32
    return %c0_i32, %c0_i32_0 : i32, i32
  }
  func.func @transform_49(%arg0: i32) -> (i32, i32, i32, i32) {
    %c0_i32 = arith.constant 0 : i32
    %c0_i32_0 = arith.constant 0 : i32
    %c0_i32_1 = arith.constant 0 : i32
    %c0_i32_2 = arith.constant 0 : i32
    return %arg0, %c0_i32, %c0_i32_0, %c0_i32_1 : i32, i32, i32, i32
  }
}

</mosaic_0001>

<llo_original>
// kernel: tpu_custom_call.1
$region0: #{tpu_custom_call.1}
  #allocation0 [shape = 'u32[]', space=smem, size = 0x4, offset = 0x4, fixed_abs, tag = 'smem constant byte address 0x4 - core index']
  #allocation1 [shape = 'u32[144,128]{1,0:T(1,128)}', space=vmem, size = 0x12000, scoped, tag = 'internal scratch']
  %s0 = inlined_call_operand.smem [shape: u32[50], index: -1, kind: input, shape index: {}]
  %s1 = sld [smem:[%s0]]
  %s2 = scalar_lea.smem %s0, 1
  %s3 = sld [smem:[%s2]]
  %s4 = scalar_lea.smem %s0, 2
  %s5 = sld [smem:[%s4]]
  %s6 = scalar_lea.smem %s0, 3
  %s7 = sld [smem:[%s6]]
  %s8 = scalar_lea.smem %s0, 4
  %s9 = sld [smem:[%s8]]
  %s10 = scalar_lea.smem %s0, 5
  %s11 = sld [smem:[%s10]]
  %s12 = scalar_lea.smem %s0, 6
  %s13 = sld [smem:[%s12]]
  %s14 = scalar_lea.smem %s0, 7
  %s15 = sld [smem:[%s14]]
  %s16 = scalar_lea.smem %s0, 8
  %s17 = sld [smem:[%s16]]
  %s18 = scalar_lea.smem %s0, 9
  %s19 = sld [smem:[%s18]]
  %s20 = scalar_lea.smem %s0, 10
  %s21 = sld [smem:[%s20]]
  %s22 = scalar_lea.smem %s0, 11
  %s23 = sld [smem:[%s22]]
  %s24 = scalar_lea.smem %s0, 12
  %s25 = sld [smem:[%s24]]
  %s26 = scalar_lea.smem %s0, 13
  %s27 = sld [smem:[%s26]]
  %s28 = scalar_lea.smem %s0, 14
  %s29 = sld [smem:[%s28]]
  %s30 = scalar_lea.smem %s0, 15
  %s31 = sld [smem:[%s30]]
  %s32 = scalar_lea.smem %s0, 16
  %s33 = sld [smem:[%s32]]
  %s34 = scalar_lea.smem %s0, 17
  %s35 = sld [smem:[%s34]]
  %s36 = scalar_lea.smem %s0, 18
  %s37 = sld [smem:[%s36]]
  %s38 = scalar_lea.smem %s0, 19
  %s39 = sld [smem:[%s38]]
  %s40 = scalar_lea.smem %s0, 20
  %s41 = sld [smem:[%s40]]
  %s42 = scalar_lea.smem %s0, 21
  %s43 = sld [smem:[%s42]]
  %s44 = scalar_lea.smem %s0, 22
  %s45 = sld [smem:[%s44]]
  %s46 = scalar_lea.smem %s0, 23
  %s47 = sld [smem:[%s46]]
  %s48 = scalar_lea.smem %s0, 24
  %s49 = sld [smem:[%s48]]
  %s50 = scalar_lea.smem %s0, 25
  %s51 = sld [smem:[%s50]]
  %s52 = scalar_lea.smem %s0, 26
  %s53 = sld [smem:[%s52]]
  %s54 = scalar_lea.smem %s0, 27
  %s55 = sld [smem:[%s54]]
  %s56 = scalar_lea.smem %s0, 28
  %s57 = sld [smem:[%s56]]
  %s58 = scalar_lea.smem %s0, 29
  %s59 = sld [smem:[%s58]]
  %s60 = scalar_lea.smem %s0, 30
  %s61 = sld [smem:[%s60]]
  %s62 = scalar_lea.smem %s0, 31
  %s63 = sld [smem:[%s62]]
  %s64 = scalar_lea.smem %s0, 32
  %s65 = sld [smem:[%s64]]
  %s66 = scalar_lea.smem %s0, 33
  %s67 = sld [smem:[%s66]]
  %s68 = scalar_lea.smem %s0, 34
  %s69 = sld [smem:[%s68]]
  %s70 = scalar_lea.smem %s0, 35
  %s71 = sld [smem:[%s70]]
  %s72 = scalar_lea.smem %s0, 36
  %s73 = sld [smem:[%s72]]
  %s74 = scalar_lea.smem %s0, 37
  %s75 = sld [smem:[%s74]]
  %s76 = scalar_lea.smem %s0, 38
  %s77 = sld [smem:[%s76]]
  %s78 = scalar_lea.smem %s0, 39
  %s79 = sld [smem:[%s78]]
  %s80 = scalar_lea.smem %s0, 40
  %s81 = sld [smem:[%s80]]
  %s82 = scalar_lea.smem %s0, 41
  %s83 = sld [smem:[%s82]]
  %s84 = scalar_lea.smem %s0, 42
  %s85 = sld [smem:[%s84]]
  %s86 = scalar_lea.smem %s0, 43
  %s87 = sld [smem:[%s86]]
  %s88 = scalar_lea.smem %s0, 44
  %s89 = sld [smem:[%s88]]
  %s90 = scalar_lea.smem %s0, 45
  %s91 = sld [smem:[%s90]]
  %s92 = scalar_lea.smem %s0, 46
  %s93 = sld [smem:[%s92]]
  %s94 = scalar_lea.smem %s0, 47
  %s95 = sld [smem:[%s94]]
  %s96 = scalar_lea.smem %s0, 48
  %s97 = sld [smem:[%s96]]
  %s98 = scalar_lea.smem %s0, 49
  %s99 = sld [smem:[%s98]]
  %s100 = sld [smem:[#allocation0]]
  $region313: #{tpu_custom_call.1} parent=0
    _
  %s102 = ssub.s32 1, %s100
  %s103 = scalar_select 0, %s102, %s100
  $region1: #{tpu_custom_call.1} parent=0
    #allocation2 [shape = 'u8[2048]{0}', space=vmem, size = 0x800, scoped, tag = 'input window, operand 2, single buffered']
    #allocation3 [shape = 's32[2]{0}', space=sflag, size = 0x8, scoped, tag = 'scoped memory for tpu_custom_call.1']
    #allocation4 [shape = 's32[2]{0}', space=sflag, size = 0x8, scoped, tag = 'scoped memory for tpu_custom_call.1']
    #allocation5 [shape = 'u8[512]{0}', space=vmem, size = 0x400, scoped, tag = 'input window, operand 3, single buffered']
    #allocation6 [shape = 's32[1]{0}', space=sflag, size = 0x4, scoped, tag = 'scoped memory for tpu_custom_call.1']
    #allocation7 [shape = 'u8[512]{0}', space=vmem, size = 0x400, scoped, tag = 'input window, operand 4, single buffered']
    #allocation8 [shape = 'u8[512]{0}', space=vmem, size = 0x400, scoped, tag = 'input window, operand 5, single buffered']
    #allocation9 [shape = 's32[1]{0}', space=sflag, size = 0x4, scoped, tag = 'scoped memory for tpu_custom_call.1']
    #allocation10 [shape = 'u8[2048]{0}', space=vmem, size = 0x800, scoped, tag = 'input window, operand 6, single buffered']
    #allocation11 [shape = 'u8[512]{0}', space=vmem, size = 0x400, scoped, tag = 'input window, operand 7, single buffered']
    #allocation12 [shape = 's32[1]{0}', space=sflag, size = 0x4, scoped, tag = 'scoped memory for tpu_custom_call.1']
    #allocation13 [shape = 'u8[24576]{0}', space=vmem, size = 0x6000, scoped, tag = 'input window, operand 8, single buffered']
    #allocation14 [shape = 'u8[512]{0}', space=vmem, size = 0x400, scoped, tag = 'input window, operand 9, single buffered']
    #allocation15 [shape = 's32[1]{0}', space=sflag, size = 0x4, scoped, tag = 'scoped memory for tpu_custom_call.1']
    #allocation16 [shape = 'u8[512]{0}', space=vmem, size = 0x400, scoped, tag = 'input window, operand 10, single buffered']
    #allocation17 [shape = 'u8[512]{0}', space=vmem, size = 0x400, scoped, tag = 'input window, operand 11, single buffered']
    #allocation18 [shape = 's32[1]{0}', space=sflag, size = 0x4, scoped, tag = 'scoped memory for tpu_custom_call.1']
    #allocation19 [shape = 'u8[24576]{0}', space=vmem, size = 0x6000, scoped, tag = 'input window, operand 12, single buffered']
    #allocation20 [shape = 'u8[512]{0}', space=vmem, size = 0x400, scoped, tag = 'input window, operand 13, single buffered']
    #allocation21 [shape = 's32[1]{0}', space=sflag, size = 0x4, scoped, tag = 'scoped memory for tpu_custom_call.1']
    #allocation22 [shape = 'u8[512]{0}', space=vmem, size = 0x400, scoped, tag = 'input window, operand 14, single buffered']
    #allocation23 [shape = 'u8[512]{0}', space=vmem, size = 0x400, scoped, tag = 'input window, operand 15, single buffered']
    #allocation24 [shape = 's32[1]{0}', space=sflag, size = 0x4, scoped, tag = 'scoped memory for tpu_custom_call.1']
    #allocation25 [shape = 'u8[512]{0}', space=vmem, size = 0x400, scoped, tag = 'input window, operand 17, single buffered']
    #allocation26 [shape = 'u8[2048]{0}', space=vmem, size = 0x800, scoped, tag = 'input window, operand 18, single buffered']
    #allocation27 [shape = 's32[1]{0}', space=sflag, size = 0x4, scoped, tag = 'scoped memory for tpu_custom_call.1']
    #allocation28 [shape = 'u8[512]{0}', space=vmem, size = 0x400, scoped, tag = 'input window, operand 19, single buffered']
    #allocation29 [shape = 'u8[2048]{0}', space=vmem, size = 0x800, scoped, tag = 'input window, operand 20, single buffered']
    #allocation30 [shape = 's32[1]{0}', space=sflag, size = 0x4, scoped, tag = 'scoped memory for tpu_custom_call.1']
    #allocation31 [shape = 'u8[512]{0}', space=vmem, size = 0x400, scoped, tag = 'input window, operand 23, single buffered']
    #allocation32 [shape = 'u8[262144]{0}', space=vmem, size = 0x40000, scoped, tag = 'input window, operand 24, single buffered']
    #allocation33 [shape = 's32[1]{0}', space=sflag, size = 0x4, scoped, tag = 'scoped memory for tpu_custom_call.1']
    #allocation34 [shape = 'u8[512]{0}', space=vmem, size = 0x400, scoped, tag = 'input window, operand 26, single buffered']
    #allocation35 [shape = 'u8[131072]{0}', space=vmem, size = 0x20000, scoped, tag = 'output window, operand 0']
    %104 = vsyncpa [#allocation3], 0
    %105 = vsyncpa [#allocation6], 0
    %106 = vsyncpa [#allocation9], 0
    %107 = vsyncpa [#allocation12], 0
    %108 = vsyncpa [#allocation15], 0
    %109 = vsyncpa [#allocation18], 0
    %110 = vsyncpa [#allocation21], 0
    %111 = vsyncpa [#allocation24], 0
    %112 = vsyncpa [#allocation27], 0
    %113 = vsyncpa [#allocation30], 0
    %114 = vsyncpa [#allocation33], 0
    %115 = vsyncpa [#allocation4], 0
    %s116 = scalar_lea.sflag [#allocation4], 1
    %117 = vsyncpa %s116, 0
    loop: start=0, step=1, limit=4
    $region2: #{tpu_custom_call.1} parent=1 // loop_pre_header
      _
    $region3: #{tpu_custom_call.1} parent=1 // loop_header
      %s119 = sphi 0, %s123
      %p120 = scmp.ge.s32.totalorder %s119, 4
      %s129 = sphi 0, %s131
      %s132 = sphi 0, %s129
      %s133 = sphi 0, %s132
      %s149 = sphi 0, %s133
      %s153 = sphi 0, %s153
      %s155 = sphi 0, %s153
      %s156 = sphi 0, %s155
      %s170 = sphi 0, %s156
      %s174 = sphi 0, %s174
      %s176 = sphi 0, %s174
      %s177 = sphi 0, %s176
      %s191 = sphi 0, %s177
      %s195 = sphi 0, %s195
      %s197 = sphi 0, %s195
      %s198 = sphi 0, %s197
      %s212 = sphi 0, %s198
      %s216 = sphi 0, %s216
      %s218 = sphi 0, %s216
      %s219 = sphi 0, %s218
      %s233 = sphi 0, %s219
      %s237 = sphi 0, %s237
      %s239 = sphi 0, %s237
      %s240 = sphi 0, %s239
      %s254 = sphi 0, %s240
      %s258 = sphi 0, %s258
      %s260 = sphi 0, %s258
      %s261 = sphi 0, %s260
      %s275 = sphi 0, %s261
      %s279 = sphi 0, %s279
      %s281 = sphi 0, %s279
      %s282 = sphi 0, %s281
      %s296 = sphi 0, %s282
      %s300 = sphi 0, %s300
      %s302 = sphi 0, %s300
      %s303 = sphi 0, %s302
      %s317 = sphi 0, %s303
      %s321 = sphi 0, %s321
      %s323 = sphi 0, %s321
      %s324 = sphi 0, %s323
      %s338 = sphi 0, %s324
      %s342 = sphi 0, %s342
      %s344 = sphi 0, %s342
      %s345 = sphi 0, %s344
      %s359 = sphi 0, %s345
      %s363 = sphi 0, %s363
      %s365 = sphi 0, %s363
      %s366 = sphi 0, %s365
      %s380 = sphi 0, %s366
      %s384 = sphi 0, %s384
      %s386 = sphi 0, %s384
      %s387 = sphi 0, %s386
      %s401 = sphi 0, %s387
      %s405 = sphi 0, %s405
      %s407 = sphi 0, %s405
      %s408 = sphi 0, %s407
      %s422 = sphi 0, %s408
      %s426 = sphi 0, %s426
      %s428 = sphi 0, %s426
      %s429 = sphi 0, %s428
      %s443 = sphi 0, %s429
      %s447 = sphi 0, %s447
      %s449 = sphi 0, %s447
      %s450 = sphi 0, %s449
      %s464 = sphi 0, %s450
      %s468 = sphi 0, %s468
      %s470 = sphi 0, %s468
      %s471 = sphi 0, %s470
      %s485 = sphi 0, %s471
      %s489 = sphi 0, %s489
      %s491 = sphi 0, %s489
      %s492 = sphi 0, %s491
      %s506 = sphi 0, %s492
      %s510 = sphi 0, %s510
      %s512 = sphi 0, %s510
      %s513 = sphi 0, %s512
      %s527 = sphi 0, %s513
      %s531 = sphi 0, %s531
      %s533 = sphi 0, %s531
      %s534 = sphi 0, %s533
      %s548 = sphi 0, %s534
      %s552 = sphi 0, %s552
      %s554 = sphi 0, %s552
      %s555 = sphi 0, %s554
      %s569 = sphi 0, %s555
      %s573 = sphi 0, %s573
      %s575 = sphi 0, %s573
      %s576 = sphi 0, %s575
      %s590 = sphi 0, %s576
      %s594 = sphi 0, %s594
      %s596 = sphi 0, %s594
      %s597 = sphi 0, %s596
      %s611 = sphi 0, %s597
      %s615 = sphi 0, %s615
      %s617 = sphi 0, %s615
      %s618 = sphi 0, %s617
      %s632 = sphi 0, %s618
      %s636 = sphi 0, %s636
      %s638 = sphi 0, %s636
      %s639 = sphi 0, %s638
      %s653 = sphi 0, %s639
      %s657 = sphi 0, %s657
      %s659 = sphi 0, %s657
      %s660 = sphi 0, %s659
      %s674 = sphi 0, %s660
      %s678 = sphi 0, %s678
      %s680 = sphi 0, %s678
      %s681 = sphi 0, %s680
      %s695 = sphi 0, %s681
      %s699 = sphi 0, %s699
      %s701 = sphi 0, %s699
      %s702 = sphi 0, %s701
      %s716 = sphi 0, %s702
      %s720 = sphi 0, %s720
      %s722 = sphi 0, %s720
      %s723 = sphi 0, %s722
      %s737 = sphi 0, %s723
      %s741 = sphi 0, %s741
      %s743 = sphi 0, %s741
      %s744 = sphi 0, %s743
      %s758 = sphi 0, %s744
      %s762 = sphi 0, %s762
      %s764 = sphi 0, %s762
      %s765 = sphi 0, %s764
      %s779 = sphi 0, %s765
      %s783 = sphi 0, %s783
      %s785 = sphi 0, %s783
      %s786 = sphi 0, %s785
      %s800 = sphi 0, %s786
      %s804 = sphi 0, %s804
      %s806 = sphi 0, %s804
      %s807 = sphi 0, %s806
      %s821 = sphi 0, %s807
      %s825 = sphi 0, %s825
      %s827 = sphi 0, %s825
      %s828 = sphi 0, %s827
      %s842 = sphi 0, %s828
      %s846 = sphi 0, %s846
      %s848 = sphi 0, %s846
      %s849 = sphi 0, %s848
      %s863 = sphi 0, %s849
      %s867 = sphi 0, %s867
      %s869 = sphi 0, %s867
      %s870 = sphi 0, %s869
      %s884 = sphi 0, %s870
      %s888 = sphi 0, %s888
      %s890 = sphi 0, %s888
      %s891 = sphi 0, %s890
      %s905 = sphi 0, %s891
      %s909 = sphi 0, %s909
      %s911 = sphi 0, %s909
      %s912 = sphi 0, %s911
      %s926 = sphi 0, %s912
      %s930 = sphi 0, %s930
      %s932 = sphi 0, %s930
      %s933 = sphi 0, %s932
      %s947 = sphi 0, %s933
      %s951 = sphi 0, %s951
      %s953 = sphi 0, %s951
      %s954 = sphi 0, %s953
      %s968 = sphi 0, %s954
      %s972 = sphi 0, %s972
      %s974 = sphi 0, %s972
      %s975 = sphi 0, %s974
      %s989 = sphi 0, %s975
      %s993 = sphi 0, %s993
      %s995 = sphi 0, %s993
      %s996 = sphi 0, %s995
      %s1010 = sphi 0, %s996
      %s1014 = sphi 0, %s1014
      %s1016 = sphi 0, %s1014
      %s1017 = sphi 0, %s1016
      %s1031 = sphi 0, %s1017
      %s1035 = sphi 0, %s1035
      %s1037 = sphi 0, %s1035
      %s1038 = sphi 0, %s1037
      %s1052 = sphi 0, %s1038
      %s1056 = sphi 0, %s1056
      %s1058 = sphi 0, %s1056
      %s1059 = sphi 0, %s1058
      %s1073 = sphi 0, %s1059
      %s1077 = sphi 0, %s1077
      %s1079 = sphi 0, %s1077
      %s1080 = sphi 0, %s1079
      %s1094 = sphi 0, %s1080
      %s1098 = sphi 0, %s1098
      %s1100 = sphi 0, %s1098
      %s1101 = sphi 0, %s1100
      %s1115 = sphi 0, %s1101
      %s1119 = sphi 0, %s1119
      %s1121 = sphi 0, %s1119
      %s1122 = sphi 0, %s1121
      %s1136 = sphi 0, %s1122
      %s1140 = sphi 0, %s1140
      %s1142 = sphi 0, %s1140
      %s1143 = sphi 0, %s1142
      %s1157 = sphi 0, %s1143
      %s1163 = sphi 0, %s1165
      %s1166 = sphi 0, %s1163
      %s1167 = sphi 0, %s1166
      %s1183 = sphi 0, %s1167
    $region4: #{tpu_custom_call.1} parent=1 // loop_header_branch
      %122 = sbr.rel (%p120) target = $region8
    $region5: #{tpu_custom_call.1} parent=1 // loop_body
      %s124 = ssub.s32 %s119, 1
      %s125 = ssub.s32 %s119, 2
      %s126 = sadd.s32 %s119, 1
      %s127 = ssub.s32 %s119, %s126
      %p128 = scmp.eq.s32.totalorder %s127, 0
      %s130 = sadd.s32 %s129, 1
      %s131 = scalar_select %p128, %s129, %s130
      %p134 = pneg %p128
      %p135 = scmp.eq.s32.totalorder %s119, 1
      %p136 = por %p134, %p135
      %p137 = scmp.ne.s32.totalorder %s129, %s132
      %p138 = scmp.eq.s32.totalorder %s119, 0
      %p139 = por %p137, %p138
      %p140 = scmp.ne.s32.totalorder %s129, %s132
      %p141 = scmp.eq.s32.totalorder %s124, 1
      %p142 = por %p140, %p141
      %p143 = scmp.ne.s32.totalorder %s132, %s133
      %p144 = scmp.eq.s32.totalorder %s124, 0
      %p145 = por %p143, %p144
      %p146 = scmp.ne.s32.totalorder %s132, %s133
      %p147 = scmp.eq.s32.totalorder %s125, 1
      %p148 = por %p146, %p147
      %p150 = scmp.ne.s32.totalorder %s133, %s149
      %p151 = scmp.eq.s32.totalorder %s125, 0
      %p152 = por %p150, %p151
      %s154 = sadd.s32 %s153, 1
      %p157 = scmp.eq.s32.totalorder %s119, 1
      %p158 = scmp.ne.s32.totalorder %s153, %s155
      %p159 = scmp.eq.s32.totalorder %s119, 0
      %p160 = por %p158, %p159
      %p161 = scmp.ne.s32.totalorder %s153, %s155
      %p162 = scmp.eq.s32.totalorder %s124, 1
      %p163 = por %p161, %p162
      %p164 = scmp.ne.s32.totalorder %s155, %s156
      %p165 = scmp.eq.s32.totalorder %s124, 0
      %p166 = por %p164, %p165
      %p167 = scmp.ne.s32.totalorder %s155, %s156
      %p168 = scmp.eq.s32.totalorder %s125, 1
      %p169 = por %p167, %p168
      %p171 = scmp.ne.s32.totalorder %s156, %s170
      %p172 = scmp.eq.s32.totalorder %s125, 0
      %p173 = por %p171, %p172
      %s175 = sadd.s32 %s174, 1
      %p178 = scmp.eq.s32.totalorder %s119, 1
      %p179 = scmp.ne.s32.totalorder %s174, %s176
      %p180 = scmp.eq.s32.totalorder %s119, 0
      %p181 = por %p179, %p180
      %p182 = scmp.ne.s32.totalorder %s174, %s176
      %p183 = scmp.eq.s32.totalorder %s124, 1
      %p184 = por %p182, %p183
      %p185 = scmp.ne.s32.totalorder %s176, %s177
      %p186 = scmp.eq.s32.totalorder %s124, 0
      %p187 = por %p185, %p186
      %p188 = scmp.ne.s32.totalorder %s176, %s177
      %p189 = scmp.eq.s32.totalorder %s125, 1
      %p190 = por %p188, %p189
      %p192 = scmp.ne.s32.totalorder %s177, %s191
      %p193 = scmp.eq.s32.totalorder %s125, 0
      %p194 = por %p192, %p193
      %s196 = sadd.s32 %s195, 1
      %p199 = scmp.eq.s32.totalorder %s119, 1
      %p200 = scmp.ne.s32.totalorder %s195, %s197
      %p201 = scmp.eq.s32.totalorder %s119, 0
      %p202 = por %p200, %p201
      %p203 = scmp.ne.s32.totalorder %s195, %s197
      %p204 = scmp.eq.s32.totalorder %s124, 1
      %p205 = por %p203, %p204
      %p206 = scmp.ne.s32.totalorder %s197, %s198
      %p207 = scmp.eq.s32.totalorder %s124, 0
      %p208 = por %p206, %p207
      %p209 = scmp.ne.s32.totalorder %s197, %s198
      %p210 = scmp.eq.s32.totalorder %s125, 1
      %p211 = por %p209, %p210
      %p213 = scmp.ne.s32.totalorder %s198, %s212
      %p214 = scmp.eq.s32.totalorder %s125, 0
      %p215 = por %p213, %p214
      %s217 = sadd.s32 %s216, 1
      %p220 = scmp.eq.s32.totalorder %s119, 1
      %p221 = scmp.ne.s32.totalorder %s216, %s218
      %p222 = scmp.eq.s32.totalorder %s119, 0
      %p223 = por %p221, %p222
      %p224 = scmp.ne.s32.totalorder %s216, %s218
      %p225 = scmp.eq.s32.totalorder %s124, 1
      %p226 = por %p224, %p225
      %p227 = scmp.ne.s32.totalorder %s218, %s219
      %p228 = scmp.eq.s32.totalorder %s124, 0
      %p229 = por %p227, %p228
      %p230 = scmp.ne.s32.totalorder %s218, %s219
      %p231 = scmp.eq.s32.totalorder %s125, 1
      %p232 = por %p230, %p231
      %p234 = scmp.ne.s32.totalorder %s219, %s233
      %p235 = scmp.eq.s32.totalorder %s125, 0
      %p236 = por %p234, %p235
      %s238 = sadd.s32 %s237, 1
      %p241 = scmp.eq.s32.totalorder %s119, 1
      %p242 = scmp.ne.s32.totalorder %s237, %s239
      %p243 = scmp.eq.s32.totalorder %s119, 0
      %p244 = por %p242, %p243
      %p245 = scmp.ne.s32.totalorder %s237, %s239
      %p246 = scmp.eq.s32.totalorder %s124, 1
      %p247 = por %p245, %p246
      %p248 = scmp.ne.s32.totalorder %s239, %s240
      %p249 = scmp.eq.s32.totalorder %s124, 0
      %p250 = por %p248, %p249
      %p251 = scmp.ne.s32.totalorder %s239, %s240
      %p252 = scmp.eq.s32.totalorder %s125, 1
      %p253 = por %p251, %p252
      %p255 = scmp.ne.s32.totalorder %s240, %s254
      %p256 = scmp.eq.s32.totalorder %s125, 0
      %p257 = por %p255, %p256
      %s259 = sadd.s32 %s258, 1
      %p262 = scmp.eq.s32.totalorder %s119, 1
      %p263 = scmp.ne.s32.totalorder %s258, %s260
      %p264 = scmp.eq.s32.totalorder %s119, 0
      %p265 = por %p263, %p264
      %p266 = scmp.ne.s32.totalorder %s258, %s260
      %p267 = scmp.eq.s32.totalorder %s124, 1
      %p268 = por %p266, %p267
      %p269 = scmp.ne.s32.totalorder %s260, %s261
      %p270 = scmp.eq.s32.totalorder %s124, 0
      %p271 = por %p269, %p270
      %p272 = scmp.ne.s32.totalorder %s260, %s261
      %p273 = scmp.eq.s32.totalorder %s125, 1
      %p274 = por %p272, %p273
      %p276 = scmp.ne.s32.totalorder %s261, %s275
      %p277 = scmp.eq.s32.totalorder %s125, 0
      %p278 = por %p276, %p277
      %s280 = sadd.s32 %s279, 1
      %p283 = scmp.eq.s32.totalorder %s119, 1
      %p284 = scmp.ne.s32.totalorder %s279, %s281
      %p285 = scmp.eq.s32.totalorder %s119, 0
      %p286 = por %p284, %p285
      %p287 = scmp.ne.s32.totalorder %s279, %s281
      %p288 = scmp.eq.s32.totalorder %s124, 1
      %p289 = por %p287, %p288
      %p290 = scmp.ne.s32.totalorder %s281, %s282
      %p291 = scmp.eq.s32.totalorder %s124, 0
      %p292 = por %p290, %p291
      %p293 = scmp.ne.s32.totalorder %s281, %s282
      %p294 = scmp.eq.s32.totalorder %s125, 1
      %p295 = por %p293, %p294
      %p297 = scmp.ne.s32.totalorder %s282, %s296
      %p298 = scmp.eq.s32.totalorder %s125, 0
      %p299 = por %p297, %p298
      %s301 = sadd.s32 %s300, 1
      %p304 = scmp.eq.s32.totalorder %s119, 1
      %p305 = scmp.ne.s32.totalorder %s300, %s302
      %p306 = scmp.eq.s32.totalorder %s119, 0
      %p307 = por %p305, %p306
      %p308 = scmp.ne.s32.totalorder %s300, %s302
      %p309 = scmp.eq.s32.totalorder %s124, 1
      %p310 = por %p308, %p309
      %p311 = scmp.ne.s32.totalorder %s302, %s303
      %p312 = scmp.eq.s32.totalorder %s124, 0
      %p313 = por %p311, %p312
      %p314 = scmp.ne.s32.totalorder %s302, %s303
      %p315 = scmp.eq.s32.totalorder %s125, 1
      %p316 = por %p314, %p315
      %p318 = scmp.ne.s32.totalorder %s303, %s317
      %p319 = scmp.eq.s32.totalorder %s125, 0
      %p320 = por %p318, %p319
      %s322 = sadd.s32 %s321, 1
      %p325 = scmp.eq.s32.totalorder %s119, 1
      %p326 = scmp.ne.s32.totalorder %s321, %s323
      %p327 = scmp.eq.s32.totalorder %s119, 0
      %p328 = por %p326, %p327
      %p329 = scmp.ne.s32.totalorder %s321, %s323
      %p330 = scmp.eq.s32.totalorder %s124, 1
      %p331 = por %p329, %p330
      %p332 = scmp.ne.s32.totalorder %s323, %s324
      %p333 = scmp.eq.s32.totalorder %s124, 0
      %p334 = por %p332, %p333
      %p335 = scmp.ne.s32.totalorder %s323, %s324
      %p336 = scmp.eq.s32.totalorder %s125, 1
      %p337 = por %p335, %p336
      %p339 = scmp.ne.s32.totalorder %s324, %s338
      %p340 = scmp.eq.s32.totalorder %s125, 0
      %p341 = por %p339, %p340
      %s343 = sadd.s32 %s342, 1
      %p346 = scmp.eq.s32.totalorder %s119, 1
      %p347 = scmp.ne.s32.totalorder %s342, %s344
      %p348 = scmp.eq.s32.totalorder %s119, 0
      %p349 = por %p347, %p348
      %p350 = scmp.ne.s32.totalorder %s342, %s344
      %p351 = scmp.eq.s32.totalorder %s124, 1
      %p352 = por %p350, %p351
      %p353 = scmp.ne.s32.totalorder %s344, %s345
      %p354 = scmp.eq.s32.totalorder %s124, 0
      %p355 = por %p353, %p354
      %p356 = scmp.ne.s32.totalorder %s344, %s345
      %p357 = scmp.eq.s32.totalorder %s125, 1
      %p358 = por %p356, %p357
      %p360 = scmp.ne.s32.totalorder %s345, %s359
      %p361 = scmp.eq.s32.totalorder %s125, 0
      %p362 = por %p360, %p361
      %s364 = sadd.s32 %s363, 1
      %p367 = scmp.eq.s32.totalorder %s119, 1
      %p368 = scmp.ne.s32.totalorder %s363, %s365
      %p369 = scmp.eq.s32.totalorder %s119, 0
      %p370 = por %p368, %p369
      %p371 = scmp.ne.s32.totalorder %s363, %s365
      %p372 = scmp.eq.s32.totalorder %s124, 1
      %p373 = por %p371, %p372
      %p374 = scmp.ne.s32.totalorder %s365, %s366
      %p375 = scmp.eq.s32.totalorder %s124, 0
      %p376 = por %p374, %p375
      %p377 = scmp.ne.s32.totalorder %s365, %s366
      %p378 = scmp.eq.s32.totalorder %s125, 1
      %p379 = por %p377, %p378
      %p381 = scmp.ne.s32.totalorder %s366, %s380
      %p382 = scmp.eq.s32.totalorder %s125, 0
      %p383 = por %p381, %p382
      %s385 = sadd.s32 %s384, 1
      %p388 = scmp.eq.s32.totalorder %s119, 1
      %p389 = scmp.ne.s32.totalorder %s384, %s386
      %p390 = scmp.eq.s32.totalorder %s119, 0
      %p391 = por %p389, %p390
      %p392 = scmp.ne.s32.totalorder %s384, %s386
      %p393 = scmp.eq.s32.totalorder %s124, 1
      %p394 = por %p392, %p393
      %p395 = scmp.ne.s32.totalorder %s386, %s387
      %p396 = scmp.eq.s32.totalorder %s124, 0
      %p397 = por %p395, %p396
      %p398 = scmp.ne.s32.totalorder %s386, %s387
      %p399 = scmp.eq.s32.totalorder %s125, 1
      %p400 = por %p398, %p399
      %p402 = scmp.ne.s32.totalorder %s387, %s401
      %p403 = scmp.eq.s32.totalorder %s125, 0
      %p404 = por %p402, %p403
      %s406 = sadd.s32 %s405, 1
      %p409 = scmp.eq.s32.totalorder %s119, 1
      %p410 = scmp.ne.s32.totalorder %s405, %s407
      %p411 = scmp.eq.s32.totalorder %s119, 0
      %p412 = por %p410, %p411
      %p413 = scmp.ne.s32.totalorder %s405, %s407
      %p414 = scmp.eq.s32.totalorder %s124, 1
      %p415 = por %p413, %p414
      %p416 = scmp.ne.s32.totalorder %s407, %s408
      %p417 = scmp.eq.s32.totalorder %s124, 0
      %p418 = por %p416, %p417
      %p419 = scmp.ne.s32.totalorder %s407, %s408
      %p420 = scmp.eq.s32.totalorder %s125, 1
      %p421 = por %p419, %p420
      %p423 = scmp.ne.s32.totalorder %s408, %s422
      %p424 = scmp.eq.s32.totalorder %s125, 0
      %p425 = por %p423, %p424
      %s427 = sadd.s32 %s426, 1
      %p430 = scmp.eq.s32.totalorder %s119, 1
      %p431 = scmp.ne.s32.totalorder %s426, %s428
      %p432 = scmp.eq.s32.totalorder %s119, 0
      %p433 = por %p431, %p432
      %p434 = scmp.ne.s32.totalorder %s426, %s428
      %p435 = scmp.eq.s32.totalorder %s124, 1
      %p436 = por %p434, %p435
      %p437 = scmp.ne.s32.totalorder %s428, %s429
      %p438 = scmp.eq.s32.totalorder %s124, 0
      %p439 = por %p437, %p438
      %p440 = scmp.ne.s32.totalorder %s428, %s429
      %p441 = scmp.eq.s32.totalorder %s125, 1
      %p442 = por %p440, %p441
      %p444 = scmp.ne.s32.totalorder %s429, %s443
      %p445 = scmp.eq.s32.totalorder %s125, 0
      %p446 = por %p444, %p445
      %s448 = sadd.s32 %s447, 1
      %p451 = scmp.eq.s32.totalorder %s119, 1
      %p452 = scmp.ne.s32.totalorder %s447, %s449
      %p453 = scmp.eq.s32.totalorder %s119, 0
      %p454 = por %p452, %p453
      %p455 = scmp.ne.s32.totalorder %s447, %s449
      %p456 = scmp.eq.s32.totalorder %s124, 1
      %p457 = por %p455, %p456
      %p458 = scmp.ne.s32.totalorder %s449, %s450
      %p459 = scmp.eq.s32.totalorder %s124, 0
      %p460 = por %p458, %p459
      %p461 = scmp.ne.s32.totalorder %s449, %s450
      %p462 = scmp.eq.s32.totalorder %s125, 1
      %p463 = por %p461, %p462
      %p465 = scmp.ne.s32.totalorder %s450, %s464
      %p466 = scmp.eq.s32.totalorder %s125, 0
      %p467 = por %p465, %p466
      %s469 = sadd.s32 %s468, 1
      %p472 = scmp.eq.s32.totalorder %s119, 1
      %p473 = scmp.ne.s32.totalorder %s468, %s470
      %p474 = scmp.eq.s32.totalorder %s119, 0
      %p475 = por %p473, %p474
      %p476 = scmp.ne.s32.totalorder %s468, %s470
      %p477 = scmp.eq.s32.totalorder %s124, 1
      %p478 = por %p476, %p477
      %p479 = scmp.ne.s32.totalorder %s470, %s471
      %p480 = scmp.eq.s32.totalorder %s124, 0
      %p481 = por %p479, %p480
      %p482 = scmp.ne.s32.totalorder %s470, %s471
      %p483 = scmp.eq.s32.totalorder %s125, 1
      %p484 = por %p482, %p483
      %p486 = scmp.ne.s32.totalorder %s471, %s485
      %p487 = scmp.eq.s32.totalorder %s125, 0
      %p488 = por %p486, %p487
      %s490 = sadd.s32 %s489, 1
      %p493 = scmp.eq.s32.totalorder %s119, 1
      %p494 = scmp.ne.s32.totalorder %s489, %s491
      %p495 = scmp.eq.s32.totalorder %s119, 0
      %p496 = por %p494, %p495
      %p497 = scmp.ne.s32.totalorder %s489, %s491
      %p498 = scmp.eq.s32.totalorder %s124, 1
      %p499 = por %p497, %p498
      %p500 = scmp.ne.s32.totalorder %s491, %s492
      %p501 = scmp.eq.s32.totalorder %s124, 0
      %p502 = por %p500, %p501
      %p503 = scmp.ne.s32.totalorder %s491, %s492
      %p504 = scmp.eq.s32.totalorder %s125, 1
      %p505 = por %p503, %p504
      %p507 = scmp.ne.s32.totalorder %s492, %s506
      %p508 = scmp.eq.s32.totalorder %s125, 0
      %p509 = por %p507, %p508
      %s511 = sadd.s32 %s510, 1
      %p514 = scmp.eq.s32.totalorder %s119, 1
      %p515 = scmp.ne.s32.totalorder %s510, %s512
      %p516 = scmp.eq.s32.totalorder %s119, 0
      %p517 = por %p515, %p516
      %p518 = scmp.ne.s32.totalorder %s510, %s512
      %p519 = scmp.eq.s32.totalorder %s124, 1
      %p520 = por %p518, %p519
      %p521 = scmp.ne.s32.totalorder %s512, %s513
      %p522 = scmp.eq.s32.totalorder %s124, 0
      %p523 = por %p521, %p522
      %p524 = scmp.ne.s32.totalorder %s512, %s513
      %p525 = scmp.eq.s32.totalorder %s125, 1
      %p526 = por %p524, %p525
      %p528 = scmp.ne.s32.totalorder %s513, %s527
      %p529 = scmp.eq.s32.totalorder %s125, 0
      %p530 = por %p528, %p529
      %s532 = sadd.s32 %s531, 1
      %p535 = scmp.eq.s32.totalorder %s119, 1
      %p536 = scmp.ne.s32.totalorder %s531, %s533
      %p537 = scmp.eq.s32.totalorder %s119, 0
      %p538 = por %p536, %p537
      %p539 = scmp.ne.s32.totalorder %s531, %s533
      %p540 = scmp.eq.s32.totalorder %s124, 1
      %p541 = por %p539, %p540
      %p542 = scmp.ne.s32.totalorder %s533, %s534
      %p543 = scmp.eq.s32.totalorder %s124, 0
      %p544 = por %p542, %p543
      %p545 = scmp.ne.s32.totalorder %s533, %s534
      %p546 = scmp.eq.s32.totalorder %s125, 1
      %p547 = por %p545, %p546
      %p549 = scmp.ne.s32.totalorder %s534, %s548
      %p550 = scmp.eq.s32.totalorder %s125, 0
      %p551 = por %p549, %p550
      %s553 = sadd.s32 %s552, 1
      %p556 = scmp.eq.s32.totalorder %s119, 1
      %p557 = scmp.ne.s32.totalorder %s552, %s554
      %p558 = scmp.eq.s32.totalorder %s119, 0
      %p559 = por %p557, %p558
      %p560 = scmp.ne.s32.totalorder %s552, %s554
      %p561 = scmp.eq.s32.totalorder %s124, 1
      %p562 = por %p560, %p561
      %p563 = scmp.ne.s32.totalorder %s554, %s555
      %p564 = scmp.eq.s32.totalorder %s124, 0
      %p565 = por %p563, %p564
      %p566 = scmp.ne.s32.totalorder %s554, %s555
      %p567 = scmp.eq.s32.totalorder %s125, 1
      %p568 = por %p566, %p567
      %p570 = scmp.ne.s32.totalorder %s555, %s569
      %p571 = scmp.eq.s32.totalorder %s125, 0
      %p572 = por %p570, %p571
      %s574 = sadd.s32 %s573, 1
      %p577 = scmp.eq.s32.totalorder %s119, 1
      %p578 = scmp.ne.s32.totalorder %s573, %s575
      %p579 = scmp.eq.s32.totalorder %s119, 0
      %p580 = por %p578, %p579
      %p581 = scmp.ne.s32.totalorder %s573, %s575
      %p582 = scmp.eq.s32.totalorder %s124, 1
      %p583 = por %p581, %p582
      %p584 = scmp.ne.s32.totalorder %s575, %s576
      %p585 = scmp.eq.s32.totalorder %s124, 0
      %p586 = por %p584, %p585
      %p587 = scmp.ne.s32.totalorder %s575, %s576
      %p588 = scmp.eq.s32.totalorder %s125, 1
      %p589 = por %p587, %p588
      %p591 = scmp.ne.s32.totalorder %s576, %s590
      %p592 = scmp.eq.s32.totalorder %s125, 0
      %p593 = por %p591, %p592
      %s595 = sadd.s32 %s594, 1
      %p598 = scmp.eq.s32.totalorder %s119, 1
      %p599 = scmp.ne.s32.totalorder %s594, %s596
      %p600 = scmp.eq.s32.totalorder %s119, 0
      %p601 = por %p599, %p600
      %p602 = scmp.ne.s32.totalorder %s594, %s596
      %p603 = scmp.eq.s32.totalorder %s124, 1
      %p604 = por %p602, %p603
      %p605 = scmp.ne.s32.totalorder %s596, %s597
      %p606 = scmp.eq.s32.totalorder %s124, 0
      %p607 = por %p605, %p606
      %p608 = scmp.ne.s32.totalorder %s596, %s597
      %p609 = scmp.eq.s32.totalorder %s125, 1
      %p610 = por %p608, %p609
      %p612 = scmp.ne.s32.totalorder %s597, %s611
      %p613 = scmp.eq.s32.totalorder %s125, 0
      %p614 = por %p612, %p613
      %s616 = sadd.s32 %s615, 1
      %p619 = scmp.eq.s32.totalorder %s119, 1
      %p620 = scmp.ne.s32.totalorder %s615, %s617
      %p621 = scmp.eq.s32.totalorder %s119, 0
      %p622 = por %p620, %p621
      %p623 = scmp.ne.s32.totalorder %s615, %s617
      %p624 = scmp.eq.s32.totalorder %s124, 1
      %p625 = por %p623, %p624
      %p626 = scmp.ne.s32.totalorder %s617, %s618
      %p627 = scmp.eq.s32.totalorder %s124, 0
      %p628 = por %p626, %p627
      %p629 = scmp.ne.s32.totalorder %s617, %s618
      %p630 = scmp.eq.s32.totalorder %s125, 1
      %p631 = por %p629, %p630
      %p633 = scmp.ne.s32.totalorder %s618, %s632
      %p634 = scmp.eq.s32.totalorder %s125, 0
      %p635 = por %p633, %p634
      %s637 = sadd.s32 %s636, 1
      %p640 = scmp.eq.s32.totalorder %s119, 1
      %p641 = scmp.ne.s32.totalorder %s636, %s638
      %p642 = scmp.eq.s32.totalorder %s119, 0
      %p643 = por %p641, %p642
      %p644 = scmp.ne.s32.totalorder %s636, %s638
      %p645 = scmp.eq.s32.totalorder %s124, 1
      %p646 = por %p644, %p645
      %p647 = scmp.ne.s32.totalorder %s638, %s639
      %p648 = scmp.eq.s32.totalorder %s124, 0
      %p649 = por %p647, %p648
      %p650 = scmp.ne.s32.totalorder %s638, %s639
      %p651 = scmp.eq.s32.totalorder %s125, 1
      %p652 = por %p650, %p651
      %p654 = scmp.ne.s32.totalorder %s639, %s653
      %p655 = scmp.eq.s32.totalorder %s125, 0
      %p656 = por %p654, %p655
      %s658 = sadd.s32 %s657, 1
      %p661 = scmp.eq.s32.totalorder %s119, 1
      %p662 = scmp.ne.s32.totalorder %s657, %s659
      %p663 = scmp.eq.s32.totalorder %s119, 0
      %p664 = por %p662, %p663
      %p665 = scmp.ne.s32.totalorder %s657, %s659
      %p666 = scmp.eq.s32.totalorder %s124, 1
      %p667 = por %p665, %p666
      %p668 = scmp.ne.s32.totalorder %s659, %s660
      %p669 = scmp.eq.s32.totalorder %s124, 0
      %p670 = por %p668, %p669
      %p671 = scmp.ne.s32.totalorder %s659, %s660
      %p672 = scmp.eq.s32.totalorder %s125, 1
      %p673 = por %p671, %p672
      %p675 = scmp.ne.s32.totalorder %s660, %s674
      %p676 = scmp.eq.s32.totalorder %s125, 0
      %p677 = por %p675, %p676
      %s679 = sadd.s32 %s678, 1
      %p682 = scmp.eq.s32.totalorder %s119, 1
      %p683 = scmp.ne.s32.totalorder %s678, %s680
      %p684 = scmp.eq.s32.totalorder %s119, 0
      %p685 = por %p683, %p684
      %p686 = scmp.ne.s32.totalorder %s678, %s680
      %p687 = scmp.eq.s32.totalorder %s124, 1
      %p688 = por %p686, %p687
      %p689 = scmp.ne.s32.totalorder %s680, %s681
      %p690 = scmp.eq.s32.totalorder %s124, 0
      %p691 = por %p689, %p690
      %p692 = scmp.ne.s32.totalorder %s680, %s681
      %p693 = scmp.eq.s32.totalorder %s125, 1
      %p694 = por %p692, %p693
      %p696 = scmp.ne.s32.totalorder %s681, %s695
      %p697 = scmp.eq.s32.totalorder %s125, 0
      %p698 = por %p696, %p697
      %s700 = sadd.s32 %s699, 1
      %p703 = scmp.eq.s32.totalorder %s119, 1
      %p704 = scmp.ne.s32.totalorder %s699, %s701
      %p705 = scmp.eq.s32.totalorder %s119, 0
      %p706 = por %p704, %p705
      %p707 = scmp.ne.s32.totalorder %s699, %s701
      %p708 = scmp.eq.s32.totalorder %s124, 1
      %p709 = por %p707, %p708
      %p710 = scmp.ne.s32.totalorder %s701, %s702
      %p711 = scmp.eq.s32.totalorder %s124, 0
      %p712 = por %p710, %p711
      %p713 = scmp.ne.s32.totalorder %s701, %s702
      %p714 = scmp.eq.s32.totalorder %s125, 1
      %p715 = por %p713, %p714
      %p717 = scmp.ne.s32.totalorder %s702, %s716
      %p718 = scmp.eq.s32.totalorder %s125, 0
      %p719 = por %p717, %p718
      %s721 = sadd.s32 %s720, 1
      %p724 = scmp.eq.s32.totalorder %s119, 1
      %p725 = scmp.ne.s32.totalorder %s720, %s722
      %p726 = scmp.eq.s32.totalorder %s119, 0
      %p727 = por %p725, %p726
      %p728 = scmp.ne.s32.totalorder %s720, %s722
      %p729 = scmp.eq.s32.totalorder %s124, 1
      %p730 = por %p728, %p729
      %p731 = scmp.ne.s32.totalorder %s722, %s723
      %p732 = scmp.eq.s32.totalorder %s124, 0
      %p733 = por %p731, %p732
      %p734 = scmp.ne.s32.totalorder %s722, %s723
      %p735 = scmp.eq.s32.totalorder %s125, 1
      %p736 = por %p734, %p735
      %p738 = scmp.ne.s32.totalorder %s723, %s737
      %p739 = scmp.eq.s32.totalorder %s125, 0
      %p740 = por %p738, %p739
      %s742 = sadd.s32 %s741, 1
      %p745 = scmp.eq.s32.totalorder %s119, 1
      %p746 = scmp.ne.s32.totalorder %s741, %s743
      %p747 = scmp.eq.s32.totalorder %s119, 0
      %p748 = por %p746, %p747
      %p749 = scmp.ne.s32.totalorder %s741, %s743
      %p750 = scmp.eq.s32.totalorder %s124, 1
      %p751 = por %p749, %p750
      %p752 = scmp.ne.s32.totalorder %s743, %s744
      %p753 = scmp.eq.s32.totalorder %s124, 0
      %p754 = por %p752, %p753
      %p755 = scmp.ne.s32.totalorder %s743, %s744
      %p756 = scmp.eq.s32.totalorder %s125, 1
      %p757 = por %p755, %p756
      %p759 = scmp.ne.s32.totalorder %s744, %s758
      %p760 = scmp.eq.s32.totalorder %s125, 0
      %p761 = por %p759, %p760
      %s763 = sadd.s32 %s762, 1
      %p766 = scmp.eq.s32.totalorder %s119, 1
      %p767 = scmp.ne.s32.totalorder %s762, %s764
      %p768 = scmp.eq.s32.totalorder %s119, 0
      %p769 = por %p767, %p768
      %p770 = scmp.ne.s32.totalorder %s762, %s764
      %p771 = scmp.eq.s32.totalorder %s124, 1
      %p772 = por %p770, %p771
      %p773 = scmp.ne.s32.totalorder %s764, %s765
      %p774 = scmp.eq.s32.totalorder %s124, 0
      %p775 = por %p773, %p774
      %p776 = scmp.ne.s32.totalorder %s764, %s765
      %p777 = scmp.eq.s32.totalorder %s125, 1
      %p778 = por %p776, %p777
      %p780 = scmp.ne.s32.totalorder %s765, %s779
      %p781 = scmp.eq.s32.totalorder %s125, 0
      %p782 = por %p780, %p781
      %s784 = sadd.s32 %s783, 1
      %p787 = scmp.eq.s32.totalorder %s119, 1
      %p788 = scmp.ne.s32.totalorder %s783, %s785
      %p789 = scmp.eq.s32.totalorder %s119, 0
      %p790 = por %p788, %p789
      %p791 = scmp.ne.s32.totalorder %s783, %s785
      %p792 = scmp.eq.s32.totalorder %s124, 1
      %p793 = por %p791, %p792
      %p794 = scmp.ne.s32.totalorder %s785, %s786
      %p795 = scmp.eq.s32.totalorder %s124, 0
      %p796 = por %p794, %p795
      %p797 = scmp.ne.s32.totalorder %s785, %s786
      %p798 = scmp.eq.s32.totalorder %s125, 1
      %p799 = por %p797, %p798
      %p801 = scmp.ne.s32.totalorder %s786, %s800
      %p802 = scmp.eq.s32.totalorder %s125, 0
      %p803 = por %p801, %p802
      %s805 = sadd.s32 %s804, 1
      %p808 = scmp.eq.s32.totalorder %s119, 1
      %p809 = scmp.ne.s32.totalorder %s804, %s806
      %p810 = scmp.eq.s32.totalorder %s119, 0
      %p811 = por %p809, %p810
      %p812 = scmp.ne.s32.totalorder %s804, %s806
      %p813 = scmp.eq.s32.totalorder %s124, 1
      %p814 = por %p812, %p813
      %p815 = scmp.ne.s32.totalorder %s806, %s807
      %p816 = scmp.eq.s32.totalorder %s124, 0
      %p817 = por %p815, %p816
      %p818 = scmp.ne.s32.totalorder %s806, %s807
      %p819 = scmp.eq.s32.totalorder %s125, 1
      %p820 = por %p818, %p819
      %p822 = scmp.ne.s32.totalorder %s807, %s821
      %p823 = scmp.eq.s32.totalorder %s125, 0
      %p824 = por %p822, %p823
      %s826 = sadd.s32 %s825, 1
      %p829 = scmp.eq.s32.totalorder %s119, 1
      %p830 = scmp.ne.s32.totalorder %s825, %s827
      %p831 = scmp.eq.s32.totalorder %s119, 0
      %p832 = por %p830, %p831
      %p833 = scmp.ne.s32.totalorder %s825, %s827
      %p834 = scmp.eq.s32.totalorder %s124, 1
      %p835 = por %p833, %p834
      %p836 = scmp.ne.s32.totalorder %s827, %s828
      %p837 = scmp.eq.s32.totalorder %s124, 0
      %p838 = por %p836, %p837
      %p839 = scmp.ne.s32.totalorder %s827, %s828
      %p840 = scmp.eq.s32.totalorder %s125, 1
      %p841 = por %p839, %p840
      %p843 = scmp.ne.s32.totalorder %s828, %s842
      %p844 = scmp.eq.s32.totalorder %s125, 0
      %p845 = por %p843, %p844
      %s847 = sadd.s32 %s846, 1
      %p850 = scmp.eq.s32.totalorder %s119, 1
      %p851 = scmp.ne.s32.totalorder %s846, %s848
      %p852 = scmp.eq.s32.totalorder %s119, 0
      %p853 = por %p851, %p852
      %p854 = scmp.ne.s32.totalorder %s846, %s848
      %p855 = scmp.eq.s32.totalorder %s124, 1
      %p856 = por %p854, %p855
      %p857 = scmp.ne.s32.totalorder %s848, %s849
      %p858 = scmp.eq.s32.totalorder %s124, 0
      %p859 = por %p857, %p858
      %p860 = scmp.ne.s32.totalorder %s848, %s849
      %p861 = scmp.eq.s32.totalorder %s125, 1
      %p862 = por %p860, %p861
      %p864 = scmp.ne.s32.totalorder %s849, %s863
      %p865 = scmp.eq.s32.totalorder %s125, 0
      %p866 = por %p864, %p865
      %s868 = sadd.s32 %s867, 1
      %p871 = scmp.eq.s32.totalorder %s119, 1
      %p872 = scmp.ne.s32.totalorder %s867, %s869
      %p873 = scmp.eq.s32.totalorder %s119, 0
      %p874 = por %p872, %p873
      %p875 = scmp.ne.s32.totalorder %s867, %s869
      %p876 = scmp.eq.s32.totalorder %s124, 1
      %p877 = por %p875, %p876
      %p878 = scmp.ne.s32.totalorder %s869, %s870
      %p879 = scmp.eq.s32.totalorder %s124, 0
      %p880 = por %p878, %p879
      %p881 = scmp.ne.s32.totalorder %s869, %s870
      %p882 = scmp.eq.s32.totalorder %s125, 1
      %p883 = por %p881, %p882
      %p885 = scmp.ne.s32.totalorder %s870, %s884
      %p886 = scmp.eq.s32.totalorder %s125, 0
      %p887 = por %p885, %p886
      %s889 = sadd.s32 %s888, 1
      %p892 = scmp.eq.s32.totalorder %s119, 1
      %p893 = scmp.ne.s32.totalorder %s888, %s890
      %p894 = scmp.eq.s32.totalorder %s119, 0
      %p895 = por %p893, %p894
      %p896 = scmp.ne.s32.totalorder %s888, %s890
      %p897 = scmp.eq.s32.totalorder %s124, 1
      %p898 = por %p896, %p897
      %p899 = scmp.ne.s32.totalorder %s890, %s891
      %p900 = scmp.eq.s32.totalorder %s124, 0
      %p901 = por %p899, %p900
      %p902 = scmp.ne.s32.totalorder %s890, %s891
      %p903 = scmp.eq.s32.totalorder %s125, 1
      %p904 = por %p902, %p903
      %p906 = scmp.ne.s32.totalorder %s891, %s905
      %p907 = scmp.eq.s32.totalorder %s125, 0
      %p908 = por %p906, %p907
      %s910 = sadd.s32 %s909, 1
      %p913 = scmp.eq.s32.totalorder %s119, 1
      %p914 = scmp.ne.s32.totalorder %s909, %s911
      %p915 = scmp.eq.s32.totalorder %s119, 0
      %p916 = por %p914, %p915
      %p917 = scmp.ne.s32.totalorder %s909, %s911
      %p918 = scmp.eq.s32.totalorder %s124, 1
      %p919 = por %p917, %p918
      %p920 = scmp.ne.s32.totalorder %s911, %s912
      %p921 = scmp.eq.s32.totalorder %s124, 0
      %p922 = por %p920, %p921
      %p923 = scmp.ne.s32.totalorder %s911, %s912
      %p924 = scmp.eq.s32.totalorder %s125, 1
      %p925 = por %p923, %p924
      %p927 = scmp.ne.s32.totalorder %s912, %s926
      %p928 = scmp.eq.s32.totalorder %s125, 0
      %p929 = por %p927, %p928
      %s931 = sadd.s32 %s930, 1
      %p934 = scmp.eq.s32.totalorder %s119, 1
      %p935 = scmp.ne.s32.totalorder %s930, %s932
      %p936 = scmp.eq.s32.totalorder %s119, 0
      %p937 = por %p935, %p936
      %p938 = scmp.ne.s32.totalorder %s930, %s932
      %p939 = scmp.eq.s32.totalorder %s124, 1
      %p940 = por %p938, %p939
      %p941 = scmp.ne.s32.totalorder %s932, %s933
      %p942 = scmp.eq.s32.totalorder %s124, 0
      %p943 = por %p941, %p942
      %p944 = scmp.ne.s32.totalorder %s932, %s933
      %p945 = scmp.eq.s32.totalorder %s125, 1
      %p946 = por %p944, %p945
      %p948 = scmp.ne.s32.totalorder %s933, %s947
      %p949 = scmp.eq.s32.totalorder %s125, 0
      %p950 = por %p948, %p949
      %s952 = sadd.s32 %s951, 1
      %p955 = scmp.eq.s32.totalorder %s119, 1
      %p956 = scmp.ne.s32.totalorder %s951, %s953
      %p957 = scmp.eq.s32.totalorder %s119, 0
      %p958 = por %p956, %p957
      %p959 = scmp.ne.s32.totalorder %s951, %s953
      %p960 = scmp.eq.s32.totalorder %s124, 1
      %p961 = por %p959, %p960
      %p962 = scmp.ne.s32.totalorder %s953, %s954
      %p963 = scmp.eq.s32.totalorder %s124, 0
      %p964 = por %p962, %p963
      %p965 = scmp.ne.s32.totalorder %s953, %s954
      %p966 = scmp.eq.s32.totalorder %s125, 1
      %p967 = por %p965, %p966
      %p969 = scmp.ne.s32.totalorder %s954, %s968
      %p970 = scmp.eq.s32.totalorder %s125, 0
      %p971 = por %p969, %p970
      %s973 = sadd.s32 %s972, 1
      %p976 = scmp.eq.s32.totalorder %s119, 1
      %p977 = scmp.ne.s32.totalorder %s972, %s974
      %p978 = scmp.eq.s32.totalorder %s119, 0
      %p979 = por %p977, %p978
      %p980 = scmp.ne.s32.totalorder %s972, %s974
      %p981 = scmp.eq.s32.totalorder %s124, 1
      %p982 = por %p980, %p981
      %p983 = scmp.ne.s32.totalorder %s974, %s975
      %p984 = scmp.eq.s32.totalorder %s124, 0
      %p985 = por %p983, %p984
      %p986 = scmp.ne.s32.totalorder %s974, %s975
      %p987 = scmp.eq.s32.totalorder %s125, 1
      %p988 = por %p986, %p987
      %p990 = scmp.ne.s32.totalorder %s975, %s989
      %p991 = scmp.eq.s32.totalorder %s125, 0
      %p992 = por %p990, %p991
      %s994 = sadd.s32 %s993, 1
      %p997 = scmp.eq.s32.totalorder %s119, 1
      %p998 = scmp.ne.s32.totalorder %s993, %s995
      %p999 = scmp.eq.s32.totalorder %s119, 0
      %p1000 = por %p998, %p999
      %p1001 = scmp.ne.s32.totalorder %s993, %s995
      %p1002 = scmp.eq.s32.totalorder %s124, 1
      %p1003 = por %p1001, %p1002
      %p1004 = scmp.ne.s32.totalorder %s995, %s996
      %p1005 = scmp.eq.s32.totalorder %s124, 0
      %p1006 = por %p1004, %p1005
      %p1007 = scmp.ne.s32.totalorder %s995, %s996
      %p1008 = scmp.eq.s32.totalorder %s125, 1
      %p1009 = por %p1007, %p1008
      %p1011 = scmp.ne.s32.totalorder %s996, %s1010
      %p1012 = scmp.eq.s32.totalorder %s125, 0
      %p1013 = por %p1011, %p1012
      %s1015 = sadd.s32 %s1014, 1
      %p1018 = scmp.eq.s32.totalorder %s119, 1
      %p1019 = scmp.ne.s32.totalorder %s1014, %s1016
      %p1020 = scmp.eq.s32.totalorder %s119, 0
      %p1021 = por %p1019, %p1020
      %p1022 = scmp.ne.s32.totalorder %s1014, %s1016
      %p1023 = scmp.eq.s32.totalorder %s124, 1
      %p1024 = por %p1022, %p1023
      %p1025 = scmp.ne.s32.totalorder %s1016, %s1017
      %p1026 = scmp.eq.s32.totalorder %s124, 0
      %p1027 = por %p1025, %p1026
      %p1028 = scmp.ne.s32.totalorder %s1016, %s1017
      %p1029 = scmp.eq.s32.totalorder %s125, 1
      %p1030 = por %p1028, %p1029
      %p1032 = scmp.ne.s32.totalorder %s1017, %s1031
      %p1033 = scmp.eq.s32.totalorder %s125, 0
      %p1034 = por %p1032, %p1033
      %s1036 = sadd.s32 %s1035, 1
      %p1039 = scmp.eq.s32.totalorder %s119, 1
      %p1040 = scmp.ne.s32.totalorder %s1035, %s1037
      %p1041 = scmp.eq.s32.totalorder %s119, 0
      %p1042 = por %p1040, %p1041
      %p1043 = scmp.ne.s32.totalorder %s1035, %s1037
      %p1044 = scmp.eq.s32.totalorder %s124, 1
      %p1045 = por %p1043, %p1044
      %p1046 = scmp.ne.s32.totalorder %s1037, %s1038
      %p1047 = scmp.eq.s32.totalorder %s124, 0
      %p1048 = por %p1046, %p1047
      %p1049 = scmp.ne.s32.totalorder %s1037, %s1038
      %p1050 = scmp.eq.s32.totalorder %s125, 1
      %p1051 = por %p1049, %p1050
      %p1053 = scmp.ne.s32.totalorder %s1038, %s1052
      %p1054 = scmp.eq.s32.totalorder %s125, 0
      %p1055 = por %p1053, %p1054
      %s1057 = sadd.s32 %s1056, 1
      %p1060 = scmp.eq.s32.totalorder %s119, 1
      %p1061 = scmp.ne.s32.totalorder %s1056, %s1058
      %p1062 = scmp.eq.s32.totalorder %s119, 0
      %p1063 = por %p1061, %p1062
      %p1064 = scmp.ne.s32.totalorder %s1056, %s1058
      %p1065 = scmp.eq.s32.totalorder %s124, 1
      %p1066 = por %p1064, %p1065
      %p1067 = scmp.ne.s32.totalorder %s1058, %s1059
      %p1068 = scmp.eq.s32.totalorder %s124, 0
      %p1069 = por %p1067, %p1068
      %p1070 = scmp.ne.s32.totalorder %s1058, %s1059
      %p1071 = scmp.eq.s32.totalorder %s125, 1
      %p1072 = por %p1070, %p1071
      %p1074 = scmp.ne.s32.totalorder %s1059, %s1073
      %p1075 = scmp.eq.s32.totalorder %s125, 0
      %p1076 = por %p1074, %p1075
      %s1078 = sadd.s32 %s1077, 1
      %p1081 = scmp.eq.s32.totalorder %s119, 1
      %p1082 = scmp.ne.s32.totalorder %s1077, %s1079
      %p1083 = scmp.eq.s32.totalorder %s119, 0
      %p1084 = por %p1082, %p1083
      %p1085 = scmp.ne.s32.totalorder %s1077, %s1079
      %p1086 = scmp.eq.s32.totalorder %s124, 1
      %p1087 = por %p1085, %p1086
      %p1088 = scmp.ne.s32.totalorder %s1079, %s1080
      %p1089 = scmp.eq.s32.totalorder %s124, 0
      %p1090 = por %p1088, %p1089
      %p1091 = scmp.ne.s32.totalorder %s1079, %s1080
      %p1092 = scmp.eq.s32.totalorder %s125, 1
      %p1093 = por %p1091, %p1092
      %p1095 = scmp.ne.s32.totalorder %s1080, %s1094
      %p1096 = scmp.eq.s32.totalorder %s125, 0
      %p1097 = por %p1095, %p1096
      %s1099 = sadd.s32 %s1098, 1
      %p1102 = scmp.eq.s32.totalorder %s119, 1
      %p1103 = scmp.ne.s32.totalorder %s1098, %s1100
      %p1104 = scmp.eq.s32.totalorder %s119, 0
      %p1105 = por %p1103, %p1104
      %p1106 = scmp.ne.s32.totalorder %s1098, %s1100
      %p1107 = scmp.eq.s32.totalorder %s124, 1
      %p1108 = por %p1106, %p1107
      %p1109 = scmp.ne.s32.totalorder %s1100, %s1101
      %p1110 = scmp.eq.s32.totalorder %s124, 0
      %p1111 = por %p1109, %p1110
      %p1112 = scmp.ne.s32.totalorder %s1100, %s1101
      %p1113 = scmp.eq.s32.totalorder %s125, 1
      %p1114 = por %p1112, %p1113
      %p1116 = scmp.ne.s32.totalorder %s1101, %s1115
      %p1117 = scmp.eq.s32.totalorder %s125, 0
      %p1118 = por %p1116, %p1117
      %s1120 = sadd.s32 %s1119, 1
      %p1123 = scmp.eq.s32.totalorder %s119, 1
      %p1124 = scmp.ne.s32.totalorder %s1119, %s1121
      %p1125 = scmp.eq.s32.totalorder %s119, 0
      %p1126 = por %p1124, %p1125
      %p1127 = scmp.ne.s32.totalorder %s1119, %s1121
      %p1128 = scmp.eq.s32.totalorder %s124, 1
      %p1129 = por %p1127, %p1128
      %p1130 = scmp.ne.s32.totalorder %s1121, %s1122
      %p1131 = scmp.eq.s32.totalorder %s124, 0
      %p1132 = por %p1130, %p1131
      %p1133 = scmp.ne.s32.totalorder %s1121, %s1122
      %p1134 = scmp.eq.s32.totalorder %s125, 1
      %p1135 = por %p1133, %p1134
      %p1137 = scmp.ne.s32.totalorder %s1122, %s1136
      %p1138 = scmp.eq.s32.totalorder %s125, 0
      %p1139 = por %p1137, %p1138
      %s1141 = sadd.s32 %s1140, 1
      %p1144 = scmp.eq.s32.totalorder %s119, 1
      %p1145 = scmp.ne.s32.totalorder %s1140, %s1142
      %p1146 = scmp.eq.s32.totalorder %s119, 0
      %p1147 = por %p1145, %p1146
      %p1148 = scmp.ne.s32.totalorder %s1140, %s1142
      %p1149 = scmp.eq.s32.totalorder %s124, 1
      %p1150 = por %p1148, %p1149
      %p1151 = scmp.ne.s32.totalorder %s1142, %s1143
      %p1152 = scmp.eq.s32.totalorder %s124, 0
      %p1153 = por %p1151, %p1152
      %p1154 = scmp.ne.s32.totalorder %s1142, %s1143
      %p1155 = scmp.eq.s32.totalorder %s125, 1
      %p1156 = por %p1154, %p1155
      %p1158 = scmp.ne.s32.totalorder %s1143, %s1157
      %p1159 = scmp.eq.s32.totalorder %s125, 0
      %p1160 = por %p1158, %p1159
      %s1161 = ssub.s32 %s119, %s126
      %p1162 = scmp.eq.s32.totalorder %s1161, 0
      %s1164 = sadd.s32 %s1163, 1
      %s1165 = scalar_select %p1162, %s1163, %s1164
      %p1168 = pneg %p1162
      %p1169 = scmp.eq.s32.totalorder %s119, 1
      %p1170 = por %p1168, %p1169
      %p1171 = scmp.ne.s32.totalorder %s1163, %s1166
      %p1172 = scmp.eq.s32.totalorder %s119, 0
      %p1173 = por %p1171, %p1172
      %p1174 = scmp.ne.s32.totalorder %s1163, %s1166
      %p1175 = scmp.eq.s32.totalorder %s124, 1
      %p1176 = por %p1174, %p1175
      %p1177 = scmp.ne.s32.totalorder %s1166, %s1167
      %p1178 = scmp.eq.s32.totalorder %s124, 0
      %p1179 = por %p1177, %p1178
      %p1180 = scmp.ne.s32.totalorder %s1166, %s1167
      %p1181 = scmp.eq.s32.totalorder %s125, 1
      %p1182 = por %p1180, %p1181
      %p1184 = scmp.ne.s32.totalorder %s1167, %s1183
      %p1185 = scmp.eq.s32.totalorder %s125, 0
      %p1186 = por %p1184, %p1185
      %p1187 = scmp.le.s32.totalorder 1, %s119
      %p1188 = scmp.lt.s32.totalorder %s119, 3
      %p1189 = pnand %p1187, %p1188
      %p1190 = pneg %p1189
      // Predicated region
      $region9: #{tpu_custom_call.1} parent=5 // pred_check
        _
      $region10: #{tpu_custom_call.1} parent=5 // pred_check_branch
        %1192 = sbr.rel (%p1189) target = $region12
      $region11: #{tpu_custom_call.1} parent=5 // pred_region
        %s1193 = ssub.s32 %s119, 1
        // Predicated region
        $region13: #{tpu_custom_call.1} parent=11 // pred_check
          %p1194 = pneg %p166
        $region14: #{tpu_custom_call.1} parent=11 // pred_check_branch
          %1196 = sbr.rel (%p1194) target = $region16
        $region15: #{tpu_custom_call.1} parent=11 // pred_region
          _
        $region16: #{tpu_custom_call.1} parent=11 // pred_fallthru
          _
        // Predicated region
        $region17: #{tpu_custom_call.1} parent=11 // pred_check
          %p1197 = pneg %p187
        $region18: #{tpu_custom_call.1} parent=11 // pred_check_branch
          %1199 = sbr.rel (%p1197) target = $region20
        $region19: #{tpu_custom_call.1} parent=11 // pred_region
          %s1201 = ssub.s32 64, 64
          %1202 = vsyncadd [#allocation3], %s1201
          %s1204 = sshll.u32 [#allocation2], 4
          %s1205 = int_to_ptr.vmem [resolvable:$true] %s1204
          %1207 = dma.hbm_to_vmem [thread:$0]  %s5, 64, %s1205, [#allocation3]
        $region20: #{tpu_custom_call.1} parent=11 // pred_fallthru
          _
        // Predicated region
        $region21: #{tpu_custom_call.1} parent=11 // pred_check
          %p1208 = pneg %p208
        $region22: #{tpu_custom_call.1} parent=11 // pred_check_branch
          %1210 = sbr.rel (%p1208) target = $region24
        $region23: #{tpu_custom_call.1} parent=11 // pred_region
          %s1212 = ssub.s32 16, 16
          %1213 = vsyncadd [#allocation6], %s1212
          %s1215 = sshll.u32 [#allocation5], 4
          %s1216 = int_to_ptr.vmem [resolvable:$true] %s1215
          %1218 = dma.hbm_to_vmem [thread:$0]  %s7, 16, %s1216, [#allocation6]
        $region24: #{tpu_custom_call.1} parent=11 // pred_fallthru
          _
        // Predicated region
        $region25: #{tpu_custom_call.1} parent=11 // pred_check
          %p1219 = pneg %p229
        $region26: #{tpu_custom_call.1} parent=11 // pred_check_branch
          %1221 = sbr.rel (%p1219) target = $region28
        $region27: #{tpu_custom_call.1} parent=11 // pred_region
          %s1223 = ssub.s32 16, 16
          %1224 = vsyncadd [#allocation6], %s1223
          %s1226 = sshll.u32 [#allocation7], 4
          %s1227 = int_to_ptr.vmem [resolvable:$true] %s1226
          %1229 = dma.hbm_to_vmem [thread:$0]  %s9, 16, %s1227, [#allocation6]
        $region28: #{tpu_custom_call.1} parent=11 // pred_fallthru
          _
        // Predicated region
        $region29: #{tpu_custom_call.1} parent=11 // pred_check
          %p1230 = pneg %p250
        $region30: #{tpu_custom_call.1} parent=11 // pred_check_branch
          %1232 = sbr.rel (%p1230) target = $region32
        $region31: #{tpu_custom_call.1} parent=11 // pred_region
          %s1234 = ssub.s32 16, 16
          %1235 = vsyncadd [#allocation9], %s1234
          %s1237 = sshll.u32 [#allocation8], 4
          %s1238 = int_to_ptr.vmem [resolvable:$true] %s1237
          %1240 = dma.hbm_to_vmem [thread:$0]  %s11, 16, %s1238, [#allocation9]
        $region32: #{tpu_custom_call.1} parent=11 // pred_fallthru
          _
        // Predicated region
        $region33: #{tpu_custom_call.1} parent=11 // pred_check
          %p1241 = pneg %p271
        $region34: #{tpu_custom_call.1} parent=11 // pred_check_branch
          %1243 = sbr.rel (%p1241) target = $region36
        $region35: #{tpu_custom_call.1} parent=11 // pred_region
          %s1245 = ssub.s32 64, 64
          %1246 = vsyncadd [#allocation9], %s1245
          %s1248 = sshll.u32 [#allocation10], 4
          %s1249 = int_to_ptr.vmem [resolvable:$true] %s1248
          %1251 = dma.hbm_to_vmem [thread:$0]  %s13, 64, %s1249, [#allocation9]
        $region36: #{tpu_custom_call.1} parent=11 // pred_fallthru
          _
        // Predicated region
        $region37: #{tpu_custom_call.1} parent=11 // pred_check
          %p1252 = pneg %p292
        $region38: #{tpu_custom_call.1} parent=11 // pred_check_branch
          %1254 = sbr.rel (%p1252) target = $region40
        $region39: #{tpu_custom_call.1} parent=11 // pred_region
          %s1256 = ssub.s32 16, 16
          %1257 = vsyncadd [#allocation12], %s1256
          %s1259 = sshll.u32 [#allocation11], 4
          %s1260 = int_to_ptr.vmem [resolvable:$true] %s1259
          %1262 = dma.hbm_to_vmem [thread:$0]  %s15, 16, %s1260, [#allocation12]
        $region40: #{tpu_custom_call.1} parent=11 // pred_fallthru
          _
        // Predicated region
        $region41: #{tpu_custom_call.1} parent=11 // pred_check
          %p1263 = pneg %p313
        $region42: #{tpu_custom_call.1} parent=11 // pred_check_branch
          %1265 = sbr.rel (%p1263) target = $region44
        $region43: #{tpu_custom_call.1} parent=11 // pred_region
          %s1267 = ssub.s32 768, 768
          %1268 = vsyncadd [#allocation12], %s1267
          %s1269 = sshll.u32 [#allocation13], 4
          %s1270 = int_to_ptr.vmem [resolvable:$true] %s1269
          %1275 = dma.hbm_to_vmem [thread:$0]  %s17, 768, %s1270, [#allocation12], 128, 128, 8
        $region44: #{tpu_custom_call.1} parent=11 // pred_fallthru
          _
        // Predicated region
        $region45: #{tpu_custom_call.1} parent=11 // pred_check
          %p1276 = pneg %p334
        $region46: #{tpu_custom_call.1} parent=11 // pred_check_branch
          %1278 = sbr.rel (%p1276) target = $region48
        $region47: #{tpu_custom_call.1} parent=11 // pred_region
          %s1280 = ssub.s32 16, 16
          %1281 = vsyncadd [#allocation15], %s1280
          %s1283 = sshll.u32 [#allocation14], 4
          %s1284 = int_to_ptr.vmem [resolvable:$true] %s1283
          %1286 = dma.hbm_to_vmem [thread:$0]  %s19, 16, %s1284, [#allocation15]
        $region48: #{tpu_custom_call.1} parent=11 // pred_fallthru
          _
        // Predicated region
        $region49: #{tpu_custom_call.1} parent=11 // pred_check
          %p1287 = pneg %p355
        $region50: #{tpu_custom_call.1} parent=11 // pred_check_branch
          %1289 = sbr.rel (%p1287) target = $region52
        $region51: #{tpu_custom_call.1} parent=11 // pred_region
          %s1291 = ssub.s32 16, 16
          %1292 = vsyncadd [#allocation15], %s1291
          %s1294 = sshll.u32 [#allocation16], 4
          %s1295 = int_to_ptr.vmem [resolvable:$true] %s1294
          %1297 = dma.hbm_to_vmem [thread:$0]  %s21, 16, %s1295, [#allocation15]
        $region52: #{tpu_custom_call.1} parent=11 // pred_fallthru
          _
        // Predicated region
        $region53: #{tpu_custom_call.1} parent=11 // pred_check
          %p1298 = pneg %p376
        $region54: #{tpu_custom_call.1} parent=11 // pred_check_branch
          %1300 = sbr.rel (%p1298) target = $region56
        $region55: #{tpu_custom_call.1} parent=11 // pred_region
          %s1302 = ssub.s32 16, 16
          %1303 = vsyncadd [#allocation18], %s1302
          %s1305 = sshll.u32 [#allocation17], 4
          %s1306 = int_to_ptr.vmem [resolvable:$true] %s1305
          %1308 = dma.hbm_to_vmem [thread:$0]  %s23, 16, %s1306, [#allocation18]
        $region56: #{tpu_custom_call.1} parent=11 // pred_fallthru
          _
        // Predicated region
        $region57: #{tpu_custom_call.1} parent=11 // pred_check
          %p1309 = pneg %p397
        $region58: #{tpu_custom_call.1} parent=11 // pred_check_branch
          %1311 = sbr.rel (%p1309) target = $region60
        $region59: #{tpu_custom_call.1} parent=11 // pred_region
          %s1313 = ssub.s32 768, 768
          %1314 = vsyncadd [#allocation18], %s1313
          %s1315 = sshll.u32 [#allocation19], 4
          %s1316 = int_to_ptr.vmem [resolvable:$true] %s1315
          %1321 = dma.hbm_to_vmem [thread:$0]  %s25, 768, %s1316, [#allocation18], 128, 128, 8
        $region60: #{tpu_custom_call.1} parent=11 // pred_fallthru
          _
        // Predicated region
        $region61: #{tpu_custom_call.1} parent=11 // pred_check
          %p1322 = pneg %p418
        $region62: #{tpu_custom_call.1} parent=11 // pred_check_branch
          %1324 = sbr.rel (%p1322) target = $region64
        $region63: #{tpu_custom_call.1} parent=11 // pred_region
          %s1326 = ssub.s32 16, 16
          %1327 = vsyncadd [#allocation21], %s1326
          %s1329 = sshll.u32 [#allocation20], 4
          %s1330 = int_to_ptr.vmem [resolvable:$true] %s1329
          %1332 = dma.hbm_to_vmem [thread:$0]  %s27, 16, %s1330, [#allocation21]
        $region64: #{tpu_custom_call.1} parent=11 // pred_fallthru
          _
        // Predicated region
        $region65: #{tpu_custom_call.1} parent=11 // pred_check
          %p1333 = pneg %p439
        $region66: #{tpu_custom_call.1} parent=11 // pred_check_branch
          %1335 = sbr.rel (%p1333) target = $region68
        $region67: #{tpu_custom_call.1} parent=11 // pred_region
          %s1337 = ssub.s32 16, 16
          %1338 = vsyncadd [#allocation21], %s1337
          %s1340 = sshll.u32 [#allocation22], 4
          %s1341 = int_to_ptr.vmem [resolvable:$true] %s1340
          %1343 = dma.hbm_to_vmem [thread:$0]  %s29, 16, %s1341, [#allocation21]
        $region68: #{tpu_custom_call.1} parent=11 // pred_fallthru
          _
        // Predicated region
        $region69: #{tpu_custom_call.1} parent=11 // pred_check
          %p1344 = pneg %p460
        $region70: #{tpu_custom_call.1} parent=11 // pred_check_branch
          %1346 = sbr.rel (%p1344) target = $region72
        $region71: #{tpu_custom_call.1} parent=11 // pred_region
          %s1348 = ssub.s32 16, 16
          %1349 = vsyncadd [#allocation24], %s1348
          %s1351 = sshll.u32 [#allocation23], 4
          %s1352 = int_to_ptr.vmem [resolvable:$true] %s1351
          %1354 = dma.hbm_to_vmem [thread:$0]  %s31, 16, %s1352, [#allocation24]
        $region72: #{tpu_custom_call.1} parent=11 // pred_fallthru
          _
        // Predicated region
        $region73: #{tpu_custom_call.1} parent=11 // pred_check
          %p1355 = pneg %p481
        $region74: #{tpu_custom_call.1} parent=11 // pred_check_branch
          %1357 = sbr.rel (%p1355) target = $region76
        $region75: #{tpu_custom_call.1} parent=11 // pred_region
          _
        $region76: #{tpu_custom_call.1} parent=11 // pred_fallthru
          _
        // Predicated region
        $region77: #{tpu_custom_call.1} parent=11 // pred_check
          %p1358 = pneg %p502
        $region78: #{tpu_custom_call.1} parent=11 // pred_check_branch
          %1360 = sbr.rel (%p1358) target = $region80
        $region79: #{tpu_custom_call.1} parent=11 // pred_region
          %s1362 = ssub.s32 16, 16
          %1363 = vsyncadd [#allocation24], %s1362
          %s1365 = sshll.u32 [#allocation25], 4
          %s1366 = int_to_ptr.vmem [resolvable:$true] %s1365
          %1368 = dma.hbm_to_vmem [thread:$0]  %s35, 16, %s1366, [#allocation24]
        $region80: #{tpu_custom_call.1} parent=11 // pred_fallthru
          _
        // Predicated region
        $region81: #{tpu_custom_call.1} parent=11 // pred_check
          %p1369 = pneg %p523
        $region82: #{tpu_custom_call.1} parent=11 // pred_check_branch
          %1371 = sbr.rel (%p1369) target = $region84
        $region83: #{tpu_custom_call.1} parent=11 // pred_region
          %s1373 = ssub.s32 64, 64
          %1374 = vsyncadd [#allocation27], %s1373
          %s1376 = sshll.u32 [#allocation26], 4
          %s1377 = int_to_ptr.vmem [resolvable:$true] %s1376
          %1379 = dma.hbm_to_vmem [thread:$0]  %s37, 64, %s1377, [#allocation27]
        $region84: #{tpu_custom_call.1} parent=11 // pred_fallthru
          _
        // Predicated region
        $region85: #{tpu_custom_call.1} parent=11 // pred_check
          %p1380 = pneg %p544
        $region86: #{tpu_custom_call.1} parent=11 // pred_check_branch
          %1382 = sbr.rel (%p1380) target = $region88
        $region87: #{tpu_custom_call.1} parent=11 // pred_region
          %s1384 = ssub.s32 16, 16
          %1385 = vsyncadd [#allocation27], %s1384
          %s1387 = sshll.u32 [#allocation28], 4
          %s1388 = int_to_ptr.vmem [resolvable:$true] %s1387
          %1390 = dma.hbm_to_vmem [thread:$0]  %s39, 16, %s1388, [#allocation27]
        $region88: #{tpu_custom_call.1} parent=11 // pred_fallthru
          _
        // Predicated region
        $region89: #{tpu_custom_call.1} parent=11 // pred_check
          %p1391 = pneg %p565
        $region90: #{tpu_custom_call.1} parent=11 // pred_check_branch
          %1393 = sbr.rel (%p1391) target = $region92
        $region91: #{tpu_custom_call.1} parent=11 // pred_region
          %s1395 = ssub.s32 64, 64
          %1396 = vsyncadd [#allocation30], %s1395
          %s1398 = sshll.u32 [#allocation29], 4
          %s1399 = int_to_ptr.vmem [resolvable:$true] %s1398
          %1401 = dma.hbm_to_vmem [thread:$0]  %s41, 64, %s1399, [#allocation30]
        $region92: #{tpu_custom_call.1} parent=11 // pred_fallthru
          _
        // Predicated region
        $region93: #{tpu_custom_call.1} parent=11 // pred_check
          %p1402 = pneg %p586
        $region94: #{tpu_custom_call.1} parent=11 // pred_check_branch
          %1404 = sbr.rel (%p1402) target = $region96
        $region95: #{tpu_custom_call.1} parent=11 // pred_region
          _
        $region96: #{tpu_custom_call.1} parent=11 // pred_fallthru
          _
        // Predicated region
        $region97: #{tpu_custom_call.1} parent=11 // pred_check
          %p1405 = pneg %p607
        $region98: #{tpu_custom_call.1} parent=11 // pred_check_branch
          %1407 = sbr.rel (%p1405) target = $region100
        $region99: #{tpu_custom_call.1} parent=11 // pred_region
          _
        $region100: #{tpu_custom_call.1} parent=11 // pred_fallthru
          _
        // Predicated region
        $region101: #{tpu_custom_call.1} parent=11 // pred_check
          %p1408 = pneg %p628
        $region102: #{tpu_custom_call.1} parent=11 // pred_check_branch
          %1410 = sbr.rel (%p1408) target = $region104
        $region103: #{tpu_custom_call.1} parent=11 // pred_region
          %s1412 = ssub.s32 16, 16
          %1413 = vsyncadd [#allocation30], %s1412
          %s1415 = sshll.u32 [#allocation31], 4
          %s1416 = int_to_ptr.vmem [resolvable:$true] %s1415
          %1418 = dma.hbm_to_vmem [thread:$0]  %s47, 16, %s1416, [#allocation30]
        $region104: #{tpu_custom_call.1} parent=11 // pred_fallthru
          _
        // Predicated region
        $region105: #{tpu_custom_call.1} parent=11 // pred_check
          %p1419 = pneg %p649
        $region106: #{tpu_custom_call.1} parent=11 // pred_check_branch
          %1421 = sbr.rel (%p1419) target = $region108
        $region107: #{tpu_custom_call.1} parent=11 // pred_region
          %s1423 = ssub.s32 8192, 8192
          %1424 = vsyncadd [#allocation33], %s1423
          %s1425 = sshll.u32 [#allocation32], 4
          %s1426 = int_to_ptr.vmem [resolvable:$true] %s1425
          %1431 = dma.hbm_to_vmem [thread:$0]  %s49, 8192, %s1426, [#allocation33], 256, 256, 16
        $region108: #{tpu_custom_call.1} parent=11 // pred_fallthru
          _
        // Predicated region
        $region109: #{tpu_custom_call.1} parent=11 // pred_check
          %p1432 = pneg %p670
        $region110: #{tpu_custom_call.1} parent=11 // pred_check_branch
          %1434 = sbr.rel (%p1432) target = $region112
        $region111: #{tpu_custom_call.1} parent=11 // pred_region
          _
        $region112: #{tpu_custom_call.1} parent=11 // pred_fallthru
          _
        // Predicated region
        $region113: #{tpu_custom_call.1} parent=11 // pred_check
          %p1435 = pneg %p691
        $region114: #{tpu_custom_call.1} parent=11 // pred_check_branch
          %1437 = sbr.rel (%p1435) target = $region116
        $region115: #{tpu_custom_call.1} parent=11 // pred_region
          %s1439 = ssub.s32 16, 16
          %1440 = vsyncadd [#allocation33], %s1439
          %s1442 = sshll.u32 [#allocation34], 4
          %s1443 = int_to_ptr.vmem [resolvable:$true] %s1442
          %1445 = dma.hbm_to_vmem [thread:$0]  %s53, 16, %s1443, [#allocation33]
        $region116: #{tpu_custom_call.1} parent=11 // pred_fallthru
          _
        // Predicated region
        $region117: #{tpu_custom_call.1} parent=11 // pred_check
          %p1446 = pneg %p712
        $region118: #{tpu_custom_call.1} parent=11 // pred_check_branch
          %1448 = sbr.rel (%p1446) target = $region120
        $region119: #{tpu_custom_call.1} parent=11 // pred_region
          _
        $region120: #{tpu_custom_call.1} parent=11 // pred_fallthru
          _
        // Predicated region
        $region121: #{tpu_custom_call.1} parent=11 // pred_check
          %p1449 = pneg %p733
        $region122: #{tpu_custom_call.1} parent=11 // pred_check_branch
          %1451 = sbr.rel (%p1449) target = $region124
        $region123: #{tpu_custom_call.1} parent=11 // pred_region
          _
        $region124: #{tpu_custom_call.1} parent=11 // pred_fallthru
          _
        // Predicated region
        $region125: #{tpu_custom_call.1} parent=11 // pred_check
          %p1452 = pneg %p754
        $region126: #{tpu_custom_call.1} parent=11 // pred_check_branch
          %1454 = sbr.rel (%p1452) target = $region128
        $region127: #{tpu_custom_call.1} parent=11 // pred_region
          _
        $region128: #{tpu_custom_call.1} parent=11 // pred_fallthru
          _
        // Predicated region
        $region129: #{tpu_custom_call.1} parent=11 // pred_check
          %p1455 = pneg %p775
        $region130: #{tpu_custom_call.1} parent=11 // pred_check_branch
          %1457 = sbr.rel (%p1455) target = $region132
        $region131: #{tpu_custom_call.1} parent=11 // pred_region
          _
        $region132: #{tpu_custom_call.1} parent=11 // pred_fallthru
          _
        // Predicated region
        $region133: #{tpu_custom_call.1} parent=11 // pred_check
          %p1458 = pneg %p796
        $region134: #{tpu_custom_call.1} parent=11 // pred_check_branch
          %1460 = sbr.rel (%p1458) target = $region136
        $region135: #{tpu_custom_call.1} parent=11 // pred_region
          _
        $region136: #{tpu_custom_call.1} parent=11 // pred_fallthru
          _
        // Predicated region
        $region137: #{tpu_custom_call.1} parent=11 // pred_check
          %p1461 = pneg %p817
        $region138: #{tpu_custom_call.1} parent=11 // pred_check_branch
          %1463 = sbr.rel (%p1461) target = $region140
        $region139: #{tpu_custom_call.1} parent=11 // pred_region
          _
        $region140: #{tpu_custom_call.1} parent=11 // pred_fallthru
          _
        // Predicated region
        $region141: #{tpu_custom_call.1} parent=11 // pred_check
          %p1464 = pneg %p838
        $region142: #{tpu_custom_call.1} parent=11 // pred_check_branch
          %1466 = sbr.rel (%p1464) target = $region144
        $region143: #{tpu_custom_call.1} parent=11 // pred_region
          _
        $region144: #{tpu_custom_call.1} parent=11 // pred_fallthru
          _
        // Predicated region
        $region145: #{tpu_custom_call.1} parent=11 // pred_check
          %p1467 = pneg %p859
        $region146: #{tpu_custom_call.1} parent=11 // pred_check_branch
          %1469 = sbr.rel (%p1467) target = $region148
        $region147: #{tpu_custom_call.1} parent=11 // pred_region
          _
        $region148: #{tpu_custom_call.1} parent=11 // pred_fallthru
          _
        // Predicated region
        $region149: #{tpu_custom_call.1} parent=11 // pred_check
          %p1470 = pneg %p880
        $region150: #{tpu_custom_call.1} parent=11 // pred_check_branch
          %1472 = sbr.rel (%p1470) target = $region152
        $region151: #{tpu_custom_call.1} parent=11 // pred_region
          _
        $region152: #{tpu_custom_call.1} parent=11 // pred_fallthru
          _
        // Predicated region
        $region153: #{tpu_custom_call.1} parent=11 // pred_check
          %p1473 = pneg %p901
        $region154: #{tpu_custom_call.1} parent=11 // pred_check_branch
          %1475 = sbr.rel (%p1473) target = $region156
        $region155: #{tpu_custom_call.1} parent=11 // pred_region
          _
        $region156: #{tpu_custom_call.1} parent=11 // pred_fallthru
          _
        // Predicated region
        $region157: #{tpu_custom_call.1} parent=11 // pred_check
          %p1476 = pneg %p922
        $region158: #{tpu_custom_call.1} parent=11 // pred_check_branch
          %1478 = sbr.rel (%p1476) target = $region160
        $region159: #{tpu_custom_call.1} parent=11 // pred_region
          _
        $region160: #{tpu_custom_call.1} parent=11 // pred_fallthru
          _
        // Predicated region
        $region161: #{tpu_custom_call.1} parent=11 // pred_check
          %p1479 = pneg %p943
        $region162: #{tpu_custom_call.1} parent=11 // pred_check_branch
          %1481 = sbr.rel (%p1479) target = $region164
        $region163: #{tpu_custom_call.1} parent=11 // pred_region
          _
        $region164: #{tpu_custom_call.1} parent=11 // pred_fallthru
          _
        // Predicated region
        $region165: #{tpu_custom_call.1} parent=11 // pred_check
          %p1482 = pneg %p964
        $region166: #{tpu_custom_call.1} parent=11 // pred_check_branch
          %1484 = sbr.rel (%p1482) target = $region168
        $region167: #{tpu_custom_call.1} parent=11 // pred_region
          _
        $region168: #{tpu_custom_call.1} parent=11 // pred_fallthru
          _
        // Predicated region
        $region169: #{tpu_custom_call.1} parent=11 // pred_check
          %p1485 = pneg %p985
        $region170: #{tpu_custom_call.1} parent=11 // pred_check_branch
          %1487 = sbr.rel (%p1485) target = $region172
        $region171: #{tpu_custom_call.1} parent=11 // pred_region
          _
        $region172: #{tpu_custom_call.1} parent=11 // pred_fallthru
          _
        // Predicated region
        $region173: #{tpu_custom_call.1} parent=11 // pred_check
          %p1488 = pneg %p1006
        $region174: #{tpu_custom_call.1} parent=11 // pred_check_branch
          %1490 = sbr.rel (%p1488) target = $region176
        $region175: #{tpu_custom_call.1} parent=11 // pred_region
          _
        $region176: #{tpu_custom_call.1} parent=11 // pred_fallthru
          _
        // Predicated region
        $region177: #{tpu_custom_call.1} parent=11 // pred_check
          %p1491 = pneg %p1027
        $region178: #{tpu_custom_call.1} parent=11 // pred_check_branch
          %1493 = sbr.rel (%p1491) target = $region180
        $region179: #{tpu_custom_call.1} parent=11 // pred_region
          _
        $region180: #{tpu_custom_call.1} parent=11 // pred_fallthru
          _
        // Predicated region
        $region181: #{tpu_custom_call.1} parent=11 // pred_check
          %p1494 = pneg %p1048
        $region182: #{tpu_custom_call.1} parent=11 // pred_check_branch
          %1496 = sbr.rel (%p1494) target = $region184
        $region183: #{tpu_custom_call.1} parent=11 // pred_region
          _
        $region184: #{tpu_custom_call.1} parent=11 // pred_fallthru
          _
        // Predicated region
        $region185: #{tpu_custom_call.1} parent=11 // pred_check
          %p1497 = pneg %p1069
        $region186: #{tpu_custom_call.1} parent=11 // pred_check_branch
          %1499 = sbr.rel (%p1497) target = $region188
        $region187: #{tpu_custom_call.1} parent=11 // pred_region
          _
        $region188: #{tpu_custom_call.1} parent=11 // pred_fallthru
          _
        // Predicated region
        $region189: #{tpu_custom_call.1} parent=11 // pred_check
          %p1500 = pneg %p1090
        $region190: #{tpu_custom_call.1} parent=11 // pred_check_branch
          %1502 = sbr.rel (%p1500) target = $region192
        $region191: #{tpu_custom_call.1} parent=11 // pred_region
          _
        $region192: #{tpu_custom_call.1} parent=11 // pred_fallthru
          _
        // Predicated region
        $region193: #{tpu_custom_call.1} parent=11 // pred_check
          %p1503 = pneg %p1111
        $region194: #{tpu_custom_call.1} parent=11 // pred_check_branch
          %1505 = sbr.rel (%p1503) target = $region196
        $region195: #{tpu_custom_call.1} parent=11 // pred_region
          _
        $region196: #{tpu_custom_call.1} parent=11 // pred_fallthru
          _
        // Predicated region
        $region197: #{tpu_custom_call.1} parent=11 // pred_check
          %p1506 = pneg %p1132
        $region198: #{tpu_custom_call.1} parent=11 // pred_check_branch
          %1508 = sbr.rel (%p1506) target = $region200
        $region199: #{tpu_custom_call.1} parent=11 // pred_region
          _
        $region200: #{tpu_custom_call.1} parent=11 // pred_fallthru
          _
        // Predicated region
        $region201: #{tpu_custom_call.1} parent=11 // pred_check
          %p1509 = pneg %p1153
        $region202: #{tpu_custom_call.1} parent=11 // pred_check_branch
          %1511 = sbr.rel (%p1509) target = $region204
        $region203: #{tpu_custom_call.1} parent=11 // pred_region
          _
        $region204: #{tpu_custom_call.1} parent=11 // pred_fallthru
          _
      $region12: #{tpu_custom_call.1} parent=5 // pred_fallthru
        _
      %p1512 = scmp.lt.s32.totalorder %s119, 2
      // Predicated region
      $region205: #{tpu_custom_call.1} parent=5 // pred_check
        %p1513 = pneg %p1512
      $region206: #{tpu_custom_call.1} parent=5 // pred_check_branch
        %1515 = sbr.rel (%p1513) target = $region208
      $region207: #{tpu_custom_call.1} parent=5 // pred_region
        // Predicated region
        $region209: #{tpu_custom_call.1} parent=207 // pred_check
          %p1516 = pneg %p139
        $region210: #{tpu_custom_call.1} parent=207 // pred_check_branch
          %1518 = sbr.rel (%p1516) target = $region212
        $region211: #{tpu_custom_call.1} parent=207 // pred_region
          %p1519 = scmp.lt.s32.totalorder %s119, 1
          %s1520 = scalar_select %p1519, %s119, 1
          %s1521 = smul.addr %s1520, 32
          %s1522 = smul.addr %s1521, 8
          %s1523 = scalar_lea.vmem %s1, %s1522
        $region212: #{tpu_custom_call.1} parent=207 // pred_fallthru
          _
      $region208: #{tpu_custom_call.1} parent=5 // pred_fallthru
        _
      %p1524 = scmp.le.s32.totalorder 1, %s119
      %p1525 = scmp.lt.s32.totalorder %s119, 3
      %p1526 = pnand %p1524, %p1525
      %p1527 = pneg %p1526
      // Predicated region
      $region213: #{tpu_custom_call.1} parent=5 // pred_check
        _
      $region214: #{tpu_custom_call.1} parent=5 // pred_check_branch
        %1529 = sbr.rel (%p1526) target = $region216
      $region215: #{tpu_custom_call.1} parent=5 // pred_region
        %s1530 = ssub.s32 %s119, 1
        // Predicated region
        $region217: #{tpu_custom_call.1} parent=215 // pred_check
          %p1531 = pneg %p187
        $region218: #{tpu_custom_call.1} parent=215 // pred_check_branch
          %1533 = sbr.rel (%p1531) target = $region220
        $region219: #{tpu_custom_call.1} parent=215 // pred_region
          %1534 = dma.done [#allocation3], 64
        $region220: #{tpu_custom_call.1} parent=215 // pred_fallthru
          _
        // Predicated region
        $region221: #{tpu_custom_call.1} parent=215 // pred_check
          %p1535 = pneg %p208
        $region222: #{tpu_custom_call.1} parent=215 // pred_check_branch
          %1537 = sbr.rel (%p1535) target = $region224
        $region223: #{tpu_custom_call.1} parent=215 // pred_region
          %1538 = dma.done [#allocation6], 16
        $region224: #{tpu_custom_call.1} parent=215 // pred_fallthru
          _
        // Predicated region
        $region225: #{tpu_custom_call.1} parent=215 // pred_check
          %p1539 = pneg %p229
        $region226: #{tpu_custom_call.1} parent=215 // pred_check_branch
          %1541 = sbr.rel (%p1539) target = $region228
        $region227: #{tpu_custom_call.1} parent=215 // pred_region
          %1542 = dma.done [#allocation6], 16
        $region228: #{tpu_custom_call.1} parent=215 // pred_fallthru
          _
        // Predicated region
        $region229: #{tpu_custom_call.1} parent=215 // pred_check
          %p1543 = pneg %p250
        $region230: #{tpu_custom_call.1} parent=215 // pred_check_branch
          %1545 = sbr.rel (%p1543) target = $region232
        $region231: #{tpu_custom_call.1} parent=215 // pred_region
          %1546 = dma.done [#allocation9], 16
        $region232: #{tpu_custom_call.1} parent=215 // pred_fallthru
          _
        // Predicated region
        $region233: #{tpu_custom_call.1} parent=215 // pred_check
          %p1547 = pneg %p271
        $region234: #{tpu_custom_call.1} parent=215 // pred_check_branch
          %1549 = sbr.rel (%p1547) target = $region236
        $region235: #{tpu_custom_call.1} parent=215 // pred_region
          %1550 = dma.done [#allocation9], 64
        $region236: #{tpu_custom_call.1} parent=215 // pred_fallthru
          _
        // Predicated region
        $region237: #{tpu_custom_call.1} parent=215 // pred_check
          %p1551 = pneg %p292
        $region238: #{tpu_custom_call.1} parent=215 // pred_check_branch
          %1553 = sbr.rel (%p1551) target = $region240
        $region239: #{tpu_custom_call.1} parent=215 // pred_region
          %1554 = dma.done [#allocation12], 16
        $region240: #{tpu_custom_call.1} parent=215 // pred_fallthru
          _
        // Predicated region
        $region241: #{tpu_custom_call.1} parent=215 // pred_check
          %p1555 = pneg %p313
        $region242: #{tpu_custom_call.1} parent=215 // pred_check_branch
          %1557 = sbr.rel (%p1555) target = $region244
        $region243: #{tpu_custom_call.1} parent=215 // pred_region
          %1558 = dma.done [#allocation12], 768
        $region244: #{tpu_custom_call.1} parent=215 // pred_fallthru
          _
        // Predicated region
        $region245: #{tpu_custom_call.1} parent=215 // pred_check
          %p1559 = pneg %p334
        $region246: #{tpu_custom_call.1} parent=215 // pred_check_branch
          %1561 = sbr.rel (%p1559) target = $region248
        $region247: #{tpu_custom_call.1} parent=215 // pred_region
          %1562 = dma.done [#allocation15], 16
        $region248: #{tpu_custom_call.1} parent=215 // pred_fallthru
          _
        // Predicated region
        $region249: #{tpu_custom_call.1} parent=215 // pred_check
          %p1563 = pneg %p355
        $region250: #{tpu_custom_call.1} parent=215 // pred_check_branch
          %1565 = sbr.rel (%p1563) target = $region252
        $region251: #{tpu_custom_call.1} parent=215 // pred_region
          %1566 = dma.done [#allocation15], 16
        $region252: #{tpu_custom_call.1} parent=215 // pred_fallthru
          _
        // Predicated region
        $region253: #{tpu_custom_call.1} parent=215 // pred_check
          %p1567 = pneg %p376
        $region254: #{tpu_custom_call.1} parent=215 // pred_check_branch
          %1569 = sbr.rel (%p1567) target = $region256
        $region255: #{tpu_custom_call.1} parent=215 // pred_region
          %1570 = dma.done [#allocation18], 16
        $region256: #{tpu_custom_call.1} parent=215 // pred_fallthru
          _
        // Predicated region
        $region257: #{tpu_custom_call.1} parent=215 // pred_check
          %p1571 = pneg %p397
        $region258: #{tpu_custom_call.1} parent=215 // pred_check_branch
          %1573 = sbr.rel (%p1571) target = $region260
        $region259: #{tpu_custom_call.1} parent=215 // pred_region
          %1574 = dma.done [#allocation18], 768
        $region260: #{tpu_custom_call.1} parent=215 // pred_fallthru
          _
        // Predicated region
        $region261: #{tpu_custom_call.1} parent=215 // pred_check
          %p1575 = pneg %p418
        $region262: #{tpu_custom_call.1} parent=215 // pred_check_branch
          %1577 = sbr.rel (%p1575) target = $region264
        $region263: #{tpu_custom_call.1} parent=215 // pred_region
          %1578 = dma.done [#allocation21], 16
        $region264: #{tpu_custom_call.1} parent=215 // pred_fallthru
          _
        // Predicated region
        $region265: #{tpu_custom_call.1} parent=215 // pred_check
          %p1579 = pneg %p439
        $region266: #{tpu_custom_call.1} parent=215 // pred_check_branch
          %1581 = sbr.rel (%p1579) target = $region268
        $region267: #{tpu_custom_call.1} parent=215 // pred_region
          %1582 = dma.done [#allocation21], 16
        $region268: #{tpu_custom_call.1} parent=215 // pred_fallthru
          _
        // Predicated region
        $region269: #{tpu_custom_call.1} parent=215 // pred_check
          %p1583 = pneg %p460
        $region270: #{tpu_custom_call.1} parent=215 // pred_check_branch
          %1585 = sbr.rel (%p1583) target = $region272
        $region271: #{tpu_custom_call.1} parent=215 // pred_region
          %1586 = dma.done [#allocation24], 16
        $region272: #{tpu_custom_call.1} parent=215 // pred_fallthru
          _
        // Predicated region
        $region273: #{tpu_custom_call.1} parent=215 // pred_check
          %p1587 = pneg %p502
        $region274: #{tpu_custom_call.1} parent=215 // pred_check_branch
          %1589 = sbr.rel (%p1587) target = $region276
        $region275: #{tpu_custom_call.1} parent=215 // pred_region
          %1590 = dma.done [#allocation24], 16
        $region276: #{tpu_custom_call.1} parent=215 // pred_fallthru
          _
        // Predicated region
        $region277: #{tpu_custom_call.1} parent=215 // pred_check
          %p1591 = pneg %p523
        $region278: #{tpu_custom_call.1} parent=215 // pred_check_branch
          %1593 = sbr.rel (%p1591) target = $region280
        $region279: #{tpu_custom_call.1} parent=215 // pred_region
          %1594 = dma.done [#allocation27], 64
        $region280: #{tpu_custom_call.1} parent=215 // pred_fallthru
          _
        // Predicated region
        $region281: #{tpu_custom_call.1} parent=215 // pred_check
          %p1595 = pneg %p544
        $region282: #{tpu_custom_call.1} parent=215 // pred_check_branch
          %1597 = sbr.rel (%p1595) target = $region284
        $region283: #{tpu_custom_call.1} parent=215 // pred_region
          %1598 = dma.done [#allocation27], 16
        $region284: #{tpu_custom_call.1} parent=215 // pred_fallthru
          _
        // Predicated region
        $region285: #{tpu_custom_call.1} parent=215 // pred_check
          %p1599 = pneg %p565
        $region286: #{tpu_custom_call.1} parent=215 // pred_check_branch
          %1601 = sbr.rel (%p1599) target = $region288
        $region287: #{tpu_custom_call.1} parent=215 // pred_region
          %1602 = dma.done [#allocation30], 64
        $region288: #{tpu_custom_call.1} parent=215 // pred_fallthru
          _
        // Predicated region
        $region289: #{tpu_custom_call.1} parent=215 // pred_check
          %p1603 = pneg %p628
        $region290: #{tpu_custom_call.1} parent=215 // pred_check_branch
          %1605 = sbr.rel (%p1603) target = $region292
        $region291: #{tpu_custom_call.1} parent=215 // pred_region
          %1606 = dma.done [#allocation30], 16
        $region292: #{tpu_custom_call.1} parent=215 // pred_fallthru
          _
        // Predicated region
        $region293: #{tpu_custom_call.1} parent=215 // pred_check
          %p1607 = pneg %p649
        $region294: #{tpu_custom_call.1} parent=215 // pred_check_branch
          %1609 = sbr.rel (%p1607) target = $region296
        $region295: #{tpu_custom_call.1} parent=215 // pred_region
          %1610 = dma.done [#allocation33], 8192
        $region296: #{tpu_custom_call.1} parent=215 // pred_fallthru
          _
        // Predicated region
        $region297: #{tpu_custom_call.1} parent=215 // pred_check
          %p1611 = pneg %p691
        $region298: #{tpu_custom_call.1} parent=215 // pred_check_branch
          %1613 = sbr.rel (%p1611) target = $region300
        $region299: #{tpu_custom_call.1} parent=215 // pred_region
          %1614 = dma.done [#allocation33], 16
        $region300: #{tpu_custom_call.1} parent=215 // pred_fallthru
          _
        %p1615 = scmp.lt.s32.totalorder %s124, 1
        %s1616 = scalar_select %p1615, %s124, 1
        %s1617 = smul.addr %s1616, 32
        %s1618 = smul.addr %s1617, 8
        %s1619 = scalar_lea.vmem %s1, %s1618
        %p1620 = pneg %p145
        %p1621 = pneg %p142
        %p1622 = pneg %p166
        %p1623 = pneg %p163
        %p1624 = pneg %p187
        %p1625 = pneg %p184
        %p1626 = pneg %p208
        %p1627 = pneg %p205
        %p1628 = pneg %p229
        %p1629 = pneg %p226
        %p1630 = pneg %p250
        %p1631 = pneg %p247
        %p1632 = pneg %p271
        %p1633 = pneg %p268
        %p1634 = pneg %p292
        %p1635 = pneg %p289
        %p1636 = pneg %p313
        %p1637 = pneg %p310
        %p1638 = pneg %p334
        %p1639 = pneg %p331
        %p1640 = pneg %p355
        %p1641 = pneg %p352
        %p1642 = pneg %p376
        %p1643 = pneg %p373
        %p1644 = pneg %p397
        %p1645 = pneg %p394
        %p1646 = pneg %p418
        %p1647 = pneg %p415
        %p1648 = pneg %p439
        %p1649 = pneg %p436
        %p1650 = pneg %p460
        %p1651 = pneg %p457
        %p1652 = pneg %p481
        %p1653 = pneg %p478
        %p1654 = pneg %p502
        %p1655 = pneg %p499
        %p1656 = pneg %p523
        %p1657 = pneg %p520
        %p1658 = pneg %p544
        %p1659 = pneg %p541
        %p1660 = pneg %p565
        %p1661 = pneg %p562
        %p1662 = pneg %p586
        %p1663 = pneg %p583
        %p1664 = pneg %p607
        %p1665 = pneg %p604
        %p1666 = pneg %p628
        %p1667 = pneg %p625
        %p1668 = pneg %p649
        %p1669 = pneg %p646
        %p1670 = pneg %p670
        %p1671 = pneg %p667
        %p1672 = pneg %p691
        %p1673 = pneg %p688
        %p1674 = pneg %p712
        %p1675 = pneg %p709
        %p1676 = pneg %p733
        %p1677 = pneg %p730
        %p1678 = pneg %p754
        %p1679 = pneg %p751
        %p1680 = pneg %p775
        %p1681 = pneg %p772
        %p1682 = pneg %p796
        %p1683 = pneg %p793
        %p1684 = pneg %p817
        %p1685 = pneg %p814
        %p1686 = pneg %p838
        %p1687 = pneg %p835
        %p1688 = pneg %p859
        %p1689 = pneg %p856
        %p1690 = pneg %p880
        %p1691 = pneg %p877
        %p1692 = pneg %p901
        %p1693 = pneg %p898
        %p1694 = pneg %p922
        %p1695 = pneg %p919
        %p1696 = pneg %p943
        %p1697 = pneg %p940
        %p1698 = pneg %p964
        %p1699 = pneg %p961
        %p1700 = pneg %p985
        %p1701 = pneg %p982
        %p1702 = pneg %p1006
        %p1703 = pneg %p1003
        %p1704 = pneg %p1027
        %p1705 = pneg %p1024
        %p1706 = pneg %p1048
        %p1707 = pneg %p1045
        %p1708 = pneg %p1069
        %p1709 = pneg %p1066
        %p1710 = pneg %p1090
        %p1711 = pneg %p1087
        %p1712 = pneg %p1111
        %p1713 = pneg %p1108
        %p1714 = pneg %p1132
        %p1715 = pneg %p1129
        %p1716 = pneg %p1153
        %p1717 = pneg %p1150
        %p1718 = pneg %p1179
        %p1719 = pneg %p1176
        %s1720 = sand.u32 %s1166, 1
        %s1721 = scalar_lea.sflag [#allocation4], %s1720
        %s1722 = sand.u32 %s1166, 1
        %s1723 = smul.addr %s1722, 128
        %s1724 = scalar_lea.vmem [#allocation35], %s1723
        %p1725 = scmp.lt.s32.totalorder %s124, 1
        %s1726 = scalar_select %p1725, %s124, 1
        %s1727 = smul.addr %s1726, 32
        %s1728 = smul.addr %s1727, 8
        %s1729 = scalar_lea.vmem %s1, %s1728
        %v1731 = vld [vmem:[%s1729] sm:$0xff]
        %v1732 = vld [vmem:[%s1729 + $0x8] sm:$0xff]
        %v1733 = vld [vmem:[%s1729 + $0x10] sm:$0xff]
        %v1734 = vld [vmem:[%s1729 + $0x18] sm:$0xff]
        %v1735 = vld [vmem:[%s1729 + $0x20] sm:$0xff]
        %v1736 = vld [vmem:[%s1729 + $0x28] sm:$0xff]
        %v1737 = vld [vmem:[%s1729 + $0x30] sm:$0xff]
        %v1738 = vld [vmem:[%s1729 + $0x38] sm:$0xff]
        %v1739 = vld [vmem:[%s1729 + $0x40] sm:$0xff]
        %v1740 = vld [vmem:[%s1729 + $0x48] sm:$0xff]
        %v1741 = vld [vmem:[%s1729 + $0x50] sm:$0xff]
        %v1742 = vld [vmem:[%s1729 + $0x58] sm:$0xff]
        %v1743 = vld [vmem:[%s1729 + $0x60] sm:$0xff]
        %v1744 = vld [vmem:[%s1729 + $0x68] sm:$0xff]
        %v1745 = vld [vmem:[%s1729 + $0x70] sm:$0xff]
        %v1746 = vld [vmem:[%s1729 + $0x78] sm:$0xff]
        %v1747 = vld [vmem:[%s1729 + $0x80] sm:$0xff]
        %v1748 = vld [vmem:[%s1729 + $0x88] sm:$0xff]
        %v1749 = vld [vmem:[%s1729 + $0x90] sm:$0xff]
        %v1750 = vld [vmem:[%s1729 + $0x98] sm:$0xff]
        %v1751 = vld [vmem:[%s1729 + $0xa0] sm:$0xff]
        %v1752 = vld [vmem:[%s1729 + $0xa8] sm:$0xff]
        %v1753 = vld [vmem:[%s1729 + $0xb0] sm:$0xff]
        %v1754 = vld [vmem:[%s1729 + $0xb8] sm:$0xff]
        %v1755 = vld [vmem:[%s1729 + $0xc0] sm:$0xff]
        %v1756 = vld [vmem:[%s1729 + $0xc8] sm:$0xff]
        %v1757 = vld [vmem:[%s1729 + $0xd0] sm:$0xff]
        %v1758 = vld [vmem:[%s1729 + $0xd8] sm:$0xff]
        %v1759 = vld [vmem:[%s1729 + $0xe0] sm:$0xff]
        %v1760 = vld [vmem:[%s1729 + $0xe8] sm:$0xff]
        %v1761 = vld [vmem:[%s1729 + $0xf0] sm:$0xff]
        %v1762 = vld [vmem:[%s1729 + $0xf8] sm:$0xff]
        %v1763 = vld [vmem:[%s3] sm:$0xff]
        %v1764 = vld [vmem:[%s3 + $0x8] sm:$0xff]
        %v1765 = vld [vmem:[%s3 + $0x10] sm:$0xff]
        %v1766 = vld [vmem:[%s3 + $0x18] sm:$0xff]
        %v1767 = vld [vmem:[%s3 + $0x20] sm:$0xff]
        %v1768 = vld [vmem:[%s3 + $0x28] sm:$0xff]
        %v1769 = vld [vmem:[%s3 + $0x30] sm:$0xff]
        %v1770 = vld [vmem:[%s3 + $0x38] sm:$0xff]
        %v1771 = vld [vmem:[%s3 + $0x40] sm:$0xff]
        %v1772 = vld [vmem:[%s3 + $0x48] sm:$0xff]
        %v1773 = vld [vmem:[%s3 + $0x50] sm:$0xff]
        %v1774 = vld [vmem:[%s3 + $0x58] sm:$0xff]
        %v1775 = vld [vmem:[%s3 + $0x60] sm:$0xff]
        %v1776 = vld [vmem:[%s3 + $0x68] sm:$0xff]
        %v1777 = vld [vmem:[%s3 + $0x70] sm:$0xff]
        %v1778 = vld [vmem:[%s3 + $0x78] sm:$0xff]
        %v1779 = vld [vmem:[%s3 + $0x80] sm:$0xff]
        %v1780 = vld [vmem:[%s3 + $0x88] sm:$0xff]
        %v1781 = vld [vmem:[%s3 + $0x90] sm:$0xff]
        %v1782 = vld [vmem:[%s3 + $0x98] sm:$0xff]
        %v1783 = vld [vmem:[%s3 + $0xa0] sm:$0xff]
        %v1784 = vld [vmem:[%s3 + $0xa8] sm:$0xff]
        %v1785 = vld [vmem:[%s3 + $0xb0] sm:$0xff]
        %v1786 = vld [vmem:[%s3 + $0xb8] sm:$0xff]
        %v1787 = vld [vmem:[%s3 + $0xc0] sm:$0xff]
        %v1788 = vld [vmem:[%s3 + $0xc8] sm:$0xff]
        %v1789 = vld [vmem:[%s3 + $0xd0] sm:$0xff]
        %v1790 = vld [vmem:[%s3 + $0xd8] sm:$0xff]
        %v1791 = vld [vmem:[%s3 + $0xe0] sm:$0xff]
        %v1792 = vld [vmem:[%s3 + $0xe8] sm:$0xff]
        %v1793 = vld [vmem:[%s3 + $0xf0] sm:$0xff]
        %v1794 = vld [vmem:[%s3 + $0xf8] sm:$0xff]
        %v1795 = vld [vmem:[%s3 + $0x100] sm:$0xff]
        %v1796 = vld [vmem:[%s3 + $0x108] sm:$0xff]
        %v1797 = vld [vmem:[%s3 + $0x110] sm:$0xff]
        %v1798 = vld [vmem:[%s3 + $0x118] sm:$0xff]
        %v1799 = vld [vmem:[%s3 + $0x120] sm:$0xff]
        %v1800 = vld [vmem:[%s3 + $0x128] sm:$0xff]
        %v1801 = vld [vmem:[%s3 + $0x130] sm:$0xff]
        %v1802 = vld [vmem:[%s3 + $0x138] sm:$0xff]
        %v1803 = vld [vmem:[%s3 + $0x140] sm:$0xff]
        %v1804 = vld [vmem:[%s3 + $0x148] sm:$0xff]
        %v1805 = vld [vmem:[%s3 + $0x150] sm:$0xff]
        %v1806 = vld [vmem:[%s3 + $0x158] sm:$0xff]
        %v1807 = vld [vmem:[%s3 + $0x160] sm:$0xff]
        %v1808 = vld [vmem:[%s3 + $0x168] sm:$0xff]
        %v1809 = vld [vmem:[%s3 + $0x170] sm:$0xff]
        %v1810 = vld [vmem:[%s3 + $0x178] sm:$0xff]
        %v1811 = vld [vmem:[%s3 + $0x180] sm:$0xff]
        %v1812 = vld [vmem:[%s3 + $0x188] sm:$0xff]
        %v1813 = vld [vmem:[%s3 + $0x190] sm:$0xff]
        %v1814 = vld [vmem:[%s3 + $0x198] sm:$0xff]
        %v1815 = vld [vmem:[%s3 + $0x1a0] sm:$0xff]
        %v1816 = vld [vmem:[%s3 + $0x1a8] sm:$0xff]
        %v1817 = vld [vmem:[%s3 + $0x1b0] sm:$0xff]
        %v1818 = vld [vmem:[%s3 + $0x1b8] sm:$0xff]
        %v1819 = vld [vmem:[%s3 + $0x1c0] sm:$0xff]
        %v1820 = vld [vmem:[%s3 + $0x1c8] sm:$0xff]
        %v1821 = vld [vmem:[%s3 + $0x1d0] sm:$0xff]
        %v1822 = vld [vmem:[%s3 + $0x1d8] sm:$0xff]
        %v1823 = vld [vmem:[%s3 + $0x1e0] sm:$0xff]
        %v1824 = vld [vmem:[%s3 + $0x1e8] sm:$0xff]
        %v1825 = vld [vmem:[%s3 + $0x1f0] sm:$0xff]
        %v1826 = vld [vmem:[%s3 + $0x1f8] sm:$0xff]
        %v1827 = vld [vmem:[#allocation2] sm:$0xf]
        %v1828 = vld [vmem:[#allocation5] sm:$0x1]
        %v1829 = vld [vmem:[#allocation7] sm:$0x1]
        %v1830 = vld [vmem:[#allocation8] sm:$0x1]
        %v1831 = vpack.c.bf16 %v1732, %v1731
        %v1832 = vpack.c.bf16 %v1734, %v1733
        %v1833 = vpack.c.bf16 %v1736, %v1735
        %v1834 = vpack.c.bf16 %v1738, %v1737
        %v1835 = vpack.c.bf16 %v1740, %v1739
        %v1836 = vpack.c.bf16 %v1742, %v1741
        %v1837 = vpack.c.bf16 %v1744, %v1743
        %v1838 = vpack.c.bf16 %v1746, %v1745
        %v1839 = vpack.c.bf16 %v1748, %v1747
        %v1840 = vpack.c.bf16 %v1750, %v1749
        %v1841 = vpack.c.bf16 %v1752, %v1751
        %v1842 = vpack.c.bf16 %v1754, %v1753
        %v1843 = vpack.c.bf16 %v1756, %v1755
        %v1844 = vpack.c.bf16 %v1758, %v1757
        %v1845 = vpack.c.bf16 %v1760, %v1759
        %v1846 = vpack.c.bf16 %v1762, %v1761
        %v1847 = vpack.c.bf16 %v1827, %v1827
        %v1849 = vlaneseq
        %v1850 = vshrl.u32 %v1849, 7
        %v1851 = vsub.s32 0, %v1850
        %v1852 = vrot.slane %v1828, %v1851
        %vm1854 = vcmask 31744
        %v1856 = vsel %vm1854, %v1831, 0
        %v1859 = vsel %vm1854, %v1832, 0
        %v1862 = vsel %vm1854, %v1833, 0
        %v1865 = vsel %vm1854, %v1834, 0
        %v1868 = vsel %vm1854, %v1835, 0
        %v1871 = vsel %vm1854, %v1836, 0
        %v1874 = vsel %vm1854, %v1837, 0
        %v1877 = vsel %vm1854, %v1838, 0
        %v1880 = vsel %vm1854, %v1839, 0
        %v1883 = vsel %vm1854, %v1840, 0
        %v1886 = vsel %vm1854, %v1841, 0
        %v1889 = vsel %vm1854, %v1842, 0
        %v1892 = vsel %vm1854, %v1843, 0
        %v1895 = vsel %vm1854, %v1844, 0
        %v1898 = vsel %vm1854, %v1845, 0
        %v1901 = vsel %vm1854, %v1846, 0
        %vm1903 = vcmask 1041408
        %v1905 = vsel %vm1903, %v1847, 0
        %1907 = vmatprep.subr.bf16.mxu0 0
        %1908 = vmatpush1.bf16.msra.mxu0 %v1905
        %1909 = vmatprep.subr.bf16.mxu0 0
        %1910 = vmatpush1.bf16.msra.mxu0 0
        %1911 = vmatprep.subr.bf16.mxu0 0
        %1912 = vmatpush1.bf16.msra.mxu0 0
        %1913 = vmatprep.subr.bf16.mxu0 0
        %1914 = vmatpush1.bf16.msra.mxu0 0
        %1915 = vmatprep.subr.bf16.mxu0 0
        %1916 = vmatpush1.bf16.msra.mxu0 0
        %1917 = vmatprep.subr.bf16.mxu0 0
        %1918 = vmatpush1.bf16.msra.mxu0 0
        %1919 = vmatprep.subr.bf16.mxu0 0
        %1920 = vmatpush1.bf16.msra.mxu0 0
        %1921 = vmatprep.subr.bf16.mxu0 0
        %1922 = vmatpush1.bf16.msra.mxu0 0
        %1923 = vmatprep.subr.bf16.mxu0 0
        %1924 = vmatpush1.bf16.msra.mxu0 0
        %1925 = vmatprep.subr.bf16.mxu0 0
        %1926 = vmatpush1.bf16.msra.mxu0 0
        %1927 = vmatprep.subr.bf16.mxu0 0
        %1928 = vmatpush1.bf16.msra.mxu0 0
        %1929 = vmatprep.subr.bf16.mxu0 0
        %1930 = vmatpush1.bf16.msra.mxu0 0
        %1931 = vmatprep.subr.bf16.mxu0 0
        %1932 = vmatpush1.bf16.msra.mxu0 0
        %1933 = vmatprep.subr.bf16.mxu0 0
        %1934 = vmatpush1.bf16.msra.mxu0 0
        %1935 = vmatprep.subr.bf16.mxu0 0
        %1936 = vmatpush1.bf16.msra.mxu0 0
        %1937 = vmatprep.subr.bf16.mxu0 0
        %1938 = vmatpush1.bf16.msra.mxu0 0
        %1939 = vmatprep.mubr.bf16.mxu0 0
        %1940 = vmatmul.mubr.bf16.gmra.mrb[0].mxu0 %v1856
        %v1941 = vpop.f32.mrb[0].mxu0
        %v1942 = vadd.f32 %v1852, %v1941
        %v1943 = vpop.f32.mrb[0].mxu0
        %v1944 = vpop.f32.mrb[0].mxu0
        %v1945 = vadd.f32 %v1852, %v1944
        %v1946 = vpop.f32.mrb[0].mxu0
        %1947 = vmatprep.mubr.bf16.mxu0 0
        %1948 = vmatmul.mubr.bf16.gmra.mrb[0].mxu0 %v1859
        %v1949 = vpop.f32.mrb[0].mxu0
        %v1950 = vadd.f32 %v1852, %v1949
        %v1951 = vpop.f32.mrb[0].mxu0
        %v1952 = vpop.f32.mrb[0].mxu0
        %v1953 = vadd.f32 %v1852, %v1952
        %v1954 = vpop.f32.mrb[0].mxu0
        %1955 = vmatprep.mubr.bf16.mxu0 0
        %1956 = vmatmul.mubr.bf16.gmra.mrb[0].mxu0 %v1862
        %v1957 = vpop.f32.mrb[0].mxu0
        %v1958 = vadd.f32 %v1852, %v1957
        %v1959 = vpop.f32.mrb[0].mxu0
        %v1960 = vpop.f32.mrb[0].mxu0
        %v1961 = vadd.f32 %v1852, %v1960
        %v1962 = vpop.f32.mrb[0].mxu0
        %1963 = vmatprep.mubr.bf16.mxu0 0
        %1964 = vmatmul.mubr.bf16.gmra.mrb[0].mxu0 %v1865
        %v1965 = vpop.f32.mrb[0].mxu0
        %v1966 = vadd.f32 %v1852, %v1965
        %v1967 = vpop.f32.mrb[0].mxu0
        %v1968 = vpop.f32.mrb[0].mxu0
        %v1969 = vadd.f32 %v1852, %v1968
        %v1970 = vpop.f32.mrb[0].mxu0
        %1971 = vmatprep.mubr.bf16.mxu0 0
        %1972 = vmatmul.mubr.bf16.gmra.mrb[0].mxu0 %v1868
        %v1973 = vpop.f32.mrb[0].mxu0
        %v1974 = vadd.f32 %v1852, %v1973
        %v1975 = vpop.f32.mrb[0].mxu0
        %v1976 = vpop.f32.mrb[0].mxu0
        %v1977 = vadd.f32 %v1852, %v1976
        %v1978 = vpop.f32.mrb[0].mxu0
        %1979 = vmatprep.mubr.bf16.mxu0 0
        %1980 = vmatmul.mubr.bf16.gmra.mrb[0].mxu0 %v1871
        %v1981 = vpop.f32.mrb[0].mxu0
        %v1982 = vadd.f32 %v1852, %v1981
        %v1983 = vpop.f32.mrb[0].mxu0
        %v1984 = vpop.f32.mrb[0].mxu0
        %v1985 = vadd.f32 %v1852, %v1984
        %v1986 = vpop.f32.mrb[0].mxu0
        %1987 = vmatprep.mubr.bf16.mxu0 0
        %1988 = vmatmul.mubr.bf16.gmra.mrb[0].mxu0 %v1874
        %v1989 = vpop.f32.mrb[0].mxu0
        %v1990 = vadd.f32 %v1852, %v1989
        %v1991 = vpop.f32.mrb[0].mxu0
        %v1992 = vpop.f32.mrb[0].mxu0
        %v1993 = vadd.f32 %v1852, %v1992
        %v1994 = vpop.f32.mrb[0].mxu0
        %1995 = vmatprep.mubr.bf16.mxu0 0
        %1996 = vmatmul.mubr.bf16.gmra.mrb[0].mxu0 %v1877
        %v1997 = vpop.f32.mrb[0].mxu0
        %v1998 = vadd.f32 %v1852, %v1997
        %v1999 = vpop.f32.mrb[0].mxu0
        %v2000 = vpop.f32.mrb[0].mxu0
        %v2001 = vadd.f32 %v1852, %v2000
        %v2002 = vpop.f32.mrb[0].mxu0
        %2003 = vmatprep.mubr.bf16.mxu0 0
        %2004 = vmatmul.mubr.bf16.gmra.mrb[0].mxu0 %v1880
        %v2005 = vpop.f32.mrb[0].mxu0
        %v2006 = vadd.f32 %v1852, %v2005
        %v2007 = vpop.f32.mrb[0].mxu0
        %v2008 = vpop.f32.mrb[0].mxu0
        %v2009 = vadd.f32 %v1852, %v2008
        %v2010 = vpop.f32.mrb[0].mxu0
        %2011 = vmatprep.mubr.bf16.mxu0 0
        %2012 = vmatmul.mubr.bf16.gmra.mrb[0].mxu0 %v1883
        %v2013 = vpop.f32.mrb[0].mxu0
        %v2014 = vadd.f32 %v1852, %v2013
        %v2015 = vpop.f32.mrb[0].mxu0
        %v2016 = vpop.f32.mrb[0].mxu0
        %v2017 = vadd.f32 %v1852, %v2016
        %v2018 = vpop.f32.mrb[0].mxu0
        %2019 = vmatprep.mubr.bf16.mxu0 0
        %2020 = vmatmul.mubr.bf16.gmra.mrb[0].mxu0 %v1886
        %v2021 = vpop.f32.mrb[0].mxu0
        %v2022 = vadd.f32 %v1852, %v2021
        %v2023 = vpop.f32.mrb[0].mxu0
        %v2024 = vpop.f32.mrb[0].mxu0
        %v2025 = vadd.f32 %v1852, %v2024
        %v2026 = vpop.f32.mrb[0].mxu0
        %2027 = vmatprep.mubr.bf16.mxu0 0
        %2028 = vmatmul.mubr.bf16.gmra.mrb[0].mxu0 %v1889
        %v2029 = vpop.f32.mrb[0].mxu0
        %v2030 = vadd.f32 %v1852, %v2029
        %v2031 = vpop.f32.mrb[0].mxu0
        %v2032 = vpop.f32.mrb[0].mxu0
        %v2033 = vadd.f32 %v1852, %v2032
        %v2034 = vpop.f32.mrb[0].mxu0
        %2035 = vmatprep.mubr.bf16.mxu0 0
        %2036 = vmatmul.mubr.bf16.gmra.mrb[0].mxu0 %v1892
        %v2037 = vpop.f32.mrb[0].mxu0
        %v2038 = vadd.f32 %v1852, %v2037
        %v2039 = vpop.f32.mrb[0].mxu0
        %v2040 = vpop.f32.mrb[0].mxu0
        %v2041 = vadd.f32 %v1852, %v2040
        %v2042 = vpop.f32.mrb[0].mxu0
        %2043 = vmatprep.mubr.bf16.mxu0 0
        %2044 = vmatmul.mubr.bf16.gmra.mrb[0].mxu0 %v1895
        %v2045 = vpop.f32.mrb[0].mxu0
        %v2046 = vadd.f32 %v1852, %v2045
        %v2047 = vpop.f32.mrb[0].mxu0
        %v2048 = vpop.f32.mrb[0].mxu0
        %v2049 = vadd.f32 %v1852, %v2048
        %v2050 = vpop.f32.mrb[0].mxu0
        %2051 = vmatprep.mubr.bf16.mxu0 0
        %2052 = vmatmul.mubr.bf16.gmra.mrb[0].mxu0 %v1898
        %v2053 = vpop.f32.mrb[0].mxu0
        %v2054 = vadd.f32 %v1852, %v2053
        %v2055 = vpop.f32.mrb[0].mxu0
        %v2056 = vpop.f32.mrb[0].mxu0
        %v2057 = vadd.f32 %v1852, %v2056
        %v2058 = vpop.f32.mrb[0].mxu0
        %2059 = vmatprep.mubr.bf16.mxu0 0
        %2060 = vmatmul.mubr.bf16.gmra.mrb[0].mxu0 %v1901
        %v2061 = vpop.f32.mrb[0].mxu0
        %v2062 = vadd.f32 %v1852, %v2061
        %v2063 = vpop.f32.mrb[0].mxu0
        %v2064 = vpop.f32.mrb[0].mxu0
        %v2065 = vadd.f32 %v1852, %v2064
        %v2066 = vpop.f32.mrb[0].mxu0
        %2067 = vdwg.mxu0
        %2100 = vrot.lane.b32.xlu0 %v1942, 112
        %v2101 = vpop.permute.xlu0 %2100
        %2102 = vrot.lane.b32.xlu0 %v1945, 112
        %v2103 = vpop.permute.xlu0 %2102
        %2104 = vrot.lane.b32.xlu0 %v1950, 112
        %v2105 = vpop.permute.xlu0 %2104
        %2106 = vrot.lane.b32.xlu0 %v1953, 112
        %v2107 = vpop.permute.xlu0 %2106
        %2108 = vrot.lane.b32.xlu0 %v1958, 112
        %v2109 = vpop.permute.xlu0 %2108
        %2110 = vrot.lane.b32.xlu0 %v1961, 112
        %v2111 = vpop.permute.xlu0 %2110
        %2112 = vrot.lane.b32.xlu0 %v1966, 112
        %v2113 = vpop.permute.xlu0 %2112
        %2114 = vrot.lane.b32.xlu0 %v1969, 112
        %v2115 = vpop.permute.xlu0 %2114
        %2116 = vrot.lane.b32.xlu0 %v1974, 112
        %v2117 = vpop.permute.xlu0 %2116
        %2118 = vrot.lane.b32.xlu0 %v1977, 112
        %v2119 = vpop.permute.xlu0 %2118
        %2120 = vrot.lane.b32.xlu0 %v1982, 112
        %v2121 = vpop.permute.xlu0 %2120
        %2122 = vrot.lane.b32.xlu0 %v1985, 112
        %v2123 = vpop.permute.xlu0 %2122
        %2124 = vrot.lane.b32.xlu0 %v1990, 112
        %v2125 = vpop.permute.xlu0 %2124
        %2126 = vrot.lane.b32.xlu0 %v1993, 112
        %v2127 = vpop.permute.xlu0 %2126
        %2128 = vrot.lane.b32.xlu0 %v1998, 112
        %v2129 = vpop.permute.xlu0 %2128
        %2130 = vrot.lane.b32.xlu0 %v2001, 112
        %v2131 = vpop.permute.xlu0 %2130
        %2132 = vrot.lane.b32.xlu0 %v2006, 112
        %v2133 = vpop.permute.xlu0 %2132
        %2134 = vrot.lane.b32.xlu0 %v2009, 112
        %v2135 = vpop.permute.xlu0 %2134
        %2136 = vrot.lane.b32.xlu0 %v2014, 112
        %v2137 = vpop.permute.xlu0 %2136
        %2138 = vrot.lane.b32.xlu0 %v2017, 112
        %v2139 = vpop.permute.xlu0 %2138
        %2140 = vrot.lane.b32.xlu0 %v2022, 112
        %v2141 = vpop.permute.xlu0 %2140
        %2142 = vrot.lane.b32.xlu0 %v2025, 112
        %v2143 = vpop.permute.xlu0 %2142
        %2144 = vrot.lane.b32.xlu0 %v2030, 112
        %v2145 = vpop.permute.xlu0 %2144
        %2146 = vrot.lane.b32.xlu0 %v2033, 112
        %v2147 = vpop.permute.xlu0 %2146
        %2148 = vrot.lane.b32.xlu0 %v2038, 112
        %v2149 = vpop.permute.xlu0 %2148
        %2150 = vrot.lane.b32.xlu0 %v2041, 112
        %v2151 = vpop.permute.xlu0 %2150
        %2152 = vrot.lane.b32.xlu0 %v2046, 112
        %v2153 = vpop.permute.xlu0 %2152
        %2154 = vrot.lane.b32.xlu0 %v2049, 112
        %v2155 = vpop.permute.xlu0 %2154
        %2156 = vrot.lane.b32.xlu0 %v2054, 112
        %v2157 = vpop.permute.xlu0 %2156
        %2158 = vrot.lane.b32.xlu0 %v2057, 112
        %v2159 = vpop.permute.xlu0 %2158
        %2160 = vrot.lane.b32.xlu0 %v2062, 112
        %v2161 = vpop.permute.xlu0 %2160
        %2162 = vrot.lane.b32.xlu0 %v2065, 112
        %v2163 = vpop.permute.xlu0 %2162
        %v2196 = vpack.c.bf16 %v1945, %v1942
        %v2197 = vpack.c.bf16 %v1953, %v1950
        %v2198 = vpack.c.bf16 %v1961, %v1958
        %v2199 = vpack.c.bf16 %v1969, %v1966
        %v2200 = vpack.c.bf16 %v1977, %v1974
        %v2201 = vpack.c.bf16 %v1985, %v1982
        %v2202 = vpack.c.bf16 %v1993, %v1990
        %v2203 = vpack.c.bf16 %v2001, %v1998
        %v2204 = vpack.c.bf16 %v2009, %v2006
        %v2205 = vpack.c.bf16 %v2017, %v2014
        %v2206 = vpack.c.bf16 %v2025, %v2022
        %v2207 = vpack.c.bf16 %v2033, %v2030
        %v2208 = vpack.c.bf16 %v2041, %v2038
        %v2209 = vpack.c.bf16 %v2049, %v2046
        %v2210 = vpack.c.bf16 %v2057, %v2054
        %v2211 = vpack.c.bf16 %v2065, %v2062
        %v2212 = vpack.c.bf16 %v2103, %v2101
        %v2213 = vpack.c.bf16 %v2107, %v2105
        %v2214 = vpack.c.bf16 %v2111, %v2109
        %v2215 = vpack.c.bf16 %v2115, %v2113
        %v2216 = vpack.c.bf16 %v2119, %v2117
        %v2217 = vpack.c.bf16 %v2123, %v2121
        %v2218 = vpack.c.bf16 %v2127, %v2125
        %v2219 = vpack.c.bf16 %v2131, %v2129
        %v2220 = vpack.c.bf16 %v2135, %v2133
        %v2221 = vpack.c.bf16 %v2139, %v2137
        %v2222 = vpack.c.bf16 %v2143, %v2141
        %v2223 = vpack.c.bf16 %v2147, %v2145
        %v2224 = vpack.c.bf16 %v2151, %v2149
        %v2225 = vpack.c.bf16 %v2155, %v2153
        %v2226 = vpack.c.bf16 %v2159, %v2157
        %v2227 = vpack.c.bf16 %v2163, %v2161
        %v2292 = vunpack.c.l.b16 %v1763
        %v2293 = vunpack.c.h.b16 %v1763
        %v2294 = vunpack.c.l.b16 %v1764
        %v2295 = vunpack.c.h.b16 %v1764
        %v2296 = vunpack.c.l.b16 %v1765
        %v2297 = vunpack.c.h.b16 %v1765
        %v2298 = vunpack.c.l.b16 %v1766
        %v2299 = vunpack.c.h.b16 %v1766
        %v2300 = vunpack.c.l.b16 %v1767
        %v2301 = vunpack.c.h.b16 %v1767
        %v2302 = vunpack.c.l.b16 %v1768
        %v2303 = vunpack.c.h.b16 %v1768
        %v2304 = vunpack.c.l.b16 %v1769
        %v2305 = vunpack.c.h.b16 %v1769
        %v2306 = vunpack.c.l.b16 %v1770
        %v2307 = vunpack.c.h.b16 %v1770
        %v2308 = vunpack.c.l.b16 %v1771
        %v2309 = vunpack.c.h.b16 %v1771
        %v2310 = vunpack.c.l.b16 %v1772
        %v2311 = vunpack.c.h.b16 %v1772
        %v2312 = vunpack.c.l.b16 %v1773
        %v2313 = vunpack.c.h.b16 %v1773
        %v2314 = vunpack.c.l.b16 %v1774
        %v2315 = vunpack.c.h.b16 %v1774
        %v2316 = vunpack.c.l.b16 %v1775
        %v2317 = vunpack.c.h.b16 %v1775
        %v2318 = vunpack.c.l.b16 %v1776
        %v2319 = vunpack.c.h.b16 %v1776
        %v2320 = vunpack.c.l.b16 %v1777
        %v2321 = vunpack.c.h.b16 %v1777
        %v2322 = vunpack.c.l.b16 %v1778
        %v2323 = vunpack.c.h.b16 %v1778
        %v2324 = vunpack.c.l.b16 %v1779
        %v2325 = vunpack.c.h.b16 %v1779
        %v2326 = vunpack.c.l.b16 %v1780
        %v2327 = vunpack.c.h.b16 %v1780
        %v2328 = vunpack.c.l.b16 %v1781
        %v2329 = vunpack.c.h.b16 %v1781
        %v2330 = vunpack.c.l.b16 %v1782
        %v2331 = vunpack.c.h.b16 %v1782
        %v2332 = vunpack.c.l.b16 %v1783
        %v2333 = vunpack.c.h.b16 %v1783
        %v2334 = vunpack.c.l.b16 %v1784
        %v2335 = vunpack.c.h.b16 %v1784
        %v2336 = vunpack.c.l.b16 %v1785
        %v2337 = vunpack.c.h.b16 %v1785
        %v2338 = vunpack.c.l.b16 %v1786
        %v2339 = vunpack.c.h.b16 %v1786
        %v2340 = vunpack.c.l.b16 %v1787
        %v2341 = vunpack.c.h.b16 %v1787
        %v2342 = vunpack.c.l.b16 %v1788
        %v2343 = vunpack.c.h.b16 %v1788
        %v2344 = vunpack.c.l.b16 %v1789
        %v2345 = vunpack.c.h.b16 %v1789
        %v2346 = vunpack.c.l.b16 %v1790
        %v2347 = vunpack.c.h.b16 %v1790
        %v2348 = vunpack.c.l.b16 %v1791
        %v2349 = vunpack.c.h.b16 %v1791
        %v2350 = vunpack.c.l.b16 %v1792
        %v2351 = vunpack.c.h.b16 %v1792
        %v2352 = vunpack.c.l.b16 %v1793
        %v2353 = vunpack.c.h.b16 %v1793
        %v2354 = vunpack.c.l.b16 %v1794
        %v2355 = vunpack.c.h.b16 %v1794
        %v2356 = vunpack.c.l.b16 %v1795
        %v2357 = vunpack.c.h.b16 %v1795
        %v2358 = vunpack.c.l.b16 %v1796
        %v2359 = vunpack.c.h.b16 %v1796
        %v2360 = vunpack.c.l.b16 %v1797
        %v2361 = vunpack.c.h.b16 %v1797
        %v2362 = vunpack.c.l.b16 %v1798
        %v2363 = vunpack.c.h.b16 %v1798
        %v2364 = vunpack.c.l.b16 %v1799
        %v2365 = vunpack.c.h.b16 %v1799
        %v2366 = vunpack.c.l.b16 %v1800
        %v2367 = vunpack.c.h.b16 %v1800
        %v2368 = vunpack.c.l.b16 %v1801
        %v2369 = vunpack.c.h.b16 %v1801
        %v2370 = vunpack.c.l.b16 %v1802
        %v2371 = vunpack.c.h.b16 %v1802
        %v2372 = vunpack.c.l.b16 %v1803
        %v2373 = vunpack.c.h.b16 %v1803
        %v2374 = vunpack.c.l.b16 %v1804
        %v2375 = vunpack.c.h.b16 %v1804
        %v2376 = vunpack.c.l.b16 %v1805
        %v2377 = vunpack.c.h.b16 %v1805
        %v2378 = vunpack.c.l.b16 %v1806
        %v2379 = vunpack.c.h.b16 %v1806
        %v2380 = vunpack.c.l.b16 %v1807
        %v2381 = vunpack.c.h.b16 %v1807
        %v2382 = vunpack.c.l.b16 %v1808
        %v2383 = vunpack.c.h.b16 %v1808
        %v2384 = vunpack.c.l.b16 %v1809
        %v2385 = vunpack.c.h.b16 %v1809
        %v2386 = vunpack.c.l.b16 %v1810
        %v2387 = vunpack.c.h.b16 %v1810
        %v2388 = vunpack.c.l.b16 %v1811
        %v2389 = vunpack.c.h.b16 %v1811
        %v2390 = vunpack.c.l.b16 %v1812
        %v2391 = vunpack.c.h.b16 %v1812
        %v2392 = vunpack.c.l.b16 %v1813
        %v2393 = vunpack.c.h.b16 %v1813
        %v2394 = vunpack.c.l.b16 %v1814
        %v2395 = vunpack.c.h.b16 %v1814
        %v2396 = vunpack.c.l.b16 %v1815
        %v2397 = vunpack.c.h.b16 %v1815
        %v2398 = vunpack.c.l.b16 %v1816
        %v2399 = vunpack.c.h.b16 %v1816
        %v2400 = vunpack.c.l.b16 %v1817
        %v2401 = vunpack.c.h.b16 %v1817
        %v2402 = vunpack.c.l.b16 %v1818
        %v2403 = vunpack.c.h.b16 %v1818
        %v2404 = vunpack.c.l.b16 %v1819
        %v2405 = vunpack.c.h.b16 %v1819
        %v2406 = vunpack.c.l.b16 %v1820
        %v2407 = vunpack.c.h.b16 %v1820
        %v2408 = vunpack.c.l.b16 %v1821
        %v2409 = vunpack.c.h.b16 %v1821
        %v2410 = vunpack.c.l.b16 %v1822
        %v2411 = vunpack.c.h.b16 %v1822
        %v2412 = vunpack.c.l.b16 %v1823
        %v2413 = vunpack.c.h.b16 %v1823
        %v2414 = vunpack.c.l.b16 %v1824
        %v2415 = vunpack.c.h.b16 %v1824
        %v2416 = vunpack.c.l.b16 %v1825
        %v2417 = vunpack.c.h.b16 %v1825
        %v2418 = vunpack.c.l.b16 %v1826
        %v2419 = vunpack.c.h.b16 %v1826
        %v2420 = vpack.c.b16 %v2296, %v2292
        %v2421 = vpack.c.b16 %v2297, %v2293
        %v2422 = vpack.c.b16 %v2298, %v2294
        %v2423 = vpack.c.b16 %v2299, %v2295
        %v2424 = vpack.c.b16 %v2304, %v2300
        %v2425 = vpack.c.b16 %v2305, %v2301
        %v2426 = vpack.c.b16 %v2306, %v2302
        %v2427 = vpack.c.b16 %v2307, %v2303
        %v2428 = vpack.c.b16 %v2312, %v2308
        %v2429 = vpack.c.b16 %v2313, %v2309
        %v2430 = vpack.c.b16 %v2314, %v2310
        %v2431 = vpack.c.b16 %v2315, %v2311
        %v2432 = vpack.c.b16 %v2320, %v2316
        %v2433 = vpack.c.b16 %v2321, %v2317
        %v2434 = vpack.c.b16 %v2322, %v2318
        %v2435 = vpack.c.b16 %v2323, %v2319
        %v2436 = vpack.c.b16 %v2328, %v2324
        %v2437 = vpack.c.b16 %v2329, %v2325
        %v2438 = vpack.c.b16 %v2330, %v2326
        %v2439 = vpack.c.b16 %v2331, %v2327
        %v2440 = vpack.c.b16 %v2336, %v2332
        %v2441 = vpack.c.b16 %v2337, %v2333
        %v2442 = vpack.c.b16 %v2338, %v2334
        %v2443 = vpack.c.b16 %v2339, %v2335
        %v2444 = vpack.c.b16 %v2344, %v2340
        %v2445 = vpack.c.b16 %v2345, %v2341
        %v2446 = vpack.c.b16 %v2346, %v2342
        %v2447 = vpack.c.b16 %v2347, %v2343
        %v2448 = vpack.c.b16 %v2352, %v2348
        %v2449 = vpack.c.b16 %v2353, %v2349
        %v2450 = vpack.c.b16 %v2354, %v2350
        %v2451 = vpack.c.b16 %v2355, %v2351
        %v2452 = vpack.c.b16 %v2360, %v2356
        %v2453 = vpack.c.b16 %v2361, %v2357
        %v2454 = vpack.c.b16 %v2362, %v2358
        %v2455 = vpack.c.b16 %v2363, %v2359
        %v2456 = vpack.c.b16 %v2368, %v2364
        %v2457 = vpack.c.b16 %v2369, %v2365
        %v2458 = vpack.c.b16 %v2370, %v2366
        %v2459 = vpack.c.b16 %v2371, %v2367
        %v2460 = vpack.c.b16 %v2376, %v2372
        %v2461 = vpack.c.b16 %v2377, %v2373
        %v2462 = vpack.c.b16 %v2378, %v2374
        %v2463 = vpack.c.b16 %v2379, %v2375
        %v2464 = vpack.c.b16 %v2384, %v2380
        %v2465 = vpack.c.b16 %v2385, %v2381
        %v2466 = vpack.c.b16 %v2386, %v2382
        %v2467 = vpack.c.b16 %v2387, %v2383
        %v2468 = vpack.c.b16 %v2392, %v2388
        %v2469 = vpack.c.b16 %v2393, %v2389
        %v2470 = vpack.c.b16 %v2394, %v2390
        %v2471 = vpack.c.b16 %v2395, %v2391
        %v2472 = vpack.c.b16 %v2400, %v2396
        %v2473 = vpack.c.b16 %v2401, %v2397
        %v2474 = vpack.c.b16 %v2402, %v2398
        %v2475 = vpack.c.b16 %v2403, %v2399
        %v2476 = vpack.c.b16 %v2408, %v2404
        %v2477 = vpack.c.b16 %v2409, %v2405
        %v2478 = vpack.c.b16 %v2410, %v2406
        %v2479 = vpack.c.b16 %v2411, %v2407
        %v2480 = vpack.c.b16 %v2416, %v2412
        %v2481 = vpack.c.b16 %v2417, %v2413
        %v2482 = vpack.c.b16 %v2418, %v2414
        %v2483 = vpack.c.b16 %v2419, %v2415
        %2548 = vmatprep.subr.bf16.mxu0 0
        %2549 = vmatpush1.bf16.msra.mxu0 %v2196
        %2550 = vmatprep.subr.bf16.mxu0 0
        %2551 = vmatpush1.bf16.msra.mxu0 %v2197
        %2552 = vmatprep.subr.bf16.mxu0 0
        %2553 = vmatpush1.bf16.msra.mxu0 %v2198
        %2554 = vmatprep.subr.bf16.mxu0 0
        %2555 = vmatpush1.bf16.msra.mxu0 %v2199
        %2556 = vmatprep.subr.bf16.mxu0 0
        %2557 = vmatpush1.bf16.msra.mxu0 %v2200
        %2558 = vmatprep.subr.bf16.mxu0 0
        %2559 = vmatpush1.bf16.msra.mxu0 %v2201
        %2560 = vmatprep.subr.bf16.mxu0 0
        %2561 = vmatpush1.bf16.msra.mxu0 %v2202
        %2562 = vmatprep.subr.bf16.mxu0 0
        %2563 = vmatpush1.bf16.msra.mxu0 %v2203
        %2564 = vmatprep.subr.bf16.mxu0 0
        %2565 = vmatpush1.bf16.msra.mxu0 %v2204
        %2566 = vmatprep.subr.bf16.mxu0 0
        %2567 = vmatpush1.bf16.msra.mxu0 %v2205
        %2568 = vmatprep.subr.bf16.mxu0 0
        %2569 = vmatpush1.bf16.msra.mxu0 %v2206
        %2570 = vmatprep.subr.bf16.mxu0 0
        %2571 = vmatpush1.bf16.msra.mxu0 %v2207
        %2572 = vmatprep.subr.bf16.mxu0 0
        %2573 = vmatpush1.bf16.msra.mxu0 %v2208
        %2574 = vmatprep.subr.bf16.mxu0 0
        %2575 = vmatpush1.bf16.msra.mxu0 %v2209
        %2576 = vmatprep.subr.bf16.mxu0 0
        %2577 = vmatpush1.bf16.msra.mxu0 %v2210
        %2578 = vmatprep.subr.bf16.mxu0 0
        %2579 = vmatpush1.bf16.msra.mxu0 %v2211
        %2580 = vmatprep.mubr.bf16.mxu0 %v2421
        %2581 = vmatmul.mubr.bf16.gmra.mrb[0].mxu0 %v2420
        %v2582 = vpop.f32.mrb[0].mxu0
        %v2583 = vadd.f32 0.0, %v2582
        %v2584 = vpop.f32.mrb[0].mxu0
        %v2585 = vpop.f32.mrb[0].mxu0
        %v2586 = vadd.f32 0.0, %v2585
        %v2587 = vpop.f32.mrb[0].mxu0
        %2588 = vmatprep.mubr.bf16.mxu0 %v2425
        %2589 = vmatmul.mubr.bf16.gmra.mrb[0].mxu0 %v2424
        %v2590 = vpop.f32.mrb[0].mxu0
        %v2591 = vadd.f32 0.0, %v2590
        %v2592 = vpop.f32.mrb[0].mxu0
        %v2593 = vpop.f32.mrb[0].mxu0
        %v2594 = vadd.f32 0.0, %v2593
        %v2595 = vpop.f32.mrb[0].mxu0
        %2596 = vmatprep.mubr.bf16.mxu0 %v2429
        %2597 = vmatmul.mubr.bf16.gmra.mrb[0].mxu0 %v2428
        %v2598 = vpop.f32.mrb[0].mxu0
        %v2599 = vadd.f32 0.0, %v2598
        %v2600 = vpop.f32.mrb[0].mxu0
        %v2601 = vpop.f32.mrb[0].mxu0
        %v2602 = vadd.f32 0.0, %v2601
        %v2603 = vpop.f32.mrb[0].mxu0
        %2604 = vmatprep.mubr.bf16.mxu0 %v2433
        %2605 = vmatmul.mubr.bf16.gmra.mrb[0].mxu0 %v2432
        %v2606 = vpop.f32.mrb[0].mxu0
        %v2607 = vadd.f32 0.0, %v2606
        %v2608 = vpop.f32.mrb[0].mxu0
        %v2609 = vpop.f32.mrb[0].mxu0
        %v2610 = vadd.f32 0.0, %v2609
        %v2611 = vpop.f32.mrb[0].mxu0
        %2612 = vmatprep.mubr.bf16.mxu0 %v2437
        %2613 = vmatmul.mubr.bf16.gmra.mrb[0].mxu0 %v2436
        %v2614 = vpop.f32.mrb[0].mxu0
        %v2615 = vadd.f32 0.0, %v2614
        %v2616 = vpop.f32.mrb[0].mxu0
        %v2617 = vpop.f32.mrb[0].mxu0
        %v2618 = vadd.f32 0.0, %v2617
        %v2619 = vpop.f32.mrb[0].mxu0
        %2620 = vmatprep.mubr.bf16.mxu0 %v2441
        %2621 = vmatmul.mubr.bf16.gmra.mrb[0].mxu0 %v2440
        %v2622 = vpop.f32.mrb[0].mxu0
        %v2623 = vadd.f32 0.0, %v2622
        %v2624 = vpop.f32.mrb[0].mxu0
        %v2625 = vpop.f32.mrb[0].mxu0
        %v2626 = vadd.f32 0.0, %v2625
        %v2627 = vpop.f32.mrb[0].mxu0
        %2628 = vmatprep.mubr.bf16.mxu0 %v2445
        %2629 = vmatmul.mubr.bf16.gmra.mrb[0].mxu0 %v2444
        %v2630 = vpop.f32.mrb[0].mxu0
        %v2631 = vadd.f32 0.0, %v2630
        %v2632 = vpop.f32.mrb[0].mxu0
        %v2633 = vpop.f32.mrb[0].mxu0
        %v2634 = vadd.f32 0.0, %v2633
        %v2635 = vpop.f32.mrb[0].mxu0
        %2636 = vmatprep.mubr.bf16.mxu0 %v2449
        %2637 = vmatmul.mubr.bf16.gmra.mrb[0].mxu0 %v2448
        %v2638 = vpop.f32.mrb[0].mxu0
        %v2639 = vadd.f32 0.0, %v2638
        %v2640 = vpop.f32.mrb[0].mxu0
        %v2641 = vpop.f32.mrb[0].mxu0
        %v2642 = vadd.f32 0.0, %v2641
        %v2643 = vpop.f32.mrb[0].mxu0
        %2644 = vmatprep.mubr.bf16.mxu0 %v2453
        %2645 = vmatmul.mubr.bf16.gmra.mrb[0].mxu0 %v2452
        %v2646 = vpop.f32.mrb[0].mxu0
        %v2647 = vadd.f32 0.0, %v2646
        %v2648 = vpop.f32.mrb[0].mxu0
        %v2649 = vpop.f32.mrb[0].mxu0
        %v2650 = vadd.f32 0.0, %v2649
        %v2651 = vpop.f32.mrb[0].mxu0
        %2652 = vmatprep.mubr.bf16.mxu0 %v2457
        %2653 = vmatmul.mubr.bf16.gmra.mrb[0].mxu0 %v2456
        %v2654 = vpop.f32.mrb[0].mxu0
        %v2655 = vadd.f32 0.0, %v2654
        %v2656 = vpop.f32.mrb[0].mxu0
        %v2657 = vpop.f32.mrb[0].mxu0
        %v2658 = vadd.f32 0.0, %v2657
        %v2659 = vpop.f32.mrb[0].mxu0
        %2660 = vmatprep.mubr.bf16.mxu0 %v2461
        %2661 = vmatmul.mubr.bf16.gmra.mrb[0].mxu0 %v2460
        %v2662 = vpop.f32.mrb[0].mxu0
        %v2663 = vadd.f32 0.0, %v2662
        %v2664 = vpop.f32.mrb[0].mxu0
        %v2665 = vpop.f32.mrb[0].mxu0
        %v2666 = vadd.f32 0.0, %v2665
        %v2667 = vpop.f32.mrb[0].mxu0
        %2668 = vmatprep.mubr.bf16.mxu0 %v2465
        %2669 = vmatmul.mubr.bf16.gmra.mrb[0].mxu0 %v2464
        %v2670 = vpop.f32.mrb[0].mxu0
        %v2671 = vadd.f32 0.0, %v2670
        %v2672 = vpop.f32.mrb[0].mxu0
        %v2673 = vpop.f32.mrb[0].mxu0
        %v2674 = vadd.f32 0.0, %v2673
        %v2675 = vpop.f32.mrb[0].mxu0
        %2676 = vmatprep.mubr.bf16.mxu0 %v2469
        %2677 = vmatmul.mubr.bf16.gmra.mrb[0].mxu0 %v2468
        %v2678 = vpop.f32.mrb[0].mxu0
        %v2679 = vadd.f32 0.0, %v2678
        %v2680 = vpop.f32.mrb[0].mxu0
        %v2681 = vpop.f32.mrb[0].mxu0
        %v2682 = vadd.f32 0.0, %v2681
        %v2683 = vpop.f32.mrb[0].mxu0
        %2684 = vmatprep.mubr.bf16.mxu0 %v2473
        %2685 = vmatmul.mubr.bf16.gmra.mrb[0].mxu0 %v2472
        %v2686 = vpop.f32.mrb[0].mxu0
        %v2687 = vadd.f32 0.0, %v2686
        %v2688 = vpop.f32.mrb[0].mxu0
        %v2689 = vpop.f32.mrb[0].mxu0
        %v2690 = vadd.f32 0.0, %v2689
        %v2691 = vpop.f32.mrb[0].mxu0
        %2692 = vmatprep.mubr.bf16.mxu0 %v2477
        %2693 = vmatmul.mubr.bf16.gmra.mrb[0].mxu0 %v2476
        %v2694 = vpop.f32.mrb[0].mxu0
        %v2695 = vadd.f32 0.0, %v2694
        %v2696 = vpop.f32.mrb[0].mxu0
        %v2697 = vpop.f32.mrb[0].mxu0
        %v2698 = vadd.f32 0.0, %v2697
        %v2699 = vpop.f32.mrb[0].mxu0
        %2700 = vmatprep.mubr.bf16.mxu0 %v2481
        %2701 = vmatmul.mubr.bf16.gmra.mrb[0].mxu0 %v2480
        %v2702 = vpop.f32.mrb[0].mxu0
        %v2703 = vadd.f32 0.0, %v2702
        %v2704 = vpop.f32.mrb[0].mxu0
        %v2705 = vpop.f32.mrb[0].mxu0
        %v2706 = vadd.f32 0.0, %v2705
        %v2707 = vpop.f32.mrb[0].mxu0
        %2708 = vdwg.mxu0
        %2709 = vmatprep.subr.bf16.mxu0 0
        %2710 = vmatpush1.bf16.msra.mxu0 %v2212
        %2711 = vmatprep.subr.bf16.mxu0 0
        %2712 = vmatpush1.bf16.msra.mxu0 %v2213
        %2713 = vmatprep.subr.bf16.mxu0 0
        %2714 = vmatpush1.bf16.msra.mxu0 %v2214
        %2715 = vmatprep.subr.bf16.mxu0 0
        %2716 = vmatpush1.bf16.msra.mxu0 %v2215
        %2717 = vmatprep.subr.bf16.mxu0 0
        %2718 = vmatpush1.bf16.msra.mxu0 %v2216
        %2719 = vmatprep.subr.bf16.mxu0 0
        %2720 = vmatpush1.bf16.msra.mxu0 %v2217
        %2721 = vmatprep.subr.bf16.mxu0 0
        %2722 = vmatpush1.bf16.msra.mxu0 %v2218
        %2723 = vmatprep.subr.bf16.mxu0 0
        %2724 = vmatpush1.bf16.msra.mxu0 %v2219
        %2725 = vmatprep.subr.bf16.mxu0 0
        %2726 = vmatpush1.bf16.msra.mxu0 %v2220
        %2727 = vmatprep.subr.bf16.mxu0 0
        %2728 = vmatpush1.bf16.msra.mxu0 %v2221
        %2729 = vmatprep.subr.bf16.mxu0 0
        %2730 = vmatpush1.bf16.msra.mxu0 %v2222
        %2731 = vmatprep.subr.bf16.mxu0 0
        %2732 = vmatpush1.bf16.msra.mxu0 %v2223
        %2733 = vmatprep.subr.bf16.mxu0 0
        %2734 = vmatpush1.bf16.msra.mxu0 %v2224
        %2735 = vmatprep.subr.bf16.mxu0 0
        %2736 = vmatpush1.bf16.msra.mxu0 %v2225
        %2737 = vmatprep.subr.bf16.mxu0 0
        %2738 = vmatpush1.bf16.msra.mxu0 %v2226
        %2739 = vmatprep.subr.bf16.mxu0 0
        %2740 = vmatpush1.bf16.msra.mxu0 %v2227
        %2741 = vmatprep.mubr.bf16.mxu0 %v2423
        %2742 = vmatmul.mubr.bf16.gmra.mrb[0].mxu0 %v2422
        %v2743 = vpop.f32.mrb[0].mxu0
        %v2744 = vadd.f32 %v2583, %v2743
        %v2745 = vpop.f32.mrb[0].mxu0
        %v2746 = vpop.f32.mrb[0].mxu0
        %v2747 = vadd.f32 %v2586, %v2746
        %v2748 = vpop.f32.mrb[0].mxu0
        %2749 = vmatprep.mubr.bf16.mxu0 %v2427
        %2750 = vmatmul.mubr.bf16.gmra.mrb[0].mxu0 %v2426
        %v2751 = vpop.f32.mrb[0].mxu0
        %v2752 = vadd.f32 %v2591, %v2751
        %v2753 = vpop.f32.mrb[0].mxu0
        %v2754 = vpop.f32.mrb[0].mxu0
        %v2755 = vadd.f32 %v2594, %v2754
        %v2756 = vpop.f32.mrb[0].mxu0
        %2757 = vmatprep.mubr.bf16.mxu0 %v2431
        %2758 = vmatmul.mubr.bf16.gmra.mrb[0].mxu0 %v2430
        %v2759 = vpop.f32.mrb[0].mxu0
        %v2760 = vadd.f32 %v2599, %v2759
        %v2761 = vpop.f32.mrb[0].mxu0
        %v2762 = vpop.f32.mrb[0].mxu0
        %v2763 = vadd.f32 %v2602, %v2762
        %v2764 = vpop.f32.mrb[0].mxu0
        %2765 = vmatprep.mubr.bf16.mxu0 %v2435
        %2766 = vmatmul.mubr.bf16.gmra.mrb[0].mxu0 %v2434
        %v2767 = vpop.f32.mrb[0].mxu0
        %v2768 = vadd.f32 %v2607, %v2767
        %v2769 = vpop.f32.mrb[0].mxu0
        %v2770 = vpop.f32.mrb[0].mxu0
        %v2771 = vadd.f32 %v2610, %v2770
        %v2772 = vpop.f32.mrb[0].mxu0
        %2773 = vmatprep.mubr.bf16.mxu0 %v2439
        %2774 = vmatmul.mubr.bf16.gmra.mrb[0].mxu0 %v2438
        %v2775 = vpop.f32.mrb[0].mxu0
        %v2776 = vadd.f32 %v2615, %v2775
        %v2777 = vpop.f32.mrb[0].mxu0
        %v2778 = vpop.f32.mrb[0].mxu0
        %v2779 = vadd.f32 %v2618, %v2778
        %v2780 = vpop.f32.mrb[0].mxu0
        %2781 = vmatprep.mubr.bf16.mxu0 %v2443
        %2782 = vmatmul.mubr.bf16.gmra.mrb[0].mxu0 %v2442
        %v2783 = vpop.f32.mrb[0].mxu0
        %v2784 = vadd.f32 %v2623, %v2783
        %v2785 = vpop.f32.mrb[0].mxu0
        %v2786 = vpop.f32.mrb[0].mxu0
        %v2787 = vadd.f32 %v2626, %v2786
        %v2788 = vpop.f32.mrb[0].mxu0
        %2789 = vmatprep.mubr.bf16.mxu0 %v2447
        %2790 = vmatmul.mubr.bf16.gmra.mrb[0].mxu0 %v2446
        %v2791 = vpop.f32.mrb[0].mxu0
        %v2792 = vadd.f32 %v2631, %v2791
        %v2793 = vpop.f32.mrb[0].mxu0
        %v2794 = vpop.f32.mrb[0].mxu0
        %v2795 = vadd.f32 %v2634, %v2794
        %v2796 = vpop.f32.mrb[0].mxu0
        %2797 = vmatprep.mubr.bf16.mxu0 %v2451
        %2798 = vmatmul.mubr.bf16.gmra.mrb[0].mxu0 %v2450
        %v2799 = vpop.f32.mrb[0].mxu0
        %v2800 = vadd.f32 %v2639, %v2799
        %v2801 = vpop.f32.mrb[0].mxu0
        %v2802 = vpop.f32.mrb[0].mxu0
        %v2803 = vadd.f32 %v2642, %v2802
        %v2804 = vpop.f32.mrb[0].mxu0
        %2805 = vmatprep.mubr.bf16.mxu0 %v2455
        %2806 = vmatmul.mubr.bf16.gmra.mrb[0].mxu0 %v2454
        %v2807 = vpop.f32.mrb[0].mxu0
        %v2808 = vadd.f32 %v2647, %v2807
        %v2809 = vpop.f32.mrb[0].mxu0
        %v2810 = vpop.f32.mrb[0].mxu0
        %v2811 = vadd.f32 %v2650, %v2810
        %v2812 = vpop.f32.mrb[0].mxu0
        %2813 = vmatprep.mubr.bf16.mxu0 %v2459
        %2814 = vmatmul.mubr.bf16.gmra.mrb[0].mxu0 %v2458
        %v2815 = vpop.f32.mrb[0].mxu0
        %v2816 = vadd.f32 %v2655, %v2815
        %v2817 = vpop.f32.mrb[0].mxu0
        %v2818 = vpop.f32.mrb[0].mxu0
        %v2819 = vadd.f32 %v2658, %v2818
        %v2820 = vpop.f32.mrb[0].mxu0
        %2821 = vmatprep.mubr.bf16.mxu0 %v2463
        %2822 = vmatmul.mubr.bf16.gmra.mrb[0].mxu0 %v2462
        %v2823 = vpop.f32.mrb[0].mxu0
        %v2824 = vadd.f32 %v2663, %v2823
        %v2825 = vpop.f32.mrb[0].mxu0
        %v2826 = vpop.f32.mrb[0].mxu0
        %v2827 = vadd.f32 %v2666, %v2826
        %v2828 = vpop.f32.mrb[0].mxu0
        %2829 = vmatprep.mubr.bf16.mxu0 %v2467
        %2830 = vmatmul.mubr.bf16.gmra.mrb[0].mxu0 %v2466
        %v2831 = vpop.f32.mrb[0].mxu0
        %v2832 = vadd.f32 %v2671, %v2831
        %v2833 = vpop.f32.mrb[0].mxu0
        %v2834 = vpop.f32.mrb[0].mxu0
        %v2835 = vadd.f32 %v2674, %v2834
        %v2836 = vpop.f32.mrb[0].mxu0
        %2837 = vmatprep.mubr.bf16.mxu0 %v2471
        %2838 = vmatmul.mubr.bf16.gmra.mrb[0].mxu0 %v2470
        %v2839 = vpop.f32.mrb[0].mxu0
        %v2840 = vadd.f32 %v2679, %v2839
        %v2841 = vpop.f32.mrb[0].mxu0
        %v2842 = vpop.f32.mrb[0].mxu0
        %v2843 = vadd.f32 %v2682, %v2842
        %v2844 = vpop.f32.mrb[0].mxu0
        %2845 = vmatprep.mubr.bf16.mxu0 %v2475
        %2846 = vmatmul.mubr.bf16.gmra.mrb[0].mxu0 %v2474
        %v2847 = vpop.f32.mrb[0].mxu0
        %v2848 = vadd.f32 %v2687, %v2847
        %v2849 = vpop.f32.mrb[0].mxu0
        %v2850 = vpop.f32.mrb[0].mxu0
        %v2851 = vadd.f32 %v2690, %v2850
        %v2852 = vpop.f32.mrb[0].mxu0
        %2853 = vmatprep.mubr.bf16.mxu0 %v2479
        %2854 = vmatmul.mubr.bf16.gmra.mrb[0].mxu0 %v2478
        %v2855 = vpop.f32.mrb[0].mxu0
        %v2856 = vadd.f32 %v2695, %v2855
        %v2857 = vpop.f32.mrb[0].mxu0
        %v2858 = vpop.f32.mrb[0].mxu0
        %v2859 = vadd.f32 %v2698, %v2858
        %v2860 = vpop.f32.mrb[0].mxu0
        %2861 = vmatprep.mubr.bf16.mxu0 %v2483
        %2862 = vmatmul.mubr.bf16.gmra.mrb[0].mxu0 %v2482
        %v2863 = vpop.f32.mrb[0].mxu0
        %v2864 = vadd.f32 %v2703, %v2863
        %v2865 = vpop.f32.mrb[0].mxu0
        %v2866 = vpop.f32.mrb[0].mxu0
        %v2867 = vadd.f32 %v2706, %v2866
        %v2868 = vpop.f32.mrb[0].mxu0
        %2869 = vdwg.mxu0
        %v2870 = vld [vmem:[#allocation10] sm:$0xf]
        %v2871 = vld [vmem:[#allocation11] sm:$0x1]
        %v2872 = vpack.c.bf16 %v2870, %v2870
        %v2874 = vlaneseq
        %v2875 = vshrl.u32 %v2874, 7
        %v2876 = vsub.s32 0, %v2875
        %v2877 = vrot.slane %v2871, %v2876
        %v2880 = vsel %vm1903, %v2872, 0
        %2882 = vmatprep.subr.bf16.mxu0 0
        %2883 = vmatpush1.bf16.msra.mxu0 %v2880
        %2884 = vmatprep.subr.bf16.mxu0 0
        %2885 = vmatpush1.bf16.msra.mxu0 0
        %2886 = vmatprep.subr.bf16.mxu0 0
        %2887 = vmatpush1.bf16.msra.mxu0 0
        %2888 = vmatprep.subr.bf16.mxu0 0
        %2889 = vmatpush1.bf16.msra.mxu0 0
        %2890 = vmatprep.subr.bf16.mxu0 0
        %2891 = vmatpush1.bf16.msra.mxu0 0
        %2892 = vmatprep.subr.bf16.mxu0 0
        %2893 = vmatpush1.bf16.msra.mxu0 0
        %2894 = vmatprep.subr.bf16.mxu0 0
        %2895 = vmatpush1.bf16.msra.mxu0 0
        %2896 = vmatprep.subr.bf16.mxu0 0
        %2897 = vmatpush1.bf16.msra.mxu0 0
        %2898 = vmatprep.subr.bf16.mxu0 0
        %2899 = vmatpush1.bf16.msra.mxu0 0
        %2900 = vmatprep.subr.bf16.mxu0 0
        %2901 = vmatpush1.bf16.msra.mxu0 0
        %2902 = vmatprep.subr.bf16.mxu0 0
        %2903 = vmatpush1.bf16.msra.mxu0 0
        %2904 = vmatprep.subr.bf16.mxu0 0
        %2905 = vmatpush1.bf16.msra.mxu0 0
        %2906 = vmatprep.subr.bf16.mxu0 0
        %2907 = vmatpush1.bf16.msra.mxu0 0
        %2908 = vmatprep.subr.bf16.mxu0 0
        %2909 = vmatpush1.bf16.msra.mxu0 0
        %2910 = vmatprep.subr.bf16.mxu0 0
        %2911 = vmatpush1.bf16.msra.mxu0 0
        %2912 = vmatprep.subr.bf16.mxu0 0
        %2913 = vmatpush1.bf16.msra.mxu0 0
        %2914 = vmatprep.mubr.bf16.mxu0 0
        %2915 = vmatmul.mubr.bf16.gmra.mrb[0].mxu0 %v1856
        %v2916 = vpop.f32.mrb[0].mxu0
        %v2917 = vadd.f32 %v2877, %v2916
        %v2918 = vpop.f32.mrb[0].mxu0
        %v2919 = vpop.f32.mrb[0].mxu0
        %v2920 = vadd.f32 %v2877, %v2919
        %v2921 = vpop.f32.mrb[0].mxu0
        %2922 = vmatprep.mubr.bf16.mxu0 0
        %2923 = vmatmul.mubr.bf16.gmra.mrb[0].mxu0 %v1859
        %v2924 = vpop.f32.mrb[0].mxu0
        %v2925 = vadd.f32 %v2877, %v2924
        %v2926 = vpop.f32.mrb[0].mxu0
        %v2927 = vpop.f32.mrb[0].mxu0
        %v2928 = vadd.f32 %v2877, %v2927
        %v2929 = vpop.f32.mrb[0].mxu0
        %2930 = vmatprep.mubr.bf16.mxu0 0
        %2931 = vmatmul.mubr.bf16.gmra.mrb[0].mxu0 %v1862
        %v2932 = vpop.f32.mrb[0].mxu0
        %v2933 = vadd.f32 %v2877, %v2932
        %v2934 = vpop.f32.mrb[0].mxu0
        %v2935 = vpop.f32.mrb[0].mxu0
        %v2936 = vadd.f32 %v2877, %v2935
        %v2937 = vpop.f32.mrb[0].mxu0
        %2938 = vmatprep.mubr.bf16.mxu0 0
        %2939 = vmatmul.mubr.bf16.gmra.mrb[0].mxu0 %v1865
        %v2940 = vpop.f32.mrb[0].mxu0
        %v2941 = vadd.f32 %v2877, %v2940
        %v2942 = vpop.f32.mrb[0].mxu0
        %v2943 = vpop.f32.mrb[0].mxu0
        %v2944 = vadd.f32 %v2877, %v2943
        %v2945 = vpop.f32.mrb[0].mxu0
        %2946 = vmatprep.mubr.bf16.mxu0 0
        %2947 = vmatmul.mubr.bf16.gmra.mrb[0].mxu0 %v1868
        %v2948 = vpop.f32.mrb[0].mxu0
        %v2949 = vadd.f32 %v2877, %v2948
        %v2950 = vpop.f32.mrb[0].mxu0
        %v2951 = vpop.f32.mrb[0].mxu0
        %v2952 = vadd.f32 %v2877, %v2951
        %v2953 = vpop.f32.mrb[0].mxu0
        %2954 = vmatprep.mubr.bf16.mxu0 0
        %2955 = vmatmul.mubr.bf16.gmra.mrb[0].mxu0 %v1871
        %v2956 = vpop.f32.mrb[0].mxu0
        %v2957 = vadd.f32 %v2877, %v2956
        %v2958 = vpop.f32.mrb[0].mxu0
        %v2959 = vpop.f32.mrb[0].mxu0
        %v2960 = vadd.f32 %v2877, %v2959
        %v2961 = vpop.f32.mrb[0].mxu0
        %2962 = vmatprep.mubr.bf16.mxu0 0
        %2963 = vmatmul.mubr.bf16.gmra.mrb[0].mxu0 %v1874
        %v2964 = vpop.f32.mrb[0].mxu0
        %v2965 = vadd.f32 %v2877, %v2964
        %v2966 = vpop.f32.mrb[0].mxu0
        %v2967 = vpop.f32.mrb[0].mxu0
        %v2968 = vadd.f32 %v2877, %v2967
        %v2969 = vpop.f32.mrb[0].mxu0
        %2970 = vmatprep.mubr.bf16.mxu0 0
        %2971 = vmatmul.mubr.bf16.gmra.mrb[0].mxu0 %v1877
        %v2972 = vpop.f32.mrb[0].mxu0
        %v2973 = vadd.f32 %v2877, %v2972
        %v2974 = vpop.f32.mrb[0].mxu0
        %v2975 = vpop.f32.mrb[0].mxu0
        %v2976 = vadd.f32 %v2877, %v2975
        %v2977 = vpop.f32.mrb[0].mxu0
        %2978 = vmatprep.mubr.bf16.mxu0 0
        %2979 = vmatmul.mubr.bf16.gmra.mrb[0].mxu0 %v1880
        %v2980 = vpop.f32.mrb[0].mxu0
        %v2981 = vadd.f32 %v2877, %v2980
        %v2982 = vpop.f32.mrb[0].mxu0
        %v2983 = vpop.f32.mrb[0].mxu0
        %v2984 = vadd.f32 %v2877, %v2983
        %v2985 = vpop.f32.mrb[0].mxu0
        %2986 = vmatprep.mubr.bf16.mxu0 0
        %2987 = vmatmul.mubr.bf16.gmra.mrb[0].mxu0 %v1883
        %v2988 = vpop.f32.mrb[0].mxu0
        %v2989 = vadd.f32 %v2877, %v2988
        %v2990 = vpop.f32.mrb[0].mxu0
        %v2991 = vpop.f32.mrb[0].mxu0
        %v2992 = vadd.f32 %v2877, %v2991
        %v2993 = vpop.f32.mrb[0].mxu0
        %2994 = vmatprep.mubr.bf16.mxu0 0
        %2995 = vmatmul.mubr.bf16.gmra.mrb[0].mxu0 %v1886
        %v2996 = vpop.f32.mrb[0].mxu0
        %v2997 = vadd.f32 %v2877, %v2996
        %v2998 = vpop.f32.mrb[0].mxu0
        %v2999 = vpop.f32.mrb[0].mxu0
        %v3000 = vadd.f32 %v2877, %v2999
        %v3001 = vpop.f32.mrb[0].mxu0
        %3002 = vmatprep.mubr.bf16.mxu0 0
        %3003 = vmatmul.mubr.bf16.gmra.mrb[0].mxu0 %v1889
        %v3004 = vpop.f32.mrb[0].mxu0
        %v3005 = vadd.f32 %v2877, %v3004
        %v3006 = vpop.f32.mrb[0].mxu0
        %v3007 = vpop.f32.mrb[0].mxu0
        %v3008 = vadd.f32 %v2877, %v3007
        %v3009 = vpop.f32.mrb[0].mxu0
        %3010 = vmatprep.mubr.bf16.mxu0 0
        %3011 = vmatmul.mubr.bf16.gmra.mrb[0].mxu0 %v1892
        %v3012 = vpop.f32.mrb[0].mxu0
        %v3013 = vadd.f32 %v2877, %v3012
        %v3014 = vpop.f32.mrb[0].mxu0
        %v3015 = vpop.f32.mrb[0].mxu0
        %v3016 = vadd.f32 %v2877, %v3015
        %v3017 = vpop.f32.mrb[0].mxu0
        %3018 = vmatprep.mubr.bf16.mxu0 0
        %3019 = vmatmul.mubr.bf16.gmra.mrb[0].mxu0 %v1895
        %v3020 = vpop.f32.mrb[0].mxu0
        %v3021 = vadd.f32 %v2877, %v3020
        %v3022 = vpop.f32.mrb[0].mxu0
        %v3023 = vpop.f32.mrb[0].mxu0
        %v3024 = vadd.f32 %v2877, %v3023
        %v3025 = vpop.f32.mrb[0].mxu0
        %3026 = vmatprep.mubr.bf16.mxu0 0
        %3027 = vmatmul.mubr.bf16.gmra.mrb[0].mxu0 %v1898
        %v3028 = vpop.f32.mrb[0].mxu0
        %v3029 = vadd.f32 %v2877, %v3028
        %v3030 = vpop.f32.mrb[0].mxu0
        %v3031 = vpop.f32.mrb[0].mxu0
        %v3032 = vadd.f32 %v2877, %v3031
        %v3033 = vpop.f32.mrb[0].mxu0
        %3034 = vmatprep.mubr.bf16.mxu0 0
        %3035 = vmatmul.mubr.bf16.gmra.mrb[0].mxu0 %v1901
        %v3036 = vpop.f32.mrb[0].mxu0
        %v3037 = vadd.f32 %v2877, %v3036
        %v3038 = vpop.f32.mrb[0].mxu0
        %v3039 = vpop.f32.mrb[0].mxu0
        %v3040 = vadd.f32 %v2877, %v3039
        %v3041 = vpop.f32.mrb[0].mxu0
        %3042 = vdwg.mxu0
        %v3044 = vlaneseq
        %v3045 = vshrl.u32 %v3044, 7
        %v3046 = vsub.s32 0, %v3045
        %v3047 = vrot.slane %v1829, %v3046
        %v3049 = vmul.f32 %v2744, %v3047
        %v3050 = vmul.f32 %v2747, %v3047
        %v3051 = vmul.f32 %v2752, %v3047
        %v3052 = vmul.f32 %v2755, %v3047
        %v3053 = vmul.f32 %v2760, %v3047
        %v3054 = vmul.f32 %v2763, %v3047
        %v3055 = vmul.f32 %v2768, %v3047
        %v3056 = vmul.f32 %v2771, %v3047
        %v3057 = vmul.f32 %v2776, %v3047
        %v3058 = vmul.f32 %v2779, %v3047
        %v3059 = vmul.f32 %v2784, %v3047
        %v3060 = vmul.f32 %v2787, %v3047
        %v3061 = vmul.f32 %v2792, %v3047
        %v3062 = vmul.f32 %v2795, %v3047
        %v3063 = vmul.f32 %v2800, %v3047
        %v3064 = vmul.f32 %v2803, %v3047
        %v3065 = vmul.f32 %v2808, %v3047
        %v3066 = vmul.f32 %v2811, %v3047
        %v3067 = vmul.f32 %v2816, %v3047
        %v3068 = vmul.f32 %v2819, %v3047
        %v3069 = vmul.f32 %v2824, %v3047
        %v3070 = vmul.f32 %v2827, %v3047
        %v3071 = vmul.f32 %v2832, %v3047
        %v3072 = vmul.f32 %v2835, %v3047
        %v3073 = vmul.f32 %v2840, %v3047
        %v3074 = vmul.f32 %v2843, %v3047
        %v3075 = vmul.f32 %v2848, %v3047
        %v3076 = vmul.f32 %v2851, %v3047
        %v3077 = vmul.f32 %v2856, %v3047
        %v3078 = vmul.f32 %v2859, %v3047
        %v3079 = vmul.f32 %v2864, %v3047
        %v3080 = vmul.f32 %v2867, %v3047
        %v3082 = vlaneseq
        %v3083 = vshrl.u32 %v3082, 7
        %v3084 = vsub.s32 0, %v3083
        %v3085 = vrot.slane %v1830, %v3084
        %v3087 = vadd.f32 %v3049, %v3085
        %v3088 = vadd.f32 %v3050, %v3085
        %v3089 = vadd.f32 %v3051, %v3085
        %v3090 = vadd.f32 %v3052, %v3085
        %v3091 = vadd.f32 %v3053, %v3085
        %v3092 = vadd.f32 %v3054, %v3085
        %v3093 = vadd.f32 %v3055, %v3085
        %v3094 = vadd.f32 %v3056, %v3085
        %v3095 = vadd.f32 %v3057, %v3085
        %v3096 = vadd.f32 %v3058, %v3085
        %v3097 = vadd.f32 %v3059, %v3085
        %v3098 = vadd.f32 %v3060, %v3085
        %v3099 = vadd.f32 %v3061, %v3085
        %v3100 = vadd.f32 %v3062, %v3085
        %v3101 = vadd.f32 %v3063, %v3085
        %v3102 = vadd.f32 %v3064, %v3085
        %v3103 = vadd.f32 %v3065, %v3085
        %v3104 = vadd.f32 %v3066, %v3085
        %v3105 = vadd.f32 %v3067, %v3085
        %v3106 = vadd.f32 %v3068, %v3085
        %v3107 = vadd.f32 %v3069, %v3085
        %v3108 = vadd.f32 %v3070, %v3085
        %v3109 = vadd.f32 %v3071, %v3085
        %v3110 = vadd.f32 %v3072, %v3085
        %v3111 = vadd.f32 %v3073, %v3085
        %v3112 = vadd.f32 %v3074, %v3085
        %v3113 = vadd.f32 %v3075, %v3085
        %v3114 = vadd.f32 %v3076, %v3085
        %v3115 = vadd.f32 %v3077, %v3085
        %v3116 = vadd.f32 %v3078, %v3085
        %v3117 = vadd.f32 %v3079, %v3085
        %v3118 = vadd.f32 %v3080, %v3085
        %v3119 = vadd.f32 %v3087, %v2917
        %v3120 = vadd.f32 %v3088, %v2920
        %v3121 = vadd.f32 %v3089, %v2925
        %v3122 = vadd.f32 %v3090, %v2928
        %v3123 = vadd.f32 %v3091, %v2933
        %v3124 = vadd.f32 %v3092, %v2936
        %v3125 = vadd.f32 %v3093, %v2941
        %v3126 = vadd.f32 %v3094, %v2944
        %v3127 = vadd.f32 %v3095, %v2949
        %v3128 = vadd.f32 %v3096, %v2952
        %v3129 = vadd.f32 %v3097, %v2957
        %v3130 = vadd.f32 %v3098, %v2960
        %v3131 = vadd.f32 %v3099, %v2965
        %v3132 = vadd.f32 %v3100, %v2968
        %v3133 = vadd.f32 %v3101, %v2973
        %v3134 = vadd.f32 %v3102, %v2976
        %v3135 = vadd.f32 %v3103, %v2981
        %v3136 = vadd.f32 %v3104, %v2984
        %v3137 = vadd.f32 %v3105, %v2989
        %v3138 = vadd.f32 %v3106, %v2992
        %v3139 = vadd.f32 %v3107, %v2997
        %v3140 = vadd.f32 %v3108, %v3000
        %v3141 = vadd.f32 %v3109, %v3005
        %v3142 = vadd.f32 %v3110, %v3008
        %v3143 = vadd.f32 %v3111, %v3013
        %v3144 = vadd.f32 %v3112, %v3016
        %v3145 = vadd.f32 %v3113, %v3021
        %v3146 = vadd.f32 %v3114, %v3024
        %v3147 = vadd.f32 %v3115, %v3029
        %v3148 = vadd.f32 %v3116, %v3032
        %v3149 = vadd.f32 %v3117, %v3037
        %v3150 = vadd.f32 %v3118, %v3040
        %v3151 = vmax.f32 %v3119, 0.0
        %v3152 = vmax.f32 %v3120, 0.0
        %v3153 = vmax.f32 %v3121, 0.0
        %v3154 = vmax.f32 %v3122, 0.0
        %v3155 = vmax.f32 %v3123, 0.0
        %v3156 = vmax.f32 %v3124, 0.0
        %v3157 = vmax.f32 %v3125, 0.0
        %v3158 = vmax.f32 %v3126, 0.0
        %v3159 = vmax.f32 %v3127, 0.0
        %v3160 = vmax.f32 %v3128, 0.0
        %v3161 = vmax.f32 %v3129, 0.0
        %v3162 = vmax.f32 %v3130, 0.0
        %v3163 = vmax.f32 %v3131, 0.0
        %v3164 = vmax.f32 %v3132, 0.0
        %v3165 = vmax.f32 %v3133, 0.0
        %v3166 = vmax.f32 %v3134, 0.0
        %v3167 = vmax.f32 %v3135, 0.0
        %v3168 = vmax.f32 %v3136, 0.0
        %v3169 = vmax.f32 %v3137, 0.0
        %v3170 = vmax.f32 %v3138, 0.0
        %v3171 = vmax.f32 %v3139, 0.0
        %v3172 = vmax.f32 %v3140, 0.0
        %v3173 = vmax.f32 %v3141, 0.0
        %v3174 = vmax.f32 %v3142, 0.0
        %v3175 = vmax.f32 %v3143, 0.0
        %v3176 = vmax.f32 %v3144, 0.0
        %v3177 = vmax.f32 %v3145, 0.0
        %v3178 = vmax.f32 %v3146, 0.0
        %v3179 = vmax.f32 %v3147, 0.0
        %v3180 = vmax.f32 %v3148, 0.0
        %v3181 = vmax.f32 %v3149, 0.0
        %v3182 = vmax.f32 %v3150, 0.0
        %v3183 = vld [vmem:[#allocation13] sm:$0xff]
        %v3184 = vld [vmem:[#allocation13 + $0x8] sm:$0xff]
        %v3185 = vld [vmem:[#allocation13 + $0x10] sm:$0xff]
        %v3186 = vld [vmem:[#allocation13 + $0x18] sm:$0xff]
        %v3187 = vld [vmem:[#allocation13 + $0x20] sm:$0xff]
        %v3188 = vld [vmem:[#allocation13 + $0x28] sm:$0xff]
        %v3189 = vld [vmem:[#allocation14] sm:$0x1]
        %v3190 = vld [vmem:[#allocation16] sm:$0x1]
        %v3191 = vld [vmem:[#allocation17] sm:$0x1]
        %v3192 = vpack.c.bf16 0.0, 0.0
        %v3193 = vpack.c.bf16 %v3152, %v3151
        %v3194 = vpack.c.bf16 %v3154, %v3153
        %v3195 = vpack.c.bf16 %v3156, %v3155
        %v3196 = vpack.c.bf16 %v3158, %v3157
        %v3197 = vpack.c.bf16 %v3160, %v3159
        %v3198 = vpack.c.bf16 %v3162, %v3161
        %v3199 = vpack.c.bf16 %v3164, %v3163
        %v3200 = vpack.c.bf16 %v3166, %v3165
        %v3201 = vpack.c.bf16 %v3168, %v3167
        %v3202 = vpack.c.bf16 %v3170, %v3169
        %v3203 = vpack.c.bf16 %v3172, %v3171
        %v3204 = vpack.c.bf16 %v3174, %v3173
        %v3205 = vpack.c.bf16 %v3176, %v3175
        %v3206 = vpack.c.bf16 %v3178, %v3177
        %v3207 = vpack.c.bf16 %v3180, %v3179
        %v3208 = vpack.c.bf16 %v3184, %v3183
        %v3209 = vpack.c.bf16 %v3182, %v3181
        %v3210 = vpack.c.bf16 %v3186, %v3185
        %vm3211 = vcmask 130048
        %v3213 = vsel %vm3211, %v3193, 0
        %v3216 = vsel %vm3211, %v3194, 0
        %v3219 = vsel %vm3211, %v3195, 0
        %v3222 = vsel %vm3211, %v3196, 0
        %v3225 = vsel %vm3211, %v3197, 0
        %v3228 = vsel %vm3211, %v3198, 0
        %v3231 = vsel %vm3211, %v3199, 0
        %v3234 = vsel %vm3211, %v3200, 0
        %v3237 = vsel %vm3211, %v3201, 0
        %v3240 = vsel %vm3211, %v3202, 0
        %v3243 = vsel %vm3211, %v3203, 0
        %v3246 = vsel %vm3211, %v3204, 0
        %v3249 = vsel %vm3211, %v3205, 0
        %v3252 = vsel %vm3211, %v3206, 0
        %v3255 = vsel %vm3211, %v3207, 0
        %v3258 = vsel %vm3211, %v3209, 0
        %3260 = vmatprep.subr.bf16.mxu0 0
        %3261 = vmatpush1.bf16.msra.mxu0 %v3210
        %3262 = vmatprep.subr.bf16.mxu0 0
        %3263 = vmatpush1.bf16.msra.mxu0 0
        %3264 = vmatprep.subr.bf16.mxu0 0
        %3265 = vmatpush1.bf16.msra.mxu0 0
        %3266 = vmatprep.subr.bf16.mxu0 0
        %3267 = vmatpush1.bf16.msra.mxu0 0
        %3268 = vmatprep.subr.bf16.mxu0 0
        %3269 = vmatpush1.bf16.msra.mxu0 0
        %3270 = vmatprep.subr.bf16.mxu0 0
        %3271 = vmatpush1.bf16.msra.mxu0 0
        %3272 = vmatprep.subr.bf16.mxu0 0
        %3273 = vmatpush1.bf16.msra.mxu0 0
        %3274 = vmatprep.subr.bf16.mxu0 0
        %3275 = vmatpush1.bf16.msra.mxu0 0
        %3276 = vmatprep.subr.bf16.mxu0 0
        %3277 = vmatpush1.bf16.msra.mxu0 0
        %3278 = vmatprep.subr.bf16.mxu0 0
        %3279 = vmatpush1.bf16.msra.mxu0 0
        %3280 = vmatprep.subr.bf16.mxu0 0
        %3281 = vmatpush1.bf16.msra.mxu0 0
        %3282 = vmatprep.subr.bf16.mxu0 0
        %3283 = vmatpush1.bf16.msra.mxu0 0
        %3284 = vmatprep.subr.bf16.mxu0 0
        %3285 = vmatpush1.bf16.msra.mxu0 0
        %3286 = vmatprep.subr.bf16.mxu0 0
        %3287 = vmatpush1.bf16.msra.mxu0 0
        %3288 = vmatprep.subr.bf16.mxu0 0
        %3289 = vmatpush1.bf16.msra.mxu0 0
        %3290 = vmatprep.subr.bf16.mxu0 0
        %3291 = vmatpush1.bf16.msra.mxu0 0
        %3292 = vmatprep.mubr.bf16.mxu0 0
        %3293 = vmatmul.mubr.bf16.gmra.mrb[0].mxu0 %v3213
        %v3294 = vpop.f32.mrb[0].mxu0
        %v3295 = vadd.f32 0.0, %v3294
        %v3296 = vpop.f32.mrb[0].mxu0
        %v3297 = vpop.f32.mrb[0].mxu0
        %v3298 = vadd.f32 0.0, %v3297
        %v3299 = vpop.f32.mrb[0].mxu0
        %3300 = vmatprep.mubr.bf16.mxu0 0
        %3301 = vmatmul.mubr.bf16.gmra.mrb[0].mxu0 %v3216
        %v3302 = vpop.f32.mrb[0].mxu0
        %v3303 = vadd.f32 0.0, %v3302
        %v3304 = vpop.f32.mrb[0].mxu0
        %v3305 = vpop.f32.mrb[0].mxu0
        %v3306 = vadd.f32 0.0, %v3305
        %v3307 = vpop.f32.mrb[0].mxu0
        %3308 = vmatprep.mubr.bf16.mxu0 0
        %3309 = vmatmul.mubr.bf16.gmra.mrb[0].mxu0 %v3219
        %v3310 = vpop.f32.mrb[0].mxu0
        %v3311 = vadd.f32 0.0, %v3310
        %v3312 = vpop.f32.mrb[0].mxu0
        %v3313 = vpop.f32.mrb[0].mxu0
        %v3314 = vadd.f32 0.0, %v3313
        %v3315 = vpop.f32.mrb[0].mxu0
        %3316 = vmatprep.mubr.bf16.mxu0 0
        %3317 = vmatmul.mubr.bf16.gmra.mrb[0].mxu0 %v3222
        %v3318 = vpop.f32.mrb[0].mxu0
        %v3319 = vadd.f32 0.0, %v3318
        %v3320 = vpop.f32.mrb[0].mxu0
        %v3321 = vpop.f32.mrb[0].mxu0
        %v3322 = vadd.f32 0.0, %v3321
        %v3323 = vpop.f32.mrb[0].mxu0
        %3324 = vmatprep.mubr.bf16.mxu0 0
        %3325 = vmatmul.mubr.bf16.gmra.mrb[0].mxu0 %v3225
        %v3326 = vpop.f32.mrb[0].mxu0
        %v3327 = vadd.f32 0.0, %v3326
        %v3328 = vpop.f32.mrb[0].mxu0
        %v3329 = vpop.f32.mrb[0].mxu0
        %v3330 = vadd.f32 0.0, %v3329
        %v3331 = vpop.f32.mrb[0].mxu0
        %3332 = vmatprep.mubr.bf16.mxu0 0
        %3333 = vmatmul.mubr.bf16.gmra.mrb[0].mxu0 %v3228
        %v3334 = vpop.f32.mrb[0].mxu0
        %v3335 = vadd.f32 0.0, %v3334
        %v3336 = vpop.f32.mrb[0].mxu0
        %v3337 = vpop.f32.mrb[0].mxu0
        %v3338 = vadd.f32 0.0, %v3337
        %v3339 = vpop.f32.mrb[0].mxu0
        %3340 = vmatprep.mubr.bf16.mxu0 0
        %3341 = vmatmul.mubr.bf16.gmra.mrb[0].mxu0 %v3231
        %v3342 = vpop.f32.mrb[0].mxu0
        %v3343 = vadd.f32 0.0, %v3342
        %v3344 = vpop.f32.mrb[0].mxu0
        %v3345 = vpop.f32.mrb[0].mxu0
        %v3346 = vadd.f32 0.0, %v3345
        %v3347 = vpop.f32.mrb[0].mxu0
        %3348 = vmatprep.mubr.bf16.mxu0 0
        %3349 = vmatmul.mubr.bf16.gmra.mrb[0].mxu0 %v3234
        %v3350 = vpop.f32.mrb[0].mxu0
        %v3351 = vadd.f32 0.0, %v3350
        %v3352 = vpop.f32.mrb[0].mxu0
        %v3353 = vpop.f32.mrb[0].mxu0
        %v3354 = vadd.f32 0.0, %v3353
        %v3355 = vpop.f32.mrb[0].mxu0
        %3356 = vmatprep.mubr.bf16.mxu0 0
        %3357 = vmatmul.mubr.bf16.gmra.mrb[0].mxu0 %v3237
        %v3358 = vpop.f32.mrb[0].mxu0
        %v3359 = vadd.f32 0.0, %v3358
        %v3360 = vpop.f32.mrb[0].mxu0
        %v3361 = vpop.f32.mrb[0].mxu0
        %v3362 = vadd.f32 0.0, %v3361
        %v3363 = vpop.f32.mrb[0].mxu0
        %3364 = vmatprep.mubr.bf16.mxu0 0
        %3365 = vmatmul.mubr.bf16.gmra.mrb[0].mxu0 %v3240
        %v3366 = vpop.f32.mrb[0].mxu0
        %v3367 = vadd.f32 0.0, %v3366
        %v3368 = vpop.f32.mrb[0].mxu0
        %v3369 = vpop.f32.mrb[0].mxu0
        %v3370 = vadd.f32 0.0, %v3369
        %v3371 = vpop.f32.mrb[0].mxu0
        %3372 = vmatprep.mubr.bf16.mxu0 0
        %3373 = vmatmul.mubr.bf16.gmra.mrb[0].mxu0 %v3243
        %v3374 = vpop.f32.mrb[0].mxu0
        %v3375 = vadd.f32 0.0, %v3374
        %v3376 = vpop.f32.mrb[0].mxu0
        %v3377 = vpop.f32.mrb[0].mxu0
        %v3378 = vadd.f32 0.0, %v3377
        %v3379 = vpop.f32.mrb[0].mxu0
        %3380 = vmatprep.mubr.bf16.mxu0 0
        %3381 = vmatmul.mubr.bf16.gmra.mrb[0].mxu0 %v3246
        %v3382 = vpop.f32.mrb[0].mxu0
        %v3383 = vadd.f32 0.0, %v3382
        %v3384 = vpop.f32.mrb[0].mxu0
        %v3385 = vpop.f32.mrb[0].mxu0
        %v3386 = vadd.f32 0.0, %v3385
        %v3387 = vpop.f32.mrb[0].mxu0
        %3388 = vmatprep.mubr.bf16.mxu0 0
        %3389 = vmatmul.mubr.bf16.gmra.mrb[0].mxu0 %v3249
        %v3390 = vpop.f32.mrb[0].mxu0
        %v3391 = vadd.f32 0.0, %v3390
        %v3392 = vpop.f32.mrb[0].mxu0
        %v3393 = vpop.f32.mrb[0].mxu0
        %v3394 = vadd.f32 0.0, %v3393
        %v3395 = vpop.f32.mrb[0].mxu0
        %3396 = vmatprep.mubr.bf16.mxu0 0
        %3397 = vmatmul.mubr.bf16.gmra.mrb[0].mxu0 %v3252
        %v3398 = vpop.f32.mrb[0].mxu0
        %v3399 = vadd.f32 0.0, %v3398
        %v3400 = vpop.f32.mrb[0].mxu0
        %v3401 = vpop.f32.mrb[0].mxu0
        %v3402 = vadd.f32 0.0, %v3401
        %v3403 = vpop.f32.mrb[0].mxu0
        %3404 = vmatprep.mubr.bf16.mxu0 0
        %3405 = vmatmul.mubr.bf16.gmra.mrb[0].mxu0 %v3255
        %v3406 = vpop.f32.mrb[0].mxu0
        %v3407 = vadd.f32 0.0, %v3406
        %v3408 = vpop.f32.mrb[0].mxu0
        %v3409 = vpop.f32.mrb[0].mxu0
        %v3410 = vadd.f32 0.0, %v3409
        %v3411 = vpop.f32.mrb[0].mxu0
        %3412 = vmatprep.mubr.bf16.mxu0 0
        %3413 = vmatmul.mubr.bf16.gmra.mrb[0].mxu0 %v3258
        %v3414 = vpop.f32.mrb[0].mxu0
        %v3415 = vadd.f32 0.0, %v3414
        %v3416 = vpop.f32.mrb[0].mxu0
        %v3417 = vpop.f32.mrb[0].mxu0
        %v3418 = vadd.f32 0.0, %v3417
        %v3419 = vpop.f32.mrb[0].mxu0
        %3420 = vdwg.mxu0
        %v3422 = vsel %vm3211, %v3192, 0
        %3424 = vmatprep.subr.bf16.mxu0 0
        %3425 = vmatpush1.bf16.msra.mxu0 %v3208
        %3426 = vmatprep.subr.bf16.mxu0 0
        %3427 = vmatpush1.bf16.msra.mxu0 0
        %3428 = vmatprep.subr.bf16.mxu0 0
        %3429 = vmatpush1.bf16.msra.mxu0 0
        %3430 = vmatprep.subr.bf16.mxu0 0
        %3431 = vmatpush1.bf16.msra.mxu0 0
        %3432 = vmatprep.subr.bf16.mxu0 0
        %3433 = vmatpush1.bf16.msra.mxu0 0
        %3434 = vmatprep.subr.bf16.mxu0 0
        %3435 = vmatpush1.bf16.msra.mxu0 0
        %3436 = vmatprep.subr.bf16.mxu0 0
        %3437 = vmatpush1.bf16.msra.mxu0 0
        %3438 = vmatprep.subr.bf16.mxu0 0
        %3439 = vmatpush1.bf16.msra.mxu0 0
        %3440 = vmatprep.subr.bf16.mxu0 0
        %3441 = vmatpush1.bf16.msra.mxu0 0
        %3442 = vmatprep.subr.bf16.mxu0 0
        %3443 = vmatpush1.bf16.msra.mxu0 0
        %3444 = vmatprep.subr.bf16.mxu0 0
        %3445 = vmatpush1.bf16.msra.mxu0 0
        %3446 = vmatprep.subr.bf16.mxu0 0
        %3447 = vmatpush1.bf16.msra.mxu0 0
        %3448 = vmatprep.subr.bf16.mxu0 0
        %3449 = vmatpush1.bf16.msra.mxu0 0
        %3450 = vmatprep.subr.bf16.mxu0 0
        %3451 = vmatpush1.bf16.msra.mxu0 0
        %3452 = vmatprep.subr.bf16.mxu0 0
        %3453 = vmatpush1.bf16.msra.mxu0 0
        %3454 = vmatprep.subr.bf16.mxu0 0
        %3455 = vmatpush1.bf16.msra.mxu0 0
        %3456 = vmatprep.mubr.bf16.mxu0 0
        %3457 = vmatmul.mubr.bf16.gmra.mrb[0].mxu0 %v3422
        %v3458 = vpop.f32.mrb[0].mxu0
        %v3459 = vadd.f32 %v3295, %v3458
        %v3460 = vpop.f32.mrb[0].mxu0
        %v3461 = vpop.f32.mrb[0].mxu0
        %v3462 = vadd.f32 %v3298, %v3461
        %v3463 = vpop.f32.mrb[0].mxu0
        %3464 = vmatprep.mubr.bf16.mxu0 0
        %3465 = vmatmul.mubr.bf16.gmra.mrb[0].mxu0 %v3213
        %v3466 = vpop.f32.mrb[0].mxu0
        %v3467 = vadd.f32 %v3303, %v3466
        %v3468 = vpop.f32.mrb[0].mxu0
        %v3469 = vpop.f32.mrb[0].mxu0
        %v3470 = vadd.f32 %v3306, %v3469
        %v3471 = vpop.f32.mrb[0].mxu0
        %3472 = vmatprep.mubr.bf16.mxu0 0
        %3473 = vmatmul.mubr.bf16.gmra.mrb[0].mxu0 %v3216
        %v3474 = vpop.f32.mrb[0].mxu0
        %v3475 = vadd.f32 %v3311, %v3474
        %v3476 = vpop.f32.mrb[0].mxu0
        %v3477 = vpop.f32.mrb[0].mxu0
        %v3478 = vadd.f32 %v3314, %v3477
        %v3479 = vpop.f32.mrb[0].mxu0
        %3480 = vmatprep.mubr.bf16.mxu0 0
        %3481 = vmatmul.mubr.bf16.gmra.mrb[0].mxu0 %v3219
        %v3482 = vpop.f32.mrb[0].mxu0
        %v3483 = vadd.f32 %v3319, %v3482
        %v3484 = vpop.f32.mrb[0].mxu0
        %v3485 = vpop.f32.mrb[0].mxu0
        %v3486 = vadd.f32 %v3322, %v3485
        %v3487 = vpop.f32.mrb[0].mxu0
        %3488 = vmatprep.mubr.bf16.mxu0 0
        %3489 = vmatmul.mubr.bf16.gmra.mrb[0].mxu0 %v3222
        %v3490 = vpop.f32.mrb[0].mxu0
        %v3491 = vadd.f32 %v3327, %v3490
        %v3492 = vpop.f32.mrb[0].mxu0
        %v3493 = vpop.f32.mrb[0].mxu0
        %v3494 = vadd.f32 %v3330, %v3493
        %v3495 = vpop.f32.mrb[0].mxu0
        %3496 = vmatprep.mubr.bf16.mxu0 0
        %3497 = vmatmul.mubr.bf16.gmra.mrb[0].mxu0 %v3225
        %v3498 = vpop.f32.mrb[0].mxu0
        %v3499 = vadd.f32 %v3335, %v3498
        %v3500 = vpop.f32.mrb[0].mxu0
        %v3501 = vpop.f32.mrb[0].mxu0
        %v3502 = vadd.f32 %v3338, %v3501
        %v3503 = vpop.f32.mrb[0].mxu0
        %3504 = vmatprep.mubr.bf16.mxu0 0
        %3505 = vmatmul.mubr.bf16.gmra.mrb[0].mxu0 %v3228
        %v3506 = vpop.f32.mrb[0].mxu0
        %v3507 = vadd.f32 %v3343, %v3506
        %v3508 = vpop.f32.mrb[0].mxu0
        %v3509 = vpop.f32.mrb[0].mxu0
        %v3510 = vadd.f32 %v3346, %v3509
        %v3511 = vpop.f32.mrb[0].mxu0
        %3512 = vmatprep.mubr.bf16.mxu0 0
        %3513 = vmatmul.mubr.bf16.gmra.mrb[0].mxu0 %v3231
        %v3514 = vpop.f32.mrb[0].mxu0
        %v3515 = vadd.f32 %v3351, %v3514
        %v3516 = vpop.f32.mrb[0].mxu0
        %v3517 = vpop.f32.mrb[0].mxu0
        %v3518 = vadd.f32 %v3354, %v3517
        %v3519 = vpop.f32.mrb[0].mxu0
        %3520 = vmatprep.mubr.bf16.mxu0 0
        %3521 = vmatmul.mubr.bf16.gmra.mrb[0].mxu0 %v3234
        %v3522 = vpop.f32.mrb[0].mxu0
        %v3523 = vadd.f32 %v3359, %v3522
        %v3524 = vpop.f32.mrb[0].mxu0
        %v3525 = vpop.f32.mrb[0].mxu0
        %v3526 = vadd.f32 %v3362, %v3525
        %v3527 = vpop.f32.mrb[0].mxu0
        %3528 = vmatprep.mubr.bf16.mxu0 0
        %3529 = vmatmul.mubr.bf16.gmra.mrb[0].mxu0 %v3237
        %v3530 = vpop.f32.mrb[0].mxu0
        %v3531 = vadd.f32 %v3367, %v3530
        %v3532 = vpop.f32.mrb[0].mxu0
        %v3533 = vpop.f32.mrb[0].mxu0
        %v3534 = vadd.f32 %v3370, %v3533
        %v3535 = vpop.f32.mrb[0].mxu0
        %3536 = vmatprep.mubr.bf16.mxu0 0
        %3537 = vmatmul.mubr.bf16.gmra.mrb[0].mxu0 %v3240
        %v3538 = vpop.f32.mrb[0].mxu0
        %v3539 = vadd.f32 %v3375, %v3538
        %v3540 = vpop.f32.mrb[0].mxu0
        %v3541 = vpop.f32.mrb[0].mxu0
        %v3542 = vadd.f32 %v3378, %v3541
        %v3543 = vpop.f32.mrb[0].mxu0
        %3544 = vmatprep.mubr.bf16.mxu0 0
        %3545 = vmatmul.mubr.bf16.gmra.mrb[0].mxu0 %v3243
        %v3546 = vpop.f32.mrb[0].mxu0
        %v3547 = vadd.f32 %v3383, %v3546
        %v3548 = vpop.f32.mrb[0].mxu0
        %v3549 = vpop.f32.mrb[0].mxu0
        %v3550 = vadd.f32 %v3386, %v3549
        %v3551 = vpop.f32.mrb[0].mxu0
        %3552 = vmatprep.mubr.bf16.mxu0 0
        %3553 = vmatmul.mubr.bf16.gmra.mrb[0].mxu0 %v3246
        %v3554 = vpop.f32.mrb[0].mxu0
        %v3555 = vadd.f32 %v3391, %v3554
        %v3556 = vpop.f32.mrb[0].mxu0
        %v3557 = vpop.f32.mrb[0].mxu0
        %v3558 = vadd.f32 %v3394, %v3557
        %v3559 = vpop.f32.mrb[0].mxu0
        %3560 = vmatprep.mubr.bf16.mxu0 0
        %3561 = vmatmul.mubr.bf16.gmra.mrb[0].mxu0 %v3249
        %v3562 = vpop.f32.mrb[0].mxu0
        %v3563 = vadd.f32 %v3399, %v3562
        %v3564 = vpop.f32.mrb[0].mxu0
        %v3565 = vpop.f32.mrb[0].mxu0
        %v3566 = vadd.f32 %v3402, %v3565
        %v3567 = vpop.f32.mrb[0].mxu0
        %3568 = vmatprep.mubr.bf16.mxu0 0
        %3569 = vmatmul.mubr.bf16.gmra.mrb[0].mxu0 %v3252
        %v3570 = vpop.f32.mrb[0].mxu0
        %v3571 = vadd.f32 %v3407, %v3570
        %v3572 = vpop.f32.mrb[0].mxu0
        %v3573 = vpop.f32.mrb[0].mxu0
        %v3574 = vadd.f32 %v3410, %v3573
        %v3575 = vpop.f32.mrb[0].mxu0
        %3576 = vmatprep.mubr.bf16.mxu0 0
        %3577 = vmatmul.mubr.bf16.gmra.mrb[0].mxu0 %v3255
        %v3578 = vpop.f32.mrb[0].mxu0
        %v3579 = vadd.f32 %v3415, %v3578
        %v3580 = vpop.f32.mrb[0].mxu0
        %v3581 = vpop.f32.mrb[0].mxu0
        %v3582 = vadd.f32 %v3418, %v3581
        %v3583 = vpop.f32.mrb[0].mxu0
        %3584 = vdwg.mxu0
        %v3585 = vpack.c.bf16 %v3188, %v3187
        %3586 = vmatprep.subr.bf16.mxu0 0
        %3587 = vmatpush1.bf16.msra.mxu0 %v3585
        %3588 = vmatprep.subr.bf16.mxu0 0
        %3589 = vmatpush1.bf16.msra.mxu0 0
        %3590 = vmatprep.subr.bf16.mxu0 0
        %3591 = vmatpush1.bf16.msra.mxu0 0
        %3592 = vmatprep.subr.bf16.mxu0 0
        %3593 = vmatpush1.bf16.msra.mxu0 0
        %3594 = vmatprep.subr.bf16.mxu0 0
        %3595 = vmatpush1.bf16.msra.mxu0 0
        %3596 = vmatprep.subr.bf16.mxu0 0
        %3597 = vmatpush1.bf16.msra.mxu0 0
        %3598 = vmatprep.subr.bf16.mxu0 0
        %3599 = vmatpush1.bf16.msra.mxu0 0
        %3600 = vmatprep.subr.bf16.mxu0 0
        %3601 = vmatpush1.bf16.msra.mxu0 0
        %3602 = vmatprep.subr.bf16.mxu0 0
        %3603 = vmatpush1.bf16.msra.mxu0 0
        %3604 = vmatprep.subr.bf16.mxu0 0
        %3605 = vmatpush1.bf16.msra.mxu0 0
        %3606 = vmatprep.subr.bf16.mxu0 0
        %3607 = vmatpush1.bf16.msra.mxu0 0
        %3608 = vmatprep.subr.bf16.mxu0 0
        %3609 = vmatpush1.bf16.msra.mxu0 0
        %3610 = vmatprep.subr.bf16.mxu0 0
        %3611 = vmatpush1.bf16.msra.mxu0 0
        %3612 = vmatprep.subr.bf16.mxu0 0
        %3613 = vmatpush1.bf16.msra.mxu0 0
        %3614 = vmatprep.subr.bf16.mxu0 0
        %3615 = vmatpush1.bf16.msra.mxu0 0
        %3616 = vmatprep.subr.bf16.mxu0 0
        %3617 = vmatpush1.bf16.msra.mxu0 0
        %3618 = vmatprep.mubr.bf16.mxu0 0
        %3619 = vmatmul.mubr.bf16.gmra.mrb[0].mxu0 %v3216
        %v3620 = vpop.f32.mrb[0].mxu0
        %v3621 = vadd.f32 0.0, %v3620
        %v3622 = vpop.f32.mrb[0].mxu0
        %v3623 = vpop.f32.mrb[0].mxu0
        %v3624 = vadd.f32 0.0, %v3623
        %v3625 = vpop.f32.mrb[0].mxu0
        %3626 = vmatprep.mubr.bf16.mxu0 0
        %3627 = vmatmul.mubr.bf16.gmra.mrb[0].mxu0 %v3219
        %v3628 = vpop.f32.mrb[0].mxu0
        %v3629 = vadd.f32 0.0, %v3628
        %v3630 = vpop.f32.mrb[0].mxu0
        %v3631 = vpop.f32.mrb[0].mxu0
        %v3632 = vadd.f32 0.0, %v3631
        %v3633 = vpop.f32.mrb[0].mxu0
        %3634 = vmatprep.mubr.bf16.mxu0 0
        %3635 = vmatmul.mubr.bf16.gmra.mrb[0].mxu0 %v3222
        %v3636 = vpop.f32.mrb[0].mxu0
        %v3637 = vadd.f32 0.0, %v3636
        %v3638 = vpop.f32.mrb[0].mxu0
        %v3639 = vpop.f32.mrb[0].mxu0
        %v3640 = vadd.f32 0.0, %v3639
        %v3641 = vpop.f32.mrb[0].mxu0
        %3642 = vmatprep.mubr.bf16.mxu0 0
        %3643 = vmatmul.mubr.bf16.gmra.mrb[0].mxu0 %v3225
        %v3644 = vpop.f32.mrb[0].mxu0
        %v3645 = vadd.f32 0.0, %v3644
        %v3646 = vpop.f32.mrb[0].mxu0
        %v3647 = vpop.f32.mrb[0].mxu0
        %v3648 = vadd.f32 0.0, %v3647
        %v3649 = vpop.f32.mrb[0].mxu0
        %3650 = vmatprep.mubr.bf16.mxu0 0
        %3651 = vmatmul.mubr.bf16.gmra.mrb[0].mxu0 %v3228
        %v3652 = vpop.f32.mrb[0].mxu0
        %v3653 = vadd.f32 0.0, %v3652
        %v3654 = vpop.f32.mrb[0].mxu0
        %v3655 = vpop.f32.mrb[0].mxu0
        %v3656 = vadd.f32 0.0, %v3655
        %v3657 = vpop.f32.mrb[0].mxu0
        %3658 = vmatprep.mubr.bf16.mxu0 0
        %3659 = vmatmul.mubr.bf16.gmra.mrb[0].mxu0 %v3231
        %v3660 = vpop.f32.mrb[0].mxu0
        %v3661 = vadd.f32 0.0, %v3660
        %v3662 = vpop.f32.mrb[0].mxu0
        %v3663 = vpop.f32.mrb[0].mxu0
        %v3664 = vadd.f32 0.0, %v3663
        %v3665 = vpop.f32.mrb[0].mxu0
        %3666 = vmatprep.mubr.bf16.mxu0 0
        %3667 = vmatmul.mubr.bf16.gmra.mrb[0].mxu0 %v3234
        %v3668 = vpop.f32.mrb[0].mxu0
        %v3669 = vadd.f32 0.0, %v3668
        %v3670 = vpop.f32.mrb[0].mxu0
        %v3671 = vpop.f32.mrb[0].mxu0
        %v3672 = vadd.f32 0.0, %v3671
        %v3673 = vpop.f32.mrb[0].mxu0
        %3674 = vmatprep.mubr.bf16.mxu0 0
        %3675 = vmatmul.mubr.bf16.gmra.mrb[0].mxu0 %v3237
        %v3676 = vpop.f32.mrb[0].mxu0
        %v3677 = vadd.f32 0.0, %v3676
        %v3678 = vpop.f32.mrb[0].mxu0
        %v3679 = vpop.f32.mrb[0].mxu0
        %v3680 = vadd.f32 0.0, %v3679
        %v3681 = vpop.f32.mrb[0].mxu0
        %3682 = vmatprep.mubr.bf16.mxu0 0
        %3683 = vmatmul.mubr.bf16.gmra.mrb[0].mxu0 %v3240
        %v3684 = vpop.f32.mrb[0].mxu0
        %v3685 = vadd.f32 0.0, %v3684
        %v3686 = vpop.f32.mrb[0].mxu0
        %v3687 = vpop.f32.mrb[0].mxu0
        %v3688 = vadd.f32 0.0, %v3687
        %v3689 = vpop.f32.mrb[0].mxu0
        %3690 = vmatprep.mubr.bf16.mxu0 0
        %3691 = vmatmul.mubr.bf16.gmra.mrb[0].mxu0 %v3243
        %v3692 = vpop.f32.mrb[0].mxu0
        %v3693 = vadd.f32 0.0, %v3692
        %v3694 = vpop.f32.mrb[0].mxu0
        %v3695 = vpop.f32.mrb[0].mxu0
        %v3696 = vadd.f32 0.0, %v3695
        %v3697 = vpop.f32.mrb[0].mxu0
        %3698 = vmatprep.mubr.bf16.mxu0 0
        %3699 = vmatmul.mubr.bf16.gmra.mrb[0].mxu0 %v3246
        %v3700 = vpop.f32.mrb[0].mxu0
        %v3701 = vadd.f32 0.0, %v3700
        %v3702 = vpop.f32.mrb[0].mxu0
        %v3703 = vpop.f32.mrb[0].mxu0
        %v3704 = vadd.f32 0.0, %v3703
        %v3705 = vpop.f32.mrb[0].mxu0
        %3706 = vmatprep.mubr.bf16.mxu0 0
        %3707 = vmatmul.mubr.bf16.gmra.mrb[0].mxu0 %v3249
        %v3708 = vpop.f32.mrb[0].mxu0
        %v3709 = vadd.f32 0.0, %v3708
        %v3710 = vpop.f32.mrb[0].mxu0
        %v3711 = vpop.f32.mrb[0].mxu0
        %v3712 = vadd.f32 0.0, %v3711
        %v3713 = vpop.f32.mrb[0].mxu0
        %3714 = vmatprep.mubr.bf16.mxu0 0
        %3715 = vmatmul.mubr.bf16.gmra.mrb[0].mxu0 %v3252
        %v3716 = vpop.f32.mrb[0].mxu0
        %v3717 = vadd.f32 0.0, %v3716
        %v3718 = vpop.f32.mrb[0].mxu0
        %v3719 = vpop.f32.mrb[0].mxu0
        %v3720 = vadd.f32 0.0, %v3719
        %v3721 = vpop.f32.mrb[0].mxu0
        %3722 = vmatprep.mubr.bf16.mxu0 0
        %3723 = vmatmul.mubr.bf16.gmra.mrb[0].mxu0 %v3255
        %v3724 = vpop.f32.mrb[0].mxu0
        %v3725 = vadd.f32 0.0, %v3724
        %v3726 = vpop.f32.mrb[0].mxu0
        %v3727 = vpop.f32.mrb[0].mxu0
        %v3728 = vadd.f32 0.0, %v3727
        %v3729 = vpop.f32.mrb[0].mxu0
        %3730 = vmatprep.mubr.bf16.mxu0 0
        %3731 = vmatmul.mubr.bf16.gmra.mrb[0].mxu0 %v3258
        %v3732 = vpop.f32.mrb[0].mxu0
        %v3733 = vadd.f32 0.0, %v3732
        %v3734 = vpop.f32.mrb[0].mxu0
        %v3735 = vpop.f32.mrb[0].mxu0
        %v3736 = vadd.f32 0.0, %v3735
        %v3737 = vpop.f32.mrb[0].mxu0
        %3738 = vmatprep.mubr.bf16.mxu0 0
        %3739 = vmatmul.mubr.bf16.gmra.mrb[0].mxu0 %v3422
        %v3740 = vpop.f32.mrb[0].mxu0
        %v3741 = vadd.f32 0.0, %v3740
        %v3742 = vpop.f32.mrb[0].mxu0
        %v3743 = vpop.f32.mrb[0].mxu0
        %v3744 = vadd.f32 0.0, %v3743
        %v3745 = vpop.f32.mrb[0].mxu0
        %3746 = vdwg.mxu0
        %v3747 = vadd.f32 %v3459, %v3621
        %v3748 = vadd.f32 %v3462, %v3624
        %v3749 = vadd.f32 %v3467, %v3629
        %v3750 = vadd.f32 %v3470, %v3632
        %v3751 = vadd.f32 %v3475, %v3637
        %v3752 = vadd.f32 %v3478, %v3640
        %v3753 = vadd.f32 %v3483, %v3645
        %v3754 = vadd.f32 %v3486, %v3648
        %v3755 = vadd.f32 %v3491, %v3653
        %v3756 = vadd.f32 %v3494, %v3656
        %v3757 = vadd.f32 %v3499, %v3661
        %v3758 = vadd.f32 %v3502, %v3664
        %v3759 = vadd.f32 %v3507, %v3669
        %v3760 = vadd.f32 %v3510, %v3672
        %v3761 = vadd.f32 %v3515, %v3677
        %v3762 = vadd.f32 %v3518, %v3680
        %v3763 = vadd.f32 %v3523, %v3685
        %v3764 = vadd.f32 %v3526, %v3688
        %v3765 = vadd.f32 %v3531, %v3693
        %v3766 = vadd.f32 %v3534, %v3696
        %v3767 = vadd.f32 %v3539, %v3701
        %v3768 = vadd.f32 %v3542, %v3704
        %v3769 = vadd.f32 %v3547, %v3709
        %v3770 = vadd.f32 %v3550, %v3712
        %v3771 = vadd.f32 %v3555, %v3717
        %v3772 = vadd.f32 %v3558, %v3720
        %v3773 = vadd.f32 %v3563, %v3725
        %v3774 = vadd.f32 %v3566, %v3728
        %v3775 = vadd.f32 %v3571, %v3733
        %v3776 = vadd.f32 %v3574, %v3736
        %v3777 = vadd.f32 %v3579, %v3741
        %v3778 = vadd.f32 %v3582, %v3744
        %v3780 = vlaneseq
        %v3781 = vshrl.u32 %v3780, 7
        %v3782 = vsub.s32 0, %v3781
        %v3783 = vrot.slane %v3189, %v3782
        %v3785 = vadd.f32 %v3747, %v3783
        %v3786 = vadd.f32 %v3748, %v3783
        %v3787 = vadd.f32 %v3749, %v3783
        %v3788 = vadd.f32 %v3750, %v3783
        %v3789 = vadd.f32 %v3751, %v3783
        %v3790 = vadd.f32 %v3752, %v3783
        %v3791 = vadd.f32 %v3753, %v3783
        %v3792 = vadd.f32 %v3754, %v3783
        %v3793 = vadd.f32 %v3755, %v3783
        %v3794 = vadd.f32 %v3756, %v3783
        %v3795 = vadd.f32 %v3757, %v3783
        %v3796 = vadd.f32 %v3758, %v3783
        %v3797 = vadd.f32 %v3759, %v3783
        %v3798 = vadd.f32 %v3760, %v3783
        %v3799 = vadd.f32 %v3761, %v3783
        %v3800 = vadd.f32 %v3762, %v3783
        %v3801 = vadd.f32 %v3763, %v3783
        %v3802 = vadd.f32 %v3764, %v3783
        %v3803 = vadd.f32 %v3765, %v3783
        %v3804 = vadd.f32 %v3766, %v3783
        %v3805 = vadd.f32 %v3767, %v3783
        %v3806 = vadd.f32 %v3768, %v3783
        %v3807 = vadd.f32 %v3769, %v3783
        %v3808 = vadd.f32 %v3770, %v3783
        %v3809 = vadd.f32 %v3771, %v3783
        %v3810 = vadd.f32 %v3772, %v3783
        %v3811 = vadd.f32 %v3773, %v3783
        %v3812 = vadd.f32 %v3774, %v3783
        %v3813 = vadd.f32 %v3775, %v3783
        %v3814 = vadd.f32 %v3776, %v3783
        %v3815 = vadd.f32 %v3777, %v3783
        %v3816 = vadd.f32 %v3778, %v3783
        %v3818 = vlaneseq
        %v3819 = vshrl.u32 %v3818, 7
        %v3820 = vsub.s32 0, %v3819
        %v3821 = vrot.slane %v3190, %v3820
        %v3823 = vmul.f32 %v3785, %v3821
        %v3824 = vmul.f32 %v3786, %v3821
        %v3825 = vmul.f32 %v3787, %v3821
        %v3826 = vmul.f32 %v3788, %v3821
        %v3827 = vmul.f32 %v3789, %v3821
        %v3828 = vmul.f32 %v3790, %v3821
        %v3829 = vmul.f32 %v3791, %v3821
        %v3830 = vmul.f32 %v3792, %v3821
        %v3831 = vmul.f32 %v3793, %v3821
        %v3832 = vmul.f32 %v3794, %v3821
        %v3833 = vmul.f32 %v3795, %v3821
        %v3834 = vmul.f32 %v3796, %v3821
        %v3835 = vmul.f32 %v3797, %v3821
        %v3836 = vmul.f32 %v3798, %v3821
        %v3837 = vmul.f32 %v3799, %v3821
        %v3838 = vmul.f32 %v3800, %v3821
        %v3839 = vmul.f32 %v3801, %v3821
        %v3840 = vmul.f32 %v3802, %v3821
        %v3841 = vmul.f32 %v3803, %v3821
        %v3842 = vmul.f32 %v3804, %v3821
        %v3843 = vmul.f32 %v3805, %v3821
        %v3844 = vmul.f32 %v3806, %v3821
        %v3845 = vmul.f32 %v3807, %v3821
        %v3846 = vmul.f32 %v3808, %v3821
        %v3847 = vmul.f32 %v3809, %v3821
        %v3848 = vmul.f32 %v3810, %v3821
        %v3849 = vmul.f32 %v3811, %v3821
        %v3850 = vmul.f32 %v3812, %v3821
        %v3851 = vmul.f32 %v3813, %v3821
        %v3852 = vmul.f32 %v3814, %v3821
        %v3853 = vmul.f32 %v3815, %v3821
        %v3854 = vmul.f32 %v3816, %v3821
        %v3856 = vlaneseq
        %v3857 = vshrl.u32 %v3856, 7
        %v3858 = vsub.s32 0, %v3857
        %v3859 = vrot.slane %v3191, %v3858
        %v3861 = vadd.f32 %v3823, %v3859
        %v3862 = vadd.f32 %v3824, %v3859
        %v3863 = vadd.f32 %v3825, %v3859
        %v3864 = vadd.f32 %v3826, %v3859
        %v3865 = vadd.f32 %v3827, %v3859
        %v3866 = vadd.f32 %v3828, %v3859
        %v3867 = vadd.f32 %v3829, %v3859
        %v3868 = vadd.f32 %v3830, %v3859
        %v3869 = vadd.f32 %v3831, %v3859
        %v3870 = vadd.f32 %v3832, %v3859
        %v3871 = vadd.f32 %v3833, %v3859
        %v3872 = vadd.f32 %v3834, %v3859
        %v3873 = vadd.f32 %v3835, %v3859
        %v3874 = vadd.f32 %v3836, %v3859
        %v3875 = vadd.f32 %v3837, %v3859
        %v3876 = vadd.f32 %v3838, %v3859
        %v3877 = vadd.f32 %v3839, %v3859
        %v3878 = vadd.f32 %v3840, %v3859
        %v3879 = vadd.f32 %v3841, %v3859
        %v3880 = vadd.f32 %v3842, %v3859
        %v3881 = vadd.f32 %v3843, %v3859
        %v3882 = vadd.f32 %v3844, %v3859
        %v3883 = vadd.f32 %v3845, %v3859
        %v3884 = vadd.f32 %v3846, %v3859
        %v3885 = vadd.f32 %v3847, %v3859
        %v3886 = vadd.f32 %v3848, %v3859
        %v3887 = vadd.f32 %v3849, %v3859
        %v3888 = vadd.f32 %v3850, %v3859
        %v3889 = vadd.f32 %v3851, %v3859
        %v3890 = vadd.f32 %v3852, %v3859
        %v3891 = vadd.f32 %v3853, %v3859
        %v3892 = vadd.f32 %v3854, %v3859
        %v3893 = vadd.f32 %v3861, %v3151
        %v3894 = vadd.f32 %v3862, %v3152
        %v3895 = vadd.f32 %v3863, %v3153
        %v3896 = vadd.f32 %v3864, %v3154
        %v3897 = vadd.f32 %v3865, %v3155
        %v3898 = vadd.f32 %v3866, %v3156
        %v3899 = vadd.f32 %v3867, %v3157
        %v3900 = vadd.f32 %v3868, %v3158
        %v3901 = vadd.f32 %v3869, %v3159
        %v3902 = vadd.f32 %v3870, %v3160
        %v3903 = vadd.f32 %v3871, %v3161
        %v3904 = vadd.f32 %v3872, %v3162
        %v3905 = vadd.f32 %v3873, %v3163
        %v3906 = vadd.f32 %v3874, %v3164
        %v3907 = vadd.f32 %v3875, %v3165
        %v3908 = vadd.f32 %v3876, %v3166
        %v3909 = vadd.f32 %v3877, %v3167
        %v3910 = vadd.f32 %v3878, %v3168
        %v3911 = vadd.f32 %v3879, %v3169
        %v3912 = vadd.f32 %v3880, %v3170
        %v3913 = vadd.f32 %v3881, %v3171
        %v3914 = vadd.f32 %v3882, %v3172
        %v3915 = vadd.f32 %v3883, %v3173
        %v3916 = vadd.f32 %v3884, %v3174
        %v3917 = vadd.f32 %v3885, %v3175
        %v3918 = vadd.f32 %v3886, %v3176
        %v3919 = vadd.f32 %v3887, %v3177
        %v3920 = vadd.f32 %v3888, %v3178
        %v3921 = vadd.f32 %v3889, %v3179
        %v3922 = vadd.f32 %v3890, %v3180
        %v3923 = vadd.f32 %v3891, %v3181
        %v3924 = vadd.f32 %v3892, %v3182
        %v3925 = vmax.f32 %v3893, 0.0
        %v3926 = vmax.f32 %v3894, 0.0
        %v3927 = vmax.f32 %v3895, 0.0
        %v3928 = vmax.f32 %v3896, 0.0
        %v3929 = vmax.f32 %v3897, 0.0
        %v3930 = vmax.f32 %v3898, 0.0
        %v3931 = vmax.f32 %v3899, 0.0
        %v3932 = vmax.f32 %v3900, 0.0
        %v3933 = vmax.f32 %v3901, 0.0
        %v3934 = vmax.f32 %v3902, 0.0
        %v3935 = vmax.f32 %v3903, 0.0
        %v3936 = vmax.f32 %v3904, 0.0
        %v3937 = vmax.f32 %v3905, 0.0
        %v3938 = vmax.f32 %v3906, 0.0
        %v3939 = vmax.f32 %v3907, 0.0
        %v3940 = vmax.f32 %v3908, 0.0
        %v3941 = vmax.f32 %v3909, 0.0
        %v3942 = vmax.f32 %v3910, 0.0
        %v3943 = vmax.f32 %v3911, 0.0
        %v3944 = vmax.f32 %v3912, 0.0
        %v3945 = vmax.f32 %v3913, 0.0
        %v3946 = vmax.f32 %v3914, 0.0
        %v3947 = vmax.f32 %v3915, 0.0
        %v3948 = vmax.f32 %v3916, 0.0
        %v3949 = vmax.f32 %v3917, 0.0
        %v3950 = vmax.f32 %v3918, 0.0
        %v3951 = vmax.f32 %v3919, 0.0
        %v3952 = vmax.f32 %v3920, 0.0
        %v3953 = vmax.f32 %v3921, 0.0
        %v3954 = vmax.f32 %v3922, 0.0
        %v3955 = vmax.f32 %v3923, 0.0
        %v3956 = vmax.f32 %v3924, 0.0
        %v3957 = vld [vmem:[#allocation19] sm:$0xff]
        %v3958 = vld [vmem:[#allocation19 + $0x8] sm:$0xff]
        %v3959 = vld [vmem:[#allocation19 + $0x10] sm:$0xff]
        %v3960 = vld [vmem:[#allocation19 + $0x18] sm:$0xff]
        %v3961 = vld [vmem:[#allocation19 + $0x20] sm:$0xff]
        %v3962 = vld [vmem:[#allocation19 + $0x28] sm:$0xff]
        %v3963 = vld [vmem:[#allocation20] sm:$0x1]
        %v3964 = vld [vmem:[#allocation22] sm:$0x1]
        %v3965 = vld [vmem:[#allocation23] sm:$0x1]
        %v3966 = vpack.c.bf16 %v3926, %v3925
        %v3967 = vpack.c.bf16 %v3928, %v3927
        %v3968 = vpack.c.bf16 %v3930, %v3929
        %v3969 = vpack.c.bf16 %v3932, %v3931
        %v3970 = vpack.c.bf16 %v3934, %v3933
        %v3971 = vpack.c.bf16 %v3936, %v3935
        %v3972 = vpack.c.bf16 %v3938, %v3937
        %v3973 = vpack.c.bf16 %v3940, %v3939
        %v3974 = vpack.c.bf16 %v3942, %v3941
        %v3975 = vpack.c.bf16 %v3944, %v3943
        %v3976 = vpack.c.bf16 %v3946, %v3945
        %v3977 = vpack.c.bf16 %v3948, %v3947
        %v3978 = vpack.c.bf16 %v3950, %v3949
        %v3979 = vpack.c.bf16 %v3952, %v3951
        %v3980 = vpack.c.bf16 %v3954, %v3953
        %v3981 = vpack.c.bf16 %v3958, %v3957
        %v3982 = vpack.c.bf16 %v3956, %v3955
        %v3983 = vpack.c.bf16 %v3960, %v3959
        %v3985 = vsel %vm3211, %v3966, 0
        %v3988 = vsel %vm3211, %v3967, 0
        %v3991 = vsel %vm3211, %v3968, 0
        %v3994 = vsel %vm3211, %v3969, 0
        %v3997 = vsel %vm3211, %v3970, 0
        %v4000 = vsel %vm3211, %v3971, 0
        %v4003 = vsel %vm3211, %v3972, 0
        %v4006 = vsel %vm3211, %v3973, 0
        %v4009 = vsel %vm3211, %v3974, 0
        %v4012 = vsel %vm3211, %v3975, 0
        %v4015 = vsel %vm3211, %v3976, 0
        %v4018 = vsel %vm3211, %v3977, 0
        %v4021 = vsel %vm3211, %v3978, 0
        %v4024 = vsel %vm3211, %v3979, 0
        %v4027 = vsel %vm3211, %v3980, 0
        %v4030 = vsel %vm3211, %v3982, 0
        %4032 = vmatprep.subr.bf16.mxu0 0
        %4033 = vmatpush1.bf16.msra.mxu0 %v3983
        %4034 = vmatprep.subr.bf16.mxu0 0
        %4035 = vmatpush1.bf16.msra.mxu0 0
        %4036 = vmatprep.subr.bf16.mxu0 0
        %4037 = vmatpush1.bf16.msra.mxu0 0
        %4038 = vmatprep.subr.bf16.mxu0 0
        %4039 = vmatpush1.bf16.msra.mxu0 0
        %4040 = vmatprep.subr.bf16.mxu0 0
        %4041 = vmatpush1.bf16.msra.mxu0 0
        %4042 = vmatprep.subr.bf16.mxu0 0
        %4043 = vmatpush1.bf16.msra.mxu0 0
        %4044 = vmatprep.subr.bf16.mxu0 0
        %4045 = vmatpush1.bf16.msra.mxu0 0
        %4046 = vmatprep.subr.bf16.mxu0 0
        %4047 = vmatpush1.bf16.msra.mxu0 0
        %4048 = vmatprep.subr.bf16.mxu0 0
        %4049 = vmatpush1.bf16.msra.mxu0 0
        %4050 = vmatprep.subr.bf16.mxu0 0
        %4051 = vmatpush1.bf16.msra.mxu0 0
        %4052 = vmatprep.subr.bf16.mxu0 0
        %4053 = vmatpush1.bf16.msra.mxu0 0
        %4054 = vmatprep.subr.bf16.mxu0 0
        %4055 = vmatpush1.bf16.msra.mxu0 0
        %4056 = vmatprep.subr.bf16.mxu0 0
        %4057 = vmatpush1.bf16.msra.mxu0 0
        %4058 = vmatprep.subr.bf16.mxu0 0
        %4059 = vmatpush1.bf16.msra.mxu0 0
        %4060 = vmatprep.subr.bf16.mxu0 0
        %4061 = vmatpush1.bf16.msra.mxu0 0
        %4062 = vmatprep.subr.bf16.mxu0 0
        %4063 = vmatpush1.bf16.msra.mxu0 0
        %4064 = vmatprep.mubr.bf16.mxu0 0
        %4065 = vmatmul.mubr.bf16.gmra.mrb[0].mxu0 %v3985
        %v4066 = vpop.f32.mrb[0].mxu0
        %v4067 = vadd.f32 0.0, %v4066
        %v4068 = vpop.f32.mrb[0].mxu0
        %v4069 = vpop.f32.mrb[0].mxu0
        %v4070 = vadd.f32 0.0, %v4069
        %v4071 = vpop.f32.mrb[0].mxu0
        %4072 = vmatprep.mubr.bf16.mxu0 0
        %4073 = vmatmul.mubr.bf16.gmra.mrb[0].mxu0 %v3988
        %v4074 = vpop.f32.mrb[0].mxu0
        %v4075 = vadd.f32 0.0, %v4074
        %v4076 = vpop.f32.mrb[0].mxu0
        %v4077 = vpop.f32.mrb[0].mxu0
        %v4078 = vadd.f32 0.0, %v4077
        %v4079 = vpop.f32.mrb[0].mxu0
        %4080 = vmatprep.mubr.bf16.mxu0 0
        %4081 = vmatmul.mubr.bf16.gmra.mrb[0].mxu0 %v3991
        %v4082 = vpop.f32.mrb[0].mxu0
        %v4083 = vadd.f32 0.0, %v4082
        %v4084 = vpop.f32.mrb[0].mxu0
        %v4085 = vpop.f32.mrb[0].mxu0
        %v4086 = vadd.f32 0.0, %v4085
        %v4087 = vpop.f32.mrb[0].mxu0
        %4088 = vmatprep.mubr.bf16.mxu0 0
        %4089 = vmatmul.mubr.bf16.gmra.mrb[0].mxu0 %v3994
        %v4090 = vpop.f32.mrb[0].mxu0
        %v4091 = vadd.f32 0.0, %v4090
        %v4092 = vpop.f32.mrb[0].mxu0
        %v4093 = vpop.f32.mrb[0].mxu0
        %v4094 = vadd.f32 0.0, %v4093
        %v4095 = vpop.f32.mrb[0].mxu0
        %4096 = vmatprep.mubr.bf16.mxu0 0
        %4097 = vmatmul.mubr.bf16.gmra.mrb[0].mxu0 %v3997
        %v4098 = vpop.f32.mrb[0].mxu0
        %v4099 = vadd.f32 0.0, %v4098
        %v4100 = vpop.f32.mrb[0].mxu0
        %v4101 = vpop.f32.mrb[0].mxu0
        %v4102 = vadd.f32 0.0, %v4101
        %v4103 = vpop.f32.mrb[0].mxu0
        %4104 = vmatprep.mubr.bf16.mxu0 0
        %4105 = vmatmul.mubr.bf16.gmra.mrb[0].mxu0 %v4000
        %v4106 = vpop.f32.mrb[0].mxu0
        %v4107 = vadd.f32 0.0, %v4106
        %v4108 = vpop.f32.mrb[0].mxu0
        %v4109 = vpop.f32.mrb[0].mxu0
        %v4110 = vadd.f32 0.0, %v4109
        %v4111 = vpop.f32.mrb[0].mxu0
        %4112 = vmatprep.mubr.bf16.mxu0 0
        %4113 = vmatmul.mubr.bf16.gmra.mrb[0].mxu0 %v4003
        %v4114 = vpop.f32.mrb[0].mxu0
        %v4115 = vadd.f32 0.0, %v4114
        %v4116 = vpop.f32.mrb[0].mxu0
        %v4117 = vpop.f32.mrb[0].mxu0
        %v4118 = vadd.f32 0.0, %v4117
        %v4119 = vpop.f32.mrb[0].mxu0
        %4120 = vmatprep.mubr.bf16.mxu0 0
        %4121 = vmatmul.mubr.bf16.gmra.mrb[0].mxu0 %v4006
        %v4122 = vpop.f32.mrb[0].mxu0
        %v4123 = vadd.f32 0.0, %v4122
        %v4124 = vpop.f32.mrb[0].mxu0
        %v4125 = vpop.f32.mrb[0].mxu0
        %v4126 = vadd.f32 0.0, %v4125
        %v4127 = vpop.f32.mrb[0].mxu0
        %4128 = vmatprep.mubr.bf16.mxu0 0
        %4129 = vmatmul.mubr.bf16.gmra.mrb[0].mxu0 %v4009
        %v4130 = vpop.f32.mrb[0].mxu0
        %v4131 = vadd.f32 0.0, %v4130
        %v4132 = vpop.f32.mrb[0].mxu0
        %v4133 = vpop.f32.mrb[0].mxu0
        %v4134 = vadd.f32 0.0, %v4133
        %v4135 = vpop.f32.mrb[0].mxu0
        %4136 = vmatprep.mubr.bf16.mxu0 0
        %4137 = vmatmul.mubr.bf16.gmra.mrb[0].mxu0 %v4012
        %v4138 = vpop.f32.mrb[0].mxu0
        %v4139 = vadd.f32 0.0, %v4138
        %v4140 = vpop.f32.mrb[0].mxu0
        %v4141 = vpop.f32.mrb[0].mxu0
        %v4142 = vadd.f32 0.0, %v4141
        %v4143 = vpop.f32.mrb[0].mxu0
        %4144 = vmatprep.mubr.bf16.mxu0 0
        %4145 = vmatmul.mubr.bf16.gmra.mrb[0].mxu0 %v4015
        %v4146 = vpop.f32.mrb[0].mxu0
        %v4147 = vadd.f32 0.0, %v4146
        %v4148 = vpop.f32.mrb[0].mxu0
        %v4149 = vpop.f32.mrb[0].mxu0
        %v4150 = vadd.f32 0.0, %v4149
        %v4151 = vpop.f32.mrb[0].mxu0
        %4152 = vmatprep.mubr.bf16.mxu0 0
        %4153 = vmatmul.mubr.bf16.gmra.mrb[0].mxu0 %v4018
        %v4154 = vpop.f32.mrb[0].mxu0
        %v4155 = vadd.f32 0.0, %v4154
        %v4156 = vpop.f32.mrb[0].mxu0
        %v4157 = vpop.f32.mrb[0].mxu0
        %v4158 = vadd.f32 0.0, %v4157
        %v4159 = vpop.f32.mrb[0].mxu0
        %4160 = vmatprep.mubr.bf16.mxu0 0
        %4161 = vmatmul.mubr.bf16.gmra.mrb[0].mxu0 %v4021
        %v4162 = vpop.f32.mrb[0].mxu0
        %v4163 = vadd.f32 0.0, %v4162
        %v4164 = vpop.f32.mrb[0].mxu0
        %v4165 = vpop.f32.mrb[0].mxu0
        %v4166 = vadd.f32 0.0, %v4165
        %v4167 = vpop.f32.mrb[0].mxu0
        %4168 = vmatprep.mubr.bf16.mxu0 0
        %4169 = vmatmul.mubr.bf16.gmra.mrb[0].mxu0 %v4024
        %v4170 = vpop.f32.mrb[0].mxu0
        %v4171 = vadd.f32 0.0, %v4170
        %v4172 = vpop.f32.mrb[0].mxu0
        %v4173 = vpop.f32.mrb[0].mxu0
        %v4174 = vadd.f32 0.0, %v4173
        %v4175 = vpop.f32.mrb[0].mxu0
        %4176 = vmatprep.mubr.bf16.mxu0 0
        %4177 = vmatmul.mubr.bf16.gmra.mrb[0].mxu0 %v4027
        %v4178 = vpop.f32.mrb[0].mxu0
        %v4179 = vadd.f32 0.0, %v4178
        %v4180 = vpop.f32.mrb[0].mxu0
        %v4181 = vpop.f32.mrb[0].mxu0
        %v4182 = vadd.f32 0.0, %v4181
        %v4183 = vpop.f32.mrb[0].mxu0
        %4184 = vmatprep.mubr.bf16.mxu0 0
        %4185 = vmatmul.mubr.bf16.gmra.mrb[0].mxu0 %v4030
        %v4186 = vpop.f32.mrb[0].mxu0
        %v4187 = vadd.f32 0.0, %v4186
        %v4188 = vpop.f32.mrb[0].mxu0
        %v4189 = vpop.f32.mrb[0].mxu0
        %v4190 = vadd.f32 0.0, %v4189
        %v4191 = vpop.f32.mrb[0].mxu0
        %4192 = vdwg.mxu0
        %4193 = vmatprep.subr.bf16.mxu0 0
        %4194 = vmatpush1.bf16.msra.mxu0 %v3981
        %4195 = vmatprep.subr.bf16.mxu0 0
        %4196 = vmatpush1.bf16.msra.mxu0 0
        %4197 = vmatprep.subr.bf16.mxu0 0
        %4198 = vmatpush1.bf16.msra.mxu0 0
        %4199 = vmatprep.subr.bf16.mxu0 0
        %4200 = vmatpush1.bf16.msra.mxu0 0
        %4201 = vmatprep.subr.bf16.mxu0 0
        %4202 = vmatpush1.bf16.msra.mxu0 0
        %4203 = vmatprep.subr.bf16.mxu0 0
        %4204 = vmatpush1.bf16.msra.mxu0 0
        %4205 = vmatprep.subr.bf16.mxu0 0
        %4206 = vmatpush1.bf16.msra.mxu0 0
        %4207 = vmatprep.subr.bf16.mxu0 0
        %4208 = vmatpush1.bf16.msra.mxu0 0
        %4209 = vmatprep.subr.bf16.mxu0 0
        %4210 = vmatpush1.bf16.msra.mxu0 0
        %4211 = vmatprep.subr.bf16.mxu0 0
        %4212 = vmatpush1.bf16.msra.mxu0 0
        %4213 = vmatprep.subr.bf16.mxu0 0
        %4214 = vmatpush1.bf16.msra.mxu0 0
        %4215 = vmatprep.subr.bf16.mxu0 0
        %4216 = vmatpush1.bf16.msra.mxu0 0
        %4217 = vmatprep.subr.bf16.mxu0 0
        %4218 = vmatpush1.bf16.msra.mxu0 0
        %4219 = vmatprep.subr.bf16.mxu0 0
        %4220 = vmatpush1.bf16.msra.mxu0 0
        %4221 = vmatprep.subr.bf16.mxu0 0
        %4222 = vmatpush1.bf16.msra.mxu0 0
        %4223 = vmatprep.subr.bf16.mxu0 0
        %4224 = vmatpush1.bf16.msra.mxu0 0
        %4225 = vmatprep.mubr.bf16.mxu0 0
        %4226 = vmatmul.mubr.bf16.gmra.mrb[0].mxu0 %v3422
        %v4227 = vpop.f32.mrb[0].mxu0
        %v4228 = vadd.f32 %v4067, %v4227
        %v4229 = vpop.f32.mrb[0].mxu0
        %v4230 = vpop.f32.mrb[0].mxu0
        %v4231 = vadd.f32 %v4070, %v4230
        %v4232 = vpop.f32.mrb[0].mxu0
        %4233 = vmatprep.mubr.bf16.mxu0 0
        %4234 = vmatmul.mubr.bf16.gmra.mrb[0].mxu0 %v3985
        %v4235 = vpop.f32.mrb[0].mxu0
        %v4236 = vadd.f32 %v4075, %v4235
        %v4237 = vpop.f32.mrb[0].mxu0
        %v4238 = vpop.f32.mrb[0].mxu0
        %v4239 = vadd.f32 %v4078, %v4238
        %v4240 = vpop.f32.mrb[0].mxu0
        %4241 = vmatprep.mubr.bf16.mxu0 0
        %4242 = vmatmul.mubr.bf16.gmra.mrb[0].mxu0 %v3988
        %v4243 = vpop.f32.mrb[0].mxu0
        %v4244 = vadd.f32 %v4083, %v4243
        %v4245 = vpop.f32.mrb[0].mxu0
        %v4246 = vpop.f32.mrb[0].mxu0
        %v4247 = vadd.f32 %v4086, %v4246
        %v4248 = vpop.f32.mrb[0].mxu0
        %4249 = vmatprep.mubr.bf16.mxu0 0
        %4250 = vmatmul.mubr.bf16.gmra.mrb[0].mxu0 %v3991
        %v4251 = vpop.f32.mrb[0].mxu0
        %v4252 = vadd.f32 %v4091, %v4251
        %v4253 = vpop.f32.mrb[0].mxu0
        %v4254 = vpop.f32.mrb[0].mxu0
        %v4255 = vadd.f32 %v4094, %v4254
        %v4256 = vpop.f32.mrb[0].mxu0
        %4257 = vmatprep.mubr.bf16.mxu0 0
        %4258 = vmatmul.mubr.bf16.gmra.mrb[0].mxu0 %v3994
        %v4259 = vpop.f32.mrb[0].mxu0
        %v4260 = vadd.f32 %v4099, %v4259
        %v4261 = vpop.f32.mrb[0].mxu0
        %v4262 = vpop.f32.mrb[0].mxu0
        %v4263 = vadd.f32 %v4102, %v4262
        %v4264 = vpop.f32.mrb[0].mxu0
        %4265 = vmatprep.mubr.bf16.mxu0 0
        %4266 = vmatmul.mubr.bf16.gmra.mrb[0].mxu0 %v3997
        %v4267 = vpop.f32.mrb[0].mxu0
        %v4268 = vadd.f32 %v4107, %v4267
        %v4269 = vpop.f32.mrb[0].mxu0
        %v4270 = vpop.f32.mrb[0].mxu0
        %v4271 = vadd.f32 %v4110, %v4270
        %v4272 = vpop.f32.mrb[0].mxu0
        %4273 = vmatprep.mubr.bf16.mxu0 0
        %4274 = vmatmul.mubr.bf16.gmra.mrb[0].mxu0 %v4000
        %v4275 = vpop.f32.mrb[0].mxu0
        %v4276 = vadd.f32 %v4115, %v4275
        %v4277 = vpop.f32.mrb[0].mxu0
        %v4278 = vpop.f32.mrb[0].mxu0
        %v4279 = vadd.f32 %v4118, %v4278
        %v4280 = vpop.f32.mrb[0].mxu0
        %4281 = vmatprep.mubr.bf16.mxu0 0
        %4282 = vmatmul.mubr.bf16.gmra.mrb[0].mxu0 %v4003
        %v4283 = vpop.f32.mrb[0].mxu0
        %v4284 = vadd.f32 %v4123, %v4283
        %v4285 = vpop.f32.mrb[0].mxu0
        %v4286 = vpop.f32.mrb[0].mxu0
        %v4287 = vadd.f32 %v4126, %v4286
        %v4288 = vpop.f32.mrb[0].mxu0
        %4289 = vmatprep.mubr.bf16.mxu0 0
        %4290 = vmatmul.mubr.bf16.gmra.mrb[0].mxu0 %v4006
        %v4291 = vpop.f32.mrb[0].mxu0
        %v4292 = vadd.f32 %v4131, %v4291
        %v4293 = vpop.f32.mrb[0].mxu0
        %v4294 = vpop.f32.mrb[0].mxu0
        %v4295 = vadd.f32 %v4134, %v4294
        %v4296 = vpop.f32.mrb[0].mxu0
        %4297 = vmatprep.mubr.bf16.mxu0 0
        %4298 = vmatmul.mubr.bf16.gmra.mrb[0].mxu0 %v4009
        %v4299 = vpop.f32.mrb[0].mxu0
        %v4300 = vadd.f32 %v4139, %v4299
        %v4301 = vpop.f32.mrb[0].mxu0
        %v4302 = vpop.f32.mrb[0].mxu0
        %v4303 = vadd.f32 %v4142, %v4302
        %v4304 = vpop.f32.mrb[0].mxu0
        %4305 = vmatprep.mubr.bf16.mxu0 0
        %4306 = vmatmul.mubr.bf16.gmra.mrb[0].mxu0 %v4012
        %v4307 = vpop.f32.mrb[0].mxu0
        %v4308 = vadd.f32 %v4147, %v4307
        %v4309 = vpop.f32.mrb[0].mxu0
        %v4310 = vpop.f32.mrb[0].mxu0
        %v4311 = vadd.f32 %v4150, %v4310
        %v4312 = vpop.f32.mrb[0].mxu0
        %4313 = vmatprep.mubr.bf16.mxu0 0
        %4314 = vmatmul.mubr.bf16.gmra.mrb[0].mxu0 %v4015
        %v4315 = vpop.f32.mrb[0].mxu0
        %v4316 = vadd.f32 %v4155, %v4315
        %v4317 = vpop.f32.mrb[0].mxu0
        %v4318 = vpop.f32.mrb[0].mxu0
        %v4319 = vadd.f32 %v4158, %v4318
        %v4320 = vpop.f32.mrb[0].mxu0
        %4321 = vmatprep.mubr.bf16.mxu0 0
        %4322 = vmatmul.mubr.bf16.gmra.mrb[0].mxu0 %v4018
        %v4323 = vpop.f32.mrb[0].mxu0
        %v4324 = vadd.f32 %v4163, %v4323
        %v4325 = vpop.f32.mrb[0].mxu0
        %v4326 = vpop.f32.mrb[0].mxu0
        %v4327 = vadd.f32 %v4166, %v4326
        %v4328 = vpop.f32.mrb[0].mxu0
        %4329 = vmatprep.mubr.bf16.mxu0 0
        %4330 = vmatmul.mubr.bf16.gmra.mrb[0].mxu0 %v4021
        %v4331 = vpop.f32.mrb[0].mxu0
        %v4332 = vadd.f32 %v4171, %v4331
        %v4333 = vpop.f32.mrb[0].mxu0
        %v4334 = vpop.f32.mrb[0].mxu0
        %v4335 = vadd.f32 %v4174, %v4334
        %v4336 = vpop.f32.mrb[0].mxu0
        %4337 = vmatprep.mubr.bf16.mxu0 0
        %4338 = vmatmul.mubr.bf16.gmra.mrb[0].mxu0 %v4024
        %v4339 = vpop.f32.mrb[0].mxu0
        %v4340 = vadd.f32 %v4179, %v4339
        %v4341 = vpop.f32.mrb[0].mxu0
        %v4342 = vpop.f32.mrb[0].mxu0
        %v4343 = vadd.f32 %v4182, %v4342
        %v4344 = vpop.f32.mrb[0].mxu0
        %4345 = vmatprep.mubr.bf16.mxu0 0
        %4346 = vmatmul.mubr.bf16.gmra.mrb[0].mxu0 %v4027
        %v4347 = vpop.f32.mrb[0].mxu0
        %v4348 = vadd.f32 %v4187, %v4347
        %v4349 = vpop.f32.mrb[0].mxu0
        %v4350 = vpop.f32.mrb[0].mxu0
        %v4351 = vadd.f32 %v4190, %v4350
        %v4352 = vpop.f32.mrb[0].mxu0
        %4353 = vdwg.mxu0
        %v4354 = vpack.c.bf16 %v3962, %v3961
        %4355 = vmatprep.subr.bf16.mxu0 0
        %4356 = vmatpush1.bf16.msra.mxu0 %v4354
        %4357 = vmatprep.subr.bf16.mxu0 0
        %4358 = vmatpush1.bf16.msra.mxu0 0
        %4359 = vmatprep.subr.bf16.mxu0 0
        %4360 = vmatpush1.bf16.msra.mxu0 0
        %4361 = vmatprep.subr.bf16.mxu0 0
        %4362 = vmatpush1.bf16.msra.mxu0 0
        %4363 = vmatprep.subr.bf16.mxu0 0
        %4364 = vmatpush1.bf16.msra.mxu0 0
        %4365 = vmatprep.subr.bf16.mxu0 0
        %4366 = vmatpush1.bf16.msra.mxu0 0
        %4367 = vmatprep.subr.bf16.mxu0 0
        %4368 = vmatpush1.bf16.msra.mxu0 0
        %4369 = vmatprep.subr.bf16.mxu0 0
        %4370 = vmatpush1.bf16.msra.mxu0 0
        %4371 = vmatprep.subr.bf16.mxu0 0
        %4372 = vmatpush1.bf16.msra.mxu0 0
        %4373 = vmatprep.subr.bf16.mxu0 0
        %4374 = vmatpush1.bf16.msra.mxu0 0
        %4375 = vmatprep.subr.bf16.mxu0 0
        %4376 = vmatpush1.bf16.msra.mxu0 0
        %4377 = vmatprep.subr.bf16.mxu0 0
        %4378 = vmatpush1.bf16.msra.mxu0 0
        %4379 = vmatprep.subr.bf16.mxu0 0
        %4380 = vmatpush1.bf16.msra.mxu0 0
        %4381 = vmatprep.subr.bf16.mxu0 0
        %4382 = vmatpush1.bf16.msra.mxu0 0
        %4383 = vmatprep.subr.bf16.mxu0 0
        %4384 = vmatpush1.bf16.msra.mxu0 0
        %4385 = vmatprep.subr.bf16.mxu0 0
        %4386 = vmatpush1.bf16.msra.mxu0 0
        %4387 = vmatprep.mubr.bf16.mxu0 0
        %4388 = vmatmul.mubr.bf16.gmra.mrb[0].mxu0 %v3988
        %v4389 = vpop.f32.mrb[0].mxu0
        %v4390 = vadd.f32 0.0, %v4389
        %v4391 = vpop.f32.mrb[0].mxu0
        %v4392 = vpop.f32.mrb[0].mxu0
        %v4393 = vadd.f32 0.0, %v4392
        %v4394 = vpop.f32.mrb[0].mxu0
        %4395 = vmatprep.mubr.bf16.mxu0 0
        %4396 = vmatmul.mubr.bf16.gmra.mrb[0].mxu0 %v3991
        %v4397 = vpop.f32.mrb[0].mxu0
        %v4398 = vadd.f32 0.0, %v4397
        %v4399 = vpop.f32.mrb[0].mxu0
        %v4400 = vpop.f32.mrb[0].mxu0
        %v4401 = vadd.f32 0.0, %v4400
        %v4402 = vpop.f32.mrb[0].mxu0
        %4403 = vmatprep.mubr.bf16.mxu0 0
        %4404 = vmatmul.mubr.bf16.gmra.mrb[0].mxu0 %v3994
        %v4405 = vpop.f32.mrb[0].mxu0
        %v4406 = vadd.f32 0.0, %v4405
        %v4407 = vpop.f32.mrb[0].mxu0
        %v4408 = vpop.f32.mrb[0].mxu0
        %v4409 = vadd.f32 0.0, %v4408
        %v4410 = vpop.f32.mrb[0].mxu0
        %4411 = vmatprep.mubr.bf16.mxu0 0
        %4412 = vmatmul.mubr.bf16.gmra.mrb[0].mxu0 %v3997
        %v4413 = vpop.f32.mrb[0].mxu0
        %v4414 = vadd.f32 0.0, %v4413
        %v4415 = vpop.f32.mrb[0].mxu0
        %v4416 = vpop.f32.mrb[0].mxu0
        %v4417 = vadd.f32 0.0, %v4416
        %v4418 = vpop.f32.mrb[0].mxu0
        %4419 = vmatprep.mubr.bf16.mxu0 0
        %4420 = vmatmul.mubr.bf16.gmra.mrb[0].mxu0 %v4000
        %v4421 = vpop.f32.mrb[0].mxu0
        %v4422 = vadd.f32 0.0, %v4421
        %v4423 = vpop.f32.mrb[0].mxu0
        %v4424 = vpop.f32.mrb[0].mxu0
        %v4425 = vadd.f32 0.0, %v4424
        %v4426 = vpop.f32.mrb[0].mxu0
        %4427 = vmatprep.mubr.bf16.mxu0 0
        %4428 = vmatmul.mubr.bf16.gmra.mrb[0].mxu0 %v4003
        %v4429 = vpop.f32.mrb[0].mxu0
        %v4430 = vadd.f32 0.0, %v4429
        %v4431 = vpop.f32.mrb[0].mxu0
        %v4432 = vpop.f32.mrb[0].mxu0
        %v4433 = vadd.f32 0.0, %v4432
        %v4434 = vpop.f32.mrb[0].mxu0
        %4435 = vmatprep.mubr.bf16.mxu0 0
        %4436 = vmatmul.mubr.bf16.gmra.mrb[0].mxu0 %v4006
        %v4437 = vpop.f32.mrb[0].mxu0
        %v4438 = vadd.f32 0.0, %v4437
        %v4439 = vpop.f32.mrb[0].mxu0
        %v4440 = vpop.f32.mrb[0].mxu0
        %v4441 = vadd.f32 0.0, %v4440
        %v4442 = vpop.f32.mrb[0].mxu0
        %4443 = vmatprep.mubr.bf16.mxu0 0
        %4444 = vmatmul.mubr.bf16.gmra.mrb[0].mxu0 %v4009
        %v4445 = vpop.f32.mrb[0].mxu0
        %v4446 = vadd.f32 0.0, %v4445
        %v4447 = vpop.f32.mrb[0].mxu0
        %v4448 = vpop.f32.mrb[0].mxu0
        %v4449 = vadd.f32 0.0, %v4448
        %v4450 = vpop.f32.mrb[0].mxu0
        %4451 = vmatprep.mubr.bf16.mxu0 0
        %4452 = vmatmul.mubr.bf16.gmra.mrb[0].mxu0 %v4012
        %v4453 = vpop.f32.mrb[0].mxu0
        %v4454 = vadd.f32 0.0, %v4453
        %v4455 = vpop.f32.mrb[0].mxu0
        %v4456 = vpop.f32.mrb[0].mxu0
        %v4457 = vadd.f32 0.0, %v4456
        %v4458 = vpop.f32.mrb[0].mxu0
        %4459 = vmatprep.mubr.bf16.mxu0 0
        %4460 = vmatmul.mubr.bf16.gmra.mrb[0].mxu0 %v4015
        %v4461 = vpop.f32.mrb[0].mxu0
        %v4462 = vadd.f32 0.0, %v4461
        %v4463 = vpop.f32.mrb[0].mxu0
        %v4464 = vpop.f32.mrb[0].mxu0
        %v4465 = vadd.f32 0.0, %v4464
        %v4466 = vpop.f32.mrb[0].mxu0
        %4467 = vmatprep.mubr.bf16.mxu0 0
        %4468 = vmatmul.mubr.bf16.gmra.mrb[0].mxu0 %v4018
        %v4469 = vpop.f32.mrb[0].mxu0
        %v4470 = vadd.f32 0.0, %v4469
        %v4471 = vpop.f32.mrb[0].mxu0
        %v4472 = vpop.f32.mrb[0].mxu0
        %v4473 = vadd.f32 0.0, %v4472
        %v4474 = vpop.f32.mrb[0].mxu0
        %4475 = vmatprep.mubr.bf16.mxu0 0
        %4476 = vmatmul.mubr.bf16.gmra.mrb[0].mxu0 %v4021
        %v4477 = vpop.f32.mrb[0].mxu0
        %v4478 = vadd.f32 0.0, %v4477
        %v4479 = vpop.f32.mrb[0].mxu0
        %v4480 = vpop.f32.mrb[0].mxu0
        %v4481 = vadd.f32 0.0, %v4480
        %v4482 = vpop.f32.mrb[0].mxu0
        %4483 = vmatprep.mubr.bf16.mxu0 0
        %4484 = vmatmul.mubr.bf16.gmra.mrb[0].mxu0 %v4024
        %v4485 = vpop.f32.mrb[0].mxu0
        %v4486 = vadd.f32 0.0, %v4485
        %v4487 = vpop.f32.mrb[0].mxu0
        %v4488 = vpop.f32.mrb[0].mxu0
        %v4489 = vadd.f32 0.0, %v4488
        %v4490 = vpop.f32.mrb[0].mxu0
        %4491 = vmatprep.mubr.bf16.mxu0 0
        %4492 = vmatmul.mubr.bf16.gmra.mrb[0].mxu0 %v4027
        %v4493 = vpop.f32.mrb[0].mxu0
        %v4494 = vadd.f32 0.0, %v4493
        %v4495 = vpop.f32.mrb[0].mxu0
        %v4496 = vpop.f32.mrb[0].mxu0
        %v4497 = vadd.f32 0.0, %v4496
        %v4498 = vpop.f32.mrb[0].mxu0
        %4499 = vmatprep.mubr.bf16.mxu0 0
        %4500 = vmatmul.mubr.bf16.gmra.mrb[0].mxu0 %v4030
        %v4501 = vpop.f32.mrb[0].mxu0
        %v4502 = vadd.f32 0.0, %v4501
        %v4503 = vpop.f32.mrb[0].mxu0
        %v4504 = vpop.f32.mrb[0].mxu0
        %v4505 = vadd.f32 0.0, %v4504
        %v4506 = vpop.f32.mrb[0].mxu0
        %4507 = vmatprep.mubr.bf16.mxu0 0
        %4508 = vmatmul.mubr.bf16.gmra.mrb[0].mxu0 %v3422
        %v4509 = vpop.f32.mrb[0].mxu0
        %v4510 = vadd.f32 0.0, %v4509
        %v4511 = vpop.f32.mrb[0].mxu0
        %v4512 = vpop.f32.mrb[0].mxu0
        %v4513 = vadd.f32 0.0, %v4512
        %v4514 = vpop.f32.mrb[0].mxu0
        %4515 = vdwg.mxu0
        %v4516 = vadd.f32 %v4228, %v4390
        %v4517 = vadd.f32 %v4231, %v4393
        %v4518 = vadd.f32 %v4236, %v4398
        %v4519 = vadd.f32 %v4239, %v4401
        %v4520 = vadd.f32 %v4244, %v4406
        %v4521 = vadd.f32 %v4247, %v4409
        %v4522 = vadd.f32 %v4252, %v4414
        %v4523 = vadd.f32 %v4255, %v4417
        %v4524 = vadd.f32 %v4260, %v4422
        %v4525 = vadd.f32 %v4263, %v4425
        %v4526 = vadd.f32 %v4268, %v4430
        %v4527 = vadd.f32 %v4271, %v4433
        %v4528 = vadd.f32 %v4276, %v4438
        %v4529 = vadd.f32 %v4279, %v4441
        %v4530 = vadd.f32 %v4284, %v4446
        %v4531 = vadd.f32 %v4287, %v4449
        %v4532 = vadd.f32 %v4292, %v4454
        %v4533 = vadd.f32 %v4295, %v4457
        %v4534 = vadd.f32 %v4300, %v4462
        %v4535 = vadd.f32 %v4303, %v4465
        %v4536 = vadd.f32 %v4308, %v4470
        %v4537 = vadd.f32 %v4311, %v4473
        %v4538 = vadd.f32 %v4316, %v4478
        %v4539 = vadd.f32 %v4319, %v4481
        %v4540 = vadd.f32 %v4324, %v4486
        %v4541 = vadd.f32 %v4327, %v4489
        %v4542 = vadd.f32 %v4332, %v4494
        %v4543 = vadd.f32 %v4335, %v4497
        %v4544 = vadd.f32 %v4340, %v4502
        %v4545 = vadd.f32 %v4343, %v4505
        %v4546 = vadd.f32 %v4348, %v4510
        %v4547 = vadd.f32 %v4351, %v4513
        %v4549 = vlaneseq
        %v4550 = vshrl.u32 %v4549, 7
        %v4551 = vsub.s32 0, %v4550
        %v4552 = vrot.slane %v3963, %v4551
        %v4554 = vadd.f32 %v4516, %v4552
        %v4555 = vadd.f32 %v4517, %v4552
        %v4556 = vadd.f32 %v4518, %v4552
        %v4557 = vadd.f32 %v4519, %v4552
        %v4558 = vadd.f32 %v4520, %v4552
        %v4559 = vadd.f32 %v4521, %v4552
        %v4560 = vadd.f32 %v4522, %v4552
        %v4561 = vadd.f32 %v4523, %v4552
        %v4562 = vadd.f32 %v4524, %v4552
        %v4563 = vadd.f32 %v4525, %v4552
        %v4564 = vadd.f32 %v4526, %v4552
        %v4565 = vadd.f32 %v4527, %v4552
        %v4566 = vadd.f32 %v4528, %v4552
        %v4567 = vadd.f32 %v4529, %v4552
        %v4568 = vadd.f32 %v4530, %v4552
        %v4569 = vadd.f32 %v4531, %v4552
        %v4570 = vadd.f32 %v4532, %v4552
        %v4571 = vadd.f32 %v4533, %v4552
        %v4572 = vadd.f32 %v4534, %v4552
        %v4573 = vadd.f32 %v4535, %v4552
        %v4574 = vadd.f32 %v4536, %v4552
        %v4575 = vadd.f32 %v4537, %v4552
        %v4576 = vadd.f32 %v4538, %v4552
        %v4577 = vadd.f32 %v4539, %v4552
        %v4578 = vadd.f32 %v4540, %v4552
        %v4579 = vadd.f32 %v4541, %v4552
        %v4580 = vadd.f32 %v4542, %v4552
        %v4581 = vadd.f32 %v4543, %v4552
        %v4582 = vadd.f32 %v4544, %v4552
        %v4583 = vadd.f32 %v4545, %v4552
        %v4584 = vadd.f32 %v4546, %v4552
        %v4585 = vadd.f32 %v4547, %v4552
        %v4587 = vlaneseq
        %v4588 = vshrl.u32 %v4587, 7
        %v4589 = vsub.s32 0, %v4588
        %v4590 = vrot.slane %v3964, %v4589
        %v4592 = vmul.f32 %v4554, %v4590
        %v4593 = vmul.f32 %v4555, %v4590
        %v4594 = vmul.f32 %v4556, %v4590
        %v4595 = vmul.f32 %v4557, %v4590
        %v4596 = vmul.f32 %v4558, %v4590
        %v4597 = vmul.f32 %v4559, %v4590
        %v4598 = vmul.f32 %v4560, %v4590
        %v4599 = vmul.f32 %v4561, %v4590
        %v4600 = vmul.f32 %v4562, %v4590
        %v4601 = vmul.f32 %v4563, %v4590
        %v4602 = vmul.f32 %v4564, %v4590
        %v4603 = vmul.f32 %v4565, %v4590
        %v4604 = vmul.f32 %v4566, %v4590
        %v4605 = vmul.f32 %v4567, %v4590
        %v4606 = vmul.f32 %v4568, %v4590
        %v4607 = vmul.f32 %v4569, %v4590
        %v4608 = vmul.f32 %v4570, %v4590
        %v4609 = vmul.f32 %v4571, %v4590
        %v4610 = vmul.f32 %v4572, %v4590
        %v4611 = vmul.f32 %v4573, %v4590
        %v4612 = vmul.f32 %v4574, %v4590
        %v4613 = vmul.f32 %v4575, %v4590
        %v4614 = vmul.f32 %v4576, %v4590
        %v4615 = vmul.f32 %v4577, %v4590
        %v4616 = vmul.f32 %v4578, %v4590
        %v4617 = vmul.f32 %v4579, %v4590
        %v4618 = vmul.f32 %v4580, %v4590
        %v4619 = vmul.f32 %v4581, %v4590
        %v4620 = vmul.f32 %v4582, %v4590
        %v4621 = vmul.f32 %v4583, %v4590
        %v4622 = vmul.f32 %v4584, %v4590
        %v4623 = vmul.f32 %v4585, %v4590
        %v4625 = vlaneseq
        %v4626 = vshrl.u32 %v4625, 7
        %v4627 = vsub.s32 0, %v4626
        %v4628 = vrot.slane %v3965, %v4627
        %v4630 = vadd.f32 %v4592, %v4628
        %v4631 = vadd.f32 %v4593, %v4628
        %v4632 = vadd.f32 %v4594, %v4628
        %v4633 = vadd.f32 %v4595, %v4628
        %v4634 = vadd.f32 %v4596, %v4628
        %v4635 = vadd.f32 %v4597, %v4628
        %v4636 = vadd.f32 %v4598, %v4628
        %v4637 = vadd.f32 %v4599, %v4628
        %v4638 = vadd.f32 %v4600, %v4628
        %v4639 = vadd.f32 %v4601, %v4628
        %v4640 = vadd.f32 %v4602, %v4628
        %v4641 = vadd.f32 %v4603, %v4628
        %v4642 = vadd.f32 %v4604, %v4628
        %v4643 = vadd.f32 %v4605, %v4628
        %v4644 = vadd.f32 %v4606, %v4628
        %v4645 = vadd.f32 %v4607, %v4628
        %v4646 = vadd.f32 %v4608, %v4628
        %v4647 = vadd.f32 %v4609, %v4628
        %v4648 = vadd.f32 %v4610, %v4628
        %v4649 = vadd.f32 %v4611, %v4628
        %v4650 = vadd.f32 %v4612, %v4628
        %v4651 = vadd.f32 %v4613, %v4628
        %v4652 = vadd.f32 %v4614, %v4628
        %v4653 = vadd.f32 %v4615, %v4628
        %v4654 = vadd.f32 %v4616, %v4628
        %v4655 = vadd.f32 %v4617, %v4628
        %v4656 = vadd.f32 %v4618, %v4628
        %v4657 = vadd.f32 %v4619, %v4628
        %v4658 = vadd.f32 %v4620, %v4628
        %v4659 = vadd.f32 %v4621, %v4628
        %v4660 = vadd.f32 %v4622, %v4628
        %v4661 = vadd.f32 %v4623, %v4628
        %v4662 = vadd.f32 %v4630, %v3925
        %v4663 = vadd.f32 %v4631, %v3926
        %v4664 = vadd.f32 %v4632, %v3927
        %v4665 = vadd.f32 %v4633, %v3928
        %v4666 = vadd.f32 %v4634, %v3929
        %v4667 = vadd.f32 %v4635, %v3930
        %v4668 = vadd.f32 %v4636, %v3931
        %v4669 = vadd.f32 %v4637, %v3932
        %v4670 = vadd.f32 %v4638, %v3933
        %v4671 = vadd.f32 %v4639, %v3934
        %v4672 = vadd.f32 %v4640, %v3935
        %v4673 = vadd.f32 %v4641, %v3936
        %v4674 = vadd.f32 %v4642, %v3937
        %v4675 = vadd.f32 %v4643, %v3938
        %v4676 = vadd.f32 %v4644, %v3939
        %v4677 = vadd.f32 %v4645, %v3940
        %v4678 = vadd.f32 %v4646, %v3941
        %v4679 = vadd.f32 %v4647, %v3942
        %v4680 = vadd.f32 %v4648, %v3943
        %v4681 = vadd.f32 %v4649, %v3944
        %v4682 = vadd.f32 %v4650, %v3945
        %v4683 = vadd.f32 %v4651, %v3946
        %v4684 = vadd.f32 %v4652, %v3947
        %v4685 = vadd.f32 %v4653, %v3948
        %v4686 = vadd.f32 %v4654, %v3949
        %v4687 = vadd.f32 %v4655, %v3950
        %v4688 = vadd.f32 %v4656, %v3951
        %v4689 = vadd.f32 %v4657, %v3952
        %v4690 = vadd.f32 %v4658, %v3953
        %v4691 = vadd.f32 %v4659, %v3954
        %v4692 = vadd.f32 %v4660, %v3955
        %v4693 = vadd.f32 %v4661, %v3956
        %v4694 = vmax.f32 %v4662, 0.0
        %v4695 = vmax.f32 %v4663, 0.0
        %v4696 = vmax.f32 %v4664, 0.0
        %v4697 = vmax.f32 %v4665, 0.0
        %v4698 = vmax.f32 %v4666, 0.0
        %v4699 = vmax.f32 %v4667, 0.0
        %v4700 = vmax.f32 %v4668, 0.0
        %v4701 = vmax.f32 %v4669, 0.0
        %v4702 = vmax.f32 %v4670, 0.0
        %v4703 = vmax.f32 %v4671, 0.0
        %v4704 = vmax.f32 %v4672, 0.0
        %v4705 = vmax.f32 %v4673, 0.0
        %v4706 = vmax.f32 %v4674, 0.0
        %v4707 = vmax.f32 %v4675, 0.0
        %v4708 = vmax.f32 %v4676, 0.0
        %v4709 = vmax.f32 %v4677, 0.0
        %v4710 = vmax.f32 %v4678, 0.0
        %v4711 = vmax.f32 %v4679, 0.0
        %v4712 = vmax.f32 %v4680, 0.0
        %v4713 = vmax.f32 %v4681, 0.0
        %v4714 = vmax.f32 %v4682, 0.0
        %v4715 = vmax.f32 %v4683, 0.0
        %v4716 = vmax.f32 %v4684, 0.0
        %v4717 = vmax.f32 %v4685, 0.0
        %v4718 = vmax.f32 %v4686, 0.0
        %v4719 = vmax.f32 %v4687, 0.0
        %v4720 = vmax.f32 %v4688, 0.0
        %v4721 = vmax.f32 %v4689, 0.0
        %v4722 = vmax.f32 %v4690, 0.0
        %v4723 = vmax.f32 %v4691, 0.0
        %v4724 = vmax.f32 %v4692, 0.0
        %v4725 = vmax.f32 %v4693, 0.0
        %v4726 = vld [vmem:[%s33] sm:$0xff]
        %v4727 = vld [vmem:[%s33 + $0x8] sm:$0xff]
        %v4728 = vld [vmem:[#allocation25] sm:$0x1]
        %v4729 = vld [vmem:[#allocation26] sm:$0xf]
        %v4730 = vld [vmem:[#allocation28] sm:$0x1]
        %v4731 = vld [vmem:[#allocation29] sm:$0xf]
        %v4732 = vld [vmem:[%s43] sm:$0x1]
        %v4733 = vld [vmem:[%s45] sm:$0x1]
        %v4734 = vld [vmem:[#allocation31] sm:$0x1]
        %v4735 = vsel %vm3211, %v4694, 0.0
        %v4736 = vsel %vm3211, %v4695, 0.0
        %v4737 = vadd.f32 %v4735, %v4736
        %v4738 = vrot.slane %v4737, 4
        %v4739 = vadd.f32 %v4737, %v4738
        %v4740 = vrot.slane %v4739, 2
        %v4741 = vadd.f32 %v4739, %v4740
        %v4742 = vrot.slane %v4741, 1
        %v4743 = vadd.f32 %v4741, %v4742
        %v4744 = vsel %vm3211, %v4696, 0.0
        %v4745 = vsel %vm3211, %v4697, 0.0
        %v4746 = vadd.f32 %v4744, %v4745
        %v4747 = vrot.slane %v4746, 4
        %v4748 = vadd.f32 %v4746, %v4747
        %v4749 = vrot.slane %v4748, 2
        %v4750 = vadd.f32 %v4748, %v4749
        %v4751 = vrot.slane %v4750, 1
        %v4752 = vadd.f32 %v4750, %v4751
        %v4753 = vsel %vm3211, %v4698, 0.0
        %v4754 = vsel %vm3211, %v4699, 0.0
        %v4755 = vadd.f32 %v4753, %v4754
        %v4756 = vrot.slane %v4755, 4
        %v4757 = vadd.f32 %v4755, %v4756
        %v4758 = vrot.slane %v4757, 2
        %v4759 = vadd.f32 %v4757, %v4758
        %v4760 = vrot.slane %v4759, 1
        %v4761 = vadd.f32 %v4759, %v4760
        %v4762 = vsel %vm3211, %v4700, 0.0
        %v4763 = vsel %vm3211, %v4701, 0.0
        %v4764 = vadd.f32 %v4762, %v4763
        %v4765 = vrot.slane %v4764, 4
        %v4766 = vadd.f32 %v4764, %v4765
        %v4767 = vrot.slane %v4766, 2
        %v4768 = vadd.f32 %v4766, %v4767
        %v4769 = vrot.slane %v4768, 1
        %v4770 = vadd.f32 %v4768, %v4769
        %v4771 = vsel %vm3211, %v4702, 0.0
        %v4772 = vsel %vm3211, %v4703, 0.0
        %v4773 = vadd.f32 %v4771, %v4772
        %v4774 = vrot.slane %v4773, 4
        %v4775 = vadd.f32 %v4773, %v4774
        %v4776 = vrot.slane %v4775, 2
        %v4777 = vadd.f32 %v4775, %v4776
        %v4778 = vrot.slane %v4777, 1
        %v4779 = vadd.f32 %v4777, %v4778
        %v4780 = vsel %vm3211, %v4704, 0.0
        %v4781 = vsel %vm3211, %v4705, 0.0
        %v4782 = vadd.f32 %v4780, %v4781
        %v4783 = vrot.slane %v4782, 4
        %v4784 = vadd.f32 %v4782, %v4783
        %v4785 = vrot.slane %v4784, 2
        %v4786 = vadd.f32 %v4784, %v4785
        %v4787 = vrot.slane %v4786, 1
        %v4788 = vadd.f32 %v4786, %v4787
        %v4789 = vsel %vm3211, %v4706, 0.0
        %v4790 = vsel %vm3211, %v4707, 0.0
        %v4791 = vadd.f32 %v4789, %v4790
        %v4792 = vrot.slane %v4791, 4
        %v4793 = vadd.f32 %v4791, %v4792
        %v4794 = vrot.slane %v4793, 2
        %v4795 = vadd.f32 %v4793, %v4794
        %v4796 = vrot.slane %v4795, 1
        %v4797 = vadd.f32 %v4795, %v4796
        %v4798 = vsel %vm3211, %v4708, 0.0
        %v4799 = vsel %vm3211, %v4709, 0.0
        %v4800 = vadd.f32 %v4798, %v4799
        %v4801 = vrot.slane %v4800, 4
        %v4802 = vadd.f32 %v4800, %v4801
        %v4803 = vrot.slane %v4802, 2
        %v4804 = vadd.f32 %v4802, %v4803
        %v4805 = vrot.slane %v4804, 1
        %v4806 = vadd.f32 %v4804, %v4805
        %v4807 = vsel %vm3211, %v4710, 0.0
        %v4808 = vsel %vm3211, %v4711, 0.0
        %v4809 = vadd.f32 %v4807, %v4808
        %v4810 = vrot.slane %v4809, 4
        %v4811 = vadd.f32 %v4809, %v4810
        %v4812 = vrot.slane %v4811, 2
        %v4813 = vadd.f32 %v4811, %v4812
        %v4814 = vrot.slane %v4813, 1
        %v4815 = vadd.f32 %v4813, %v4814
        %v4816 = vsel %vm3211, %v4712, 0.0
        %v4817 = vsel %vm3211, %v4713, 0.0
        %v4818 = vadd.f32 %v4816, %v4817
        %v4819 = vrot.slane %v4818, 4
        %v4820 = vadd.f32 %v4818, %v4819
        %v4821 = vrot.slane %v4820, 2
        %v4822 = vadd.f32 %v4820, %v4821
        %v4823 = vrot.slane %v4822, 1
        %v4824 = vadd.f32 %v4822, %v4823
        %v4825 = vsel %vm3211, %v4714, 0.0
        %v4826 = vsel %vm3211, %v4715, 0.0
        %v4827 = vadd.f32 %v4825, %v4826
        %v4828 = vrot.slane %v4827, 4
        %v4829 = vadd.f32 %v4827, %v4828
        %v4830 = vrot.slane %v4829, 2
        %v4831 = vadd.f32 %v4829, %v4830
        %v4832 = vrot.slane %v4831, 1
        %v4833 = vadd.f32 %v4831, %v4832
        %v4834 = vsel %vm3211, %v4716, 0.0
        %v4835 = vsel %vm3211, %v4717, 0.0
        %v4836 = vadd.f32 %v4834, %v4835
        %v4837 = vrot.slane %v4836, 4
        %v4838 = vadd.f32 %v4836, %v4837
        %v4839 = vrot.slane %v4838, 2
        %v4840 = vadd.f32 %v4838, %v4839
        %v4841 = vrot.slane %v4840, 1
        %v4842 = vadd.f32 %v4840, %v4841
        %v4843 = vsel %vm3211, %v4718, 0.0
        %v4844 = vsel %vm3211, %v4719, 0.0
        %v4845 = vadd.f32 %v4843, %v4844
        %v4846 = vrot.slane %v4845, 4
        %v4847 = vadd.f32 %v4845, %v4846
        %v4848 = vrot.slane %v4847, 2
        %v4849 = vadd.f32 %v4847, %v4848
        %v4850 = vrot.slane %v4849, 1
        %v4851 = vadd.f32 %v4849, %v4850
        %v4852 = vsel %vm3211, %v4720, 0.0
        %v4853 = vsel %vm3211, %v4721, 0.0
        %v4854 = vadd.f32 %v4852, %v4853
        %v4855 = vrot.slane %v4854, 4
        %v4856 = vadd.f32 %v4854, %v4855
        %v4857 = vrot.slane %v4856, 2
        %v4858 = vadd.f32 %v4856, %v4857
        %v4859 = vrot.slane %v4858, 1
        %v4860 = vadd.f32 %v4858, %v4859
        %v4861 = vsel %vm3211, %v4722, 0.0
        %v4862 = vsel %vm3211, %v4723, 0.0
        %v4863 = vadd.f32 %v4861, %v4862
        %v4864 = vrot.slane %v4863, 4
        %v4865 = vadd.f32 %v4863, %v4864
        %v4866 = vrot.slane %v4865, 2
        %v4867 = vadd.f32 %v4865, %v4866
        %v4868 = vrot.slane %v4867, 1
        %v4869 = vadd.f32 %v4867, %v4868
        %v4870 = vsel %vm3211, %v4724, 0.0
        %v4871 = vsel %vm3211, %v4725, 0.0
        %v4872 = vadd.f32 %v4870, %v4871
        %v4873 = vrot.slane %v4872, 4
        %v4874 = vadd.f32 %v4872, %v4873
        %v4875 = vrot.slane %v4874, 2
        %v4876 = vadd.f32 %v4874, %v4875
        %v4877 = vrot.slane %v4876, 1
        %v4878 = vadd.f32 %v4876, %v4877
        %v4879 = vrcp.pop 16.0
        %v4880 = vmul.f32 %v4743, %v4879
        %v4881 = vmul.f32 %v4752, %v4879
        %v4882 = vmul.f32 %v4761, %v4879
        %v4883 = vmul.f32 %v4770, %v4879
        %v4884 = vmul.f32 %v4779, %v4879
        %v4885 = vmul.f32 %v4788, %v4879
        %v4886 = vmul.f32 %v4797, %v4879
        %v4887 = vmul.f32 %v4806, %v4879
        %v4888 = vmul.f32 %v4815, %v4879
        %v4889 = vmul.f32 %v4824, %v4879
        %v4890 = vmul.f32 %v4833, %v4879
        %v4891 = vmul.f32 %v4842, %v4879
        %v4892 = vmul.f32 %v4851, %v4879
        %v4893 = vmul.f32 %v4860, %v4879
        %v4894 = vmul.f32 %v4869, %v4879
        %v4895 = vmul.f32 %v4878, %v4879
        %v4896 = vadd.f32 %v4735, %v4744
        %v4897 = vadd.f32 %v4896, %v4753
        %v4898 = vadd.f32 %v4897, %v4762
        %v4899 = vadd.f32 %v4898, %v4771
        %v4900 = vadd.f32 %v4899, %v4780
        %v4901 = vadd.f32 %v4900, %v4789
        %v4902 = vadd.f32 %v4901, %v4798
        %v4903 = vadd.f32 %v4902, %v4807
        %v4904 = vadd.f32 %v4903, %v4816
        %v4905 = vadd.f32 %v4904, %v4825
        %v4906 = vadd.f32 %v4905, %v4834
        %v4907 = vadd.f32 %v4906, %v4843
        %v4908 = vadd.f32 %v4907, %v4852
        %v4909 = vadd.f32 %v4908, %v4861
        %v4910 = vadd.f32 %v4909, %v4870
        %v4911 = vadd.f32 %v4736, %v4745
        %v4912 = vadd.f32 %v4911, %v4754
        %v4913 = vadd.f32 %v4912, %v4763
        %v4914 = vadd.f32 %v4913, %v4772
        %v4915 = vadd.f32 %v4914, %v4781
        %v4916 = vadd.f32 %v4915, %v4790
        %v4917 = vadd.f32 %v4916, %v4799
        %v4918 = vadd.f32 %v4917, %v4808
        %v4919 = vadd.f32 %v4918, %v4817
        %v4920 = vadd.f32 %v4919, %v4826
        %v4921 = vadd.f32 %v4920, %v4835
        %v4922 = vadd.f32 %v4921, %v4844
        %v4923 = vadd.f32 %v4922, %v4853
        %v4924 = vadd.f32 %v4923, %v4862
        %v4925 = vadd.f32 %v4924, %v4871
        %v4926 = vmul.f32 %v4910, %v4879
        %v4927 = vmul.f32 %v4925, %v4879
        %vm4944 = vcmask 1041409
        %v4945 = vsel %vm4944, %v4881, %v4880
        %vm4946 = vcmask 1042434
        %v4947 = vsel %vm4946, %v4882, %v4945
        %vm4948 = vcmask 1043459
        %v4949 = vsel %vm4948, %v4883, %v4947
        %vm4950 = vcmask 1044484
        %v4951 = vsel %vm4950, %v4884, %v4949
        %vm4952 = vcmask 1045509
        %v4953 = vsel %vm4952, %v4885, %v4951
        %vm4954 = vcmask 1046534
        %v4955 = vsel %vm4954, %v4886, %v4953
        %vm4956 = vcmask 1047559
        %v4957 = vsel %vm4956, %v4887, %v4955
        %v4958 = vsel %vm4944, %v4889, %v4888
        %v4959 = vsel %vm4946, %v4890, %v4958
        %v4960 = vsel %vm4948, %v4891, %v4959
        %v4961 = vsel %vm4950, %v4892, %v4960
        %v4962 = vsel %vm4952, %v4893, %v4961
        %v4963 = vsel %vm4954, %v4894, %v4962
        %v4964 = vsel %vm4956, %v4895, %v4963
        %v4967 = vpack.c.bf16 %v4964, %v4957
        %v4968 = vpack.c.bf16 %v4927, %v4926
        %v4969 = vpack.c.bf16 %v4727, %v4726
        %v4971 = vlaneseq
        %v4972 = vshrl.u32 %v4971, 7
        %v4973 = vsub.s32 0, %v4972
        %v4974 = vrot.slane %v4728, %v4973
        %v4977 = vsel %vm3211, %v4967, 0
        %v4980 = vsel %vm3211, %v4968, 0
        %4982 = vmatprep.subr.bf16.mxu0 0
        %4983 = vmatpush1.bf16.msra.mxu0 %v4969
        %4984 = vmatprep.subr.bf16.mxu0 0
        %4985 = vmatpush1.bf16.msra.mxu0 0
        %4986 = vmatprep.subr.bf16.mxu0 0
        %4987 = vmatpush1.bf16.msra.mxu0 0
        %4988 = vmatprep.subr.bf16.mxu0 0
        %4989 = vmatpush1.bf16.msra.mxu0 0
        %4990 = vmatprep.subr.bf16.mxu0 0
        %4991 = vmatpush1.bf16.msra.mxu0 0
        %4992 = vmatprep.subr.bf16.mxu0 0
        %4993 = vmatpush1.bf16.msra.mxu0 0
        %4994 = vmatprep.subr.bf16.mxu0 0
        %4995 = vmatpush1.bf16.msra.mxu0 0
        %4996 = vmatprep.subr.bf16.mxu0 0
        %4997 = vmatpush1.bf16.msra.mxu0 0
        %4998 = vmatprep.subr.bf16.mxu0 0
        %4999 = vmatpush1.bf16.msra.mxu0 0
        %5000 = vmatprep.subr.bf16.mxu0 0
        %5001 = vmatpush1.bf16.msra.mxu0 0
        %5002 = vmatprep.subr.bf16.mxu0 0
        %5003 = vmatpush1.bf16.msra.mxu0 0
        %5004 = vmatprep.subr.bf16.mxu0 0
        %5005 = vmatpush1.bf16.msra.mxu0 0
        %5006 = vmatprep.subr.bf16.mxu0 0
        %5007 = vmatpush1.bf16.msra.mxu0 0
        %5008 = vmatprep.subr.bf16.mxu0 0
        %5009 = vmatpush1.bf16.msra.mxu0 0
        %5010 = vmatprep.subr.bf16.mxu0 0
        %5011 = vmatpush1.bf16.msra.mxu0 0
        %5012 = vmatprep.subr.bf16.mxu0 0
        %5013 = vmatpush1.bf16.msra.mxu0 0
        %5014 = vmatprep.mubr.bf16.mxu0 0
        %5015 = vmatmul.mubr.bf16.gmra.mrb[0].mxu0 %v4977
        %v5016 = vpop.f32.mrb[0].mxu0
        %v5017 = vadd.f32 %v4974, %v5016
        %v5018 = vpop.f32.mrb[0].mxu0
        %v5019 = vpop.f32.mrb[0].mxu0
        %v5020 = vadd.f32 %v4974, %v5019
        %v5021 = vpop.f32.mrb[0].mxu0
        %5022 = vmatprep.mubr.bf16.mxu0 0
        %5023 = vmatmul.mubr.bf16.gmra.mrb[0].mxu0 %v4980
        %v5024 = vpop.f32.mrb[0].mxu0
        %v5025 = vadd.f32 %v4974, %v5024
        %v5026 = vpop.f32.mrb[0].mxu0
        %v5027 = vpop.f32.mrb[0].mxu0
        %v5028 = vadd.f32 %v4974, %v5027
        %v5029 = vpop.f32.mrb[0].mxu0
        %5030 = vdwg.mxu0
        %v5031 = vadd.f32 %v5017, 3.0
        %v5032 = vadd.f32 %v5020, 3.0
        %v5033 = vadd.f32 %v5025, 3.0
        %v5034 = vadd.f32 %v5028, 3.0
        %v5035 = vmax.f32 %v5031, 0.0
        %v5036 = vmax.f32 %v5032, 0.0
        %v5037 = vmax.f32 %v5033, 0.0
        %v5038 = vmax.f32 %v5034, 0.0
        %v5039 = vmin.f32 %v5035, 6.0
        %v5040 = vmin.f32 %v5036, 6.0
        %v5041 = vmin.f32 %v5037, 6.0
        %v5042 = vmin.f32 %v5038, 6.0
        %v5043 = vmul.f32 %v5017, %v5039
        %v5044 = vmul.f32 %v5020, %v5040
        %v5045 = vmul.f32 %v5025, %v5041
        %v5046 = vmul.f32 %v5028, %v5042
        %v5047 = vmul.f32 %v5043, 0.16666667
        %v5048 = vmul.f32 %v5044, 0.16666667
        %v5049 = vmul.f32 %v5045, 0.16666667
        %v5050 = vmul.f32 %v5046, 0.16666667
        %v5051 = vpack.c.bf16 %v5048, %v5047
        %v5052 = vpack.c.bf16 %v4729, %v4729
        %v5054 = vlaneseq
        %v5055 = vshrl.u32 %v5054, 7
        %v5056 = vsub.s32 0, %v5055
        %v5057 = vrot.slane %v4730, %v5056
        %v5060 = vsel %vm1854, %v5051, 0
        %v5063 = vsel %vm1903, %v5052, 0
        %5065 = vmatprep.subr.bf16.mxu0 0
        %5066 = vmatpush1.bf16.msra.mxu0 %v5063
        %5067 = vmatprep.subr.bf16.mxu0 0
        %5068 = vmatpush1.bf16.msra.mxu0 0
        %5069 = vmatprep.subr.bf16.mxu0 0
        %5070 = vmatpush1.bf16.msra.mxu0 0
        %5071 = vmatprep.subr.bf16.mxu0 0
        %5072 = vmatpush1.bf16.msra.mxu0 0
        %5073 = vmatprep.subr.bf16.mxu0 0
        %5074 = vmatpush1.bf16.msra.mxu0 0
        %5075 = vmatprep.subr.bf16.mxu0 0
        %5076 = vmatpush1.bf16.msra.mxu0 0
        %5077 = vmatprep.subr.bf16.mxu0 0
        %5078 = vmatpush1.bf16.msra.mxu0 0
        %5079 = vmatprep.subr.bf16.mxu0 0
        %5080 = vmatpush1.bf16.msra.mxu0 0
        %5081 = vmatprep.subr.bf16.mxu0 0
        %5082 = vmatpush1.bf16.msra.mxu0 0
        %5083 = vmatprep.subr.bf16.mxu0 0
        %5084 = vmatpush1.bf16.msra.mxu0 0
        %5085 = vmatprep.subr.bf16.mxu0 0
        %5086 = vmatpush1.bf16.msra.mxu0 0
        %5087 = vmatprep.subr.bf16.mxu0 0
        %5088 = vmatpush1.bf16.msra.mxu0 0
        %5089 = vmatprep.subr.bf16.mxu0 0
        %5090 = vmatpush1.bf16.msra.mxu0 0
        %5091 = vmatprep.subr.bf16.mxu0 0
        %5092 = vmatpush1.bf16.msra.mxu0 0
        %5093 = vmatprep.subr.bf16.mxu0 0
        %5094 = vmatpush1.bf16.msra.mxu0 0
        %5095 = vmatprep.subr.bf16.mxu0 0
        %5096 = vmatpush1.bf16.msra.mxu0 0
        %5097 = vmatprep.mubr.bf16.mxu0 0
        %5098 = vmatmul.mubr.bf16.gmra.mrb[0].mxu0 %v5060
        %v5099 = vpop.f32.mrb[0].mxu0
        %v5100 = vadd.f32 %v5057, %v5099
        %v5101 = vpop.f32.mrb[0].mxu0
        %v5102 = vpop.f32.mrb[0].mxu0
        %v5103 = vadd.f32 %v5057, %v5102
        %v5104 = vpop.f32.mrb[0].mxu0
        %5105 = vdwg.mxu0
        %v5106 = vsub.f32 0.0, %v5100
        %v5107 = vsub.f32 0.0, %v5103
        %v5108 = vmul.f32 %v5106, 1.442695
        %v5109 = vpow.pop %v5108
        %v5110 = vmul.f32 %v5107, 1.442695
        %v5111 = vpow.pop %v5110
        %v5112 = vadd.f32 %v5109, 1.0
        %v5113 = vadd.f32 %v5111, 1.0
        %v5114 = vrcp.pop %v5112
        %v5115 = vrcp.pop %v5113
        %v5116 = vpack.c.bf16 %v5050, %v5049
        %v5117 = vpack.c.bf16 %v4731, %v4731
        %v5119 = vlaneseq
        %v5120 = vshrl.u32 %v5119, 7
        %v5121 = vsub.s32 0, %v5120
        %v5122 = vrot.slane %v4732, %v5121
        %v5125 = vsel %vm1854, %v5116, 0
        %v5128 = vsel %vm1903, %v5117, 0
        %5130 = vmatprep.subr.bf16.mxu0 0
        %5131 = vmatpush1.bf16.msra.mxu0 %v5128
        %5132 = vmatprep.subr.bf16.mxu0 0
        %5133 = vmatpush1.bf16.msra.mxu0 0
        %5134 = vmatprep.subr.bf16.mxu0 0
        %5135 = vmatpush1.bf16.msra.mxu0 0
        %5136 = vmatprep.subr.bf16.mxu0 0
        %5137 = vmatpush1.bf16.msra.mxu0 0
        %5138 = vmatprep.subr.bf16.mxu0 0
        %5139 = vmatpush1.bf16.msra.mxu0 0
        %5140 = vmatprep.subr.bf16.mxu0 0
        %5141 = vmatpush1.bf16.msra.mxu0 0
        %5142 = vmatprep.subr.bf16.mxu0 0
        %5143 = vmatpush1.bf16.msra.mxu0 0
        %5144 = vmatprep.subr.bf16.mxu0 0
        %5145 = vmatpush1.bf16.msra.mxu0 0
        %5146 = vmatprep.subr.bf16.mxu0 0
        %5147 = vmatpush1.bf16.msra.mxu0 0
        %5148 = vmatprep.subr.bf16.mxu0 0
        %5149 = vmatpush1.bf16.msra.mxu0 0
        %5150 = vmatprep.subr.bf16.mxu0 0
        %5151 = vmatpush1.bf16.msra.mxu0 0
        %5152 = vmatprep.subr.bf16.mxu0 0
        %5153 = vmatpush1.bf16.msra.mxu0 0
        %5154 = vmatprep.subr.bf16.mxu0 0
        %5155 = vmatpush1.bf16.msra.mxu0 0
        %5156 = vmatprep.subr.bf16.mxu0 0
        %5157 = vmatpush1.bf16.msra.mxu0 0
        %5158 = vmatprep.subr.bf16.mxu0 0
        %5159 = vmatpush1.bf16.msra.mxu0 0
        %5160 = vmatprep.subr.bf16.mxu0 0
        %5161 = vmatpush1.bf16.msra.mxu0 0
        %5162 = vmatprep.mubr.bf16.mxu0 0
        %5163 = vmatmul.mubr.bf16.gmra.mrb[0].mxu0 %v5125
        %v5164 = vpop.f32.mrb[0].mxu0
        %v5165 = vadd.f32 %v5122, %v5164
        %v5166 = vpop.f32.mrb[0].mxu0
        %v5167 = vpop.f32.mrb[0].mxu0
        %v5168 = vadd.f32 %v5122, %v5167
        %v5169 = vpop.f32.mrb[0].mxu0
        %5170 = vdwg.mxu0
        %v5171 = vsub.f32 0.0, %v5165
        %v5172 = vsub.f32 0.0, %v5168
        %v5173 = vmul.f32 %v5171, 1.442695
        %v5174 = vpow.pop %v5173
        %v5175 = vmul.f32 %v5172, 1.442695
        %v5176 = vpow.pop %v5175
        %v5177 = vadd.f32 %v5174, 1.0
        %v5178 = vadd.f32 %v5176, 1.0
        %v5179 = vrcp.pop %v5177
        %v5180 = vrcp.pop %v5178
        %v5183 = vcombine.high %v5114, %v5114
        %v5185 = vunpack.c.l.s4 1966171168
        %v5186 = vunpack.c.0.s8 %v5185
        %v5187 = vlaneseq
        %v5188 = vshrl.u32 %v5187, 7
        %v5189 = vsub.s32 %v5186, %v5188
        %v5190 = vrot.slane %v5114, %v5189
        %v5192 = vunpack.c.l.s4 1966171168
        %v5193 = vunpack.c.0.s8 %v5192
        %v5194 = vlaneseq
        %v5195 = vshrl.u32 %v5194, 7
        %v5196 = vsub.s32 %v5193, %v5195
        %v5197 = vrot.slane %v5183, %v5196
        %v5198 = vcombine.high %v5190, %v5190
        %v5199 = vcombine.high %v5197, %v5197
        %v5201 = vunpack.c.l.s4 1966171168
        %v5202 = vunpack.c.0.s8 %v5201
        %v5203 = vlaneseq
        %v5204 = vshrl.u32 %v5203, 7
        %v5205 = vsub.s32 %v5202, %v5204
        %v5206 = vrot.slane %v5190, %v5205
        %v5208 = vunpack.c.l.s4 1966171168
        %v5209 = vunpack.c.0.s8 %v5208
        %v5210 = vlaneseq
        %v5211 = vshrl.u32 %v5210, 7
        %v5212 = vsub.s32 %v5209, %v5211
        %v5213 = vrot.slane %v5197, %v5212
        %v5215 = vunpack.c.l.s4 1966171168
        %v5216 = vunpack.c.0.s8 %v5215
        %v5217 = vlaneseq
        %v5218 = vshrl.u32 %v5217, 7
        %v5219 = vsub.s32 %v5216, %v5218
        %v5220 = vrot.slane %v5198, %v5219
        %v5222 = vunpack.c.l.s4 1966171168
        %v5223 = vunpack.c.0.s8 %v5222
        %v5224 = vlaneseq
        %v5225 = vshrl.u32 %v5224, 7
        %v5226 = vsub.s32 %v5223, %v5225
        %v5227 = vrot.slane %v5199, %v5226
        %v5228 = vcombine.high %v5206, %v5206
        %v5229 = vcombine.high %v5213, %v5213
        %v5230 = vcombine.high %v5220, %v5220
        %v5231 = vcombine.high %v5227, %v5227
        %v5232 = vcombine.high %v5115, %v5115
        %v5234 = vunpack.c.l.s4 1966171168
        %v5235 = vunpack.c.0.s8 %v5234
        %v5236 = vlaneseq
        %v5237 = vshrl.u32 %v5236, 7
        %v5238 = vsub.s32 %v5235, %v5237
        %v5239 = vrot.slane %v5115, %v5238
        %v5241 = vunpack.c.l.s4 1966171168
        %v5242 = vunpack.c.0.s8 %v5241
        %v5243 = vlaneseq
        %v5244 = vshrl.u32 %v5243, 7
        %v5245 = vsub.s32 %v5242, %v5244
        %v5246 = vrot.slane %v5232, %v5245
        %v5247 = vcombine.high %v5239, %v5239
        %v5248 = vcombine.high %v5246, %v5246
        %v5250 = vunpack.c.l.s4 1966171168
        %v5251 = vunpack.c.0.s8 %v5250
        %v5252 = vlaneseq
        %v5253 = vshrl.u32 %v5252, 7
        %v5254 = vsub.s32 %v5251, %v5253
        %v5255 = vrot.slane %v5239, %v5254
        %v5257 = vunpack.c.l.s4 1966171168
        %v5258 = vunpack.c.0.s8 %v5257
        %v5259 = vlaneseq
        %v5260 = vshrl.u32 %v5259, 7
        %v5261 = vsub.s32 %v5258, %v5260
        %v5262 = vrot.slane %v5246, %v5261
        %v5264 = vunpack.c.l.s4 1966171168
        %v5265 = vunpack.c.0.s8 %v5264
        %v5266 = vlaneseq
        %v5267 = vshrl.u32 %v5266, 7
        %v5268 = vsub.s32 %v5265, %v5267
        %v5269 = vrot.slane %v5247, %v5268
        %v5271 = vunpack.c.l.s4 1966171168
        %v5272 = vunpack.c.0.s8 %v5271
        %v5273 = vlaneseq
        %v5274 = vshrl.u32 %v5273, 7
        %v5275 = vsub.s32 %v5272, %v5274
        %v5276 = vrot.slane %v5248, %v5275
        %v5277 = vcombine.high %v5255, %v5255
        %v5278 = vcombine.high %v5262, %v5262
        %v5279 = vcombine.high %v5269, %v5269
        %v5280 = vcombine.high %v5276, %v5276
        %v5281 = vlaneseq
        %v5282 = vshrl.u32 %v5281, 7
        %v5283 = vsub.s32 0, %v5282
        %v5284 = vrot.slane %v5206, %v5283
        %v5285 = vlaneseq
        %v5286 = vshrl.u32 %v5285, 7
        %v5287 = vsub.s32 0, %v5286
        %v5288 = vrot.slane %v5220, %v5287
        %v5289 = vlaneseq
        %v5290 = vshrl.u32 %v5289, 7
        %v5291 = vsub.s32 0, %v5290
        %v5292 = vrot.slane %v5228, %v5291
        %v5293 = vlaneseq
        %v5294 = vshrl.u32 %v5293, 7
        %v5295 = vsub.s32 0, %v5294
        %v5296 = vrot.slane %v5230, %v5295
        %v5297 = vlaneseq
        %v5298 = vshrl.u32 %v5297, 7
        %v5299 = vsub.s32 0, %v5298
        %v5300 = vrot.slane %v5213, %v5299
        %v5301 = vlaneseq
        %v5302 = vshrl.u32 %v5301, 7
        %v5303 = vsub.s32 0, %v5302
        %v5304 = vrot.slane %v5227, %v5303
        %v5305 = vlaneseq
        %v5306 = vshrl.u32 %v5305, 7
        %v5307 = vsub.s32 0, %v5306
        %v5308 = vrot.slane %v5229, %v5307
        %v5309 = vlaneseq
        %v5310 = vshrl.u32 %v5309, 7
        %v5311 = vsub.s32 0, %v5310
        %v5312 = vrot.slane %v5231, %v5311
        %v5313 = vlaneseq
        %v5314 = vshrl.u32 %v5313, 7
        %v5315 = vsub.s32 0, %v5314
        %v5316 = vrot.slane %v5255, %v5315
        %v5317 = vlaneseq
        %v5318 = vshrl.u32 %v5317, 7
        %v5319 = vsub.s32 0, %v5318
        %v5320 = vrot.slane %v5269, %v5319
        %v5321 = vlaneseq
        %v5322 = vshrl.u32 %v5321, 7
        %v5323 = vsub.s32 0, %v5322
        %v5324 = vrot.slane %v5277, %v5323
        %v5325 = vlaneseq
        %v5326 = vshrl.u32 %v5325, 7
        %v5327 = vsub.s32 0, %v5326
        %v5328 = vrot.slane %v5279, %v5327
        %v5329 = vlaneseq
        %v5330 = vshrl.u32 %v5329, 7
        %v5331 = vsub.s32 0, %v5330
        %v5332 = vrot.slane %v5262, %v5331
        %v5333 = vlaneseq
        %v5334 = vshrl.u32 %v5333, 7
        %v5335 = vsub.s32 0, %v5334
        %v5336 = vrot.slane %v5276, %v5335
        %v5337 = vlaneseq
        %v5338 = vshrl.u32 %v5337, 7
        %v5339 = vsub.s32 0, %v5338
        %v5340 = vrot.slane %v5278, %v5339
        %v5341 = vlaneseq
        %v5342 = vshrl.u32 %v5341, 7
        %v5343 = vsub.s32 0, %v5342
        %v5344 = vrot.slane %v5280, %v5343
        %v5361 = vmul.f32 %v5284, %v5179
        %v5362 = vmul.f32 %v5284, %v5180
        %v5363 = vmul.f32 %v5288, %v5179
        %v5364 = vmul.f32 %v5288, %v5180
        %v5365 = vmul.f32 %v5292, %v5179
        %v5366 = vmul.f32 %v5292, %v5180
        %v5367 = vmul.f32 %v5296, %v5179
        %v5368 = vmul.f32 %v5296, %v5180
        %v5369 = vmul.f32 %v5300, %v5179
        %v5370 = vmul.f32 %v5300, %v5180
        %v5371 = vmul.f32 %v5304, %v5179
        %v5372 = vmul.f32 %v5304, %v5180
        %v5373 = vmul.f32 %v5308, %v5179
        %v5374 = vmul.f32 %v5308, %v5180
        %v5375 = vmul.f32 %v5312, %v5179
        %v5376 = vmul.f32 %v5312, %v5180
        %v5377 = vmul.f32 %v5316, %v5179
        %v5378 = vmul.f32 %v5316, %v5180
        %v5379 = vmul.f32 %v5320, %v5179
        %v5380 = vmul.f32 %v5320, %v5180
        %v5381 = vmul.f32 %v5324, %v5179
        %v5382 = vmul.f32 %v5324, %v5180
        %v5383 = vmul.f32 %v5328, %v5179
        %v5384 = vmul.f32 %v5328, %v5180
        %v5385 = vmul.f32 %v5332, %v5179
        %v5386 = vmul.f32 %v5332, %v5180
        %v5387 = vmul.f32 %v5336, %v5179
        %v5388 = vmul.f32 %v5336, %v5180
        %v5389 = vmul.f32 %v5340, %v5179
        %v5390 = vmul.f32 %v5340, %v5180
        %v5391 = vmul.f32 %v5344, %v5179
        %v5392 = vmul.f32 %v5344, %v5180
        %v5393 = vmul.f32 %v4694, %v5361
        %v5394 = vmul.f32 %v4695, %v5362
        %v5395 = vmul.f32 %v4696, %v5363
        %v5396 = vmul.f32 %v4697, %v5364
        %v5397 = vmul.f32 %v4698, %v5365
        %v5398 = vmul.f32 %v4699, %v5366
        %v5399 = vmul.f32 %v4700, %v5367
        %v5400 = vmul.f32 %v4701, %v5368
        %v5401 = vmul.f32 %v4702, %v5369
        %v5402 = vmul.f32 %v4703, %v5370
        %v5403 = vmul.f32 %v4704, %v5371
        %v5404 = vmul.f32 %v4705, %v5372
        %v5405 = vmul.f32 %v4706, %v5373
        %v5406 = vmul.f32 %v4707, %v5374
        %v5407 = vmul.f32 %v4708, %v5375
        %v5408 = vmul.f32 %v4709, %v5376
        %v5409 = vmul.f32 %v4710, %v5377
        %v5410 = vmul.f32 %v4711, %v5378
        %v5411 = vmul.f32 %v4712, %v5379
        %v5412 = vmul.f32 %v4713, %v5380
        %v5413 = vmul.f32 %v4714, %v5381
        %v5414 = vmul.f32 %v4715, %v5382
        %v5415 = vmul.f32 %v4716, %v5383
        %v5416 = vmul.f32 %v4717, %v5384
        %v5417 = vmul.f32 %v4718, %v5385
        %v5418 = vmul.f32 %v4719, %v5386
        %v5419 = vmul.f32 %v4720, %v5387
        %v5420 = vmul.f32 %v4721, %v5388
        %v5421 = vmul.f32 %v4722, %v5389
        %v5422 = vmul.f32 %v4723, %v5390
        %v5423 = vmul.f32 %v4724, %v5391
        %v5424 = vmul.f32 %v4725, %v5392
        %v5426 = vlaneseq
        %v5427 = vshrl.u32 %v5426, 7
        %v5428 = vsub.s32 0, %v5427
        %v5429 = vrot.slane %v4733, %v5428
        %v5431 = vmul.f32 %v5393, %v5429
        %v5432 = vmul.f32 %v5394, %v5429
        %v5433 = vmul.f32 %v5395, %v5429
        %v5434 = vmul.f32 %v5396, %v5429
        %v5435 = vmul.f32 %v5397, %v5429
        %v5436 = vmul.f32 %v5398, %v5429
        %v5437 = vmul.f32 %v5399, %v5429
        %v5438 = vmul.f32 %v5400, %v5429
        %v5439 = vmul.f32 %v5401, %v5429
        %v5440 = vmul.f32 %v5402, %v5429
        %v5441 = vmul.f32 %v5403, %v5429
        %v5442 = vmul.f32 %v5404, %v5429
        %v5443 = vmul.f32 %v5405, %v5429
        %v5444 = vmul.f32 %v5406, %v5429
        %v5445 = vmul.f32 %v5407, %v5429
        %v5446 = vmul.f32 %v5408, %v5429
        %v5447 = vmul.f32 %v5409, %v5429
        %v5448 = vmul.f32 %v5410, %v5429
        %v5449 = vmul.f32 %v5411, %v5429
        %v5450 = vmul.f32 %v5412, %v5429
        %v5451 = vmul.f32 %v5413, %v5429
        %v5452 = vmul.f32 %v5414, %v5429
        %v5453 = vmul.f32 %v5415, %v5429
        %v5454 = vmul.f32 %v5416, %v5429
        %v5455 = vmul.f32 %v5417, %v5429
        %v5456 = vmul.f32 %v5418, %v5429
        %v5457 = vmul.f32 %v5419, %v5429
        %v5458 = vmul.f32 %v5420, %v5429
        %v5459 = vmul.f32 %v5421, %v5429
        %v5460 = vmul.f32 %v5422, %v5429
        %v5461 = vmul.f32 %v5423, %v5429
        %v5462 = vmul.f32 %v5424, %v5429
        %v5464 = vlaneseq
        %v5465 = vshrl.u32 %v5464, 7
        %v5466 = vsub.s32 0, %v5465
        %v5467 = vrot.slane %v4734, %v5466
        %v5469 = vadd.f32 %v5431, %v5467
        %v5470 = vadd.f32 %v5432, %v5467
        %v5471 = vadd.f32 %v5433, %v5467
        %v5472 = vadd.f32 %v5434, %v5467
        %v5473 = vadd.f32 %v5435, %v5467
        %v5474 = vadd.f32 %v5436, %v5467
        %v5475 = vadd.f32 %v5437, %v5467
        %v5476 = vadd.f32 %v5438, %v5467
        %v5477 = vadd.f32 %v5439, %v5467
        %v5478 = vadd.f32 %v5440, %v5467
        %v5479 = vadd.f32 %v5441, %v5467
        %v5480 = vadd.f32 %v5442, %v5467
        %v5481 = vadd.f32 %v5443, %v5467
        %v5482 = vadd.f32 %v5444, %v5467
        %v5483 = vadd.f32 %v5445, %v5467
        %v5484 = vadd.f32 %v5446, %v5467
        %v5485 = vadd.f32 %v5447, %v5467
        %v5486 = vadd.f32 %v5448, %v5467
        %v5487 = vadd.f32 %v5449, %v5467
        %v5488 = vadd.f32 %v5450, %v5467
        %v5489 = vadd.f32 %v5451, %v5467
        %v5490 = vadd.f32 %v5452, %v5467
        %v5491 = vadd.f32 %v5453, %v5467
        %v5492 = vadd.f32 %v5454, %v5467
        %v5493 = vadd.f32 %v5455, %v5467
        %v5494 = vadd.f32 %v5456, %v5467
        %v5495 = vadd.f32 %v5457, %v5467
        %v5496 = vadd.f32 %v5458, %v5467
        %v5497 = vadd.f32 %v5459, %v5467
        %v5498 = vadd.f32 %v5460, %v5467
        %v5499 = vadd.f32 %v5461, %v5467
        %v5500 = vadd.f32 %v5462, %v5467
        %v5501 = vadd.f32 %v5469, %v4694
        %v5502 = vadd.f32 %v5470, %v4695
        %v5503 = vadd.f32 %v5471, %v4696
        %v5504 = vadd.f32 %v5472, %v4697
        %v5505 = vadd.f32 %v5473, %v4698
        %v5506 = vadd.f32 %v5474, %v4699
        %v5507 = vadd.f32 %v5475, %v4700
        %v5508 = vadd.f32 %v5476, %v4701
        %v5509 = vadd.f32 %v5477, %v4702
        %v5510 = vadd.f32 %v5478, %v4703
        %v5511 = vadd.f32 %v5479, %v4704
        %v5512 = vadd.f32 %v5480, %v4705
        %v5513 = vadd.f32 %v5481, %v4706
        %v5514 = vadd.f32 %v5482, %v4707
        %v5515 = vadd.f32 %v5483, %v4708
        %v5516 = vadd.f32 %v5484, %v4709
        %v5517 = vadd.f32 %v5485, %v4710
        %v5518 = vadd.f32 %v5486, %v4711
        %v5519 = vadd.f32 %v5487, %v4712
        %v5520 = vadd.f32 %v5488, %v4713
        %v5521 = vadd.f32 %v5489, %v4714
        %v5522 = vadd.f32 %v5490, %v4715
        %v5523 = vadd.f32 %v5491, %v4716
        %v5524 = vadd.f32 %v5492, %v4717
        %v5525 = vadd.f32 %v5493, %v4718
        %v5526 = vadd.f32 %v5494, %v4719
        %v5527 = vadd.f32 %v5495, %v4720
        %v5528 = vadd.f32 %v5496, %v4721
        %v5529 = vadd.f32 %v5497, %v4722
        %v5530 = vadd.f32 %v5498, %v4723
        %v5531 = vadd.f32 %v5499, %v4724
        %v5532 = vadd.f32 %v5500, %v4725
        %v5533 = vmax.f32 %v5501, 0.0
        %v5534 = vmax.f32 %v5502, 0.0
        %v5535 = vmax.f32 %v5503, 0.0
        %v5536 = vmax.f32 %v5504, 0.0
        %v5537 = vmax.f32 %v5505, 0.0
        %v5538 = vmax.f32 %v5506, 0.0
        %v5539 = vmax.f32 %v5507, 0.0
        %v5540 = vmax.f32 %v5508, 0.0
        %v5541 = vmax.f32 %v5509, 0.0
        %v5542 = vmax.f32 %v5510, 0.0
        %v5543 = vmax.f32 %v5511, 0.0
        %v5544 = vmax.f32 %v5512, 0.0
        %v5545 = vmax.f32 %v5513, 0.0
        %v5546 = vmax.f32 %v5514, 0.0
        %v5547 = vmax.f32 %v5515, 0.0
        %v5548 = vmax.f32 %v5516, 0.0
        %v5549 = vmax.f32 %v5517, 0.0
        %v5550 = vmax.f32 %v5518, 0.0
        %v5551 = vmax.f32 %v5519, 0.0
        %v5552 = vmax.f32 %v5520, 0.0
        %v5553 = vmax.f32 %v5521, 0.0
        %v5554 = vmax.f32 %v5522, 0.0
        %v5555 = vmax.f32 %v5523, 0.0
        %v5556 = vmax.f32 %v5524, 0.0
        %v5557 = vmax.f32 %v5525, 0.0
        %v5558 = vmax.f32 %v5526, 0.0
        %v5559 = vmax.f32 %v5527, 0.0
        %v5560 = vmax.f32 %v5528, 0.0
        %v5561 = vmax.f32 %v5529, 0.0
        %v5562 = vmax.f32 %v5530, 0.0
        %v5563 = vmax.f32 %v5531, 0.0
        %v5564 = vmax.f32 %v5532, 0.0
        %v5565 = vld [vmem:[#allocation32] sm:$0xff]
        %v5566 = vld [vmem:[#allocation32 + $0x8] sm:$0xff]
        %v5567 = vld [vmem:[#allocation32 + $0x10] sm:$0xff]
        %v5568 = vld [vmem:[#allocation32 + $0x18] sm:$0xff]
        %v5569 = vld [vmem:[#allocation32 + $0x20] sm:$0xff]
        %v5570 = vld [vmem:[#allocation32 + $0x28] sm:$0xff]
        %v5571 = vld [vmem:[#allocation32 + $0x30] sm:$0xff]
        %v5572 = vld [vmem:[#allocation32 + $0x38] sm:$0xff]
        %v5573 = vld [vmem:[#allocation32 + $0x40] sm:$0xff]
        %v5574 = vld [vmem:[#allocation32 + $0x48] sm:$0xff]
        %v5575 = vld [vmem:[#allocation32 + $0x50] sm:$0xff]
        %v5576 = vld [vmem:[#allocation32 + $0x58] sm:$0xff]
        %v5577 = vld [vmem:[#allocation32 + $0x60] sm:$0xff]
        %v5578 = vld [vmem:[#allocation32 + $0x68] sm:$0xff]
        %v5579 = vld [vmem:[#allocation32 + $0x70] sm:$0xff]
        %v5580 = vld [vmem:[#allocation32 + $0x78] sm:$0xff]
        %v5581 = vld [vmem:[#allocation32 + $0x80] sm:$0xff]
        %v5582 = vld [vmem:[#allocation32 + $0x88] sm:$0xff]
        %v5583 = vld [vmem:[#allocation32 + $0x90] sm:$0xff]
        %v5584 = vld [vmem:[#allocation32 + $0x98] sm:$0xff]
        %v5585 = vld [vmem:[#allocation32 + $0xa0] sm:$0xff]
        %v5586 = vld [vmem:[#allocation32 + $0xa8] sm:$0xff]
        %v5587 = vld [vmem:[#allocation32 + $0xb0] sm:$0xff]
        %v5588 = vld [vmem:[#allocation32 + $0xb8] sm:$0xff]
        %v5589 = vld [vmem:[#allocation32 + $0xc0] sm:$0xff]
        %v5590 = vld [vmem:[#allocation32 + $0xc8] sm:$0xff]
        %v5591 = vld [vmem:[#allocation32 + $0xd0] sm:$0xff]
        %v5592 = vld [vmem:[#allocation32 + $0xd8] sm:$0xff]
        %v5593 = vld [vmem:[#allocation32 + $0xe0] sm:$0xff]
        %v5594 = vld [vmem:[#allocation32 + $0xe8] sm:$0xff]
        %v5595 = vld [vmem:[#allocation32 + $0xf0] sm:$0xff]
        %v5596 = vld [vmem:[#allocation32 + $0xf8] sm:$0xff]
        %v5597 = vld [vmem:[#allocation32 + $0x100] sm:$0xff]
        %v5598 = vld [vmem:[#allocation32 + $0x108] sm:$0xff]
        %v5599 = vld [vmem:[#allocation32 + $0x110] sm:$0xff]
        %v5600 = vld [vmem:[#allocation32 + $0x118] sm:$0xff]
        %v5601 = vld [vmem:[#allocation32 + $0x120] sm:$0xff]
        %v5602 = vld [vmem:[#allocation32 + $0x128] sm:$0xff]
        %v5603 = vld [vmem:[#allocation32 + $0x130] sm:$0xff]
        %v5604 = vld [vmem:[#allocation32 + $0x138] sm:$0xff]
        %v5605 = vld [vmem:[#allocation32 + $0x140] sm:$0xff]
        %v5606 = vld [vmem:[#allocation32 + $0x148] sm:$0xff]
        %v5607 = vld [vmem:[#allocation32 + $0x150] sm:$0xff]
        %v5608 = vld [vmem:[#allocation32 + $0x158] sm:$0xff]
        %v5609 = vld [vmem:[#allocation32 + $0x160] sm:$0xff]
        %v5610 = vld [vmem:[#allocation32 + $0x168] sm:$0xff]
        %v5611 = vld [vmem:[#allocation32 + $0x170] sm:$0xff]
        %v5612 = vld [vmem:[#allocation32 + $0x178] sm:$0xff]
        %v5613 = vld [vmem:[#allocation32 + $0x180] sm:$0xff]
        %v5614 = vld [vmem:[#allocation32 + $0x188] sm:$0xff]
        %v5615 = vld [vmem:[#allocation32 + $0x190] sm:$0xff]
        %v5616 = vld [vmem:[#allocation32 + $0x198] sm:$0xff]
        %v5617 = vld [vmem:[#allocation32 + $0x1a0] sm:$0xff]
        %v5618 = vld [vmem:[#allocation32 + $0x1a8] sm:$0xff]
        %v5619 = vld [vmem:[#allocation32 + $0x1b0] sm:$0xff]
        %v5620 = vld [vmem:[#allocation32 + $0x1b8] sm:$0xff]
        %v5621 = vld [vmem:[#allocation32 + $0x1c0] sm:$0xff]
        %v5622 = vld [vmem:[#allocation32 + $0x1c8] sm:$0xff]
        %v5623 = vld [vmem:[#allocation32 + $0x1d0] sm:$0xff]
        %v5624 = vld [vmem:[#allocation32 + $0x1d8] sm:$0xff]
        %v5625 = vld [vmem:[#allocation32 + $0x1e0] sm:$0xff]
        %v5626 = vld [vmem:[#allocation32 + $0x1e8] sm:$0xff]
        %v5627 = vld [vmem:[#allocation32 + $0x1f0] sm:$0xff]
        %v5628 = vld [vmem:[#allocation32 + $0x1f8] sm:$0xff]
        %v5629 = vld [vmem:[%s51] sm:$0xff]
        %v5630 = vld [vmem:[%s51 + $0x8] sm:$0xff]
        %v5631 = vld [vmem:[#allocation34] sm:$0x1]
        %v5632 = vld [vmem:[%s55] sm:$0x1]
        %v5633 = vld [vmem:[%s57] sm:$0x1]
        %v5634 = vpack.c.bf16 %v5534, %v5533
        %v5635 = vpack.c.bf16 %v5536, %v5535
        %v5636 = vpack.c.bf16 %v5538, %v5537
        %v5637 = vpack.c.bf16 %v5540, %v5539
        %v5638 = vpack.c.bf16 %v5542, %v5541
        %v5639 = vpack.c.bf16 %v5544, %v5543
        %v5640 = vpack.c.bf16 %v5546, %v5545
        %v5641 = vpack.c.bf16 %v5548, %v5547
        %v5642 = vpack.c.bf16 %v5550, %v5549
        %v5643 = vpack.c.bf16 %v5552, %v5551
        %v5644 = vpack.c.bf16 %v5554, %v5553
        %v5645 = vpack.c.bf16 %v5556, %v5555
        %v5646 = vpack.c.bf16 %v5558, %v5557
        %v5647 = vpack.c.bf16 %v5560, %v5559
        %v5648 = vpack.c.bf16 %v5562, %v5561
        %v5649 = vpack.c.bf16 %v5564, %v5563
        %v5650 = vpack.c.bf16 %v5630, %v5629
        %v5652 = vlaneseq
        %v5653 = vshrl.u32 %v5652, 7
        %v5654 = vsub.s32 0, %v5653
        %v5655 = vrot.slane %v5631, %v5654
        %v5658 = vsel %vm3211, %v5634, 0
        %v5661 = vsel %vm3211, %v5635, 0
        %v5664 = vsel %vm3211, %v5636, 0
        %v5667 = vsel %vm3211, %v5637, 0
        %v5670 = vsel %vm3211, %v5638, 0
        %v5673 = vsel %vm3211, %v5639, 0
        %v5676 = vsel %vm3211, %v5640, 0
        %v5679 = vsel %vm3211, %v5641, 0
        %v5682 = vsel %vm3211, %v5642, 0
        %v5685 = vsel %vm3211, %v5643, 0
        %v5688 = vsel %vm3211, %v5644, 0
        %v5691 = vsel %vm3211, %v5645, 0
        %v5694 = vsel %vm3211, %v5646, 0
        %v5697 = vsel %vm3211, %v5647, 0
        %v5700 = vsel %vm3211, %v5648, 0
        %v5703 = vsel %vm3211, %v5649, 0
        %5705 = vmatprep.subr.bf16.mxu0 0
        %5706 = vmatpush1.bf16.msra.mxu0 %v5650
        %5707 = vmatprep.subr.bf16.mxu0 0
        %5708 = vmatpush1.bf16.msra.mxu0 0
        %5709 = vmatprep.subr.bf16.mxu0 0
        %5710 = vmatpush1.bf16.msra.mxu0 0
        %5711 = vmatprep.subr.bf16.mxu0 0
        %5712 = vmatpush1.bf16.msra.mxu0 0
        %5713 = vmatprep.subr.bf16.mxu0 0
        %5714 = vmatpush1.bf16.msra.mxu0 0
        %5715 = vmatprep.subr.bf16.mxu0 0
        %5716 = vmatpush1.bf16.msra.mxu0 0
        %5717 = vmatprep.subr.bf16.mxu0 0
        %5718 = vmatpush1.bf16.msra.mxu0 0
        %5719 = vmatprep.subr.bf16.mxu0 0
        %5720 = vmatpush1.bf16.msra.mxu0 0
        %5721 = vmatprep.subr.bf16.mxu0 0
        %5722 = vmatpush1.bf16.msra.mxu0 0
        %5723 = vmatprep.subr.bf16.mxu0 0
        %5724 = vmatpush1.bf16.msra.mxu0 0
        %5725 = vmatprep.subr.bf16.mxu0 0
        %5726 = vmatpush1.bf16.msra.mxu0 0
        %5727 = vmatprep.subr.bf16.mxu0 0
        %5728 = vmatpush1.bf16.msra.mxu0 0
        %5729 = vmatprep.subr.bf16.mxu0 0
        %5730 = vmatpush1.bf16.msra.mxu0 0
        %5731 = vmatprep.subr.bf16.mxu0 0
        %5732 = vmatpush1.bf16.msra.mxu0 0
        %5733 = vmatprep.subr.bf16.mxu0 0
        %5734 = vmatpush1.bf16.msra.mxu0 0
        %5735 = vmatprep.subr.bf16.mxu0 0
        %5736 = vmatpush1.bf16.msra.mxu0 0
        %5737 = vmatprep.mubr.bf16.mxu0 0
        %5738 = vmatmul.mubr.bf16.gmra.mrb[0].mxu0 %v5658
        %v5739 = vpop.f32.mrb[0].mxu0
        %v5740 = vadd.f32 %v5655, %v5739
        %v5741 = vpop.f32.mrb[0].mxu0
        %v5742 = vpop.f32.mrb[0].mxu0
        %v5743 = vadd.f32 %v5655, %v5742
        %v5744 = vpop.f32.mrb[0].mxu0
        %5745 = vmatprep.mubr.bf16.mxu0 0
        %5746 = vmatmul.mubr.bf16.gmra.mrb[0].mxu0 %v5661
        %v5747 = vpop.f32.mrb[0].mxu0
        %v5748 = vadd.f32 %v5655, %v5747
        %v5749 = vpop.f32.mrb[0].mxu0
        %v5750 = vpop.f32.mrb[0].mxu0
        %v5751 = vadd.f32 %v5655, %v5750
        %v5752 = vpop.f32.mrb[0].mxu0
        %5753 = vmatprep.mubr.bf16.mxu0 0
        %5754 = vmatmul.mubr.bf16.gmra.mrb[0].mxu0 %v5664
        %v5755 = vpop.f32.mrb[0].mxu0
        %v5756 = vadd.f32 %v5655, %v5755
        %v5757 = vpop.f32.mrb[0].mxu0
        %v5758 = vpop.f32.mrb[0].mxu0
        %v5759 = vadd.f32 %v5655, %v5758
        %v5760 = vpop.f32.mrb[0].mxu0
        %5761 = vmatprep.mubr.bf16.mxu0 0
        %5762 = vmatmul.mubr.bf16.gmra.mrb[0].mxu0 %v5667
        %v5763 = vpop.f32.mrb[0].mxu0
        %v5764 = vadd.f32 %v5655, %v5763
        %v5765 = vpop.f32.mrb[0].mxu0
        %v5766 = vpop.f32.mrb[0].mxu0
        %v5767 = vadd.f32 %v5655, %v5766
        %v5768 = vpop.f32.mrb[0].mxu0
        %5769 = vmatprep.mubr.bf16.mxu0 0
        %5770 = vmatmul.mubr.bf16.gmra.mrb[0].mxu0 %v5670
        %v5771 = vpop.f32.mrb[0].mxu0
        %v5772 = vadd.f32 %v5655, %v5771
        %v5773 = vpop.f32.mrb[0].mxu0
        %v5774 = vpop.f32.mrb[0].mxu0
        %v5775 = vadd.f32 %v5655, %v5774
        %v5776 = vpop.f32.mrb[0].mxu0
        %5777 = vmatprep.mubr.bf16.mxu0 0
        %5778 = vmatmul.mubr.bf16.gmra.mrb[0].mxu0 %v5673
        %v5779 = vpop.f32.mrb[0].mxu0
        %v5780 = vadd.f32 %v5655, %v5779
        %v5781 = vpop.f32.mrb[0].mxu0
        %v5782 = vpop.f32.mrb[0].mxu0
        %v5783 = vadd.f32 %v5655, %v5782
        %v5784 = vpop.f32.mrb[0].mxu0
        %5785 = vmatprep.mubr.bf16.mxu0 0
        %5786 = vmatmul.mubr.bf16.gmra.mrb[0].mxu0 %v5676
        %v5787 = vpop.f32.mrb[0].mxu0
        %v5788 = vadd.f32 %v5655, %v5787
        %v5789 = vpop.f32.mrb[0].mxu0
        %v5790 = vpop.f32.mrb[0].mxu0
        %v5791 = vadd.f32 %v5655, %v5790
        %v5792 = vpop.f32.mrb[0].mxu0
        %5793 = vmatprep.mubr.bf16.mxu0 0
        %5794 = vmatmul.mubr.bf16.gmra.mrb[0].mxu0 %v5679
        %v5795 = vpop.f32.mrb[0].mxu0
        %v5796 = vadd.f32 %v5655, %v5795
        %v5797 = vpop.f32.mrb[0].mxu0
        %v5798 = vpop.f32.mrb[0].mxu0
        %v5799 = vadd.f32 %v5655, %v5798
        %v5800 = vpop.f32.mrb[0].mxu0
        %5801 = vmatprep.mubr.bf16.mxu0 0
        %5802 = vmatmul.mubr.bf16.gmra.mrb[0].mxu0 %v5682
        %v5803 = vpop.f32.mrb[0].mxu0
        %v5804 = vadd.f32 %v5655, %v5803
        %v5805 = vpop.f32.mrb[0].mxu0
        %v5806 = vpop.f32.mrb[0].mxu0
        %v5807 = vadd.f32 %v5655, %v5806
        %v5808 = vpop.f32.mrb[0].mxu0
        %5809 = vmatprep.mubr.bf16.mxu0 0
        %5810 = vmatmul.mubr.bf16.gmra.mrb[0].mxu0 %v5685
        %v5811 = vpop.f32.mrb[0].mxu0
        %v5812 = vadd.f32 %v5655, %v5811
        %v5813 = vpop.f32.mrb[0].mxu0
        %v5814 = vpop.f32.mrb[0].mxu0
        %v5815 = vadd.f32 %v5655, %v5814
        %v5816 = vpop.f32.mrb[0].mxu0
        %5817 = vmatprep.mubr.bf16.mxu0 0
        %5818 = vmatmul.mubr.bf16.gmra.mrb[0].mxu0 %v5688
        %v5819 = vpop.f32.mrb[0].mxu0
        %v5820 = vadd.f32 %v5655, %v5819
        %v5821 = vpop.f32.mrb[0].mxu0
        %v5822 = vpop.f32.mrb[0].mxu0
        %v5823 = vadd.f32 %v5655, %v5822
        %v5824 = vpop.f32.mrb[0].mxu0
        %5825 = vmatprep.mubr.bf16.mxu0 0
        %5826 = vmatmul.mubr.bf16.gmra.mrb[0].mxu0 %v5691
        %v5827 = vpop.f32.mrb[0].mxu0
        %v5828 = vadd.f32 %v5655, %v5827
        %v5829 = vpop.f32.mrb[0].mxu0
        %v5830 = vpop.f32.mrb[0].mxu0
        %v5831 = vadd.f32 %v5655, %v5830
        %v5832 = vpop.f32.mrb[0].mxu0
        %5833 = vmatprep.mubr.bf16.mxu0 0
        %5834 = vmatmul.mubr.bf16.gmra.mrb[0].mxu0 %v5694
        %v5835 = vpop.f32.mrb[0].mxu0
        %v5836 = vadd.f32 %v5655, %v5835
        %v5837 = vpop.f32.mrb[0].mxu0
        %v5838 = vpop.f32.mrb[0].mxu0
        %v5839 = vadd.f32 %v5655, %v5838
        %v5840 = vpop.f32.mrb[0].mxu0
        %5841 = vmatprep.mubr.bf16.mxu0 0
        %5842 = vmatmul.mubr.bf16.gmra.mrb[0].mxu0 %v5697
        %v5843 = vpop.f32.mrb[0].mxu0
        %v5844 = vadd.f32 %v5655, %v5843
        %v5845 = vpop.f32.mrb[0].mxu0
        %v5846 = vpop.f32.mrb[0].mxu0
        %v5847 = vadd.f32 %v5655, %v5846
        %v5848 = vpop.f32.mrb[0].mxu0
        %5849 = vmatprep.mubr.bf16.mxu0 0
        %5850 = vmatmul.mubr.bf16.gmra.mrb[0].mxu0 %v5700
        %v5851 = vpop.f32.mrb[0].mxu0
        %v5852 = vadd.f32 %v5655, %v5851
        %v5853 = vpop.f32.mrb[0].mxu0
        %v5854 = vpop.f32.mrb[0].mxu0
        %v5855 = vadd.f32 %v5655, %v5854
        %v5856 = vpop.f32.mrb[0].mxu0
        %5857 = vmatprep.mubr.bf16.mxu0 0
        %5858 = vmatmul.mubr.bf16.gmra.mrb[0].mxu0 %v5703
        %v5859 = vpop.f32.mrb[0].mxu0
        %v5860 = vadd.f32 %v5655, %v5859
        %v5861 = vpop.f32.mrb[0].mxu0
        %v5862 = vpop.f32.mrb[0].mxu0
        %v5863 = vadd.f32 %v5655, %v5862
        %v5864 = vpop.f32.mrb[0].mxu0
        %5865 = vdwg.mxu0
        %5898 = vrot.lane.b32.xlu0 %v5740, 96
        %v5899 = vpop.permute.xlu0 %5898
        %5900 = vrot.lane.b32.xlu0 %v5743, 96
        %v5901 = vpop.permute.xlu0 %5900
        %5902 = vrot.lane.b32.xlu0 %v5748, 96
        %v5903 = vpop.permute.xlu0 %5902
        %5904 = vrot.lane.b32.xlu0 %v5751, 96
        %v5905 = vpop.permute.xlu0 %5904
        %5906 = vrot.lane.b32.xlu0 %v5756, 96
        %v5907 = vpop.permute.xlu0 %5906
        %5908 = vrot.lane.b32.xlu0 %v5759, 96
        %v5909 = vpop.permute.xlu0 %5908
        %5910 = vrot.lane.b32.xlu0 %v5764, 96
        %v5911 = vpop.permute.xlu0 %5910
        %5912 = vrot.lane.b32.xlu0 %v5767, 96
        %v5913 = vpop.permute.xlu0 %5912
        %5914 = vrot.lane.b32.xlu0 %v5772, 96
        %v5915 = vpop.permute.xlu0 %5914
        %5916 = vrot.lane.b32.xlu0 %v5775, 96
        %v5917 = vpop.permute.xlu0 %5916
        %5918 = vrot.lane.b32.xlu0 %v5780, 96
        %v5919 = vpop.permute.xlu0 %5918
        %5920 = vrot.lane.b32.xlu0 %v5783, 96
        %v5921 = vpop.permute.xlu0 %5920
        %5922 = vrot.lane.b32.xlu0 %v5788, 96
        %v5923 = vpop.permute.xlu0 %5922
        %5924 = vrot.lane.b32.xlu0 %v5791, 96
        %v5925 = vpop.permute.xlu0 %5924
        %5926 = vrot.lane.b32.xlu0 %v5796, 96
        %v5927 = vpop.permute.xlu0 %5926
        %5928 = vrot.lane.b32.xlu0 %v5799, 96
        %v5929 = vpop.permute.xlu0 %5928
        %5930 = vrot.lane.b32.xlu0 %v5804, 96
        %v5931 = vpop.permute.xlu0 %5930
        %5932 = vrot.lane.b32.xlu0 %v5807, 96
        %v5933 = vpop.permute.xlu0 %5932
        %5934 = vrot.lane.b32.xlu0 %v5812, 96
        %v5935 = vpop.permute.xlu0 %5934
        %5936 = vrot.lane.b32.xlu0 %v5815, 96
        %v5937 = vpop.permute.xlu0 %5936
        %5938 = vrot.lane.b32.xlu0 %v5820, 96
        %v5939 = vpop.permute.xlu0 %5938
        %5940 = vrot.lane.b32.xlu0 %v5823, 96
        %v5941 = vpop.permute.xlu0 %5940
        %5942 = vrot.lane.b32.xlu0 %v5828, 96
        %v5943 = vpop.permute.xlu0 %5942
        %5944 = vrot.lane.b32.xlu0 %v5831, 96
        %v5945 = vpop.permute.xlu0 %5944
        %5946 = vrot.lane.b32.xlu0 %v5836, 96
        %v5947 = vpop.permute.xlu0 %5946
        %5948 = vrot.lane.b32.xlu0 %v5839, 96
        %v5949 = vpop.permute.xlu0 %5948
        %5950 = vrot.lane.b32.xlu0 %v5844, 96
        %v5951 = vpop.permute.xlu0 %5950
        %5952 = vrot.lane.b32.xlu0 %v5847, 96
        %v5953 = vpop.permute.xlu0 %5952
        %5954 = vrot.lane.b32.xlu0 %v5852, 96
        %v5955 = vpop.permute.xlu0 %5954
        %5956 = vrot.lane.b32.xlu0 %v5855, 96
        %v5957 = vpop.permute.xlu0 %5956
        %5958 = vrot.lane.b32.xlu0 %v5860, 96
        %v5959 = vpop.permute.xlu0 %5958
        %5960 = vrot.lane.b32.xlu0 %v5863, 96
        %v5961 = vpop.permute.xlu0 %5960
        %v5994 = vpack.c.bf16 %v5743, %v5740
        %v5995 = vpack.c.bf16 %v5751, %v5748
        %v5996 = vpack.c.bf16 %v5759, %v5756
        %v5997 = vpack.c.bf16 %v5767, %v5764
        %v5998 = vpack.c.bf16 %v5775, %v5772
        %v5999 = vpack.c.bf16 %v5783, %v5780
        %v6000 = vpack.c.bf16 %v5791, %v5788
        %v6001 = vpack.c.bf16 %v5799, %v5796
        %v6002 = vpack.c.bf16 %v5807, %v5804
        %v6003 = vpack.c.bf16 %v5815, %v5812
        %v6004 = vpack.c.bf16 %v5823, %v5820
        %v6005 = vpack.c.bf16 %v5831, %v5828
        %v6006 = vpack.c.bf16 %v5839, %v5836
        %v6007 = vpack.c.bf16 %v5847, %v5844
        %v6008 = vpack.c.bf16 %v5855, %v5852
        %v6009 = vpack.c.bf16 %v5863, %v5860
        %v6010 = vpack.c.bf16 %v5901, %v5899
        %v6011 = vpack.c.bf16 %v5905, %v5903
        %v6012 = vpack.c.bf16 %v5909, %v5907
        %v6013 = vpack.c.bf16 %v5913, %v5911
        %v6014 = vpack.c.bf16 %v5917, %v5915
        %v6015 = vpack.c.bf16 %v5921, %v5919
        %v6016 = vpack.c.bf16 %v5925, %v5923
        %v6017 = vpack.c.bf16 %v5929, %v5927
        %v6018 = vpack.c.bf16 %v5933, %v5931
        %v6019 = vpack.c.bf16 %v5937, %v5935
        %v6020 = vpack.c.bf16 %v5941, %v5939
        %v6021 = vpack.c.bf16 %v5945, %v5943
        %v6022 = vpack.c.bf16 %v5949, %v5947
        %v6023 = vpack.c.bf16 %v5953, %v5951
        %v6024 = vpack.c.bf16 %v5957, %v5955
        %v6025 = vpack.c.bf16 %v5961, %v5959
        %v6090 = vunpack.c.l.b16 %v5565
        %v6091 = vunpack.c.h.b16 %v5565
        %v6092 = vunpack.c.l.b16 %v5566
        %v6093 = vunpack.c.h.b16 %v5566
        %v6094 = vunpack.c.l.b16 %v5567
        %v6095 = vunpack.c.h.b16 %v5567
        %v6096 = vunpack.c.l.b16 %v5568
        %v6097 = vunpack.c.h.b16 %v5568
        %v6098 = vunpack.c.l.b16 %v5569
        %v6099 = vunpack.c.h.b16 %v5569
        %v6100 = vunpack.c.l.b16 %v5570
        %v6101 = vunpack.c.h.b16 %v5570
        %v6102 = vunpack.c.l.b16 %v5571
        %v6103 = vunpack.c.h.b16 %v5571
        %v6104 = vunpack.c.l.b16 %v5572
        %v6105 = vunpack.c.h.b16 %v5572
        %v6106 = vunpack.c.l.b16 %v5573
        %v6107 = vunpack.c.h.b16 %v5573
        %v6108 = vunpack.c.l.b16 %v5574
        %v6109 = vunpack.c.h.b16 %v5574
        %v6110 = vunpack.c.l.b16 %v5575
        %v6111 = vunpack.c.h.b16 %v5575
        %v6112 = vunpack.c.l.b16 %v5576
        %v6113 = vunpack.c.h.b16 %v5576
        %v6114 = vunpack.c.l.b16 %v5577
        %v6115 = vunpack.c.h.b16 %v5577
        %v6116 = vunpack.c.l.b16 %v5578
        %v6117 = vunpack.c.h.b16 %v5578
        %v6118 = vunpack.c.l.b16 %v5579
        %v6119 = vunpack.c.h.b16 %v5579
        %v6120 = vunpack.c.l.b16 %v5580
        %v6121 = vunpack.c.h.b16 %v5580
        %v6122 = vunpack.c.l.b16 %v5581
        %v6123 = vunpack.c.h.b16 %v5581
        %v6124 = vunpack.c.l.b16 %v5582
        %v6125 = vunpack.c.h.b16 %v5582
        %v6126 = vunpack.c.l.b16 %v5583
        %v6127 = vunpack.c.h.b16 %v5583
        %v6128 = vunpack.c.l.b16 %v5584
        %v6129 = vunpack.c.h.b16 %v5584
        %v6130 = vunpack.c.l.b16 %v5585
        %v6131 = vunpack.c.h.b16 %v5585
        %v6132 = vunpack.c.l.b16 %v5586
        %v6133 = vunpack.c.h.b16 %v5586
        %v6134 = vunpack.c.l.b16 %v5587
        %v6135 = vunpack.c.h.b16 %v5587
        %v6136 = vunpack.c.l.b16 %v5588
        %v6137 = vunpack.c.h.b16 %v5588
        %v6138 = vunpack.c.l.b16 %v5589
        %v6139 = vunpack.c.h.b16 %v5589
        %v6140 = vunpack.c.l.b16 %v5590
        %v6141 = vunpack.c.h.b16 %v5590
        %v6142 = vunpack.c.l.b16 %v5591
        %v6143 = vunpack.c.h.b16 %v5591
        %v6144 = vunpack.c.l.b16 %v5592
        %v6145 = vunpack.c.h.b16 %v5592
        %v6146 = vunpack.c.l.b16 %v5593
        %v6147 = vunpack.c.h.b16 %v5593
        %v6148 = vunpack.c.l.b16 %v5594
        %v6149 = vunpack.c.h.b16 %v5594
        %v6150 = vunpack.c.l.b16 %v5595
        %v6151 = vunpack.c.h.b16 %v5595
        %v6152 = vunpack.c.l.b16 %v5596
        %v6153 = vunpack.c.h.b16 %v5596
        %v6154 = vunpack.c.l.b16 %v5597
        %v6155 = vunpack.c.h.b16 %v5597
        %v6156 = vunpack.c.l.b16 %v5598
        %v6157 = vunpack.c.h.b16 %v5598
        %v6158 = vunpack.c.l.b16 %v5599
        %v6159 = vunpack.c.h.b16 %v5599
        %v6160 = vunpack.c.l.b16 %v5600
        %v6161 = vunpack.c.h.b16 %v5600
        %v6162 = vunpack.c.l.b16 %v5601
        %v6163 = vunpack.c.h.b16 %v5601
        %v6164 = vunpack.c.l.b16 %v5602
        %v6165 = vunpack.c.h.b16 %v5602
        %v6166 = vunpack.c.l.b16 %v5603
        %v6167 = vunpack.c.h.b16 %v5603
        %v6168 = vunpack.c.l.b16 %v5604
        %v6169 = vunpack.c.h.b16 %v5604
        %v6170 = vunpack.c.l.b16 %v5605
        %v6171 = vunpack.c.h.b16 %v5605
        %v6172 = vunpack.c.l.b16 %v5606
        %v6173 = vunpack.c.h.b16 %v5606
        %v6174 = vunpack.c.l.b16 %v5607
        %v6175 = vunpack.c.h.b16 %v5607
        %v6176 = vunpack.c.l.b16 %v5608
        %v6177 = vunpack.c.h.b16 %v5608
        %v6178 = vunpack.c.l.b16 %v5609
        %v6179 = vunpack.c.h.b16 %v5609
        %v6180 = vunpack.c.l.b16 %v5610
        %v6181 = vunpack.c.h.b16 %v5610
        %v6182 = vunpack.c.l.b16 %v5611
        %v6183 = vunpack.c.h.b16 %v5611
        %v6184 = vunpack.c.l.b16 %v5612
        %v6185 = vunpack.c.h.b16 %v5612
        %v6186 = vunpack.c.l.b16 %v5613
        %v6187 = vunpack.c.h.b16 %v5613
        %v6188 = vunpack.c.l.b16 %v5614
        %v6189 = vunpack.c.h.b16 %v5614
        %v6190 = vunpack.c.l.b16 %v5615
        %v6191 = vunpack.c.h.b16 %v5615
        %v6192 = vunpack.c.l.b16 %v5616
        %v6193 = vunpack.c.h.b16 %v5616
        %v6194 = vunpack.c.l.b16 %v5617
        %v6195 = vunpack.c.h.b16 %v5617
        %v6196 = vunpack.c.l.b16 %v5618
        %v6197 = vunpack.c.h.b16 %v5618
        %v6198 = vunpack.c.l.b16 %v5619
        %v6199 = vunpack.c.h.b16 %v5619
        %v6200 = vunpack.c.l.b16 %v5620
        %v6201 = vunpack.c.h.b16 %v5620
        %v6202 = vunpack.c.l.b16 %v5621
        %v6203 = vunpack.c.h.b16 %v5621
        %v6204 = vunpack.c.l.b16 %v5622
        %v6205 = vunpack.c.h.b16 %v5622
        %v6206 = vunpack.c.l.b16 %v5623
        %v6207 = vunpack.c.h.b16 %v5623
        %v6208 = vunpack.c.l.b16 %v5624
        %v6209 = vunpack.c.h.b16 %v5624
        %v6210 = vunpack.c.l.b16 %v5625
        %v6211 = vunpack.c.h.b16 %v5625
        %v6212 = vunpack.c.l.b16 %v5626
        %v6213 = vunpack.c.h.b16 %v5626
        %v6214 = vunpack.c.l.b16 %v5627
        %v6215 = vunpack.c.h.b16 %v5627
        %v6216 = vunpack.c.l.b16 %v5628
        %v6217 = vunpack.c.h.b16 %v5628
        %v6218 = vpack.c.b16 %v6094, %v6090
        %v6219 = vpack.c.b16 %v6095, %v6091
        %v6220 = vpack.c.b16 %v6096, %v6092
        %v6221 = vpack.c.b16 %v6097, %v6093
        %v6222 = vpack.c.b16 %v6102, %v6098
        %v6223 = vpack.c.b16 %v6103, %v6099
        %v6224 = vpack.c.b16 %v6104, %v6100
        %v6225 = vpack.c.b16 %v6105, %v6101
        %v6226 = vpack.c.b16 %v6110, %v6106
        %v6227 = vpack.c.b16 %v6111, %v6107
        %v6228 = vpack.c.b16 %v6112, %v6108
        %v6229 = vpack.c.b16 %v6113, %v6109
        %v6230 = vpack.c.b16 %v6118, %v6114
        %v6231 = vpack.c.b16 %v6119, %v6115
        %v6232 = vpack.c.b16 %v6120, %v6116
        %v6233 = vpack.c.b16 %v6121, %v6117
        %v6234 = vpack.c.b16 %v6126, %v6122
        %v6235 = vpack.c.b16 %v6127, %v6123
        %v6236 = vpack.c.b16 %v6128, %v6124
        %v6237 = vpack.c.b16 %v6129, %v6125
        %v6238 = vpack.c.b16 %v6134, %v6130
        %v6239 = vpack.c.b16 %v6135, %v6131
        %v6240 = vpack.c.b16 %v6136, %v6132
        %v6241 = vpack.c.b16 %v6137, %v6133
        %v6242 = vpack.c.b16 %v6142, %v6138
        %v6243 = vpack.c.b16 %v6143, %v6139
        %v6244 = vpack.c.b16 %v6144, %v6140
        %v6245 = vpack.c.b16 %v6145, %v6141
        %v6246 = vpack.c.b16 %v6150, %v6146
        %v6247 = vpack.c.b16 %v6151, %v6147
        %v6248 = vpack.c.b16 %v6152, %v6148
        %v6249 = vpack.c.b16 %v6153, %v6149
        %v6250 = vpack.c.b16 %v6158, %v6154
        %v6251 = vpack.c.b16 %v6159, %v6155
        %v6252 = vpack.c.b16 %v6160, %v6156
        %v6253 = vpack.c.b16 %v6161, %v6157
        %v6254 = vpack.c.b16 %v6166, %v6162
        %v6255 = vpack.c.b16 %v6167, %v6163
        %v6256 = vpack.c.b16 %v6168, %v6164
        %v6257 = vpack.c.b16 %v6169, %v6165
        %v6258 = vpack.c.b16 %v6174, %v6170
        %v6259 = vpack.c.b16 %v6175, %v6171
        %v6260 = vpack.c.b16 %v6176, %v6172
        %v6261 = vpack.c.b16 %v6177, %v6173
        %v6262 = vpack.c.b16 %v6182, %v6178
        %v6263 = vpack.c.b16 %v6183, %v6179
        %v6264 = vpack.c.b16 %v6184, %v6180
        %v6265 = vpack.c.b16 %v6185, %v6181
        %v6266 = vpack.c.b16 %v6190, %v6186
        %v6267 = vpack.c.b16 %v6191, %v6187
        %v6268 = vpack.c.b16 %v6192, %v6188
        %v6269 = vpack.c.b16 %v6193, %v6189
        %v6270 = vpack.c.b16 %v6198, %v6194
        %v6271 = vpack.c.b16 %v6199, %v6195
        %v6272 = vpack.c.b16 %v6200, %v6196
        %v6273 = vpack.c.b16 %v6201, %v6197
        %v6274 = vpack.c.b16 %v6206, %v6202
        %v6275 = vpack.c.b16 %v6207, %v6203
        %v6276 = vpack.c.b16 %v6208, %v6204
        %v6277 = vpack.c.b16 %v6209, %v6205
        %v6278 = vpack.c.b16 %v6214, %v6210
        %v6279 = vpack.c.b16 %v6215, %v6211
        %v6280 = vpack.c.b16 %v6216, %v6212
        %v6281 = vpack.c.b16 %v6217, %v6213
        %6346 = vmatprep.subr.bf16.mxu0 0
        %6347 = vmatpush1.bf16.msra.mxu0 %v5994
        %6348 = vmatprep.subr.bf16.mxu0 0
        %6349 = vmatpush1.bf16.msra.mxu0 %v5995
        %6350 = vmatprep.subr.bf16.mxu0 0
        %6351 = vmatpush1.bf16.msra.mxu0 %v5996
        %6352 = vmatprep.subr.bf16.mxu0 0
        %6353 = vmatpush1.bf16.msra.mxu0 %v5997
        %6354 = vmatprep.subr.bf16.mxu0 0
        %6355 = vmatpush1.bf16.msra.mxu0 %v5998
        %6356 = vmatprep.subr.bf16.mxu0 0
        %6357 = vmatpush1.bf16.msra.mxu0 %v5999
        %6358 = vmatprep.subr.bf16.mxu0 0
        %6359 = vmatpush1.bf16.msra.mxu0 %v6000
        %6360 = vmatprep.subr.bf16.mxu0 0
        %6361 = vmatpush1.bf16.msra.mxu0 %v6001
        %6362 = vmatprep.subr.bf16.mxu0 0
        %6363 = vmatpush1.bf16.msra.mxu0 %v6002
        %6364 = vmatprep.subr.bf16.mxu0 0
        %6365 = vmatpush1.bf16.msra.mxu0 %v6003
        %6366 = vmatprep.subr.bf16.mxu0 0
        %6367 = vmatpush1.bf16.msra.mxu0 %v6004
        %6368 = vmatprep.subr.bf16.mxu0 0
        %6369 = vmatpush1.bf16.msra.mxu0 %v6005
        %6370 = vmatprep.subr.bf16.mxu0 0
        %6371 = vmatpush1.bf16.msra.mxu0 %v6006
        %6372 = vmatprep.subr.bf16.mxu0 0
        %6373 = vmatpush1.bf16.msra.mxu0 %v6007
        %6374 = vmatprep.subr.bf16.mxu0 0
        %6375 = vmatpush1.bf16.msra.mxu0 %v6008
        %6376 = vmatprep.subr.bf16.mxu0 0
        %6377 = vmatpush1.bf16.msra.mxu0 %v6009
        %6378 = vmatprep.mubr.bf16.mxu0 %v6219
        %6379 = vmatmul.mubr.bf16.gmra.mrb[0].mxu0 %v6218
        %v6380 = vpop.f32.mrb[0].mxu0
        %v6381 = vadd.f32 0.0, %v6380
        %v6382 = vpop.f32.mrb[0].mxu0
        %v6383 = vpop.f32.mrb[0].mxu0
        %v6384 = vadd.f32 0.0, %v6383
        %v6385 = vpop.f32.mrb[0].mxu0
        %6386 = vmatprep.mubr.bf16.mxu0 %v6223
        %6387 = vmatmul.mubr.bf16.gmra.mrb[0].mxu0 %v6222
        %v6388 = vpop.f32.mrb[0].mxu0
        %v6389 = vadd.f32 0.0, %v6388
        %v6390 = vpop.f32.mrb[0].mxu0
        %v6391 = vpop.f32.mrb[0].mxu0
        %v6392 = vadd.f32 0.0, %v6391
        %v6393 = vpop.f32.mrb[0].mxu0
        %6394 = vmatprep.mubr.bf16.mxu0 %v6227
        %6395 = vmatmul.mubr.bf16.gmra.mrb[0].mxu0 %v6226
        %v6396 = vpop.f32.mrb[0].mxu0
        %v6397 = vadd.f32 0.0, %v6396
        %v6398 = vpop.f32.mrb[0].mxu0
        %v6399 = vpop.f32.mrb[0].mxu0
        %v6400 = vadd.f32 0.0, %v6399
        %v6401 = vpop.f32.mrb[0].mxu0
        %6402 = vmatprep.mubr.bf16.mxu0 %v6231
        %6403 = vmatmul.mubr.bf16.gmra.mrb[0].mxu0 %v6230
        %v6404 = vpop.f32.mrb[0].mxu0
        %v6405 = vadd.f32 0.0, %v6404
        %v6406 = vpop.f32.mrb[0].mxu0
        %v6407 = vpop.f32.mrb[0].mxu0
        %v6408 = vadd.f32 0.0, %v6407
        %v6409 = vpop.f32.mrb[0].mxu0
        %6410 = vmatprep.mubr.bf16.mxu0 %v6235
        %6411 = vmatmul.mubr.bf16.gmra.mrb[0].mxu0 %v6234
        %v6412 = vpop.f32.mrb[0].mxu0
        %v6413 = vadd.f32 0.0, %v6412
        %v6414 = vpop.f32.mrb[0].mxu0
        %v6415 = vpop.f32.mrb[0].mxu0
        %v6416 = vadd.f32 0.0, %v6415
        %v6417 = vpop.f32.mrb[0].mxu0
        %6418 = vmatprep.mubr.bf16.mxu0 %v6239
        %6419 = vmatmul.mubr.bf16.gmra.mrb[0].mxu0 %v6238
        %v6420 = vpop.f32.mrb[0].mxu0
        %v6421 = vadd.f32 0.0, %v6420
        %v6422 = vpop.f32.mrb[0].mxu0
        %v6423 = vpop.f32.mrb[0].mxu0
        %v6424 = vadd.f32 0.0, %v6423
        %v6425 = vpop.f32.mrb[0].mxu0
        %6426 = vmatprep.mubr.bf16.mxu0 %v6243
        %6427 = vmatmul.mubr.bf16.gmra.mrb[0].mxu0 %v6242
        %v6428 = vpop.f32.mrb[0].mxu0
        %v6429 = vadd.f32 0.0, %v6428
        %v6430 = vpop.f32.mrb[0].mxu0
        %v6431 = vpop.f32.mrb[0].mxu0
        %v6432 = vadd.f32 0.0, %v6431
        %v6433 = vpop.f32.mrb[0].mxu0
        %6434 = vmatprep.mubr.bf16.mxu0 %v6247
        %6435 = vmatmul.mubr.bf16.gmra.mrb[0].mxu0 %v6246
        %v6436 = vpop.f32.mrb[0].mxu0
        %v6437 = vadd.f32 0.0, %v6436
        %v6438 = vpop.f32.mrb[0].mxu0
        %v6439 = vpop.f32.mrb[0].mxu0
        %v6440 = vadd.f32 0.0, %v6439
        %v6441 = vpop.f32.mrb[0].mxu0
        %6442 = vmatprep.mubr.bf16.mxu0 %v6251
        %6443 = vmatmul.mubr.bf16.gmra.mrb[0].mxu0 %v6250
        %v6444 = vpop.f32.mrb[0].mxu0
        %v6445 = vadd.f32 0.0, %v6444
        %v6446 = vpop.f32.mrb[0].mxu0
        %v6447 = vpop.f32.mrb[0].mxu0
        %v6448 = vadd.f32 0.0, %v6447
        %v6449 = vpop.f32.mrb[0].mxu0
        %6450 = vmatprep.mubr.bf16.mxu0 %v6255
        %6451 = vmatmul.mubr.bf16.gmra.mrb[0].mxu0 %v6254
        %v6452 = vpop.f32.mrb[0].mxu0
        %v6453 = vadd.f32 0.0, %v6452
        %v6454 = vpop.f32.mrb[0].mxu0
        %v6455 = vpop.f32.mrb[0].mxu0
        %v6456 = vadd.f32 0.0, %v6455
        %v6457 = vpop.f32.mrb[0].mxu0
        %6458 = vmatprep.mubr.bf16.mxu0 %v6259
        %6459 = vmatmul.mubr.bf16.gmra.mrb[0].mxu0 %v6258
        %v6460 = vpop.f32.mrb[0].mxu0
        %v6461 = vadd.f32 0.0, %v6460
        %v6462 = vpop.f32.mrb[0].mxu0
        %v6463 = vpop.f32.mrb[0].mxu0
        %v6464 = vadd.f32 0.0, %v6463
        %v6465 = vpop.f32.mrb[0].mxu0
        %6466 = vmatprep.mubr.bf16.mxu0 %v6263
        %6467 = vmatmul.mubr.bf16.gmra.mrb[0].mxu0 %v6262
        %v6468 = vpop.f32.mrb[0].mxu0
        %v6469 = vadd.f32 0.0, %v6468
        %v6470 = vpop.f32.mrb[0].mxu0
        %v6471 = vpop.f32.mrb[0].mxu0
        %v6472 = vadd.f32 0.0, %v6471
        %v6473 = vpop.f32.mrb[0].mxu0
        %6474 = vmatprep.mubr.bf16.mxu0 %v6267
        %6475 = vmatmul.mubr.bf16.gmra.mrb[0].mxu0 %v6266
        %v6476 = vpop.f32.mrb[0].mxu0
        %v6477 = vadd.f32 0.0, %v6476
        %v6478 = vpop.f32.mrb[0].mxu0
        %v6479 = vpop.f32.mrb[0].mxu0
        %v6480 = vadd.f32 0.0, %v6479
        %v6481 = vpop.f32.mrb[0].mxu0
        %6482 = vmatprep.mubr.bf16.mxu0 %v6271
        %6483 = vmatmul.mubr.bf16.gmra.mrb[0].mxu0 %v6270
        %v6484 = vpop.f32.mrb[0].mxu0
        %v6485 = vadd.f32 0.0, %v6484
        %v6486 = vpop.f32.mrb[0].mxu0
        %v6487 = vpop.f32.mrb[0].mxu0
        %v6488 = vadd.f32 0.0, %v6487
        %v6489 = vpop.f32.mrb[0].mxu0
        %6490 = vmatprep.mubr.bf16.mxu0 %v6275
        %6491 = vmatmul.mubr.bf16.gmra.mrb[0].mxu0 %v6274
        %v6492 = vpop.f32.mrb[0].mxu0
        %v6493 = vadd.f32 0.0, %v6492
        %v6494 = vpop.f32.mrb[0].mxu0
        %v6495 = vpop.f32.mrb[0].mxu0
        %v6496 = vadd.f32 0.0, %v6495
        %v6497 = vpop.f32.mrb[0].mxu0
        %6498 = vmatprep.mubr.bf16.mxu0 %v6279
        %6499 = vmatmul.mubr.bf16.gmra.mrb[0].mxu0 %v6278
        %v6500 = vpop.f32.mrb[0].mxu0
        %v6501 = vadd.f32 0.0, %v6500
        %v6502 = vpop.f32.mrb[0].mxu0
        %v6503 = vpop.f32.mrb[0].mxu0
        %v6504 = vadd.f32 0.0, %v6503
        %v6505 = vpop.f32.mrb[0].mxu0
        %6506 = vdwg.mxu0
        %6507 = vmatprep.subr.bf16.mxu0 0
        %6508 = vmatpush1.bf16.msra.mxu0 %v6010
        %6509 = vmatprep.subr.bf16.mxu0 0
        %6510 = vmatpush1.bf16.msra.mxu0 %v6011
        %6511 = vmatprep.subr.bf16.mxu0 0
        %6512 = vmatpush1.bf16.msra.mxu0 %v6012
        %6513 = vmatprep.subr.bf16.mxu0 0
        %6514 = vmatpush1.bf16.msra.mxu0 %v6013
        %6515 = vmatprep.subr.bf16.mxu0 0
        %6516 = vmatpush1.bf16.msra.mxu0 %v6014
        %6517 = vmatprep.subr.bf16.mxu0 0
        %6518 = vmatpush1.bf16.msra.mxu0 %v6015
        %6519 = vmatprep.subr.bf16.mxu0 0
        %6520 = vmatpush1.bf16.msra.mxu0 %v6016
        %6521 = vmatprep.subr.bf16.mxu0 0
        %6522 = vmatpush1.bf16.msra.mxu0 %v6017
        %6523 = vmatprep.subr.bf16.mxu0 0
        %6524 = vmatpush1.bf16.msra.mxu0 %v6018
        %6525 = vmatprep.subr.bf16.mxu0 0
        %6526 = vmatpush1.bf16.msra.mxu0 %v6019
        %6527 = vmatprep.subr.bf16.mxu0 0
        %6528 = vmatpush1.bf16.msra.mxu0 %v6020
        %6529 = vmatprep.subr.bf16.mxu0 0
        %6530 = vmatpush1.bf16.msra.mxu0 %v6021
        %6531 = vmatprep.subr.bf16.mxu0 0
        %6532 = vmatpush1.bf16.msra.mxu0 %v6022
        %6533 = vmatprep.subr.bf16.mxu0 0
        %6534 = vmatpush1.bf16.msra.mxu0 %v6023
        %6535 = vmatprep.subr.bf16.mxu0 0
        %6536 = vmatpush1.bf16.msra.mxu0 %v6024
        %6537 = vmatprep.subr.bf16.mxu0 0
        %6538 = vmatpush1.bf16.msra.mxu0 %v6025
        %6539 = vmatprep.mubr.bf16.mxu0 %v6221
        %6540 = vmatmul.mubr.bf16.gmra.mrb[0].mxu0 %v6220
        %v6541 = vpop.f32.mrb[0].mxu0
        %v6542 = vadd.f32 %v6381, %v6541
        %v6543 = vpop.f32.mrb[0].mxu0
        %v6544 = vpop.f32.mrb[0].mxu0
        %v6545 = vadd.f32 %v6384, %v6544
        %v6546 = vpop.f32.mrb[0].mxu0
        %6547 = vmatprep.mubr.bf16.mxu0 %v6225
        %6548 = vmatmul.mubr.bf16.gmra.mrb[0].mxu0 %v6224
        %v6549 = vpop.f32.mrb[0].mxu0
        %v6550 = vadd.f32 %v6389, %v6549
        %v6551 = vpop.f32.mrb[0].mxu0
        %v6552 = vpop.f32.mrb[0].mxu0
        %v6553 = vadd.f32 %v6392, %v6552
        %v6554 = vpop.f32.mrb[0].mxu0
        %6555 = vmatprep.mubr.bf16.mxu0 %v6229
        %6556 = vmatmul.mubr.bf16.gmra.mrb[0].mxu0 %v6228
        %v6557 = vpop.f32.mrb[0].mxu0
        %v6558 = vadd.f32 %v6397, %v6557
        %v6559 = vpop.f32.mrb[0].mxu0
        %v6560 = vpop.f32.mrb[0].mxu0
        %v6561 = vadd.f32 %v6400, %v6560
        %v6562 = vpop.f32.mrb[0].mxu0
        %6563 = vmatprep.mubr.bf16.mxu0 %v6233
        %6564 = vmatmul.mubr.bf16.gmra.mrb[0].mxu0 %v6232
        %v6565 = vpop.f32.mrb[0].mxu0
        %v6566 = vadd.f32 %v6405, %v6565
        %v6567 = vpop.f32.mrb[0].mxu0
        %v6568 = vpop.f32.mrb[0].mxu0
        %v6569 = vadd.f32 %v6408, %v6568
        %v6570 = vpop.f32.mrb[0].mxu0
        %6571 = vmatprep.mubr.bf16.mxu0 %v6237
        %6572 = vmatmul.mubr.bf16.gmra.mrb[0].mxu0 %v6236
        %v6573 = vpop.f32.mrb[0].mxu0
        %v6574 = vadd.f32 %v6413, %v6573
        %v6575 = vpop.f32.mrb[0].mxu0
        %v6576 = vpop.f32.mrb[0].mxu0
        %v6577 = vadd.f32 %v6416, %v6576
        %v6578 = vpop.f32.mrb[0].mxu0
        %6579 = vmatprep.mubr.bf16.mxu0 %v6241
        %6580 = vmatmul.mubr.bf16.gmra.mrb[0].mxu0 %v6240
        %v6581 = vpop.f32.mrb[0].mxu0
        %v6582 = vadd.f32 %v6421, %v6581
        %v6583 = vpop.f32.mrb[0].mxu0
        %v6584 = vpop.f32.mrb[0].mxu0
        %v6585 = vadd.f32 %v6424, %v6584
        %v6586 = vpop.f32.mrb[0].mxu0
        %6587 = vmatprep.mubr.bf16.mxu0 %v6245
        %6588 = vmatmul.mubr.bf16.gmra.mrb[0].mxu0 %v6244
        %v6589 = vpop.f32.mrb[0].mxu0
        %v6590 = vadd.f32 %v6429, %v6589
        %v6591 = vpop.f32.mrb[0].mxu0
        %v6592 = vpop.f32.mrb[0].mxu0
        %v6593 = vadd.f32 %v6432, %v6592
        %v6594 = vpop.f32.mrb[0].mxu0
        %6595 = vmatprep.mubr.bf16.mxu0 %v6249
        %6596 = vmatmul.mubr.bf16.gmra.mrb[0].mxu0 %v6248
        %v6597 = vpop.f32.mrb[0].mxu0
        %v6598 = vadd.f32 %v6437, %v6597
        %v6599 = vpop.f32.mrb[0].mxu0
        %v6600 = vpop.f32.mrb[0].mxu0
        %v6601 = vadd.f32 %v6440, %v6600
        %v6602 = vpop.f32.mrb[0].mxu0
        %6603 = vmatprep.mubr.bf16.mxu0 %v6253
        %6604 = vmatmul.mubr.bf16.gmra.mrb[0].mxu0 %v6252
        %v6605 = vpop.f32.mrb[0].mxu0
        %v6606 = vadd.f32 %v6445, %v6605
        %v6607 = vpop.f32.mrb[0].mxu0
        %v6608 = vpop.f32.mrb[0].mxu0
        %v6609 = vadd.f32 %v6448, %v6608
        %v6610 = vpop.f32.mrb[0].mxu0
        %6611 = vmatprep.mubr.bf16.mxu0 %v6257
        %6612 = vmatmul.mubr.bf16.gmra.mrb[0].mxu0 %v6256
        %v6613 = vpop.f32.mrb[0].mxu0
        %v6614 = vadd.f32 %v6453, %v6613
        %v6615 = vpop.f32.mrb[0].mxu0
        %v6616 = vpop.f32.mrb[0].mxu0
        %v6617 = vadd.f32 %v6456, %v6616
        %v6618 = vpop.f32.mrb[0].mxu0
        %6619 = vmatprep.mubr.bf16.mxu0 %v6261
        %6620 = vmatmul.mubr.bf16.gmra.mrb[0].mxu0 %v6260
        %v6621 = vpop.f32.mrb[0].mxu0
        %v6622 = vadd.f32 %v6461, %v6621
        %v6623 = vpop.f32.mrb[0].mxu0
        %v6624 = vpop.f32.mrb[0].mxu0
        %v6625 = vadd.f32 %v6464, %v6624
        %v6626 = vpop.f32.mrb[0].mxu0
        %6627 = vmatprep.mubr.bf16.mxu0 %v6265
        %6628 = vmatmul.mubr.bf16.gmra.mrb[0].mxu0 %v6264
        %v6629 = vpop.f32.mrb[0].mxu0
        %v6630 = vadd.f32 %v6469, %v6629
        %v6631 = vpop.f32.mrb[0].mxu0
        %v6632 = vpop.f32.mrb[0].mxu0
        %v6633 = vadd.f32 %v6472, %v6632
        %v6634 = vpop.f32.mrb[0].mxu0
        %6635 = vmatprep.mubr.bf16.mxu0 %v6269
        %6636 = vmatmul.mubr.bf16.gmra.mrb[0].mxu0 %v6268
        %v6637 = vpop.f32.mrb[0].mxu0
        %v6638 = vadd.f32 %v6477, %v6637
        %v6639 = vpop.f32.mrb[0].mxu0
        %v6640 = vpop.f32.mrb[0].mxu0
        %v6641 = vadd.f32 %v6480, %v6640
        %v6642 = vpop.f32.mrb[0].mxu0
        %6643 = vmatprep.mubr.bf16.mxu0 %v6273
        %6644 = vmatmul.mubr.bf16.gmra.mrb[0].mxu0 %v6272
        %v6645 = vpop.f32.mrb[0].mxu0
        %v6646 = vadd.f32 %v6485, %v6645
        %v6647 = vpop.f32.mrb[0].mxu0
        %v6648 = vpop.f32.mrb[0].mxu0
        %v6649 = vadd.f32 %v6488, %v6648
        %v6650 = vpop.f32.mrb[0].mxu0
        %6651 = vmatprep.mubr.bf16.mxu0 %v6277
        %6652 = vmatmul.mubr.bf16.gmra.mrb[0].mxu0 %v6276
        %v6653 = vpop.f32.mrb[0].mxu0
        %v6654 = vadd.f32 %v6493, %v6653
        %v6655 = vpop.f32.mrb[0].mxu0
        %v6656 = vpop.f32.mrb[0].mxu0
        %v6657 = vadd.f32 %v6496, %v6656
        %v6658 = vpop.f32.mrb[0].mxu0
        %6659 = vmatprep.mubr.bf16.mxu0 %v6281
        %6660 = vmatmul.mubr.bf16.gmra.mrb[0].mxu0 %v6280
        %v6661 = vpop.f32.mrb[0].mxu0
        %v6662 = vadd.f32 %v6501, %v6661
        %v6663 = vpop.f32.mrb[0].mxu0
        %v6664 = vpop.f32.mrb[0].mxu0
        %v6665 = vadd.f32 %v6504, %v6664
        %v6666 = vpop.f32.mrb[0].mxu0
        %6667 = vdwg.mxu0
        %v6668 = vld [vmem:[%s59] sm:$0xff]
        %v6669 = vld [vmem:[%s59 + $0x8] sm:$0xff]
        %v6670 = vld [vmem:[%s61] sm:$0x1]
        %v6671 = vpack.c.bf16 %v6669, %v6668
        %v6673 = vlaneseq
        %v6674 = vshrl.u32 %v6673, 7
        %v6675 = vsub.s32 0, %v6674
        %v6676 = vrot.slane %v6670, %v6675
        %6678 = vmatprep.subr.bf16.mxu0 0
        %6679 = vmatpush1.bf16.msra.mxu0 %v6671
        %6680 = vmatprep.subr.bf16.mxu0 0
        %6681 = vmatpush1.bf16.msra.mxu0 0
        %6682 = vmatprep.subr.bf16.mxu0 0
        %6683 = vmatpush1.bf16.msra.mxu0 0
        %6684 = vmatprep.subr.bf16.mxu0 0
        %6685 = vmatpush1.bf16.msra.mxu0 0
        %6686 = vmatprep.subr.bf16.mxu0 0
        %6687 = vmatpush1.bf16.msra.mxu0 0
        %6688 = vmatprep.subr.bf16.mxu0 0
        %6689 = vmatpush1.bf16.msra.mxu0 0
        %6690 = vmatprep.subr.bf16.mxu0 0
        %6691 = vmatpush1.bf16.msra.mxu0 0
        %6692 = vmatprep.subr.bf16.mxu0 0
        %6693 = vmatpush1.bf16.msra.mxu0 0
        %6694 = vmatprep.subr.bf16.mxu0 0
        %6695 = vmatpush1.bf16.msra.mxu0 0
        %6696 = vmatprep.subr.bf16.mxu0 0
        %6697 = vmatpush1.bf16.msra.mxu0 0
        %6698 = vmatprep.subr.bf16.mxu0 0
        %6699 = vmatpush1.bf16.msra.mxu0 0
        %6700 = vmatprep.subr.bf16.mxu0 0
        %6701 = vmatpush1.bf16.msra.mxu0 0
        %6702 = vmatprep.subr.bf16.mxu0 0
        %6703 = vmatpush1.bf16.msra.mxu0 0
        %6704 = vmatprep.subr.bf16.mxu0 0
        %6705 = vmatpush1.bf16.msra.mxu0 0
        %6706 = vmatprep.subr.bf16.mxu0 0
        %6707 = vmatpush1.bf16.msra.mxu0 0
        %6708 = vmatprep.subr.bf16.mxu0 0
        %6709 = vmatpush1.bf16.msra.mxu0 0
        %6710 = vmatprep.mubr.bf16.mxu0 0
        %6711 = vmatmul.mubr.bf16.gmra.mrb[0].mxu0 %v5658
        %v6712 = vpop.f32.mrb[0].mxu0
        %v6713 = vadd.f32 %v6676, %v6712
        %v6714 = vpop.f32.mrb[0].mxu0
        %v6715 = vpop.f32.mrb[0].mxu0
        %v6716 = vadd.f32 %v6676, %v6715
        %v6717 = vpop.f32.mrb[0].mxu0
        %6718 = vmatprep.mubr.bf16.mxu0 0
        %6719 = vmatmul.mubr.bf16.gmra.mrb[0].mxu0 %v5661
        %v6720 = vpop.f32.mrb[0].mxu0
        %v6721 = vadd.f32 %v6676, %v6720
        %v6722 = vpop.f32.mrb[0].mxu0
        %v6723 = vpop.f32.mrb[0].mxu0
        %v6724 = vadd.f32 %v6676, %v6723
        %v6725 = vpop.f32.mrb[0].mxu0
        %6726 = vmatprep.mubr.bf16.mxu0 0
        %6727 = vmatmul.mubr.bf16.gmra.mrb[0].mxu0 %v5664
        %v6728 = vpop.f32.mrb[0].mxu0
        %v6729 = vadd.f32 %v6676, %v6728
        %v6730 = vpop.f32.mrb[0].mxu0
        %v6731 = vpop.f32.mrb[0].mxu0
        %v6732 = vadd.f32 %v6676, %v6731
        %v6733 = vpop.f32.mrb[0].mxu0
        %6734 = vmatprep.mubr.bf16.mxu0 0
        %6735 = vmatmul.mubr.bf16.gmra.mrb[0].mxu0 %v5667
        %v6736 = vpop.f32.mrb[0].mxu0
        %v6737 = vadd.f32 %v6676, %v6736
        %v6738 = vpop.f32.mrb[0].mxu0
        %v6739 = vpop.f32.mrb[0].mxu0
        %v6740 = vadd.f32 %v6676, %v6739
        %v6741 = vpop.f32.mrb[0].mxu0
        %6742 = vmatprep.mubr.bf16.mxu0 0
        %6743 = vmatmul.mubr.bf16.gmra.mrb[0].mxu0 %v5670
        %v6744 = vpop.f32.mrb[0].mxu0
        %v6745 = vadd.f32 %v6676, %v6744
        %v6746 = vpop.f32.mrb[0].mxu0
        %v6747 = vpop.f32.mrb[0].mxu0
        %v6748 = vadd.f32 %v6676, %v6747
        %v6749 = vpop.f32.mrb[0].mxu0
        %6750 = vmatprep.mubr.bf16.mxu0 0
        %6751 = vmatmul.mubr.bf16.gmra.mrb[0].mxu0 %v5673
        %v6752 = vpop.f32.mrb[0].mxu0
        %v6753 = vadd.f32 %v6676, %v6752
        %v6754 = vpop.f32.mrb[0].mxu0
        %v6755 = vpop.f32.mrb[0].mxu0
        %v6756 = vadd.f32 %v6676, %v6755
        %v6757 = vpop.f32.mrb[0].mxu0
        %6758 = vmatprep.mubr.bf16.mxu0 0
        %6759 = vmatmul.mubr.bf16.gmra.mrb[0].mxu0 %v5676
        %v6760 = vpop.f32.mrb[0].mxu0
        %v6761 = vadd.f32 %v6676, %v6760
        %v6762 = vpop.f32.mrb[0].mxu0
        %v6763 = vpop.f32.mrb[0].mxu0
        %v6764 = vadd.f32 %v6676, %v6763
        %v6765 = vpop.f32.mrb[0].mxu0
        %6766 = vmatprep.mubr.bf16.mxu0 0
        %6767 = vmatmul.mubr.bf16.gmra.mrb[0].mxu0 %v5679
        %v6768 = vpop.f32.mrb[0].mxu0
        %v6769 = vadd.f32 %v6676, %v6768
        %v6770 = vpop.f32.mrb[0].mxu0
        %v6771 = vpop.f32.mrb[0].mxu0
        %v6772 = vadd.f32 %v6676, %v6771
        %v6773 = vpop.f32.mrb[0].mxu0
        %6774 = vmatprep.mubr.bf16.mxu0 0
        %6775 = vmatmul.mubr.bf16.gmra.mrb[0].mxu0 %v5682
        %v6776 = vpop.f32.mrb[0].mxu0
        %v6777 = vadd.f32 %v6676, %v6776
        %v6778 = vpop.f32.mrb[0].mxu0
        %v6779 = vpop.f32.mrb[0].mxu0
        %v6780 = vadd.f32 %v6676, %v6779
        %v6781 = vpop.f32.mrb[0].mxu0
        %6782 = vmatprep.mubr.bf16.mxu0 0
        %6783 = vmatmul.mubr.bf16.gmra.mrb[0].mxu0 %v5685
        %v6784 = vpop.f32.mrb[0].mxu0
        %v6785 = vadd.f32 %v6676, %v6784
        %v6786 = vpop.f32.mrb[0].mxu0
        %v6787 = vpop.f32.mrb[0].mxu0
        %v6788 = vadd.f32 %v6676, %v6787
        %v6789 = vpop.f32.mrb[0].mxu0
        %6790 = vmatprep.mubr.bf16.mxu0 0
        %6791 = vmatmul.mubr.bf16.gmra.mrb[0].mxu0 %v5688
        %v6792 = vpop.f32.mrb[0].mxu0
        %v6793 = vadd.f32 %v6676, %v6792
        %v6794 = vpop.f32.mrb[0].mxu0
        %v6795 = vpop.f32.mrb[0].mxu0
        %v6796 = vadd.f32 %v6676, %v6795
        %v6797 = vpop.f32.mrb[0].mxu0
        %6798 = vmatprep.mubr.bf16.mxu0 0
        %6799 = vmatmul.mubr.bf16.gmra.mrb[0].mxu0 %v5691
        %v6800 = vpop.f32.mrb[0].mxu0
        %v6801 = vadd.f32 %v6676, %v6800
        %v6802 = vpop.f32.mrb[0].mxu0
        %v6803 = vpop.f32.mrb[0].mxu0
        %v6804 = vadd.f32 %v6676, %v6803
        %v6805 = vpop.f32.mrb[0].mxu0
        %6806 = vmatprep.mubr.bf16.mxu0 0
        %6807 = vmatmul.mubr.bf16.gmra.mrb[0].mxu0 %v5694
        %v6808 = vpop.f32.mrb[0].mxu0
        %v6809 = vadd.f32 %v6676, %v6808
        %v6810 = vpop.f32.mrb[0].mxu0
        %v6811 = vpop.f32.mrb[0].mxu0
        %v6812 = vadd.f32 %v6676, %v6811
        %v6813 = vpop.f32.mrb[0].mxu0
        %6814 = vmatprep.mubr.bf16.mxu0 0
        %6815 = vmatmul.mubr.bf16.gmra.mrb[0].mxu0 %v5697
        %v6816 = vpop.f32.mrb[0].mxu0
        %v6817 = vadd.f32 %v6676, %v6816
        %v6818 = vpop.f32.mrb[0].mxu0
        %v6819 = vpop.f32.mrb[0].mxu0
        %v6820 = vadd.f32 %v6676, %v6819
        %v6821 = vpop.f32.mrb[0].mxu0
        %6822 = vmatprep.mubr.bf16.mxu0 0
        %6823 = vmatmul.mubr.bf16.gmra.mrb[0].mxu0 %v5700
        %v6824 = vpop.f32.mrb[0].mxu0
        %v6825 = vadd.f32 %v6676, %v6824
        %v6826 = vpop.f32.mrb[0].mxu0
        %v6827 = vpop.f32.mrb[0].mxu0
        %v6828 = vadd.f32 %v6676, %v6827
        %v6829 = vpop.f32.mrb[0].mxu0
        %6830 = vmatprep.mubr.bf16.mxu0 0
        %6831 = vmatmul.mubr.bf16.gmra.mrb[0].mxu0 %v5703
        %v6832 = vpop.f32.mrb[0].mxu0
        %v6833 = vadd.f32 %v6676, %v6832
        %v6834 = vpop.f32.mrb[0].mxu0
        %v6835 = vpop.f32.mrb[0].mxu0
        %v6836 = vadd.f32 %v6676, %v6835
        %v6837 = vpop.f32.mrb[0].mxu0
        %6838 = vdwg.mxu0
        %v6840 = vlaneseq
        %v6841 = vshrl.u32 %v6840, 7
        %v6842 = vsub.s32 0, %v6841
        %v6843 = vrot.slane %v5632, %v6842
        %v6845 = vmul.f32 %v6542, %v6843
        %v6846 = vmul.f32 %v6545, %v6843
        %v6847 = vmul.f32 %v6550, %v6843
        %v6848 = vmul.f32 %v6553, %v6843
        %v6849 = vmul.f32 %v6558, %v6843
        %v6850 = vmul.f32 %v6561, %v6843
        %v6851 = vmul.f32 %v6566, %v6843
        %v6852 = vmul.f32 %v6569, %v6843
        %v6853 = vmul.f32 %v6574, %v6843
        %v6854 = vmul.f32 %v6577, %v6843
        %v6855 = vmul.f32 %v6582, %v6843
        %v6856 = vmul.f32 %v6585, %v6843
        %v6857 = vmul.f32 %v6590, %v6843
        %v6858 = vmul.f32 %v6593, %v6843
        %v6859 = vmul.f32 %v6598, %v6843
        %v6860 = vmul.f32 %v6601, %v6843
        %v6861 = vmul.f32 %v6606, %v6843
        %v6862 = vmul.f32 %v6609, %v6843
        %v6863 = vmul.f32 %v6614, %v6843
        %v6864 = vmul.f32 %v6617, %v6843
        %v6865 = vmul.f32 %v6622, %v6843
        %v6866 = vmul.f32 %v6625, %v6843
        %v6867 = vmul.f32 %v6630, %v6843
        %v6868 = vmul.f32 %v6633, %v6843
        %v6869 = vmul.f32 %v6638, %v6843
        %v6870 = vmul.f32 %v6641, %v6843
        %v6871 = vmul.f32 %v6646, %v6843
        %v6872 = vmul.f32 %v6649, %v6843
        %v6873 = vmul.f32 %v6654, %v6843
        %v6874 = vmul.f32 %v6657, %v6843
        %v6875 = vmul.f32 %v6662, %v6843
        %v6876 = vmul.f32 %v6665, %v6843
        %v6878 = vlaneseq
        %v6879 = vshrl.u32 %v6878, 7
        %v6880 = vsub.s32 0, %v6879
        %v6881 = vrot.slane %v5633, %v6880
        %v6883 = vadd.f32 %v6845, %v6881
        %v6884 = vadd.f32 %v6846, %v6881
        %v6885 = vadd.f32 %v6847, %v6881
        %v6886 = vadd.f32 %v6848, %v6881
        %v6887 = vadd.f32 %v6849, %v6881
        %v6888 = vadd.f32 %v6850, %v6881
        %v6889 = vadd.f32 %v6851, %v6881
        %v6890 = vadd.f32 %v6852, %v6881
        %v6891 = vadd.f32 %v6853, %v6881
        %v6892 = vadd.f32 %v6854, %v6881
        %v6893 = vadd.f32 %v6855, %v6881
        %v6894 = vadd.f32 %v6856, %v6881
        %v6895 = vadd.f32 %v6857, %v6881
        %v6896 = vadd.f32 %v6858, %v6881
        %v6897 = vadd.f32 %v6859, %v6881
        %v6898 = vadd.f32 %v6860, %v6881
        %v6899 = vadd.f32 %v6861, %v6881
        %v6900 = vadd.f32 %v6862, %v6881
        %v6901 = vadd.f32 %v6863, %v6881
        %v6902 = vadd.f32 %v6864, %v6881
        %v6903 = vadd.f32 %v6865, %v6881
        %v6904 = vadd.f32 %v6866, %v6881
        %v6905 = vadd.f32 %v6867, %v6881
        %v6906 = vadd.f32 %v6868, %v6881
        %v6907 = vadd.f32 %v6869, %v6881
        %v6908 = vadd.f32 %v6870, %v6881
        %v6909 = vadd.f32 %v6871, %v6881
        %v6910 = vadd.f32 %v6872, %v6881
        %v6911 = vadd.f32 %v6873, %v6881
        %v6912 = vadd.f32 %v6874, %v6881
        %v6913 = vadd.f32 %v6875, %v6881
        %v6914 = vadd.f32 %v6876, %v6881
        %v6915 = vadd.f32 %v6883, %v6713
        %v6916 = vadd.f32 %v6884, %v6716
        %v6917 = vadd.f32 %v6885, %v6721
        %v6918 = vadd.f32 %v6886, %v6724
        %v6919 = vadd.f32 %v6887, %v6729
        %v6920 = vadd.f32 %v6888, %v6732
        %v6921 = vadd.f32 %v6889, %v6737
        %v6922 = vadd.f32 %v6890, %v6740
        %v6923 = vadd.f32 %v6891, %v6745
        %v6924 = vadd.f32 %v6892, %v6748
        %v6925 = vadd.f32 %v6893, %v6753
        %v6926 = vadd.f32 %v6894, %v6756
        %v6927 = vadd.f32 %v6895, %v6761
        %v6928 = vadd.f32 %v6896, %v6764
        %v6929 = vadd.f32 %v6897, %v6769
        %v6930 = vadd.f32 %v6898, %v6772
        %v6931 = vadd.f32 %v6899, %v6777
        %v6932 = vadd.f32 %v6900, %v6780
        %v6933 = vadd.f32 %v6901, %v6785
        %v6934 = vadd.f32 %v6902, %v6788
        %v6935 = vadd.f32 %v6903, %v6793
        %v6936 = vadd.f32 %v6904, %v6796
        %v6937 = vadd.f32 %v6905, %v6801
        %v6938 = vadd.f32 %v6906, %v6804
        %v6939 = vadd.f32 %v6907, %v6809
        %v6940 = vadd.f32 %v6908, %v6812
        %v6941 = vadd.f32 %v6909, %v6817
        %v6942 = vadd.f32 %v6910, %v6820
        %v6943 = vadd.f32 %v6911, %v6825
        %v6944 = vadd.f32 %v6912, %v6828
        %v6945 = vadd.f32 %v6913, %v6833
        %v6946 = vadd.f32 %v6914, %v6836
        %v6947 = vmax.f32 %v6915, 0.0
        %v6948 = vmax.f32 %v6916, 0.0
        %v6949 = vmax.f32 %v6917, 0.0
        %v6950 = vmax.f32 %v6918, 0.0
        %v6951 = vmax.f32 %v6919, 0.0
        %v6952 = vmax.f32 %v6920, 0.0
        %v6953 = vmax.f32 %v6921, 0.0
        %v6954 = vmax.f32 %v6922, 0.0
        %v6955 = vmax.f32 %v6923, 0.0
        %v6956 = vmax.f32 %v6924, 0.0
        %v6957 = vmax.f32 %v6925, 0.0
        %v6958 = vmax.f32 %v6926, 0.0
        %v6959 = vmax.f32 %v6927, 0.0
        %v6960 = vmax.f32 %v6928, 0.0
        %v6961 = vmax.f32 %v6929, 0.0
        %v6962 = vmax.f32 %v6930, 0.0
        %v6963 = vmax.f32 %v6931, 0.0
        %v6964 = vmax.f32 %v6932, 0.0
        %v6965 = vmax.f32 %v6933, 0.0
        %v6966 = vmax.f32 %v6934, 0.0
        %v6967 = vmax.f32 %v6935, 0.0
        %v6968 = vmax.f32 %v6936, 0.0
        %v6969 = vmax.f32 %v6937, 0.0
        %v6970 = vmax.f32 %v6938, 0.0
        %v6971 = vmax.f32 %v6939, 0.0
        %v6972 = vmax.f32 %v6940, 0.0
        %v6973 = vmax.f32 %v6941, 0.0
        %v6974 = vmax.f32 %v6942, 0.0
        %v6975 = vmax.f32 %v6943, 0.0
        %v6976 = vmax.f32 %v6944, 0.0
        %v6977 = vmax.f32 %v6945, 0.0
        %v6978 = vmax.f32 %v6946, 0.0
        %v6979 = vld [vmem:[%s63] sm:$0xff]
        %v6980 = vld [vmem:[%s63 + $0x8] sm:$0xff]
        %v6981 = vld [vmem:[%s63 + $0x10] sm:$0xff]
        %v6982 = vld [vmem:[%s63 + $0x18] sm:$0xff]
        %v6983 = vld [vmem:[%s63 + $0x20] sm:$0xff]
        %v6984 = vld [vmem:[%s63 + $0x28] sm:$0xff]
        %v6985 = vld [vmem:[%s63 + $0x30] sm:$0xff]
        %v6986 = vld [vmem:[%s63 + $0x38] sm:$0xff]
        %v6987 = vld [vmem:[%s63 + $0x40] sm:$0xff]
        %v6988 = vld [vmem:[%s63 + $0x48] sm:$0xff]
        %v6989 = vld [vmem:[%s63 + $0x50] sm:$0xff]
        %v6990 = vld [vmem:[%s63 + $0x58] sm:$0xff]
        %v6991 = vld [vmem:[%s65] sm:$0x1]
        %v6992 = vld [vmem:[%s67] sm:$0x1]
        %v6993 = vld [vmem:[%s69] sm:$0x1]
        %v6994 = vpack.c.bf16 %v6950, %v6949
        %v6995 = vpack.c.bf16 %v6954, %v6953
        %v6996 = vpack.c.bf16 %v6958, %v6957
        %v6997 = vpack.c.bf16 %v6962, %v6961
        %v6998 = vpack.c.bf16 %v6966, %v6965
        %v6999 = vpack.c.bf16 %v6970, %v6969
        %v7000 = vpack.c.bf16 %v6974, %v6973
        %v7001 = vpack.c.bf16 %v6980, %v6979
        %v7002 = vpack.c.bf16 %v6982, %v6981
        %v7003 = vpack.c.bf16 %v6948, %v6947
        %v7004 = vpack.c.bf16 %v6952, %v6951
        %v7005 = vpack.c.bf16 %v6956, %v6955
        %v7006 = vpack.c.bf16 %v6960, %v6959
        %v7007 = vpack.c.bf16 %v6964, %v6963
        %v7008 = vpack.c.bf16 %v6968, %v6967
        %v7009 = vpack.c.bf16 %v6972, %v6971
        %v7010 = vpack.c.bf16 %v6976, %v6975
        %v7011 = vpack.c.bf16 %v6984, %v6983
        %v7012 = vpack.c.bf16 %v6986, %v6985
        %vm7013 = vcmask 261120
        %v7015 = vsel %vm7013, %v7003, 0
        %v7018 = vsel %vm7013, %v7004, 0
        %v7021 = vsel %vm7013, %v7005, 0
        %v7024 = vsel %vm7013, %v7006, 0
        %v7027 = vsel %vm7013, %v7007, 0
        %v7030 = vsel %vm7013, %v7008, 0
        %v7033 = vsel %vm7013, %v7009, 0
        %v7036 = vsel %vm7013, %v7010, 0
        %7038 = vmatprep.subr.bf16.mxu0 0
        %7039 = vmatpush1.bf16.msra.mxu0 %v7011
        %7040 = vmatprep.subr.bf16.mxu0 0
        %7041 = vmatpush1.bf16.msra.mxu0 %v7012
        %7042 = vmatprep.subr.bf16.mxu0 0
        %7043 = vmatpush1.bf16.msra.mxu0 0
        %7044 = vmatprep.subr.bf16.mxu0 0
        %7045 = vmatpush1.bf16.msra.mxu0 0
        %7046 = vmatprep.subr.bf16.mxu0 0
        %7047 = vmatpush1.bf16.msra.mxu0 0
        %7048 = vmatprep.subr.bf16.mxu0 0
        %7049 = vmatpush1.bf16.msra.mxu0 0
        %7050 = vmatprep.subr.bf16.mxu0 0
        %7051 = vmatpush1.bf16.msra.mxu0 0
        %7052 = vmatprep.subr.bf16.mxu0 0
        %7053 = vmatpush1.bf16.msra.mxu0 0
        %7054 = vmatprep.subr.bf16.mxu0 0
        %7055 = vmatpush1.bf16.msra.mxu0 0
        %7056 = vmatprep.subr.bf16.mxu0 0
        %7057 = vmatpush1.bf16.msra.mxu0 0
        %7058 = vmatprep.subr.bf16.mxu0 0
        %7059 = vmatpush1.bf16.msra.mxu0 0
        %7060 = vmatprep.subr.bf16.mxu0 0
        %7061 = vmatpush1.bf16.msra.mxu0 0
        %7062 = vmatprep.subr.bf16.mxu0 0
        %7063 = vmatpush1.bf16.msra.mxu0 0
        %7064 = vmatprep.subr.bf16.mxu0 0
        %7065 = vmatpush1.bf16.msra.mxu0 0
        %7066 = vmatprep.subr.bf16.mxu0 0
        %7067 = vmatpush1.bf16.msra.mxu0 0
        %7068 = vmatprep.subr.bf16.mxu0 0
        %7069 = vmatpush1.bf16.msra.mxu0 0
        %7070 = vmatprep.mubr.bf16.mxu0 0
        %7071 = vmatmul.mubr.bf16.gmra.mrb[0].mxu0 %v7015
        %v7072 = vpop.f32.mrb[0].mxu0
        %v7073 = vadd.f32 0.0, %v7072
        %v7074 = vpop.f32.mrb[0].mxu0
        %v7075 = vpop.f32.mrb[0].mxu0
        %v7076 = vadd.f32 0.0, %v7075
        %v7077 = vpop.f32.mrb[0].mxu0
        %7078 = vmatprep.mubr.bf16.mxu0 0
        %7079 = vmatmul.mubr.bf16.gmra.mrb[0].mxu0 %v7018
        %v7080 = vpop.f32.mrb[0].mxu0
        %v7081 = vadd.f32 0.0, %v7080
        %v7082 = vpop.f32.mrb[0].mxu0
        %v7083 = vpop.f32.mrb[0].mxu0
        %v7084 = vadd.f32 0.0, %v7083
        %v7085 = vpop.f32.mrb[0].mxu0
        %7086 = vmatprep.mubr.bf16.mxu0 0
        %7087 = vmatmul.mubr.bf16.gmra.mrb[0].mxu0 %v7021
        %v7088 = vpop.f32.mrb[0].mxu0
        %v7089 = vadd.f32 0.0, %v7088
        %v7090 = vpop.f32.mrb[0].mxu0
        %v7091 = vpop.f32.mrb[0].mxu0
        %v7092 = vadd.f32 0.0, %v7091
        %v7093 = vpop.f32.mrb[0].mxu0
        %7094 = vmatprep.mubr.bf16.mxu0 0
        %7095 = vmatmul.mubr.bf16.gmra.mrb[0].mxu0 %v7024
        %v7096 = vpop.f32.mrb[0].mxu0
        %v7097 = vadd.f32 0.0, %v7096
        %v7098 = vpop.f32.mrb[0].mxu0
        %v7099 = vpop.f32.mrb[0].mxu0
        %v7100 = vadd.f32 0.0, %v7099
        %v7101 = vpop.f32.mrb[0].mxu0
        %7102 = vmatprep.mubr.bf16.mxu0 0
        %7103 = vmatmul.mubr.bf16.gmra.mrb[0].mxu0 %v7027
        %v7104 = vpop.f32.mrb[0].mxu0
        %v7105 = vadd.f32 0.0, %v7104
        %v7106 = vpop.f32.mrb[0].mxu0
        %v7107 = vpop.f32.mrb[0].mxu0
        %v7108 = vadd.f32 0.0, %v7107
        %v7109 = vpop.f32.mrb[0].mxu0
        %7110 = vmatprep.mubr.bf16.mxu0 0
        %7111 = vmatmul.mubr.bf16.gmra.mrb[0].mxu0 %v7030
        %v7112 = vpop.f32.mrb[0].mxu0
        %v7113 = vadd.f32 0.0, %v7112
        %v7114 = vpop.f32.mrb[0].mxu0
        %v7115 = vpop.f32.mrb[0].mxu0
        %v7116 = vadd.f32 0.0, %v7115
        %v7117 = vpop.f32.mrb[0].mxu0
        %7118 = vmatprep.mubr.bf16.mxu0 0
        %7119 = vmatmul.mubr.bf16.gmra.mrb[0].mxu0 %v7033
        %v7120 = vpop.f32.mrb[0].mxu0
        %v7121 = vadd.f32 0.0, %v7120
        %v7122 = vpop.f32.mrb[0].mxu0
        %v7123 = vpop.f32.mrb[0].mxu0
        %v7124 = vadd.f32 0.0, %v7123
        %v7125 = vpop.f32.mrb[0].mxu0
        %7126 = vmatprep.mubr.bf16.mxu0 0
        %7127 = vmatmul.mubr.bf16.gmra.mrb[0].mxu0 %v7036
        %v7128 = vpop.f32.mrb[0].mxu0
        %v7129 = vadd.f32 0.0, %v7128
        %v7130 = vpop.f32.mrb[0].mxu0
        %v7131 = vpop.f32.mrb[0].mxu0
        %v7132 = vadd.f32 0.0, %v7131
        %v7133 = vpop.f32.mrb[0].mxu0
        %7134 = vdwg.mxu0
        %v7135 = vsel %vm7013, %v3192, 0
        %v7138 = vsel %vm7013, %v6994, 0
        %v7141 = vsel %vm7013, %v6995, 0
        %v7144 = vsel %vm7013, %v6996, 0
        %v7147 = vsel %vm7013, %v6997, 0
        %v7150 = vsel %vm7013, %v6998, 0
        %v7153 = vsel %vm7013, %v6999, 0
        %v7156 = vsel %vm7013, %v7000, 0
        %7158 = vmatprep.subr.bf16.mxu0 0
        %7159 = vmatpush1.bf16.msra.mxu0 %v7001
        %7160 = vmatprep.subr.bf16.mxu0 0
        %7161 = vmatpush1.bf16.msra.mxu0 %v7002
        %7162 = vmatprep.subr.bf16.mxu0 0
        %7163 = vmatpush1.bf16.msra.mxu0 0
        %7164 = vmatprep.subr.bf16.mxu0 0
        %7165 = vmatpush1.bf16.msra.mxu0 0
        %7166 = vmatprep.subr.bf16.mxu0 0
        %7167 = vmatpush1.bf16.msra.mxu0 0
        %7168 = vmatprep.subr.bf16.mxu0 0
        %7169 = vmatpush1.bf16.msra.mxu0 0
        %7170 = vmatprep.subr.bf16.mxu0 0
        %7171 = vmatpush1.bf16.msra.mxu0 0
        %7172 = vmatprep.subr.bf16.mxu0 0
        %7173 = vmatpush1.bf16.msra.mxu0 0
        %7174 = vmatprep.subr.bf16.mxu0 0
        %7175 = vmatpush1.bf16.msra.mxu0 0
        %7176 = vmatprep.subr.bf16.mxu0 0
        %7177 = vmatpush1.bf16.msra.mxu0 0
        %7178 = vmatprep.subr.bf16.mxu0 0
        %7179 = vmatpush1.bf16.msra.mxu0 0
        %7180 = vmatprep.subr.bf16.mxu0 0
        %7181 = vmatpush1.bf16.msra.mxu0 0
        %7182 = vmatprep.subr.bf16.mxu0 0
        %7183 = vmatpush1.bf16.msra.mxu0 0
        %7184 = vmatprep.subr.bf16.mxu0 0
        %7185 = vmatpush1.bf16.msra.mxu0 0
        %7186 = vmatprep.subr.bf16.mxu0 0
        %7187 = vmatpush1.bf16.msra.mxu0 0
        %7188 = vmatprep.subr.bf16.mxu0 0
        %7189 = vmatpush1.bf16.msra.mxu0 0
        %7190 = vmatprep.mubr.bf16.mxu0 0
        %7191 = vmatmul.mubr.bf16.gmra.mrb[0].mxu0 %v7135
        %v7192 = vpop.f32.mrb[0].mxu0
        %v7193 = vadd.f32 %v7073, %v7192
        %v7194 = vpop.f32.mrb[0].mxu0
        %v7195 = vpop.f32.mrb[0].mxu0
        %v7196 = vadd.f32 %v7076, %v7195
        %v7197 = vpop.f32.mrb[0].mxu0
        %7198 = vmatprep.mubr.bf16.mxu0 0
        %7199 = vmatmul.mubr.bf16.gmra.mrb[0].mxu0 %v7138
        %v7200 = vpop.f32.mrb[0].mxu0
        %v7201 = vadd.f32 %v7081, %v7200
        %v7202 = vpop.f32.mrb[0].mxu0
        %v7203 = vpop.f32.mrb[0].mxu0
        %v7204 = vadd.f32 %v7084, %v7203
        %v7205 = vpop.f32.mrb[0].mxu0
        %7206 = vmatprep.mubr.bf16.mxu0 0
        %7207 = vmatmul.mubr.bf16.gmra.mrb[0].mxu0 %v7141
        %v7208 = vpop.f32.mrb[0].mxu0
        %v7209 = vadd.f32 %v7089, %v7208
        %v7210 = vpop.f32.mrb[0].mxu0
        %v7211 = vpop.f32.mrb[0].mxu0
        %v7212 = vadd.f32 %v7092, %v7211
        %v7213 = vpop.f32.mrb[0].mxu0
        %7214 = vmatprep.mubr.bf16.mxu0 0
        %7215 = vmatmul.mubr.bf16.gmra.mrb[0].mxu0 %v7144
        %v7216 = vpop.f32.mrb[0].mxu0
        %v7217 = vadd.f32 %v7097, %v7216
        %v7218 = vpop.f32.mrb[0].mxu0
        %v7219 = vpop.f32.mrb[0].mxu0
        %v7220 = vadd.f32 %v7100, %v7219
        %v7221 = vpop.f32.mrb[0].mxu0
        %7222 = vmatprep.mubr.bf16.mxu0 0
        %7223 = vmatmul.mubr.bf16.gmra.mrb[0].mxu0 %v7147
        %v7224 = vpop.f32.mrb[0].mxu0
        %v7225 = vadd.f32 %v7105, %v7224
        %v7226 = vpop.f32.mrb[0].mxu0
        %v7227 = vpop.f32.mrb[0].mxu0
        %v7228 = vadd.f32 %v7108, %v7227
        %v7229 = vpop.f32.mrb[0].mxu0
        %7230 = vmatprep.mubr.bf16.mxu0 0
        %7231 = vmatmul.mubr.bf16.gmra.mrb[0].mxu0 %v7150
        %v7232 = vpop.f32.mrb[0].mxu0
        %v7233 = vadd.f32 %v7113, %v7232
        %v7234 = vpop.f32.mrb[0].mxu0
        %v7235 = vpop.f32.mrb[0].mxu0
        %v7236 = vadd.f32 %v7116, %v7235
        %v7237 = vpop.f32.mrb[0].mxu0
        %7238 = vmatprep.mubr.bf16.mxu0 0
        %7239 = vmatmul.mubr.bf16.gmra.mrb[0].mxu0 %v7153
        %v7240 = vpop.f32.mrb[0].mxu0
        %v7241 = vadd.f32 %v7121, %v7240
        %v7242 = vpop.f32.mrb[0].mxu0
        %v7243 = vpop.f32.mrb[0].mxu0
        %v7244 = vadd.f32 %v7124, %v7243
        %v7245 = vpop.f32.mrb[0].mxu0
        %7246 = vmatprep.mubr.bf16.mxu0 0
        %7247 = vmatmul.mubr.bf16.gmra.mrb[0].mxu0 %v7156
        %v7248 = vpop.f32.mrb[0].mxu0
        %v7249 = vadd.f32 %v7129, %v7248
        %v7250 = vpop.f32.mrb[0].mxu0
        %v7251 = vpop.f32.mrb[0].mxu0
        %v7252 = vadd.f32 %v7132, %v7251
        %v7253 = vpop.f32.mrb[0].mxu0
        %7254 = vdwg.mxu0
        %v7255 = vpack.c.bf16 %v6978, %v6977
        %v7256 = vpack.c.bf16 %v6988, %v6987
        %v7257 = vpack.c.bf16 %v6990, %v6989
        %v7259 = vsel %vm7013, %v7255, 0
        %7261 = vmatprep.subr.bf16.mxu0 0
        %7262 = vmatpush1.bf16.msra.mxu0 %v7256
        %7263 = vmatprep.subr.bf16.mxu0 0
        %7264 = vmatpush1.bf16.msra.mxu0 %v7257
        %7265 = vmatprep.subr.bf16.mxu0 0
        %7266 = vmatpush1.bf16.msra.mxu0 0
        %7267 = vmatprep.subr.bf16.mxu0 0
        %7268 = vmatpush1.bf16.msra.mxu0 0
        %7269 = vmatprep.subr.bf16.mxu0 0
        %7270 = vmatpush1.bf16.msra.mxu0 0
        %7271 = vmatprep.subr.bf16.mxu0 0
        %7272 = vmatpush1.bf16.msra.mxu0 0
        %7273 = vmatprep.subr.bf16.mxu0 0
        %7274 = vmatpush1.bf16.msra.mxu0 0
        %7275 = vmatprep.subr.bf16.mxu0 0
        %7276 = vmatpush1.bf16.msra.mxu0 0
        %7277 = vmatprep.subr.bf16.mxu0 0
        %7278 = vmatpush1.bf16.msra.mxu0 0
        %7279 = vmatprep.subr.bf16.mxu0 0
        %7280 = vmatpush1.bf16.msra.mxu0 0
        %7281 = vmatprep.subr.bf16.mxu0 0
        %7282 = vmatpush1.bf16.msra.mxu0 0
        %7283 = vmatprep.subr.bf16.mxu0 0
        %7284 = vmatpush1.bf16.msra.mxu0 0
        %7285 = vmatprep.subr.bf16.mxu0 0
        %7286 = vmatpush1.bf16.msra.mxu0 0
        %7287 = vmatprep.subr.bf16.mxu0 0
        %7288 = vmatpush1.bf16.msra.mxu0 0
        %7289 = vmatprep.subr.bf16.mxu0 0
        %7290 = vmatpush1.bf16.msra.mxu0 0
        %7291 = vmatprep.subr.bf16.mxu0 0
        %7292 = vmatpush1.bf16.msra.mxu0 0
        %7293 = vmatprep.mubr.bf16.mxu0 0
        %7294 = vmatmul.mubr.bf16.gmra.mrb[0].mxu0 %v7138
        %v7295 = vpop.f32.mrb[0].mxu0
        %v7296 = vadd.f32 0.0, %v7295
        %v7297 = vpop.f32.mrb[0].mxu0
        %v7298 = vpop.f32.mrb[0].mxu0
        %v7299 = vadd.f32 0.0, %v7298
        %v7300 = vpop.f32.mrb[0].mxu0
        %7301 = vmatprep.mubr.bf16.mxu0 0
        %7302 = vmatmul.mubr.bf16.gmra.mrb[0].mxu0 %v7141
        %v7303 = vpop.f32.mrb[0].mxu0
        %v7304 = vadd.f32 0.0, %v7303
        %v7305 = vpop.f32.mrb[0].mxu0
        %v7306 = vpop.f32.mrb[0].mxu0
        %v7307 = vadd.f32 0.0, %v7306
        %v7308 = vpop.f32.mrb[0].mxu0
        %7309 = vmatprep.mubr.bf16.mxu0 0
        %7310 = vmatmul.mubr.bf16.gmra.mrb[0].mxu0 %v7144
        %v7311 = vpop.f32.mrb[0].mxu0
        %v7312 = vadd.f32 0.0, %v7311
        %v7313 = vpop.f32.mrb[0].mxu0
        %v7314 = vpop.f32.mrb[0].mxu0
        %v7315 = vadd.f32 0.0, %v7314
        %v7316 = vpop.f32.mrb[0].mxu0
        %7317 = vmatprep.mubr.bf16.mxu0 0
        %7318 = vmatmul.mubr.bf16.gmra.mrb[0].mxu0 %v7147
        %v7319 = vpop.f32.mrb[0].mxu0
        %v7320 = vadd.f32 0.0, %v7319
        %v7321 = vpop.f32.mrb[0].mxu0
        %v7322 = vpop.f32.mrb[0].mxu0
        %v7323 = vadd.f32 0.0, %v7322
        %v7324 = vpop.f32.mrb[0].mxu0
        %7325 = vmatprep.mubr.bf16.mxu0 0
        %7326 = vmatmul.mubr.bf16.gmra.mrb[0].mxu0 %v7150
        %v7327 = vpop.f32.mrb[0].mxu0
        %v7328 = vadd.f32 0.0, %v7327
        %v7329 = vpop.f32.mrb[0].mxu0
        %v7330 = vpop.f32.mrb[0].mxu0
        %v7331 = vadd.f32 0.0, %v7330
        %v7332 = vpop.f32.mrb[0].mxu0
        %7333 = vmatprep.mubr.bf16.mxu0 0
        %7334 = vmatmul.mubr.bf16.gmra.mrb[0].mxu0 %v7153
        %v7335 = vpop.f32.mrb[0].mxu0
        %v7336 = vadd.f32 0.0, %v7335
        %v7337 = vpop.f32.mrb[0].mxu0
        %v7338 = vpop.f32.mrb[0].mxu0
        %v7339 = vadd.f32 0.0, %v7338
        %v7340 = vpop.f32.mrb[0].mxu0
        %7341 = vmatprep.mubr.bf16.mxu0 0
        %7342 = vmatmul.mubr.bf16.gmra.mrb[0].mxu0 %v7156
        %v7343 = vpop.f32.mrb[0].mxu0
        %v7344 = vadd.f32 0.0, %v7343
        %v7345 = vpop.f32.mrb[0].mxu0
        %v7346 = vpop.f32.mrb[0].mxu0
        %v7347 = vadd.f32 0.0, %v7346
        %v7348 = vpop.f32.mrb[0].mxu0
        %7349 = vmatprep.mubr.bf16.mxu0 0
        %7350 = vmatmul.mubr.bf16.gmra.mrb[0].mxu0 %v7259
        %v7351 = vpop.f32.mrb[0].mxu0
        %v7352 = vadd.f32 0.0, %v7351
        %v7353 = vpop.f32.mrb[0].mxu0
        %v7354 = vpop.f32.mrb[0].mxu0
        %v7355 = vadd.f32 0.0, %v7354
        %v7356 = vpop.f32.mrb[0].mxu0
        %7357 = vdwg.mxu0
        %v7358 = vadd.f32 %v7193, %v7296
        %v7359 = vadd.f32 %v7196, %v7299
        %v7360 = vadd.f32 %v7201, %v7304
        %v7361 = vadd.f32 %v7204, %v7307
        %v7362 = vadd.f32 %v7209, %v7312
        %v7363 = vadd.f32 %v7212, %v7315
        %v7364 = vadd.f32 %v7217, %v7320
        %v7365 = vadd.f32 %v7220, %v7323
        %v7366 = vadd.f32 %v7225, %v7328
        %v7367 = vadd.f32 %v7228, %v7331
        %v7368 = vadd.f32 %v7233, %v7336
        %v7369 = vadd.f32 %v7236, %v7339
        %v7370 = vadd.f32 %v7241, %v7344
        %v7371 = vadd.f32 %v7244, %v7347
        %v7372 = vadd.f32 %v7249, %v7352
        %v7373 = vadd.f32 %v7252, %v7355
        %v7375 = vlaneseq
        %v7376 = vshrl.u32 %v7375, 7
        %v7377 = vsub.s32 0, %v7376
        %v7378 = vrot.slane %v6991, %v7377
        %v7380 = vadd.f32 %v7358, %v7378
        %v7381 = vadd.f32 %v7359, %v7378
        %v7382 = vadd.f32 %v7360, %v7378
        %v7383 = vadd.f32 %v7361, %v7378
        %v7384 = vadd.f32 %v7362, %v7378
        %v7385 = vadd.f32 %v7363, %v7378
        %v7386 = vadd.f32 %v7364, %v7378
        %v7387 = vadd.f32 %v7365, %v7378
        %v7388 = vadd.f32 %v7366, %v7378
        %v7389 = vadd.f32 %v7367, %v7378
        %v7390 = vadd.f32 %v7368, %v7378
        %v7391 = vadd.f32 %v7369, %v7378
        %v7392 = vadd.f32 %v7370, %v7378
        %v7393 = vadd.f32 %v7371, %v7378
        %v7394 = vadd.f32 %v7372, %v7378
        %v7395 = vadd.f32 %v7373, %v7378
        %v7397 = vlaneseq
        %v7398 = vshrl.u32 %v7397, 7
        %v7399 = vsub.s32 0, %v7398
        %v7400 = vrot.slane %v6992, %v7399
        %v7402 = vmul.f32 %v7380, %v7400
        %v7403 = vmul.f32 %v7381, %v7400
        %v7404 = vmul.f32 %v7382, %v7400
        %v7405 = vmul.f32 %v7383, %v7400
        %v7406 = vmul.f32 %v7384, %v7400
        %v7407 = vmul.f32 %v7385, %v7400
        %v7408 = vmul.f32 %v7386, %v7400
        %v7409 = vmul.f32 %v7387, %v7400
        %v7410 = vmul.f32 %v7388, %v7400
        %v7411 = vmul.f32 %v7389, %v7400
        %v7412 = vmul.f32 %v7390, %v7400
        %v7413 = vmul.f32 %v7391, %v7400
        %v7414 = vmul.f32 %v7392, %v7400
        %v7415 = vmul.f32 %v7393, %v7400
        %v7416 = vmul.f32 %v7394, %v7400
        %v7417 = vmul.f32 %v7395, %v7400
        %v7419 = vlaneseq
        %v7420 = vshrl.u32 %v7419, 7
        %v7421 = vsub.s32 0, %v7420
        %v7422 = vrot.slane %v6993, %v7421
        %v7424 = vadd.f32 %v7402, %v7422
        %v7425 = vadd.f32 %v7403, %v7422
        %v7426 = vadd.f32 %v7404, %v7422
        %v7427 = vadd.f32 %v7405, %v7422
        %v7428 = vadd.f32 %v7406, %v7422
        %v7429 = vadd.f32 %v7407, %v7422
        %v7430 = vadd.f32 %v7408, %v7422
        %v7431 = vadd.f32 %v7409, %v7422
        %v7432 = vadd.f32 %v7410, %v7422
        %v7433 = vadd.f32 %v7411, %v7422
        %v7434 = vadd.f32 %v7412, %v7422
        %v7435 = vadd.f32 %v7413, %v7422
        %v7436 = vadd.f32 %v7414, %v7422
        %v7437 = vadd.f32 %v7415, %v7422
        %v7438 = vadd.f32 %v7416, %v7422
        %v7439 = vadd.f32 %v7417, %v7422
        %v7440 = vld [vmem:[%s71] sm:$0xff]
        %v7441 = vld [vmem:[%s71 + $0x8] sm:$0xff]
        %v7442 = vld [vmem:[%s71 + $0x10] sm:$0xff]
        %v7443 = vld [vmem:[%s71 + $0x18] sm:$0xff]
        %v7444 = vld [vmem:[%s73] sm:$0x1]
        %v7445 = vpack.c.bf16 %v7441, %v7440
        %v7446 = vpack.c.bf16 %v7443, %v7442
        %v7448 = vlaneseq
        %v7449 = vshrl.u32 %v7448, 7
        %v7450 = vsub.s32 0, %v7449
        %v7451 = vrot.slane %v7444, %v7450
        %7453 = vmatprep.subr.bf16.mxu0 0
        %7454 = vmatpush1.bf16.msra.mxu0 %v7445
        %7455 = vmatprep.subr.bf16.mxu0 0
        %7456 = vmatpush1.bf16.msra.mxu0 %v7446
        %7457 = vmatprep.subr.bf16.mxu0 0
        %7458 = vmatpush1.bf16.msra.mxu0 0
        %7459 = vmatprep.subr.bf16.mxu0 0
        %7460 = vmatpush1.bf16.msra.mxu0 0
        %7461 = vmatprep.subr.bf16.mxu0 0
        %7462 = vmatpush1.bf16.msra.mxu0 0
        %7463 = vmatprep.subr.bf16.mxu0 0
        %7464 = vmatpush1.bf16.msra.mxu0 0
        %7465 = vmatprep.subr.bf16.mxu0 0
        %7466 = vmatpush1.bf16.msra.mxu0 0
        %7467 = vmatprep.subr.bf16.mxu0 0
        %7468 = vmatpush1.bf16.msra.mxu0 0
        %7469 = vmatprep.subr.bf16.mxu0 0
        %7470 = vmatpush1.bf16.msra.mxu0 0
        %7471 = vmatprep.subr.bf16.mxu0 0
        %7472 = vmatpush1.bf16.msra.mxu0 0
        %7473 = vmatprep.subr.bf16.mxu0 0
        %7474 = vmatpush1.bf16.msra.mxu0 0
        %7475 = vmatprep.subr.bf16.mxu0 0
        %7476 = vmatpush1.bf16.msra.mxu0 0
        %7477 = vmatprep.subr.bf16.mxu0 0
        %7478 = vmatpush1.bf16.msra.mxu0 0
        %7479 = vmatprep.subr.bf16.mxu0 0
        %7480 = vmatpush1.bf16.msra.mxu0 0
        %7481 = vmatprep.subr.bf16.mxu0 0
        %7482 = vmatpush1.bf16.msra.mxu0 0
        %7483 = vmatprep.subr.bf16.mxu0 0
        %7484 = vmatpush1.bf16.msra.mxu0 0
        %7485 = vmatprep.mubr.bf16.mxu0 0
        %7486 = vmatmul.mubr.bf16.gmra.mrb[0].mxu0 %v7015
        %v7487 = vpop.f32.mrb[0].mxu0
        %v7488 = vadd.f32 %v7451, %v7487
        %v7489 = vpop.f32.mrb[0].mxu0
        %v7490 = vpop.f32.mrb[0].mxu0
        %v7491 = vadd.f32 %v7451, %v7490
        %v7492 = vpop.f32.mrb[0].mxu0
        %7493 = vmatprep.mubr.bf16.mxu0 0
        %7494 = vmatmul.mubr.bf16.gmra.mrb[0].mxu0 %v7018
        %v7495 = vpop.f32.mrb[0].mxu0
        %v7496 = vadd.f32 %v7451, %v7495
        %v7497 = vpop.f32.mrb[0].mxu0
        %v7498 = vpop.f32.mrb[0].mxu0
        %v7499 = vadd.f32 %v7451, %v7498
        %v7500 = vpop.f32.mrb[0].mxu0
        %7501 = vmatprep.mubr.bf16.mxu0 0
        %7502 = vmatmul.mubr.bf16.gmra.mrb[0].mxu0 %v7021
        %v7503 = vpop.f32.mrb[0].mxu0
        %v7504 = vadd.f32 %v7451, %v7503
        %v7505 = vpop.f32.mrb[0].mxu0
        %v7506 = vpop.f32.mrb[0].mxu0
        %v7507 = vadd.f32 %v7451, %v7506
        %v7508 = vpop.f32.mrb[0].mxu0
        %7509 = vmatprep.mubr.bf16.mxu0 0
        %7510 = vmatmul.mubr.bf16.gmra.mrb[0].mxu0 %v7024
        %v7511 = vpop.f32.mrb[0].mxu0
        %v7512 = vadd.f32 %v7451, %v7511
        %v7513 = vpop.f32.mrb[0].mxu0
        %v7514 = vpop.f32.mrb[0].mxu0
        %v7515 = vadd.f32 %v7451, %v7514
        %v7516 = vpop.f32.mrb[0].mxu0
        %7517 = vmatprep.mubr.bf16.mxu0 0
        %7518 = vmatmul.mubr.bf16.gmra.mrb[0].mxu0 %v7027
        %v7519 = vpop.f32.mrb[0].mxu0
        %v7520 = vadd.f32 %v7451, %v7519
        %v7521 = vpop.f32.mrb[0].mxu0
        %v7522 = vpop.f32.mrb[0].mxu0
        %v7523 = vadd.f32 %v7451, %v7522
        %v7524 = vpop.f32.mrb[0].mxu0
        %7525 = vmatprep.mubr.bf16.mxu0 0
        %7526 = vmatmul.mubr.bf16.gmra.mrb[0].mxu0 %v7030
        %v7527 = vpop.f32.mrb[0].mxu0
        %v7528 = vadd.f32 %v7451, %v7527
        %v7529 = vpop.f32.mrb[0].mxu0
        %v7530 = vpop.f32.mrb[0].mxu0
        %v7531 = vadd.f32 %v7451, %v7530
        %v7532 = vpop.f32.mrb[0].mxu0
        %7533 = vmatprep.mubr.bf16.mxu0 0
        %7534 = vmatmul.mubr.bf16.gmra.mrb[0].mxu0 %v7033
        %v7535 = vpop.f32.mrb[0].mxu0
        %v7536 = vadd.f32 %v7451, %v7535
        %v7537 = vpop.f32.mrb[0].mxu0
        %v7538 = vpop.f32.mrb[0].mxu0
        %v7539 = vadd.f32 %v7451, %v7538
        %v7540 = vpop.f32.mrb[0].mxu0
        %7541 = vmatprep.mubr.bf16.mxu0 0
        %7542 = vmatmul.mubr.bf16.gmra.mrb[0].mxu0 %v7036
        %v7543 = vpop.f32.mrb[0].mxu0
        %v7544 = vadd.f32 %v7451, %v7543
        %v7545 = vpop.f32.mrb[0].mxu0
        %v7546 = vpop.f32.mrb[0].mxu0
        %v7547 = vadd.f32 %v7451, %v7546
        %v7548 = vpop.f32.mrb[0].mxu0
        %7549 = vdwg.mxu0
        %v7550 = vadd.f32 %v7424, %v7488
        %v7551 = vadd.f32 %v7425, %v7491
        %v7552 = vadd.f32 %v7426, %v7496
        %v7553 = vadd.f32 %v7427, %v7499
        %v7554 = vadd.f32 %v7428, %v7504
        %v7555 = vadd.f32 %v7429, %v7507
        %v7556 = vadd.f32 %v7430, %v7512
        %v7557 = vadd.f32 %v7431, %v7515
        %v7558 = vadd.f32 %v7432, %v7520
        %v7559 = vadd.f32 %v7433, %v7523
        %v7560 = vadd.f32 %v7434, %v7528
        %v7561 = vadd.f32 %v7435, %v7531
        %v7562 = vadd.f32 %v7436, %v7536
        %v7563 = vadd.f32 %v7437, %v7539
        %v7564 = vadd.f32 %v7438, %v7544
        %v7565 = vadd.f32 %v7439, %v7547
        %v7566 = vmax.f32 %v7550, 0.0
        %v7567 = vmax.f32 %v7551, 0.0
        %v7568 = vmax.f32 %v7552, 0.0
        %v7569 = vmax.f32 %v7553, 0.0
        %v7570 = vmax.f32 %v7554, 0.0
        %v7571 = vmax.f32 %v7555, 0.0
        %v7572 = vmax.f32 %v7556, 0.0
        %v7573 = vmax.f32 %v7557, 0.0
        %v7574 = vmax.f32 %v7558, 0.0
        %v7575 = vmax.f32 %v7559, 0.0
        %v7576 = vmax.f32 %v7560, 0.0
        %v7577 = vmax.f32 %v7561, 0.0
        %v7578 = vmax.f32 %v7562, 0.0
        %v7579 = vmax.f32 %v7563, 0.0
        %v7580 = vmax.f32 %v7564, 0.0
        %v7581 = vmax.f32 %v7565, 0.0
        %v7582 = vld [vmem:[%s75] sm:$0xff]
        %v7583 = vld [vmem:[%s75 + $0x8] sm:$0xff]
        %v7584 = vld [vmem:[%s75 + $0x10] sm:$0xff]
        %v7585 = vld [vmem:[%s75 + $0x18] sm:$0xff]
        %v7586 = vld [vmem:[%s75 + $0x20] sm:$0xff]
        %v7587 = vld [vmem:[%s75 + $0x28] sm:$0xff]
        %v7588 = vld [vmem:[%s75 + $0x30] sm:$0xff]
        %v7589 = vld [vmem:[%s75 + $0x38] sm:$0xff]
        %v7590 = vld [vmem:[%s75 + $0x40] sm:$0xff]
        %v7591 = vld [vmem:[%s75 + $0x48] sm:$0xff]
        %v7592 = vld [vmem:[%s75 + $0x50] sm:$0xff]
        %v7593 = vld [vmem:[%s75 + $0x58] sm:$0xff]
        %v7594 = vld [vmem:[%s77] sm:$0x1]
        %v7595 = vld [vmem:[%s79] sm:$0x1]
        %v7596 = vld [vmem:[%s81] sm:$0x1]
        %v7597 = vpack.c.bf16 %v7567, %v7566
        %v7598 = vpack.c.bf16 %v7569, %v7568
        %v7599 = vpack.c.bf16 %v7571, %v7570
        %v7600 = vpack.c.bf16 %v7573, %v7572
        %v7601 = vpack.c.bf16 %v7575, %v7574
        %v7602 = vpack.c.bf16 %v7577, %v7576
        %v7603 = vpack.c.bf16 %v7579, %v7578
        %v7604 = vpack.c.bf16 %v7583, %v7582
        %v7605 = vpack.c.bf16 %v7585, %v7584
        %v7606 = vpack.c.bf16 %v7581, %v7580
        %v7607 = vpack.c.bf16 %v7587, %v7586
        %v7608 = vpack.c.bf16 %v7589, %v7588
        %v7610 = vsel %vm7013, %v7597, 0
        %v7613 = vsel %vm7013, %v7598, 0
        %v7616 = vsel %vm7013, %v7599, 0
        %v7619 = vsel %vm7013, %v7600, 0
        %v7622 = vsel %vm7013, %v7601, 0
        %v7625 = vsel %vm7013, %v7602, 0
        %v7628 = vsel %vm7013, %v7603, 0
        %v7631 = vsel %vm7013, %v7606, 0
        %7633 = vmatprep.subr.bf16.mxu0 0
        %7634 = vmatpush1.bf16.msra.mxu0 %v7607
        %7635 = vmatprep.subr.bf16.mxu0 0
        %7636 = vmatpush1.bf16.msra.mxu0 %v7608
        %7637 = vmatprep.subr.bf16.mxu0 0
        %7638 = vmatpush1.bf16.msra.mxu0 0
        %7639 = vmatprep.subr.bf16.mxu0 0
        %7640 = vmatpush1.bf16.msra.mxu0 0
        %7641 = vmatprep.subr.bf16.mxu0 0
        %7642 = vmatpush1.bf16.msra.mxu0 0
        %7643 = vmatprep.subr.bf16.mxu0 0
        %7644 = vmatpush1.bf16.msra.mxu0 0
        %7645 = vmatprep.subr.bf16.mxu0 0
        %7646 = vmatpush1.bf16.msra.mxu0 0
        %7647 = vmatprep.subr.bf16.mxu0 0
        %7648 = vmatpush1.bf16.msra.mxu0 0
        %7649 = vmatprep.subr.bf16.mxu0 0
        %7650 = vmatpush1.bf16.msra.mxu0 0
        %7651 = vmatprep.subr.bf16.mxu0 0
        %7652 = vmatpush1.bf16.msra.mxu0 0
        %7653 = vmatprep.subr.bf16.mxu0 0
        %7654 = vmatpush1.bf16.msra.mxu0 0
        %7655 = vmatprep.subr.bf16.mxu0 0
        %7656 = vmatpush1.bf16.msra.mxu0 0
        %7657 = vmatprep.subr.bf16.mxu0 0
        %7658 = vmatpush1.bf16.msra.mxu0 0
        %7659 = vmatprep.subr.bf16.mxu0 0
        %7660 = vmatpush1.bf16.msra.mxu0 0
        %7661 = vmatprep.subr.bf16.mxu0 0
        %7662 = vmatpush1.bf16.msra.mxu0 0
        %7663 = vmatprep.subr.bf16.mxu0 0
        %7664 = vmatpush1.bf16.msra.mxu0 0
        %7665 = vmatprep.mubr.bf16.mxu0 0
        %7666 = vmatmul.mubr.bf16.gmra.mrb[0].mxu0 %v7610
        %v7667 = vpop.f32.mrb[0].mxu0
        %v7668 = vadd.f32 0.0, %v7667
        %v7669 = vpop.f32.mrb[0].mxu0
        %v7670 = vpop.f32.mrb[0].mxu0
        %v7671 = vadd.f32 0.0, %v7670
        %v7672 = vpop.f32.mrb[0].mxu0
        %7673 = vmatprep.mubr.bf16.mxu0 0
        %7674 = vmatmul.mubr.bf16.gmra.mrb[0].mxu0 %v7613
        %v7675 = vpop.f32.mrb[0].mxu0
        %v7676 = vadd.f32 0.0, %v7675
        %v7677 = vpop.f32.mrb[0].mxu0
        %v7678 = vpop.f32.mrb[0].mxu0
        %v7679 = vadd.f32 0.0, %v7678
        %v7680 = vpop.f32.mrb[0].mxu0
        %7681 = vmatprep.mubr.bf16.mxu0 0
        %7682 = vmatmul.mubr.bf16.gmra.mrb[0].mxu0 %v7616
        %v7683 = vpop.f32.mrb[0].mxu0
        %v7684 = vadd.f32 0.0, %v7683
        %v7685 = vpop.f32.mrb[0].mxu0
        %v7686 = vpop.f32.mrb[0].mxu0
        %v7687 = vadd.f32 0.0, %v7686
        %v7688 = vpop.f32.mrb[0].mxu0
        %7689 = vmatprep.mubr.bf16.mxu0 0
        %7690 = vmatmul.mubr.bf16.gmra.mrb[0].mxu0 %v7619
        %v7691 = vpop.f32.mrb[0].mxu0
        %v7692 = vadd.f32 0.0, %v7691
        %v7693 = vpop.f32.mrb[0].mxu0
        %v7694 = vpop.f32.mrb[0].mxu0
        %v7695 = vadd.f32 0.0, %v7694
        %v7696 = vpop.f32.mrb[0].mxu0
        %7697 = vmatprep.mubr.bf16.mxu0 0
        %7698 = vmatmul.mubr.bf16.gmra.mrb[0].mxu0 %v7622
        %v7699 = vpop.f32.mrb[0].mxu0
        %v7700 = vadd.f32 0.0, %v7699
        %v7701 = vpop.f32.mrb[0].mxu0
        %v7702 = vpop.f32.mrb[0].mxu0
        %v7703 = vadd.f32 0.0, %v7702
        %v7704 = vpop.f32.mrb[0].mxu0
        %7705 = vmatprep.mubr.bf16.mxu0 0
        %7706 = vmatmul.mubr.bf16.gmra.mrb[0].mxu0 %v7625
        %v7707 = vpop.f32.mrb[0].mxu0
        %v7708 = vadd.f32 0.0, %v7707
        %v7709 = vpop.f32.mrb[0].mxu0
        %v7710 = vpop.f32.mrb[0].mxu0
        %v7711 = vadd.f32 0.0, %v7710
        %v7712 = vpop.f32.mrb[0].mxu0
        %7713 = vmatprep.mubr.bf16.mxu0 0
        %7714 = vmatmul.mubr.bf16.gmra.mrb[0].mxu0 %v7628
        %v7715 = vpop.f32.mrb[0].mxu0
        %v7716 = vadd.f32 0.0, %v7715
        %v7717 = vpop.f32.mrb[0].mxu0
        %v7718 = vpop.f32.mrb[0].mxu0
        %v7719 = vadd.f32 0.0, %v7718
        %v7720 = vpop.f32.mrb[0].mxu0
        %7721 = vmatprep.mubr.bf16.mxu0 0
        %7722 = vmatmul.mubr.bf16.gmra.mrb[0].mxu0 %v7631
        %v7723 = vpop.f32.mrb[0].mxu0
        %v7724 = vadd.f32 0.0, %v7723
        %v7725 = vpop.f32.mrb[0].mxu0
        %v7726 = vpop.f32.mrb[0].mxu0
        %v7727 = vadd.f32 0.0, %v7726
        %v7728 = vpop.f32.mrb[0].mxu0
        %7729 = vdwg.mxu0
        %7730 = vmatprep.subr.bf16.mxu0 0
        %7731 = vmatpush1.bf16.msra.mxu0 %v7604
        %7732 = vmatprep.subr.bf16.mxu0 0
        %7733 = vmatpush1.bf16.msra.mxu0 %v7605
        %7734 = vmatprep.subr.bf16.mxu0 0
        %7735 = vmatpush1.bf16.msra.mxu0 0
        %7736 = vmatprep.subr.bf16.mxu0 0
        %7737 = vmatpush1.bf16.msra.mxu0 0
        %7738 = vmatprep.subr.bf16.mxu0 0
        %7739 = vmatpush1.bf16.msra.mxu0 0
        %7740 = vmatprep.subr.bf16.mxu0 0
        %7741 = vmatpush1.bf16.msra.mxu0 0
        %7742 = vmatprep.subr.bf16.mxu0 0
        %7743 = vmatpush1.bf16.msra.mxu0 0
        %7744 = vmatprep.subr.bf16.mxu0 0
        %7745 = vmatpush1.bf16.msra.mxu0 0
        %7746 = vmatprep.subr.bf16.mxu0 0
        %7747 = vmatpush1.bf16.msra.mxu0 0
        %7748 = vmatprep.subr.bf16.mxu0 0
        %7749 = vmatpush1.bf16.msra.mxu0 0
        %7750 = vmatprep.subr.bf16.mxu0 0
        %7751 = vmatpush1.bf16.msra.mxu0 0
        %7752 = vmatprep.subr.bf16.mxu0 0
        %7753 = vmatpush1.bf16.msra.mxu0 0
        %7754 = vmatprep.subr.bf16.mxu0 0
        %7755 = vmatpush1.bf16.msra.mxu0 0
        %7756 = vmatprep.subr.bf16.mxu0 0
        %7757 = vmatpush1.bf16.msra.mxu0 0
        %7758 = vmatprep.subr.bf16.mxu0 0
        %7759 = vmatpush1.bf16.msra.mxu0 0
        %7760 = vmatprep.subr.bf16.mxu0 0
        %7761 = vmatpush1.bf16.msra.mxu0 0
        %7762 = vmatprep.mubr.bf16.mxu0 0
        %7763 = vmatmul.mubr.bf16.gmra.mrb[0].mxu0 %v7135
        %v7764 = vpop.f32.mrb[0].mxu0
        %v7765 = vadd.f32 %v7668, %v7764
        %v7766 = vpop.f32.mrb[0].mxu0
        %v7767 = vpop.f32.mrb[0].mxu0
        %v7768 = vadd.f32 %v7671, %v7767
        %v7769 = vpop.f32.mrb[0].mxu0
        %7770 = vmatprep.mubr.bf16.mxu0 0
        %7771 = vmatmul.mubr.bf16.gmra.mrb[0].mxu0 %v7610
        %v7772 = vpop.f32.mrb[0].mxu0
        %v7773 = vadd.f32 %v7676, %v7772
        %v7774 = vpop.f32.mrb[0].mxu0
        %v7775 = vpop.f32.mrb[0].mxu0
        %v7776 = vadd.f32 %v7679, %v7775
        %v7777 = vpop.f32.mrb[0].mxu0
        %7778 = vmatprep.mubr.bf16.mxu0 0
        %7779 = vmatmul.mubr.bf16.gmra.mrb[0].mxu0 %v7613
        %v7780 = vpop.f32.mrb[0].mxu0
        %v7781 = vadd.f32 %v7684, %v7780
        %v7782 = vpop.f32.mrb[0].mxu0
        %v7783 = vpop.f32.mrb[0].mxu0
        %v7784 = vadd.f32 %v7687, %v7783
        %v7785 = vpop.f32.mrb[0].mxu0
        %7786 = vmatprep.mubr.bf16.mxu0 0
        %7787 = vmatmul.mubr.bf16.gmra.mrb[0].mxu0 %v7616
        %v7788 = vpop.f32.mrb[0].mxu0
        %v7789 = vadd.f32 %v7692, %v7788
        %v7790 = vpop.f32.mrb[0].mxu0
        %v7791 = vpop.f32.mrb[0].mxu0
        %v7792 = vadd.f32 %v7695, %v7791
        %v7793 = vpop.f32.mrb[0].mxu0
        %7794 = vmatprep.mubr.bf16.mxu0 0
        %7795 = vmatmul.mubr.bf16.gmra.mrb[0].mxu0 %v7619
        %v7796 = vpop.f32.mrb[0].mxu0
        %v7797 = vadd.f32 %v7700, %v7796
        %v7798 = vpop.f32.mrb[0].mxu0
        %v7799 = vpop.f32.mrb[0].mxu0
        %v7800 = vadd.f32 %v7703, %v7799
        %v7801 = vpop.f32.mrb[0].mxu0
        %7802 = vmatprep.mubr.bf16.mxu0 0
        %7803 = vmatmul.mubr.bf16.gmra.mrb[0].mxu0 %v7622
        %v7804 = vpop.f32.mrb[0].mxu0
        %v7805 = vadd.f32 %v7708, %v7804
        %v7806 = vpop.f32.mrb[0].mxu0
        %v7807 = vpop.f32.mrb[0].mxu0
        %v7808 = vadd.f32 %v7711, %v7807
        %v7809 = vpop.f32.mrb[0].mxu0
        %7810 = vmatprep.mubr.bf16.mxu0 0
        %7811 = vmatmul.mubr.bf16.gmra.mrb[0].mxu0 %v7625
        %v7812 = vpop.f32.mrb[0].mxu0
        %v7813 = vadd.f32 %v7716, %v7812
        %v7814 = vpop.f32.mrb[0].mxu0
        %v7815 = vpop.f32.mrb[0].mxu0
        %v7816 = vadd.f32 %v7719, %v7815
        %v7817 = vpop.f32.mrb[0].mxu0
        %7818 = vmatprep.mubr.bf16.mxu0 0
        %7819 = vmatmul.mubr.bf16.gmra.mrb[0].mxu0 %v7628
        %v7820 = vpop.f32.mrb[0].mxu0
        %v7821 = vadd.f32 %v7724, %v7820
        %v7822 = vpop.f32.mrb[0].mxu0
        %v7823 = vpop.f32.mrb[0].mxu0
        %v7824 = vadd.f32 %v7727, %v7823
        %v7825 = vpop.f32.mrb[0].mxu0
        %7826 = vdwg.mxu0
        %v7827 = vpack.c.bf16 %v7591, %v7590
        %v7828 = vpack.c.bf16 %v7593, %v7592
        %7829 = vmatprep.subr.bf16.mxu0 0
        %7830 = vmatpush1.bf16.msra.mxu0 %v7827
        %7831 = vmatprep.subr.bf16.mxu0 0
        %7832 = vmatpush1.bf16.msra.mxu0 %v7828
        %7833 = vmatprep.subr.bf16.mxu0 0
        %7834 = vmatpush1.bf16.msra.mxu0 0
        %7835 = vmatprep.subr.bf16.mxu0 0
        %7836 = vmatpush1.bf16.msra.mxu0 0
        %7837 = vmatprep.subr.bf16.mxu0 0
        %7838 = vmatpush1.bf16.msra.mxu0 0
        %7839 = vmatprep.subr.bf16.mxu0 0
        %7840 = vmatpush1.bf16.msra.mxu0 0
        %7841 = vmatprep.subr.bf16.mxu0 0
        %7842 = vmatpush1.bf16.msra.mxu0 0
        %7843 = vmatprep.subr.bf16.mxu0 0
        %7844 = vmatpush1.bf16.msra.mxu0 0
        %7845 = vmatprep.subr.bf16.mxu0 0
        %7846 = vmatpush1.bf16.msra.mxu0 0
        %7847 = vmatprep.subr.bf16.mxu0 0
        %7848 = vmatpush1.bf16.msra.mxu0 0
        %7849 = vmatprep.subr.bf16.mxu0 0
        %7850 = vmatpush1.bf16.msra.mxu0 0
        %7851 = vmatprep.subr.bf16.mxu0 0
        %7852 = vmatpush1.bf16.msra.mxu0 0
        %7853 = vmatprep.subr.bf16.mxu0 0
        %7854 = vmatpush1.bf16.msra.mxu0 0
        %7855 = vmatprep.subr.bf16.mxu0 0
        %7856 = vmatpush1.bf16.msra.mxu0 0
        %7857 = vmatprep.subr.bf16.mxu0 0
        %7858 = vmatpush1.bf16.msra.mxu0 0
        %7859 = vmatprep.subr.bf16.mxu0 0
        %7860 = vmatpush1.bf16.msra.mxu0 0
        %7861 = vmatprep.mubr.bf16.mxu0 0
        %7862 = vmatmul.mubr.bf16.gmra.mrb[0].mxu0 %v7613
        %v7863 = vpop.f32.mrb[0].mxu0
        %v7864 = vadd.f32 0.0, %v7863
        %v7865 = vpop.f32.mrb[0].mxu0
        %v7866 = vpop.f32.mrb[0].mxu0
        %v7867 = vadd.f32 0.0, %v7866
        %v7868 = vpop.f32.mrb[0].mxu0
        %7869 = vmatprep.mubr.bf16.mxu0 0
        %7870 = vmatmul.mubr.bf16.gmra.mrb[0].mxu0 %v7616
        %v7871 = vpop.f32.mrb[0].mxu0
        %v7872 = vadd.f32 0.0, %v7871
        %v7873 = vpop.f32.mrb[0].mxu0
        %v7874 = vpop.f32.mrb[0].mxu0
        %v7875 = vadd.f32 0.0, %v7874
        %v7876 = vpop.f32.mrb[0].mxu0
        %7877 = vmatprep.mubr.bf16.mxu0 0
        %7878 = vmatmul.mubr.bf16.gmra.mrb[0].mxu0 %v7619
        %v7879 = vpop.f32.mrb[0].mxu0
        %v7880 = vadd.f32 0.0, %v7879
        %v7881 = vpop.f32.mrb[0].mxu0
        %v7882 = vpop.f32.mrb[0].mxu0
        %v7883 = vadd.f32 0.0, %v7882
        %v7884 = vpop.f32.mrb[0].mxu0
        %7885 = vmatprep.mubr.bf16.mxu0 0
        %7886 = vmatmul.mubr.bf16.gmra.mrb[0].mxu0 %v7622
        %v7887 = vpop.f32.mrb[0].mxu0
        %v7888 = vadd.f32 0.0, %v7887
        %v7889 = vpop.f32.mrb[0].mxu0
        %v7890 = vpop.f32.mrb[0].mxu0
        %v7891 = vadd.f32 0.0, %v7890
        %v7892 = vpop.f32.mrb[0].mxu0
        %7893 = vmatprep.mubr.bf16.mxu0 0
        %7894 = vmatmul.mubr.bf16.gmra.mrb[0].mxu0 %v7625
        %v7895 = vpop.f32.mrb[0].mxu0
        %v7896 = vadd.f32 0.0, %v7895
        %v7897 = vpop.f32.mrb[0].mxu0
        %v7898 = vpop.f32.mrb[0].mxu0
        %v7899 = vadd.f32 0.0, %v7898
        %v7900 = vpop.f32.mrb[0].mxu0
        %7901 = vmatprep.mubr.bf16.mxu0 0
        %7902 = vmatmul.mubr.bf16.gmra.mrb[0].mxu0 %v7628
        %v7903 = vpop.f32.mrb[0].mxu0
        %v7904 = vadd.f32 0.0, %v7903
        %v7905 = vpop.f32.mrb[0].mxu0
        %v7906 = vpop.f32.mrb[0].mxu0
        %v7907 = vadd.f32 0.0, %v7906
        %v7908 = vpop.f32.mrb[0].mxu0
        %7909 = vmatprep.mubr.bf16.mxu0 0
        %7910 = vmatmul.mubr.bf16.gmra.mrb[0].mxu0 %v7631
        %v7911 = vpop.f32.mrb[0].mxu0
        %v7912 = vadd.f32 0.0, %v7911
        %v7913 = vpop.f32.mrb[0].mxu0
        %v7914 = vpop.f32.mrb[0].mxu0
        %v7915 = vadd.f32 0.0, %v7914
        %v7916 = vpop.f32.mrb[0].mxu0
        %7917 = vmatprep.mubr.bf16.mxu0 0
        %7918 = vmatmul.mubr.bf16.gmra.mrb[0].mxu0 %v7135
        %v7919 = vpop.f32.mrb[0].mxu0
        %v7920 = vadd.f32 0.0, %v7919
        %v7921 = vpop.f32.mrb[0].mxu0
        %v7922 = vpop.f32.mrb[0].mxu0
        %v7923 = vadd.f32 0.0, %v7922
        %v7924 = vpop.f32.mrb[0].mxu0
        %7925 = vdwg.mxu0
        %v7926 = vadd.f32 %v7765, %v7864
        %v7927 = vadd.f32 %v7768, %v7867
        %v7928 = vadd.f32 %v7773, %v7872
        %v7929 = vadd.f32 %v7776, %v7875
        %v7930 = vadd.f32 %v7781, %v7880
        %v7931 = vadd.f32 %v7784, %v7883
        %v7932 = vadd.f32 %v7789, %v7888
        %v7933 = vadd.f32 %v7792, %v7891
        %v7934 = vadd.f32 %v7797, %v7896
        %v7935 = vadd.f32 %v7800, %v7899
        %v7936 = vadd.f32 %v7805, %v7904
        %v7937 = vadd.f32 %v7808, %v7907
        %v7938 = vadd.f32 %v7813, %v7912
        %v7939 = vadd.f32 %v7816, %v7915
        %v7940 = vadd.f32 %v7821, %v7920
        %v7941 = vadd.f32 %v7824, %v7923
        %v7943 = vlaneseq
        %v7944 = vshrl.u32 %v7943, 7
        %v7945 = vsub.s32 0, %v7944
        %v7946 = vrot.slane %v7594, %v7945
        %v7948 = vadd.f32 %v7926, %v7946
        %v7949 = vadd.f32 %v7927, %v7946
        %v7950 = vadd.f32 %v7928, %v7946
        %v7951 = vadd.f32 %v7929, %v7946
        %v7952 = vadd.f32 %v7930, %v7946
        %v7953 = vadd.f32 %v7931, %v7946
        %v7954 = vadd.f32 %v7932, %v7946
        %v7955 = vadd.f32 %v7933, %v7946
        %v7956 = vadd.f32 %v7934, %v7946
        %v7957 = vadd.f32 %v7935, %v7946
        %v7958 = vadd.f32 %v7936, %v7946
        %v7959 = vadd.f32 %v7937, %v7946
        %v7960 = vadd.f32 %v7938, %v7946
        %v7961 = vadd.f32 %v7939, %v7946
        %v7962 = vadd.f32 %v7940, %v7946
        %v7963 = vadd.f32 %v7941, %v7946
        %v7965 = vlaneseq
        %v7966 = vshrl.u32 %v7965, 7
        %v7967 = vsub.s32 0, %v7966
        %v7968 = vrot.slane %v7595, %v7967
        %v7970 = vmul.f32 %v7948, %v7968
        %v7971 = vmul.f32 %v7949, %v7968
        %v7972 = vmul.f32 %v7950, %v7968
        %v7973 = vmul.f32 %v7951, %v7968
        %v7974 = vmul.f32 %v7952, %v7968
        %v7975 = vmul.f32 %v7953, %v7968
        %v7976 = vmul.f32 %v7954, %v7968
        %v7977 = vmul.f32 %v7955, %v7968
        %v7978 = vmul.f32 %v7956, %v7968
        %v7979 = vmul.f32 %v7957, %v7968
        %v7980 = vmul.f32 %v7958, %v7968
        %v7981 = vmul.f32 %v7959, %v7968
        %v7982 = vmul.f32 %v7960, %v7968
        %v7983 = vmul.f32 %v7961, %v7968
        %v7984 = vmul.f32 %v7962, %v7968
        %v7985 = vmul.f32 %v7963, %v7968
        %v7987 = vlaneseq
        %v7988 = vshrl.u32 %v7987, 7
        %v7989 = vsub.s32 0, %v7988
        %v7990 = vrot.slane %v7596, %v7989
        %v7992 = vadd.f32 %v7970, %v7990
        %v7993 = vadd.f32 %v7971, %v7990
        %v7994 = vadd.f32 %v7972, %v7990
        %v7995 = vadd.f32 %v7973, %v7990
        %v7996 = vadd.f32 %v7974, %v7990
        %v7997 = vadd.f32 %v7975, %v7990
        %v7998 = vadd.f32 %v7976, %v7990
        %v7999 = vadd.f32 %v7977, %v7990
        %v8000 = vadd.f32 %v7978, %v7990
        %v8001 = vadd.f32 %v7979, %v7990
        %v8002 = vadd.f32 %v7980, %v7990
        %v8003 = vadd.f32 %v7981, %v7990
        %v8004 = vadd.f32 %v7982, %v7990
        %v8005 = vadd.f32 %v7983, %v7990
        %v8006 = vadd.f32 %v7984, %v7990
        %v8007 = vadd.f32 %v7985, %v7990
        %v8008 = vadd.f32 %v7992, %v7566
        %v8009 = vadd.f32 %v7993, %v7567
        %v8010 = vadd.f32 %v7994, %v7568
        %v8011 = vadd.f32 %v7995, %v7569
        %v8012 = vadd.f32 %v7996, %v7570
        %v8013 = vadd.f32 %v7997, %v7571
        %v8014 = vadd.f32 %v7998, %v7572
        %v8015 = vadd.f32 %v7999, %v7573
        %v8016 = vadd.f32 %v8000, %v7574
        %v8017 = vadd.f32 %v8001, %v7575
        %v8018 = vadd.f32 %v8002, %v7576
        %v8019 = vadd.f32 %v8003, %v7577
        %v8020 = vadd.f32 %v8004, %v7578
        %v8021 = vadd.f32 %v8005, %v7579
        %v8022 = vadd.f32 %v8006, %v7580
        %v8023 = vadd.f32 %v8007, %v7581
        %v8024 = vmax.f32 %v8008, 0.0
        %v8025 = vmax.f32 %v8009, 0.0
        %v8026 = vmax.f32 %v8010, 0.0
        %v8027 = vmax.f32 %v8011, 0.0
        %v8028 = vmax.f32 %v8012, 0.0
        %v8029 = vmax.f32 %v8013, 0.0
        %v8030 = vmax.f32 %v8014, 0.0
        %v8031 = vmax.f32 %v8015, 0.0
        %v8032 = vmax.f32 %v8016, 0.0
        %v8033 = vmax.f32 %v8017, 0.0
        %v8034 = vmax.f32 %v8018, 0.0
        %v8035 = vmax.f32 %v8019, 0.0
        %v8036 = vmax.f32 %v8020, 0.0
        %v8037 = vmax.f32 %v8021, 0.0
        %v8038 = vmax.f32 %v8022, 0.0
        %v8039 = vmax.f32 %v8023, 0.0
        %v8040 = vld [vmem:[%s83] sm:$0xff]
        %v8041 = vld [vmem:[%s83 + $0x8] sm:$0xff]
        %v8042 = vld [vmem:[%s83 + $0x10] sm:$0xff]
        %v8043 = vld [vmem:[%s83 + $0x18] sm:$0xff]
        %v8044 = vld [vmem:[%s85] sm:$0x1]
        %v8045 = vld [vmem:[%s87] sm:$0xff]
        %v8046 = vld [vmem:[%s89] sm:$0x1]
        %v8047 = vld [vmem:[%s91] sm:$0xff]
        %v8048 = vld [vmem:[%s93] sm:$0x1]
        %v8049 = vld [vmem:[%s95] sm:$0x1]
        %v8050 = vld [vmem:[%s97] sm:$0x1]
        %v8051 = vsel %vm7013, %v8024, 0.0
        %v8052 = vsel %vm7013, %v8025, 0.0
        %v8053 = vadd.f32 %v8051, %v8052
        %v8054 = vrot.slane %v8053, 4
        %v8055 = vadd.f32 %v8053, %v8054
        %v8056 = vrot.slane %v8055, 2
        %v8057 = vadd.f32 %v8055, %v8056
        %v8058 = vrot.slane %v8057, 1
        %v8059 = vadd.f32 %v8057, %v8058
        %v8060 = vsel %vm7013, %v8026, 0.0
        %v8061 = vsel %vm7013, %v8027, 0.0
        %v8062 = vadd.f32 %v8060, %v8061
        %v8063 = vrot.slane %v8062, 4
        %v8064 = vadd.f32 %v8062, %v8063
        %v8065 = vrot.slane %v8064, 2
        %v8066 = vadd.f32 %v8064, %v8065
        %v8067 = vrot.slane %v8066, 1
        %v8068 = vadd.f32 %v8066, %v8067
        %v8069 = vsel %vm7013, %v8028, 0.0
        %v8070 = vsel %vm7013, %v8029, 0.0
        %v8071 = vadd.f32 %v8069, %v8070
        %v8072 = vrot.slane %v8071, 4
        %v8073 = vadd.f32 %v8071, %v8072
        %v8074 = vrot.slane %v8073, 2
        %v8075 = vadd.f32 %v8073, %v8074
        %v8076 = vrot.slane %v8075, 1
        %v8077 = vadd.f32 %v8075, %v8076
        %v8078 = vsel %vm7013, %v8030, 0.0
        %v8079 = vsel %vm7013, %v8031, 0.0
        %v8080 = vadd.f32 %v8078, %v8079
        %v8081 = vrot.slane %v8080, 4
        %v8082 = vadd.f32 %v8080, %v8081
        %v8083 = vrot.slane %v8082, 2
        %v8084 = vadd.f32 %v8082, %v8083
        %v8085 = vrot.slane %v8084, 1
        %v8086 = vadd.f32 %v8084, %v8085
        %v8087 = vsel %vm7013, %v8032, 0.0
        %v8088 = vsel %vm7013, %v8033, 0.0
        %v8089 = vadd.f32 %v8087, %v8088
        %v8090 = vrot.slane %v8089, 4
        %v8091 = vadd.f32 %v8089, %v8090
        %v8092 = vrot.slane %v8091, 2
        %v8093 = vadd.f32 %v8091, %v8092
        %v8094 = vrot.slane %v8093, 1
        %v8095 = vadd.f32 %v8093, %v8094
        %v8096 = vsel %vm7013, %v8034, 0.0
        %v8097 = vsel %vm7013, %v8035, 0.0
        %v8098 = vadd.f32 %v8096, %v8097
        %v8099 = vrot.slane %v8098, 4
        %v8100 = vadd.f32 %v8098, %v8099
        %v8101 = vrot.slane %v8100, 2
        %v8102 = vadd.f32 %v8100, %v8101
        %v8103 = vrot.slane %v8102, 1
        %v8104 = vadd.f32 %v8102, %v8103
        %v8105 = vsel %vm7013, %v8036, 0.0
        %v8106 = vsel %vm7013, %v8037, 0.0
        %v8107 = vadd.f32 %v8105, %v8106
        %v8108 = vrot.slane %v8107, 4
        %v8109 = vadd.f32 %v8107, %v8108
        %v8110 = vrot.slane %v8109, 2
        %v8111 = vadd.f32 %v8109, %v8110
        %v8112 = vrot.slane %v8111, 1
        %v8113 = vadd.f32 %v8111, %v8112
        %v8114 = vsel %vm7013, %v8038, 0.0
        %v8115 = vsel %vm7013, %v8039, 0.0
        %v8116 = vadd.f32 %v8114, %v8115
        %v8117 = vrot.slane %v8116, 4
        %v8118 = vadd.f32 %v8116, %v8117
        %v8119 = vrot.slane %v8118, 2
        %v8120 = vadd.f32 %v8118, %v8119
        %v8121 = vrot.slane %v8120, 1
        %v8122 = vadd.f32 %v8120, %v8121
        %v8123 = vmul.f32 %v8059, %v4879
        %v8124 = vmul.f32 %v8068, %v4879
        %v8125 = vmul.f32 %v8077, %v4879
        %v8126 = vmul.f32 %v8086, %v4879
        %v8127 = vmul.f32 %v8095, %v4879
        %v8128 = vmul.f32 %v8104, %v4879
        %v8129 = vmul.f32 %v8113, %v4879
        %v8130 = vmul.f32 %v8122, %v4879
        %v8131 = vadd.f32 %v8051, %v8060
        %v8132 = vadd.f32 %v8131, %v8069
        %v8133 = vadd.f32 %v8132, %v8078
        %v8134 = vadd.f32 %v8133, %v8087
        %v8135 = vadd.f32 %v8134, %v8096
        %v8136 = vadd.f32 %v8135, %v8105
        %v8137 = vadd.f32 %v8136, %v8114
        %v8138 = vadd.f32 %v8052, %v8061
        %v8139 = vadd.f32 %v8138, %v8070
        %v8140 = vadd.f32 %v8139, %v8079
        %v8141 = vadd.f32 %v8140, %v8088
        %v8142 = vadd.f32 %v8141, %v8097
        %v8143 = vadd.f32 %v8142, %v8106
        %v8144 = vadd.f32 %v8143, %v8115
        %v8145 = vrcp.pop 8.0
        %v8146 = vmul.f32 %v8137, %v8145
        %v8147 = vmul.f32 %v8144, %v8145
        %v8156 = vsel %vm4944, %v8124, %v8123
        %v8157 = vsel %vm4946, %v8125, %v8156
        %v8158 = vsel %vm4948, %v8126, %v8157
        %v8159 = vsel %vm4950, %v8127, %v8158
        %v8160 = vsel %vm4952, %v8128, %v8159
        %v8161 = vsel %vm4954, %v8129, %v8160
        %v8162 = vsel %vm4956, %v8130, %v8161
        %v8164 = vpack.c.bf16 %v8146, %v8162
        %v8165 = vpack.c.bf16 %v8147, %v8147
        %v8166 = vpack.c.bf16 %v8041, %v8040
        %v8167 = vpack.c.bf16 %v8043, %v8042
        %v8169 = vlaneseq
        %v8170 = vshrl.u32 %v8169, 7
        %v8171 = vsub.s32 0, %v8170
        %v8172 = vrot.slane %v8044, %v8171
        %v8175 = vsel %vm7013, %v8164, 0
        %v8178 = vsel %vm7013, %v8165, 0
        %8180 = vmatprep.subr.bf16.mxu0 0
        %8181 = vmatpush1.bf16.msra.mxu0 %v8166
        %8182 = vmatprep.subr.bf16.mxu0 0
        %8183 = vmatpush1.bf16.msra.mxu0 %v8167
        %8184 = vmatprep.subr.bf16.mxu0 0
        %8185 = vmatpush1.bf16.msra.mxu0 0
        %8186 = vmatprep.subr.bf16.mxu0 0
        %8187 = vmatpush1.bf16.msra.mxu0 0
        %8188 = vmatprep.subr.bf16.mxu0 0
        %8189 = vmatpush1.bf16.msra.mxu0 0
        %8190 = vmatprep.subr.bf16.mxu0 0
        %8191 = vmatpush1.bf16.msra.mxu0 0
        %8192 = vmatprep.subr.bf16.mxu0 0
        %8193 = vmatpush1.bf16.msra.mxu0 0
        %8194 = vmatprep.subr.bf16.mxu0 0
        %8195 = vmatpush1.bf16.msra.mxu0 0
        %8196 = vmatprep.subr.bf16.mxu0 0
        %8197 = vmatpush1.bf16.msra.mxu0 0
        %8198 = vmatprep.subr.bf16.mxu0 0
        %8199 = vmatpush1.bf16.msra.mxu0 0
        %8200 = vmatprep.subr.bf16.mxu0 0
        %8201 = vmatpush1.bf16.msra.mxu0 0
        %8202 = vmatprep.subr.bf16.mxu0 0
        %8203 = vmatpush1.bf16.msra.mxu0 0
        %8204 = vmatprep.subr.bf16.mxu0 0
        %8205 = vmatpush1.bf16.msra.mxu0 0
        %8206 = vmatprep.subr.bf16.mxu0 0
        %8207 = vmatpush1.bf16.msra.mxu0 0
        %8208 = vmatprep.subr.bf16.mxu0 0
        %8209 = vmatpush1.bf16.msra.mxu0 0
        %8210 = vmatprep.subr.bf16.mxu0 0
        %8211 = vmatpush1.bf16.msra.mxu0 0
        %8212 = vmatprep.mubr.bf16.mxu0 0
        %8213 = vmatmul.mubr.bf16.gmra.mrb[0].mxu0 %v8175
        %v8214 = vpop.f32.mrb[0].mxu0
        %v8215 = vadd.f32 %v8172, %v8214
        %v8216 = vpop.f32.mrb[0].mxu0
        %v8217 = vpop.f32.mrb[0].mxu0
        %v8218 = vadd.f32 %v8172, %v8217
        %v8219 = vpop.f32.mrb[0].mxu0
        %8220 = vmatprep.mubr.bf16.mxu0 0
        %8221 = vmatmul.mubr.bf16.gmra.mrb[0].mxu0 %v8178
        %v8222 = vpop.f32.mrb[0].mxu0
        %v8223 = vadd.f32 %v8172, %v8222
        %v8224 = vpop.f32.mrb[0].mxu0
        %v8225 = vpop.f32.mrb[0].mxu0
        %v8226 = vpop.f32.mrb[0].mxu0
        %8227 = vdwg.mxu0
        %v8228 = vadd.f32 %v8215, 3.0
        %v8229 = vadd.f32 %v8218, 3.0
        %v8230 = vadd.f32 %v8223, 3.0
        %v8231 = vmax.f32 %v8228, 0.0
        %v8232 = vmax.f32 %v8229, 0.0
        %v8233 = vmax.f32 %v8230, 0.0
        %v8234 = vmin.f32 %v8231, 6.0
        %v8235 = vmin.f32 %v8232, 6.0
        %v8236 = vmin.f32 %v8233, 6.0
        %v8237 = vmul.f32 %v8215, %v8234
        %v8238 = vmul.f32 %v8218, %v8235
        %v8239 = vmul.f32 %v8223, %v8236
        %v8240 = vmul.f32 %v8237, 0.16666667
        %v8241 = vmul.f32 %v8238, 0.16666667
        %v8242 = vmul.f32 %v8239, 0.16666667
        %v8243 = vpack.c.bf16 %v8240, %v8240
        %v8244 = vpack.c.bf16 %v8045, %v8045
        %v8246 = vlaneseq
        %v8247 = vshrl.u32 %v8246, 7
        %v8248 = vsub.s32 0, %v8247
        %v8249 = vrot.slane %v8046, %v8248
        %vm8251 = vcmask 64512
        %v8253 = vsel %vm8251, %v8243, 0
        %vm8255 = vcmask 1043456
        %v8257 = vsel %vm8255, %v8244, 0
        %8259 = vmatprep.subr.bf16.mxu0 0
        %8260 = vmatpush1.bf16.msra.mxu0 %v8257
        %8261 = vmatprep.subr.bf16.mxu0 0
        %8262 = vmatpush1.bf16.msra.mxu0 0
        %8263 = vmatprep.subr.bf16.mxu0 0
        %8264 = vmatpush1.bf16.msra.mxu0 0
        %8265 = vmatprep.subr.bf16.mxu0 0
        %8266 = vmatpush1.bf16.msra.mxu0 0
        %8267 = vmatprep.subr.bf16.mxu0 0
        %8268 = vmatpush1.bf16.msra.mxu0 0
        %8269 = vmatprep.subr.bf16.mxu0 0
        %8270 = vmatpush1.bf16.msra.mxu0 0
        %8271 = vmatprep.subr.bf16.mxu0 0
        %8272 = vmatpush1.bf16.msra.mxu0 0
        %8273 = vmatprep.subr.bf16.mxu0 0
        %8274 = vmatpush1.bf16.msra.mxu0 0
        %8275 = vmatprep.subr.bf16.mxu0 0
        %8276 = vmatpush1.bf16.msra.mxu0 0
        %8277 = vmatprep.subr.bf16.mxu0 0
        %8278 = vmatpush1.bf16.msra.mxu0 0
        %8279 = vmatprep.subr.bf16.mxu0 0
        %8280 = vmatpush1.bf16.msra.mxu0 0
        %8281 = vmatprep.subr.bf16.mxu0 0
        %8282 = vmatpush1.bf16.msra.mxu0 0
        %8283 = vmatprep.subr.bf16.mxu0 0
        %8284 = vmatpush1.bf16.msra.mxu0 0
        %8285 = vmatprep.subr.bf16.mxu0 0
        %8286 = vmatpush1.bf16.msra.mxu0 0
        %8287 = vmatprep.subr.bf16.mxu0 0
        %8288 = vmatpush1.bf16.msra.mxu0 0
        %8289 = vmatprep.subr.bf16.mxu0 0
        %8290 = vmatpush1.bf16.msra.mxu0 0
        %8291 = vmatprep.mubr.bf16.mxu0 0
        %8292 = vmatmul.mubr.bf16.gmra.mrb[0].mxu0 %v8253
        %v8293 = vpop.f32.mrb[0].mxu0
        %v8294 = vadd.f32 %v8249, %v8293
        %v8295 = vpop.f32.mrb[0].mxu0
        %v8296 = vpop.f32.mrb[0].mxu0
        %v8297 = vpop.f32.mrb[0].mxu0
        %8298 = vdwg.mxu0
        %v8299 = vsub.f32 0.0, %v8294
        %v8300 = vmul.f32 %v8299, 1.442695
        %v8301 = vpow.pop %v8300
        %v8302 = vadd.f32 %v8301, 1.0
        %v8303 = vrcp.pop %v8302
        %v8304 = vpack.c.bf16 %v8242, %v8241
        %v8305 = vpack.c.bf16 %v8047, %v8047
        %v8307 = vlaneseq
        %v8308 = vshrl.u32 %v8307, 7
        %v8309 = vsub.s32 0, %v8308
        %v8310 = vrot.slane %v8048, %v8309
        %v8313 = vsel %vm8251, %v8304, 0
        %v8316 = vsel %vm8255, %v8305, 0
        %8318 = vmatprep.subr.bf16.mxu0 0
        %8319 = vmatpush1.bf16.msra.mxu0 %v8316
        %8320 = vmatprep.subr.bf16.mxu0 0
        %8321 = vmatpush1.bf16.msra.mxu0 0
        %8322 = vmatprep.subr.bf16.mxu0 0
        %8323 = vmatpush1.bf16.msra.mxu0 0
        %8324 = vmatprep.subr.bf16.mxu0 0
        %8325 = vmatpush1.bf16.msra.mxu0 0
        %8326 = vmatprep.subr.bf16.mxu0 0
        %8327 = vmatpush1.bf16.msra.mxu0 0
        %8328 = vmatprep.subr.bf16.mxu0 0
        %8329 = vmatpush1.bf16.msra.mxu0 0
        %8330 = vmatprep.subr.bf16.mxu0 0
        %8331 = vmatpush1.bf16.msra.mxu0 0
        %8332 = vmatprep.subr.bf16.mxu0 0
        %8333 = vmatpush1.bf16.msra.mxu0 0
        %8334 = vmatprep.subr.bf16.mxu0 0
        %8335 = vmatpush1.bf16.msra.mxu0 0
        %8336 = vmatprep.subr.bf16.mxu0 0
        %8337 = vmatpush1.bf16.msra.mxu0 0
        %8338 = vmatprep.subr.bf16.mxu0 0
        %8339 = vmatpush1.bf16.msra.mxu0 0
        %8340 = vmatprep.subr.bf16.mxu0 0
        %8341 = vmatpush1.bf16.msra.mxu0 0
        %8342 = vmatprep.subr.bf16.mxu0 0
        %8343 = vmatpush1.bf16.msra.mxu0 0
        %8344 = vmatprep.subr.bf16.mxu0 0
        %8345 = vmatpush1.bf16.msra.mxu0 0
        %8346 = vmatprep.subr.bf16.mxu0 0
        %8347 = vmatpush1.bf16.msra.mxu0 0
        %8348 = vmatprep.subr.bf16.mxu0 0
        %8349 = vmatpush1.bf16.msra.mxu0 0
        %8350 = vmatprep.mubr.bf16.mxu0 0
        %8351 = vmatmul.mubr.bf16.gmra.mrb[0].mxu0 %v8313
        %v8352 = vpop.f32.mrb[0].mxu0
        %v8353 = vadd.f32 %v8310, %v8352
        %v8354 = vpop.f32.mrb[0].mxu0
        %v8355 = vpop.f32.mrb[0].mxu0
        %v8356 = vadd.f32 %v8310, %v8355
        %v8357 = vpop.f32.mrb[0].mxu0
        %8358 = vdwg.mxu0
        %v8359 = vsub.f32 0.0, %v8353
        %v8360 = vsub.f32 0.0, %v8356
        %v8361 = vmul.f32 %v8359, 1.442695
        %v8362 = vpow.pop %v8361
        %v8363 = vmul.f32 %v8360, 1.442695
        %v8364 = vpow.pop %v8363
        %v8365 = vadd.f32 %v8362, 1.0
        %v8366 = vadd.f32 %v8364, 1.0
        %v8367 = vrcp.pop %v8365
        %v8368 = vrcp.pop %v8366
        %v8370 = vcombine.high %v8303, %v8303
        %v8372 = vunpack.c.l.s4 1966171168
        %v8373 = vunpack.c.0.s8 %v8372
        %v8374 = vlaneseq
        %v8375 = vshrl.u32 %v8374, 7
        %v8376 = vsub.s32 %v8373, %v8375
        %v8377 = vrot.slane %v8303, %v8376
        %v8379 = vunpack.c.l.s4 1966171168
        %v8380 = vunpack.c.0.s8 %v8379
        %v8381 = vlaneseq
        %v8382 = vshrl.u32 %v8381, 7
        %v8383 = vsub.s32 %v8380, %v8382
        %v8384 = vrot.slane %v8370, %v8383
        %v8385 = vcombine.high %v8377, %v8377
        %v8386 = vcombine.high %v8384, %v8384
        %v8388 = vunpack.c.l.s4 1966171168
        %v8389 = vunpack.c.0.s8 %v8388
        %v8390 = vlaneseq
        %v8391 = vshrl.u32 %v8390, 7
        %v8392 = vsub.s32 %v8389, %v8391
        %v8393 = vrot.slane %v8377, %v8392
        %v8395 = vunpack.c.l.s4 1966171168
        %v8396 = vunpack.c.0.s8 %v8395
        %v8397 = vlaneseq
        %v8398 = vshrl.u32 %v8397, 7
        %v8399 = vsub.s32 %v8396, %v8398
        %v8400 = vrot.slane %v8384, %v8399
        %v8402 = vunpack.c.l.s4 1966171168
        %v8403 = vunpack.c.0.s8 %v8402
        %v8404 = vlaneseq
        %v8405 = vshrl.u32 %v8404, 7
        %v8406 = vsub.s32 %v8403, %v8405
        %v8407 = vrot.slane %v8385, %v8406
        %v8409 = vunpack.c.l.s4 1966171168
        %v8410 = vunpack.c.0.s8 %v8409
        %v8411 = vlaneseq
        %v8412 = vshrl.u32 %v8411, 7
        %v8413 = vsub.s32 %v8410, %v8412
        %v8414 = vrot.slane %v8386, %v8413
        %v8415 = vcombine.high %v8393, %v8393
        %v8416 = vcombine.high %v8400, %v8400
        %v8417 = vcombine.high %v8407, %v8407
        %v8418 = vcombine.high %v8414, %v8414
        %v8419 = vlaneseq
        %v8420 = vshrl.u32 %v8419, 7
        %v8421 = vsub.s32 0, %v8420
        %v8422 = vrot.slane %v8393, %v8421
        %v8423 = vlaneseq
        %v8424 = vshrl.u32 %v8423, 7
        %v8425 = vsub.s32 0, %v8424
        %v8426 = vrot.slane %v8407, %v8425
        %v8427 = vlaneseq
        %v8428 = vshrl.u32 %v8427, 7
        %v8429 = vsub.s32 0, %v8428
        %v8430 = vrot.slane %v8415, %v8429
        %v8431 = vlaneseq
        %v8432 = vshrl.u32 %v8431, 7
        %v8433 = vsub.s32 0, %v8432
        %v8434 = vrot.slane %v8417, %v8433
        %v8435 = vlaneseq
        %v8436 = vshrl.u32 %v8435, 7
        %v8437 = vsub.s32 0, %v8436
        %v8438 = vrot.slane %v8400, %v8437
        %v8439 = vlaneseq
        %v8440 = vshrl.u32 %v8439, 7
        %v8441 = vsub.s32 0, %v8440
        %v8442 = vrot.slane %v8414, %v8441
        %v8443 = vlaneseq
        %v8444 = vshrl.u32 %v8443, 7
        %v8445 = vsub.s32 0, %v8444
        %v8446 = vrot.slane %v8416, %v8445
        %v8447 = vlaneseq
        %v8448 = vshrl.u32 %v8447, 7
        %v8449 = vsub.s32 0, %v8448
        %v8450 = vrot.slane %v8418, %v8449
        %v8459 = vmul.f32 %v8422, %v8367
        %v8460 = vmul.f32 %v8422, %v8368
        %v8461 = vmul.f32 %v8426, %v8367
        %v8462 = vmul.f32 %v8426, %v8368
        %v8463 = vmul.f32 %v8430, %v8367
        %v8464 = vmul.f32 %v8430, %v8368
        %v8465 = vmul.f32 %v8434, %v8367
        %v8466 = vmul.f32 %v8434, %v8368
        %v8467 = vmul.f32 %v8438, %v8367
        %v8468 = vmul.f32 %v8438, %v8368
        %v8469 = vmul.f32 %v8442, %v8367
        %v8470 = vmul.f32 %v8442, %v8368
        %v8471 = vmul.f32 %v8446, %v8367
        %v8472 = vmul.f32 %v8446, %v8368
        %v8473 = vmul.f32 %v8450, %v8367
        %v8474 = vmul.f32 %v8450, %v8368
        %v8475 = vmul.f32 %v8024, %v8459
        %v8476 = vmul.f32 %v8025, %v8460
        %v8477 = vmul.f32 %v8026, %v8461
        %v8478 = vmul.f32 %v8027, %v8462
        %v8479 = vmul.f32 %v8028, %v8463
        %v8480 = vmul.f32 %v8029, %v8464
        %v8481 = vmul.f32 %v8030, %v8465
        %v8482 = vmul.f32 %v8031, %v8466
        %v8483 = vmul.f32 %v8032, %v8467
        %v8484 = vmul.f32 %v8033, %v8468
        %v8485 = vmul.f32 %v8034, %v8469
        %v8486 = vmul.f32 %v8035, %v8470
        %v8487 = vmul.f32 %v8036, %v8471
        %v8488 = vmul.f32 %v8037, %v8472
        %v8489 = vmul.f32 %v8038, %v8473
        %v8490 = vmul.f32 %v8039, %v8474
        %v8492 = vlaneseq
        %v8493 = vshrl.u32 %v8492, 7
        %v8494 = vsub.s32 0, %v8493
        %v8495 = vrot.slane %v8049, %v8494
        %v8497 = vmul.f32 %v8475, %v8495
        %v8498 = vmul.f32 %v8476, %v8495
        %v8499 = vmul.f32 %v8477, %v8495
        %v8500 = vmul.f32 %v8478, %v8495
        %v8501 = vmul.f32 %v8479, %v8495
        %v8502 = vmul.f32 %v8480, %v8495
        %v8503 = vmul.f32 %v8481, %v8495
        %v8504 = vmul.f32 %v8482, %v8495
        %v8505 = vmul.f32 %v8483, %v8495
        %v8506 = vmul.f32 %v8484, %v8495
        %v8507 = vmul.f32 %v8485, %v8495
        %v8508 = vmul.f32 %v8486, %v8495
        %v8509 = vmul.f32 %v8487, %v8495
        %v8510 = vmul.f32 %v8488, %v8495
        %v8511 = vmul.f32 %v8489, %v8495
        %v8512 = vmul.f32 %v8490, %v8495
        %v8514 = vlaneseq
        %v8515 = vshrl.u32 %v8514, 7
        %v8516 = vsub.s32 0, %v8515
        %v8517 = vrot.slane %v8050, %v8516
        %v8519 = vadd.f32 %v8497, %v8517
        %v8520 = vadd.f32 %v8498, %v8517
        %v8521 = vadd.f32 %v8499, %v8517
        %v8522 = vadd.f32 %v8500, %v8517
        %v8523 = vadd.f32 %v8501, %v8517
        %v8524 = vadd.f32 %v8502, %v8517
        %v8525 = vadd.f32 %v8503, %v8517
        %v8526 = vadd.f32 %v8504, %v8517
        %v8527 = vadd.f32 %v8505, %v8517
        %v8528 = vadd.f32 %v8506, %v8517
        %v8529 = vadd.f32 %v8507, %v8517
        %v8530 = vadd.f32 %v8508, %v8517
        %v8531 = vadd.f32 %v8509, %v8517
        %v8532 = vadd.f32 %v8510, %v8517
        %v8533 = vadd.f32 %v8511, %v8517
        %v8534 = vadd.f32 %v8512, %v8517
        %v8535 = vadd.f32 %v8519, %v8024
        %v8536 = vadd.f32 %v8520, %v8025
        %v8537 = vadd.f32 %v8521, %v8026
        %v8538 = vadd.f32 %v8522, %v8027
        %v8539 = vadd.f32 %v8523, %v8028
        %v8540 = vadd.f32 %v8524, %v8029
        %v8541 = vadd.f32 %v8525, %v8030
        %v8542 = vadd.f32 %v8526, %v8031
        %v8543 = vadd.f32 %v8527, %v8032
        %v8544 = vadd.f32 %v8528, %v8033
        %v8545 = vadd.f32 %v8529, %v8034
        %v8546 = vadd.f32 %v8530, %v8035
        %v8547 = vadd.f32 %v8531, %v8036
        %v8548 = vadd.f32 %v8532, %v8037
        %v8549 = vadd.f32 %v8533, %v8038
        %v8550 = vadd.f32 %v8534, %v8039
        %v8551 = vmax.f32 %v8535, 0.0
        %v8552 = vmax.f32 %v8536, 0.0
        %v8553 = vmax.f32 %v8537, 0.0
        %v8554 = vmax.f32 %v8538, 0.0
        %v8555 = vmax.f32 %v8539, 0.0
        %v8556 = vmax.f32 %v8540, 0.0
        %v8557 = vmax.f32 %v8541, 0.0
        %v8558 = vmax.f32 %v8542, 0.0
        %v8559 = vmax.f32 %v8543, 0.0
        %v8560 = vmax.f32 %v8544, 0.0
        %v8561 = vmax.f32 %v8545, 0.0
        %v8562 = vmax.f32 %v8546, 0.0
        %v8563 = vmax.f32 %v8547, 0.0
        %v8564 = vmax.f32 %v8548, 0.0
        %v8565 = vmax.f32 %v8549, 0.0
        %v8566 = vmax.f32 %v8550, 0.0
        %8567 = vst.msk [vmem:[%s1724] sm:$0xff] %vm7013, %v8551
        %8568 = vst.msk [vmem:[%s1724 + $0x8] sm:$0xff] %vm7013, %v8552
        %8569 = vst.msk [vmem:[%s1724 + $0x10] sm:$0xff] %vm7013, %v8553
        %8570 = vst.msk [vmem:[%s1724 + $0x18] sm:$0xff] %vm7013, %v8554
        %8571 = vst.msk [vmem:[%s1724 + $0x20] sm:$0xff] %vm7013, %v8555
        %8572 = vst.msk [vmem:[%s1724 + $0x28] sm:$0xff] %vm7013, %v8556
        %8573 = vst.msk [vmem:[%s1724 + $0x30] sm:$0xff] %vm7013, %v8557
        %8574 = vst.msk [vmem:[%s1724 + $0x38] sm:$0xff] %vm7013, %v8558
        %8575 = vst.msk [vmem:[%s1724 + $0x40] sm:$0xff] %vm7013, %v8559
        %8576 = vst.msk [vmem:[%s1724 + $0x48] sm:$0xff] %vm7013, %v8560
        %8577 = vst.msk [vmem:[%s1724 + $0x50] sm:$0xff] %vm7013, %v8561
        %8578 = vst.msk [vmem:[%s1724 + $0x58] sm:$0xff] %vm7013, %v8562
        %8579 = vst.msk [vmem:[%s1724 + $0x60] sm:$0xff] %vm7013, %v8563
        %8580 = vst.msk [vmem:[%s1724 + $0x68] sm:$0xff] %vm7013, %v8564
        %8581 = vst.msk [vmem:[%s1724 + $0x70] sm:$0xff] %vm7013, %v8565
        %8582 = vst.msk [vmem:[%s1724 + $0x78] sm:$0xff] %vm7013, %v8566
        %s8583 = sand.u32 %s1166, 1
        %s8584 = scalar_lea.sflag [#allocation4], %s8583
        %s8585 = sand.u32 %s1166, 1
        %s8586 = smul.addr %s8585, 128
        %s8587 = scalar_lea.vmem [#allocation35], %s8586
        // Predicated region
        $region301: #{tpu_custom_call.1} parent=215 // pred_check
          %p8588 = pneg %p1176
        $region302: #{tpu_custom_call.1} parent=215 // pred_check_branch
          %8590 = sbr.rel (%p8588) target = $region304
        $region303: #{tpu_custom_call.1} parent=215 // pred_region
          %s8592 = ssub.s32 2048, 2048
          %8593 = vsyncadd %s8584, %s8592
          %s8594 = smul.addr %s124, 16
          %s8595 = smul.addr %s8594, 128
          %s8596 = scalar_lea.hbm %s99, %s8595
          %s8597 = sshll.u32 %s8587, 4
          %s8598 = int_to_ptr.vmem [resolvable:$true] %s8597
          %8603 = dma.vmem_to_hbm [thread:$0]  %s8598, 2048, %s8596, %s8584, 128, 128, 8
        $region304: #{tpu_custom_call.1} parent=215 // pred_fallthru
          _
      $region216: #{tpu_custom_call.1} parent=5 // pred_fallthru
        _
      %p8604 = scmp.le.s32.totalorder 2, %s119
      // Predicated region
      $region305: #{tpu_custom_call.1} parent=5 // pred_check
        %p8605 = pneg %p8604
      $region306: #{tpu_custom_call.1} parent=5 // pred_check_branch
        %8607 = sbr.rel (%p8605) target = $region308
      $region307: #{tpu_custom_call.1} parent=5 // pred_region
        %s8608 = ssub.s32 %s119, 2
        // Predicated region
        $region309: #{tpu_custom_call.1} parent=307 // pred_check
          %p8609 = pneg %p1182
        $region310: #{tpu_custom_call.1} parent=307 // pred_check_branch
          %8611 = sbr.rel (%p8609) target = $region312
        $region311: #{tpu_custom_call.1} parent=307 // pred_region
          %s8612 = sand.u32 %s1167, 1
          %s8613 = scalar_lea.sflag [#allocation4], %s8612
          %s8614 = sand.u32 %s1167, 1
          %s8615 = smul.addr %s8614, 128
          %s8616 = scalar_lea.vmem [#allocation35], %s8615
          %8617 = dma.done %s8613, 2048
        $region312: #{tpu_custom_call.1} parent=307 // pred_fallthru
          _
      $region308: #{tpu_custom_call.1} parent=5 // pred_fallthru
        _
    $region6: #{tpu_custom_call.1} parent=1 // loop_footer
      %s123 = sadd.s32 1, %s119
    $region7: #{tpu_custom_call.1} parent=1 // loop_footer_branch
      %118 = sbr.rel target = $region3
    $region8: #{tpu_custom_call.1} parent=1 // loop_exit
      _
    %8618 = vsyncpa [#allocation3], 1
    %s8619 = scalar_lea.sflag [#allocation3], 1
    %8620 = vsyncpa %s8619, 1
    %8621 = vsyncpa [#allocation6], 1
    %8622 = vsyncpa [#allocation9], 1
    %8623 = vsyncpa [#allocation12], 1
    %8624 = vsyncpa [#allocation15], 1
    %8625 = vsyncpa [#allocation18], 1
    %8626 = vsyncpa [#allocation21], 1
    %8627 = vsyncpa [#allocation24], 1
    %8628 = vsyncpa [#allocation27], 1
    %8629 = vsyncpa [#allocation30], 1
    %8630 = vsyncpa [#allocation33], 1
    %8631 = vsyncpa [#allocation4], 1
    %s8632 = scalar_lea.sflag [#allocation4], 1
    %8633 = vsyncpa %s8632, 1

</llo_original>
